<compile_context>
chip_gen: v7x
topology: tpu7x:2x2x1
jax: 0.10.0
libtpu: 0.0.40
codegen_flags: <defaults>
</compile_context>

<pallas_src>
import functools

import numpy as np

import jax
import jax.numpy as jnp
from jax.experimental import pallas as pl
from jax.experimental.pallas import tpu as pltpu

EPS_BN = 1e-5      # nn.BatchNorm2d default eps
EPS_NORM = 1e-12   # F.normalize default eps


# ----------------------------- Pallas kernel --------------------------------

def _moco_fused_kernel(x_ref,
                       g1_ref, w1_ref, gm1_ref, bt1_ref,
                       g2_ref, w2_ref, gm2_ref, bt2_ref,
                       g3_ref, w3_ref, gm3_ref, bt3_ref,
                       pool_ref, wa_ref, ba_ref, wb_ref, bb_ref,
                       out_ref):
    f32, bf16 = jnp.float32, jnp.bfloat16

    def conv_bn_relu(x, g_ref, w_ref, gamma_ref, beta_ref):
        # x:     (m_in, cin_pad)   activations (rows = N*H*W, lanes = channels)
        # g_ref: (9*m_out, m_in)   0/1 gather (stride-2 window + zero padding)
        # w_ref: (9*cin_pad, cout) packed weights, w[k*cin_pad + c, o] = W[o, c, ki, kj]
        m_out = g_ref.shape[0] // 9
        cin_p = w_ref.shape[0] // 9
        cout = w_ref.shape[1]
        xb = x.astype(bf16)
        acc = jnp.zeros((m_out, cout), f32)
        for k in range(9):                                   # unrolled implicit GEMM
            gk = g_ref[k * m_out:(k + 1) * m_out, :]
            wk = w_ref[k * cin_p:(k + 1) * cin_p, :]
            patch = jnp.dot(gk, xb, preferred_element_type=f32)   # exact row select
            acc = acc + jnp.dot(patch.astype(bf16), wk, preferred_element_type=f32)
        # BatchNorm2d, training mode: batch statistics (biased variance), f32 math.
        inv_m = 1.0 / m_out
        mean = jnp.sum(acc, axis=0, keepdims=True) * inv_m
        d = acc - mean
        var = jnp.sum(d * d, axis=0, keepdims=True) * inv_m
        y = d * jax.lax.rsqrt(var + EPS_BN) * gamma_ref[...] + beta_ref[...]
        return jnp.maximum(y, 0.0)                           # ReLU

    h = conv_bn_relu(x_ref[...], g1_ref, w1_ref, gm1_ref, bt1_ref)
    h = conv_bn_relu(h, g2_ref, w2_ref, gm2_ref, bt2_ref)
    h = conv_bn_relu(h, g3_ref, w3_ref, gm3_ref, bt3_ref)

    # AdaptiveAvgPool2d(1): per-sample spatial mean via a tiny selection matmul.
    n = pool_ref.shape[0]
    hw = pool_ref.shape[1] // n
    pooled = jnp.dot(pool_ref[...], h.astype(bf16),
                     preferred_element_type=f32) * (1.0 / hw)          # (N, 128)

    # Projector MLP (feature dim zero-padded to 128 lanes; pad lanes stay exactly 0).
    hid = jnp.dot(pooled.astype(bf16), wa_ref[...], preferred_element_type=f32)
    hid = jnp.maximum(hid + ba_ref[...], 0.0)
    z = jnp.dot(hid.astype(bf16), wb_ref[...], preferred_element_type=f32) + bb_ref[...]

    # F.normalize(dim=1): z / max(||z||, eps) == z * rsqrt(max(||z||^2, eps^2)).
    sumsq = jnp.sum(z * z, axis=1, keepdims=True)
    out_ref[...] = z * jax.lax.rsqrt(jnp.maximum(sumsq, EPS_NORM * EPS_NORM))


# ----------------------------- wrapper ---------------------------------------

def _full_spec(shape):
    return pl.BlockSpec(shape, lambda i: (0, 0))


def _fused_forward(xf, plan):
    n = plan["pool"].shape[0]
    fd_pad = plan["wa"].shape[1]
    args = [xf]
    for l in range(3):
        args += [plan["gs"][l], plan["ws"][l], plan["gammas"][l], plan["betas"][l]]
    args += [plan["pool"], plan["wa"], plan["ba"], plan["wb"], plan["bb"]]
    return pl.pallas_call(
        _moco_fused_kernel,
        out_shape=jax.ShapeDtypeStruct((n, fd_pad), jnp.float32),
        grid=(1,),
        in_specs=[_full_spec(a.shape) for a in args],
        out_specs=_full_spec((n, fd_pad)),
        compiler_params=pltpu.CompilerParams(
            dimension_semantics=("arbitrary",),
            vmem_limit_bytes=32 * 1024 * 1024),
    )(*args)


@functools.partial(jax.jit, static_argnames=("feature_dim",))
def moco_forward(x, plan, *, feature_dim):
    n, c, h, w = x.shape
    cin_pad = max(8, ((c + 7) // 8) * 8)
    xf = jnp.transpose(x, (0, 2, 3, 1)).reshape(n * h * w, c)   # rows=(n,h,w), lanes=C
    xf = jnp.pad(xf, ((0, 0), (0, cin_pad - c))).astype(jnp.bfloat16)
    out = _fused_forward(xf, plan)
    return out[:, :feature_dim]                                 # trim lane padding


# ----------------------------- plan building (host, once) --------------------

def _gather_matrix(n, h_in, w_in, h_out, w_out):
    """0/1 selection matrices for a 3x3 / stride-2 / pad-1 conv (implicit im2col)."""
    m_in, m_out = n * h_in * w_in, n * h_out * w_out
    g = np.zeros((9 * m_out, m_in), np.float32)
    for ki in range(3):
        for kj in range(3):
            k = ki * 3 + kj
            for b in range(n):
                for oh in range(h_out):
                    ih = 2 * oh + ki - 1
                    if ih < 0 or ih >= h_in:
                        continue
                    for ow in range(w_out):
                        iw = 2 * ow + kj - 1
                        if iw < 0 or iw >= w_in:
                            continue
                        dst = k * m_out + (b * h_out + oh) * w_out + ow
                        src = (b * h_in + ih) * w_in + iw
                        g[dst, src] = 1.0
    return g


def _pack_conv_weight(w, cin_pad):
    w = np.asarray(w, np.float32)                 # (cout, cin, 3, 3) torch layout
    cout, cin, kh, kw = w.shape
    wt = np.transpose(w, (2, 3, 1, 0)).reshape(kh * kw, cin, cout)
    if cin_pad > cin:
        wt = np.pad(wt, ((0, 0), (0, cin_pad - cin), (0, 0)))
    return wt.reshape(kh * kw * cin_pad, cout)


def build_plan(params, x_shape, feature_dim):
    """Pre-pack gather/weight matrices for the fused kernel (done once, host side)."""
    n, cin, h, w = x_shape
    plan = {"gs": [], "ws": [], "gammas": [], "betas": []}
    for (wconv, gamma, beta) in params["convs"]:
        oh, ow = (h - 1) // 2 + 1, (w - 1) // 2 + 1
        cin_pad = max(8, ((cin + 7) // 8) * 8)
        plan["gs"].append(jnp.asarray(_gather_matrix(n, h, w, oh, ow), jnp.bfloat16))
        plan["ws"].append(jnp.asarray(_pack_conv_weight(wconv, cin_pad), jnp.bfloat16))
        plan["gammas"].append(jnp.asarray(gamma, jnp.float32).reshape(1, -1))
        plan["betas"].append(jnp.asarray(beta, jnp.float32).reshape(1, -1))
        h, w, cin = oh, ow, wconv.shape[0]

    hw = h * w
    pool = np.zeros((n, n * hw), np.float32)
    for b in range(n):
        pool[b, b * hw:(b + 1) * hw] = 1.0        # scaled by 1/hw inside the kernel
    plan["pool"] = jnp.asarray(pool, jnp.bfloat16)

    fd = feature_dim
    fd_pad = max(128, ((fd + 127) // 128) * 128)   # lane-dense output store
    out_f = params["w1"].shape[0]
    wa = np.zeros((out_f, fd_pad), np.float32); wa[:, :fd] = np.asarray(params["w1"])
    ba = np.zeros((1, fd_pad), np.float32);     ba[0, :fd] = np.asarray(params["b1"])
    wb = np.zeros((fd_pad, fd_pad), np.float32); wb[:fd, :fd] = np.asarray(params["w2"])
    bb = np.zeros((1, fd_pad), np.float32);     bb[0, :fd] = np.asarray(params["b2"])
    plan["wa"] = jnp.asarray(wa, jnp.bfloat16)
    plan["ba"] = jnp.asarray(ba, jnp.float32)
    plan["wb"] = jnp.asarray(wb, jnp.bfloat16)
    plan["bb"] = jnp.asarray(bb, jnp.float32)
    return plan


# ----------------------------- reference & init ------------------------------

def ref_forward(x, params):
    # Pure-JAX f32 reference mirroring the PyTorch forward (training mode, mlp=True).
    h = x
    for (w, g, b) in params["convs"]:
        y = jax.lax.conv_general_dilated(h, w, (2, 2), ((1, 1), (1, 1)),
                                         dimension_numbers=("NCHW", "OIHW", "NCHW"))
        mean = y.mean(axis=(0, 2, 3), keepdims=True)
        var = ((y - mean) ** 2).mean(axis=(0, 2, 3), keepdims=True)
        y = (y - mean) / jnp.sqrt(var + EPS_BN) * g.reshape(1, -1, 1, 1) + b.reshape(1, -1, 1, 1)
        h = jnp.maximum(y, 0.0)
    pooled = h.mean(axis=(2, 3))
    hid = jnp.maximum(pooled @ params["w1"] + params["b1"].reshape(1, -1), 0.0)
    z = hid @ params["w2"] + params["b2"].reshape(1, -1)
    n = jnp.sqrt((z * z).sum(axis=1, keepdims=True))
    return z / jnp.maximum(n, EPS_NORM)


def init_params(key, feature_dim=32):
    ks = jax.random.split(key, 12)
    convs = []
    chans = [(3, 32), (32, 64), (64, 128)]
    for li, (cin, cout) in enumerate(chans):
        w = 0.1 * jax.random.normal(ks[3 * li + 0], (cout, cin, 3, 3), jnp.float32)
        g = 1.0 + 0.1 * jax.random.normal(ks[3 * li + 1], (cout,), jnp.float32)
        b = 0.1 * jax.random.normal(ks[3 * li + 2], (cout,), jnp.float32)
        convs.append((w, g, b))
    w1 = 0.1 * jax.random.normal(ks[9], (128, feature_dim), jnp.float32)
    b1 = 0.1 * jax.random.normal(ks[10], (feature_dim,), jnp.float32)
    w2 = 0.1 * jax.random.normal(ks[11], (feature_dim, feature_dim), jnp.float32)
    b2 = jnp.zeros((feature_dim,), jnp.float32)
    return {"convs": convs, "w1": w1, "b1": b1, "w2": w2, "b2": b2}


if __name__ == "__main__":
    key = jax.random.PRNGKey(0)
    kx, kp = jax.random.split(key)
    x = jax.random.normal(kx, (2, 3, 16, 16), jnp.float32)   # NCHW, like PyTorch
    feature_dim = 32
    params = init_params(kp, feature_dim=feature_dim)

    plan = build_plan(params, x.shape, feature_dim)
    out = moco_forward(x, plan, feature_dim=feature_dim)
    out = jax.block_until_ready(out)

    ref = ref_forward(x, params)
    assert out.shape == (2, feature_dim)
    assert jnp.allclose(out, ref, rtol=2e-2, atol=2e-2), "mismatch vs reference"

    print("KERNEL_OK")
</pallas_src>

<mosaic_0001>
module attributes {stable_mosaic.version = 11 : i64} {
  func.func @_moco_fused_kernel(%arg0: i32, %arg1: memref<512x8xbf16, #tpu.memory_space<vmem>>, %arg2: memref<1152x512xbf16, #tpu.memory_space<vmem>>, %arg3: memref<72x32xbf16, #tpu.memory_space<vmem>>, %arg4: memref<1x32xf32, #tpu.memory_space<vmem>>, %arg5: memref<1x32xf32, #tpu.memory_space<vmem>>, %arg6: memref<288x128xbf16, #tpu.memory_space<vmem>>, %arg7: memref<288x64xbf16, #tpu.memory_space<vmem>>, %arg8: memref<1x64xf32, #tpu.memory_space<vmem>>, %arg9: memref<1x64xf32, #tpu.memory_space<vmem>>, %arg10: memref<72x32xbf16, #tpu.memory_space<vmem>>, %arg11: memref<576x128xbf16, #tpu.memory_space<vmem>>, %arg12: memref<1x128xf32, #tpu.memory_space<vmem>>, %arg13: memref<1x128xf32, #tpu.memory_space<vmem>>, %arg14: memref<2x8xbf16, #tpu.memory_space<vmem>>, %arg15: memref<128x128xbf16, #tpu.memory_space<vmem>>, %arg16: memref<1x128xf32, #tpu.memory_space<vmem>>, %arg17: memref<128x128xbf16, #tpu.memory_space<vmem>>, %arg18: memref<1x128xf32, #tpu.memory_space<vmem>>, %arg19: memref<2x128xf32, #tpu.memory_space<vmem>>) attributes {dimension_semantics = [#tpu.dimension_semantics<arbitrary>], iteration_bounds = array<i64: 1>, scalar_prefetch = 0 : i64, scratch_operands = 0 : i64, tpu.core_type = #tpu.core_type<tc>, window_params = [{pipeline_mode = #tpu.pipeline_mode<synchronous>, transform_indices = @transform_0, window_bounds = array<i64: 512, 8>}, {pipeline_mode = #tpu.pipeline_mode<synchronous>, transform_indices = @transform_1, window_bounds = array<i64: 1152, 512>}, {pipeline_mode = #tpu.pipeline_mode<synchronous>, transform_indices = @transform_2, window_bounds = array<i64: 72, 32>}, {pipeline_mode = #tpu.pipeline_mode<synchronous>, transform_indices = @transform_3, window_bounds = array<i64: 1, 32>}, {pipeline_mode = #tpu.pipeline_mode<synchronous>, transform_indices = @transform_4, window_bounds = array<i64: 1, 32>}, {pipeline_mode = #tpu.pipeline_mode<synchronous>, transform_indices = @transform_5, window_bounds = array<i64: 288, 128>}, {pipeline_mode = #tpu.pipeline_mode<synchronous>, transform_indices = @transform_6, window_bounds = array<i64: 288, 64>}, {pipeline_mode = #tpu.pipeline_mode<synchronous>, transform_indices = @transform_7, window_bounds = array<i64: 1, 64>}, {pipeline_mode = #tpu.pipeline_mode<synchronous>, transform_indices = @transform_8, window_bounds = array<i64: 1, 64>}, {pipeline_mode = #tpu.pipeline_mode<synchronous>, transform_indices = @transform_9, window_bounds = array<i64: 72, 32>}, {pipeline_mode = #tpu.pipeline_mode<synchronous>, transform_indices = @transform_10, window_bounds = array<i64: 576, 128>}, {pipeline_mode = #tpu.pipeline_mode<synchronous>, transform_indices = @transform_11, window_bounds = array<i64: 1, 128>}, {pipeline_mode = #tpu.pipeline_mode<synchronous>, transform_indices = @transform_12, window_bounds = array<i64: 1, 128>}, {pipeline_mode = #tpu.pipeline_mode<synchronous>, transform_indices = @transform_13, window_bounds = array<i64: 2, 8>}, {pipeline_mode = #tpu.pipeline_mode<synchronous>, transform_indices = @transform_14, window_bounds = array<i64: 128, 128>}, {pipeline_mode = #tpu.pipeline_mode<synchronous>, transform_indices = @transform_15, window_bounds = array<i64: 1, 128>}, {pipeline_mode = #tpu.pipeline_mode<synchronous>, transform_indices = @transform_16, window_bounds = array<i64: 128, 128>}, {pipeline_mode = #tpu.pipeline_mode<synchronous>, transform_indices = @transform_17, window_bounds = array<i64: 1, 128>}, {pipeline_mode = #tpu.pipeline_mode<synchronous>, transform_indices = @transform_18, window_bounds = array<i64: 2, 128>}]} {
    %c0 = arith.constant 0 : index
    %c0_0 = arith.constant 0 : index
    %0 = vector.load %arg1[%c0, %c0_0] : memref<512x8xbf16, #tpu.memory_space<vmem>>, vector<512x8xbf16>
    %cst = arith.constant 0.000000e+00 : f32
    %1 = vector.broadcast %cst : f32 to vector<128x32xf32>
    %c0_1 = arith.constant 0 : index
    %c0_2 = arith.constant 0 : index
    %2 = vector.load %arg2[%c0_1, %c0_2] : memref<1152x512xbf16, #tpu.memory_space<vmem>>, vector<128x512xbf16>
    %c0_3 = arith.constant 0 : index
    %c0_4 = arith.constant 0 : index
    %3 = vector.load %arg3[%c0_3, %c0_4] : memref<72x32xbf16, #tpu.memory_space<vmem>>, vector<8x32xbf16>
    %cst_5 = arith.constant dense<0.000000e+00> : vector<128x8xf32>
    %4 = tpu.matmul %2, %0, %cst_5 {dimension_numbers = #tpu.dot_dimension_numbers<[1], [0], [0], [1], [0, 0, 1, 1], [], []>} : vector<128x512xbf16>, vector<512x8xbf16>, vector<128x8xf32> -> vector<128x8xf32>
    %5 = arith.truncf %4 : vector<128x8xf32> to vector<128x8xbf16>
    %cst_6 = arith.constant dense<0.000000e+00> : vector<128x32xf32>
    %6 = tpu.matmul %5, %3, %cst_6 {dimension_numbers = #tpu.dot_dimension_numbers<[1], [0], [0], [1], [0, 0, 1, 1], [], []>} : vector<128x8xbf16>, vector<8x32xbf16>, vector<128x32xf32> -> vector<128x32xf32>
    %7 = arith.addf %1, %6 : vector<128x32xf32>
    %c128 = arith.constant 128 : index
    %c0_7 = arith.constant 0 : index
    %8 = vector.load %arg2[%c128, %c0_7] : memref<1152x512xbf16, #tpu.memory_space<vmem>>, vector<128x512xbf16>
    %c8 = arith.constant 8 : index
    %c0_8 = arith.constant 0 : index
    %9 = vector.load %arg3[%c8, %c0_8] : memref<72x32xbf16, #tpu.memory_space<vmem>>, vector<8x32xbf16>
    %cst_9 = arith.constant dense<0.000000e+00> : vector<128x8xf32>
    %10 = tpu.matmul %8, %0, %cst_9 {dimension_numbers = #tpu.dot_dimension_numbers<[1], [0], [0], [1], [0, 0, 1, 1], [], []>} : vector<128x512xbf16>, vector<512x8xbf16>, vector<128x8xf32> -> vector<128x8xf32>
    %11 = arith.truncf %10 : vector<128x8xf32> to vector<128x8xbf16>
    %cst_10 = arith.constant dense<0.000000e+00> : vector<128x32xf32>
    %12 = tpu.matmul %11, %9, %cst_10 {dimension_numbers = #tpu.dot_dimension_numbers<[1], [0], [0], [1], [0, 0, 1, 1], [], []>} : vector<128x8xbf16>, vector<8x32xbf16>, vector<128x32xf32> -> vector<128x32xf32>
    %13 = arith.addf %7, %12 : vector<128x32xf32>
    %c256 = arith.constant 256 : index
    %c0_11 = arith.constant 0 : index
    %14 = vector.load %arg2[%c256, %c0_11] : memref<1152x512xbf16, #tpu.memory_space<vmem>>, vector<128x512xbf16>
    %c16 = arith.constant 16 : index
    %c0_12 = arith.constant 0 : index
    %15 = vector.load %arg3[%c16, %c0_12] : memref<72x32xbf16, #tpu.memory_space<vmem>>, vector<8x32xbf16>
    %cst_13 = arith.constant dense<0.000000e+00> : vector<128x8xf32>
    %16 = tpu.matmul %14, %0, %cst_13 {dimension_numbers = #tpu.dot_dimension_numbers<[1], [0], [0], [1], [0, 0, 1, 1], [], []>} : vector<128x512xbf16>, vector<512x8xbf16>, vector<128x8xf32> -> vector<128x8xf32>
    %17 = arith.truncf %16 : vector<128x8xf32> to vector<128x8xbf16>
    %cst_14 = arith.constant dense<0.000000e+00> : vector<128x32xf32>
    %18 = tpu.matmul %17, %15, %cst_14 {dimension_numbers = #tpu.dot_dimension_numbers<[1], [0], [0], [1], [0, 0, 1, 1], [], []>} : vector<128x8xbf16>, vector<8x32xbf16>, vector<128x32xf32> -> vector<128x32xf32>
    %19 = arith.addf %13, %18 : vector<128x32xf32>
    %c384 = arith.constant 384 : index
    %c0_15 = arith.constant 0 : index
    %20 = vector.load %arg2[%c384, %c0_15] : memref<1152x512xbf16, #tpu.memory_space<vmem>>, vector<128x512xbf16>
    %c24 = arith.constant 24 : index
    %c0_16 = arith.constant 0 : index
    %21 = vector.load %arg3[%c24, %c0_16] : memref<72x32xbf16, #tpu.memory_space<vmem>>, vector<8x32xbf16>
    %cst_17 = arith.constant dense<0.000000e+00> : vector<128x8xf32>
    %22 = tpu.matmul %20, %0, %cst_17 {dimension_numbers = #tpu.dot_dimension_numbers<[1], [0], [0], [1], [0, 0, 1, 1], [], []>} : vector<128x512xbf16>, vector<512x8xbf16>, vector<128x8xf32> -> vector<128x8xf32>
    %23 = arith.truncf %22 : vector<128x8xf32> to vector<128x8xbf16>
    %cst_18 = arith.constant dense<0.000000e+00> : vector<128x32xf32>
    %24 = tpu.matmul %23, %21, %cst_18 {dimension_numbers = #tpu.dot_dimension_numbers<[1], [0], [0], [1], [0, 0, 1, 1], [], []>} : vector<128x8xbf16>, vector<8x32xbf16>, vector<128x32xf32> -> vector<128x32xf32>
    %25 = arith.addf %19, %24 : vector<128x32xf32>
    %c512 = arith.constant 512 : index
    %c0_19 = arith.constant 0 : index
    %26 = vector.load %arg2[%c512, %c0_19] : memref<1152x512xbf16, #tpu.memory_space<vmem>>, vector<128x512xbf16>
    %c32 = arith.constant 32 : index
    %c0_20 = arith.constant 0 : index
    %27 = vector.load %arg3[%c32, %c0_20] : memref<72x32xbf16, #tpu.memory_space<vmem>>, vector<8x32xbf16>
    %cst_21 = arith.constant dense<0.000000e+00> : vector<128x8xf32>
    %28 = tpu.matmul %26, %0, %cst_21 {dimension_numbers = #tpu.dot_dimension_numbers<[1], [0], [0], [1], [0, 0, 1, 1], [], []>} : vector<128x512xbf16>, vector<512x8xbf16>, vector<128x8xf32> -> vector<128x8xf32>
    %29 = arith.truncf %28 : vector<128x8xf32> to vector<128x8xbf16>
    %cst_22 = arith.constant dense<0.000000e+00> : vector<128x32xf32>
    %30 = tpu.matmul %29, %27, %cst_22 {dimension_numbers = #tpu.dot_dimension_numbers<[1], [0], [0], [1], [0, 0, 1, 1], [], []>} : vector<128x8xbf16>, vector<8x32xbf16>, vector<128x32xf32> -> vector<128x32xf32>
    %31 = arith.addf %25, %30 : vector<128x32xf32>
    %c640 = arith.constant 640 : index
    %c0_23 = arith.constant 0 : index
    %32 = vector.load %arg2[%c640, %c0_23] : memref<1152x512xbf16, #tpu.memory_space<vmem>>, vector<128x512xbf16>
    %c40 = arith.constant 40 : index
    %c0_24 = arith.constant 0 : index
    %33 = vector.load %arg3[%c40, %c0_24] : memref<72x32xbf16, #tpu.memory_space<vmem>>, vector<8x32xbf16>
    %cst_25 = arith.constant dense<0.000000e+00> : vector<128x8xf32>
    %34 = tpu.matmul %32, %0, %cst_25 {dimension_numbers = #tpu.dot_dimension_numbers<[1], [0], [0], [1], [0, 0, 1, 1], [], []>} : vector<128x512xbf16>, vector<512x8xbf16>, vector<128x8xf32> -> vector<128x8xf32>
    %35 = arith.truncf %34 : vector<128x8xf32> to vector<128x8xbf16>
    %cst_26 = arith.constant dense<0.000000e+00> : vector<128x32xf32>
    %36 = tpu.matmul %35, %33, %cst_26 {dimension_numbers = #tpu.dot_dimension_numbers<[1], [0], [0], [1], [0, 0, 1, 1], [], []>} : vector<128x8xbf16>, vector<8x32xbf16>, vector<128x32xf32> -> vector<128x32xf32>
    %37 = arith.addf %31, %36 : vector<128x32xf32>
    %c768 = arith.constant 768 : index
    %c0_27 = arith.constant 0 : index
    %38 = vector.load %arg2[%c768, %c0_27] : memref<1152x512xbf16, #tpu.memory_space<vmem>>, vector<128x512xbf16>
    %c48 = arith.constant 48 : index
    %c0_28 = arith.constant 0 : index
    %39 = vector.load %arg3[%c48, %c0_28] : memref<72x32xbf16, #tpu.memory_space<vmem>>, vector<8x32xbf16>
    %cst_29 = arith.constant dense<0.000000e+00> : vector<128x8xf32>
    %40 = tpu.matmul %38, %0, %cst_29 {dimension_numbers = #tpu.dot_dimension_numbers<[1], [0], [0], [1], [0, 0, 1, 1], [], []>} : vector<128x512xbf16>, vector<512x8xbf16>, vector<128x8xf32> -> vector<128x8xf32>
    %41 = arith.truncf %40 : vector<128x8xf32> to vector<128x8xbf16>
    %cst_30 = arith.constant dense<0.000000e+00> : vector<128x32xf32>
    %42 = tpu.matmul %41, %39, %cst_30 {dimension_numbers = #tpu.dot_dimension_numbers<[1], [0], [0], [1], [0, 0, 1, 1], [], []>} : vector<128x8xbf16>, vector<8x32xbf16>, vector<128x32xf32> -> vector<128x32xf32>
    %43 = arith.addf %37, %42 : vector<128x32xf32>
    %c896 = arith.constant 896 : index
    %c0_31 = arith.constant 0 : index
    %44 = vector.load %arg2[%c896, %c0_31] : memref<1152x512xbf16, #tpu.memory_space<vmem>>, vector<128x512xbf16>
    %c56 = arith.constant 56 : index
    %c0_32 = arith.constant 0 : index
    %45 = vector.load %arg3[%c56, %c0_32] : memref<72x32xbf16, #tpu.memory_space<vmem>>, vector<8x32xbf16>
    %cst_33 = arith.constant dense<0.000000e+00> : vector<128x8xf32>
    %46 = tpu.matmul %44, %0, %cst_33 {dimension_numbers = #tpu.dot_dimension_numbers<[1], [0], [0], [1], [0, 0, 1, 1], [], []>} : vector<128x512xbf16>, vector<512x8xbf16>, vector<128x8xf32> -> vector<128x8xf32>
    %47 = arith.truncf %46 : vector<128x8xf32> to vector<128x8xbf16>
    %cst_34 = arith.constant dense<0.000000e+00> : vector<128x32xf32>
    %48 = tpu.matmul %47, %45, %cst_34 {dimension_numbers = #tpu.dot_dimension_numbers<[1], [0], [0], [1], [0, 0, 1, 1], [], []>} : vector<128x8xbf16>, vector<8x32xbf16>, vector<128x32xf32> -> vector<128x32xf32>
    %49 = arith.addf %43, %48 : vector<128x32xf32>
    %c1024 = arith.constant 1024 : index
    %c0_35 = arith.constant 0 : index
    %50 = vector.load %arg2[%c1024, %c0_35] : memref<1152x512xbf16, #tpu.memory_space<vmem>>, vector<128x512xbf16>
    %c64 = arith.constant 64 : index
    %c0_36 = arith.constant 0 : index
    %51 = vector.load %arg3[%c64, %c0_36] : memref<72x32xbf16, #tpu.memory_space<vmem>>, vector<8x32xbf16>
    %cst_37 = arith.constant dense<0.000000e+00> : vector<128x8xf32>
    %52 = tpu.matmul %50, %0, %cst_37 {dimension_numbers = #tpu.dot_dimension_numbers<[1], [0], [0], [1], [0, 0, 1, 1], [], []>} : vector<128x512xbf16>, vector<512x8xbf16>, vector<128x8xf32> -> vector<128x8xf32>
    %53 = arith.truncf %52 : vector<128x8xf32> to vector<128x8xbf16>
    %cst_38 = arith.constant dense<0.000000e+00> : vector<128x32xf32>
    %54 = tpu.matmul %53, %51, %cst_38 {dimension_numbers = #tpu.dot_dimension_numbers<[1], [0], [0], [1], [0, 0, 1, 1], [], []>} : vector<128x8xbf16>, vector<8x32xbf16>, vector<128x32xf32> -> vector<128x32xf32>
    %55 = arith.addf %49, %54 : vector<128x32xf32>
    %cst_39 = arith.constant dense<0.000000e+00> : vector<32xf32>
    %56 = vector.multi_reduction <add>, %55, %cst_39 [0] : vector<128x32xf32> to vector<32xf32>
    %57 = vector.shape_cast %56 : vector<32xf32> to vector<1x32xf32>
    %cst_40 = arith.constant 7.812500e-03 : f32
    %58 = vector.broadcast %cst_40 : f32 to vector<1x32xf32>
    %59 = arith.mulf %57, %58 : vector<1x32xf32>
    %60 = vector.broadcast %59 : vector<1x32xf32> to vector<128x32xf32>
    %61 = arith.subf %55, %60 : vector<128x32xf32>
    %62 = arith.mulf %61, %61 : vector<128x32xf32>
    %cst_41 = arith.constant dense<0.000000e+00> : vector<32xf32>
    %63 = vector.multi_reduction <add>, %62, %cst_41 [0] : vector<128x32xf32> to vector<32xf32>
    %64 = vector.shape_cast %63 : vector<32xf32> to vector<1x32xf32>
    %cst_42 = arith.constant 7.812500e-03 : f32
    %65 = vector.broadcast %cst_42 : f32 to vector<1x32xf32>
    %66 = arith.mulf %64, %65 : vector<1x32xf32>
    %cst_43 = arith.constant 9.99999974E-6 : f32
    %67 = vector.broadcast %cst_43 : f32 to vector<1x32xf32>
    %68 = arith.addf %66, %67 : vector<1x32xf32>
    %69 = math.rsqrt %68 : vector<1x32xf32>
    %70 = vector.broadcast %69 : vector<1x32xf32> to vector<128x32xf32>
    %71 = arith.mulf %61, %70 : vector<128x32xf32>
    %c0_44 = arith.constant 0 : index
    %c0_45 = arith.constant 0 : index
    %72 = vector.load %arg4[%c0_44, %c0_45] : memref<1x32xf32, #tpu.memory_space<vmem>>, vector<1x32xf32>
    %73 = vector.broadcast %72 : vector<1x32xf32> to vector<128x32xf32>
    %74 = arith.mulf %71, %73 : vector<128x32xf32>
    %c0_46 = arith.constant 0 : index
    %c0_47 = arith.constant 0 : index
    %75 = vector.load %arg5[%c0_46, %c0_47] : memref<1x32xf32, #tpu.memory_space<vmem>>, vector<1x32xf32>
    %76 = vector.broadcast %75 : vector<1x32xf32> to vector<128x32xf32>
    %77 = arith.addf %74, %76 : vector<128x32xf32>
    %cst_48 = arith.constant 0.000000e+00 : f32
    %78 = vector.broadcast %cst_48 : f32 to vector<128x32xf32>
    %79 = arith.maximumf %77, %78 : vector<128x32xf32>
    %80 = arith.truncf %79 : vector<128x32xf32> to vector<128x32xbf16>
    %cst_49 = arith.constant 0.000000e+00 : f32
    %81 = vector.broadcast %cst_49 : f32 to vector<32x64xf32>
    %c0_50 = arith.constant 0 : index
    %c0_51 = arith.constant 0 : index
    %82 = vector.load %arg6[%c0_50, %c0_51] : memref<288x128xbf16, #tpu.memory_space<vmem>>, vector<32x128xbf16>
    %c0_52 = arith.constant 0 : index
    %c0_53 = arith.constant 0 : index
    %83 = vector.load %arg7[%c0_52, %c0_53] : memref<288x64xbf16, #tpu.memory_space<vmem>>, vector<32x64xbf16>
    %cst_54 = arith.constant dense<0.000000e+00> : vector<32x32xf32>
    %84 = tpu.matmul %82, %80, %cst_54 {dimension_numbers = #tpu.dot_dimension_numbers<[1], [0], [0], [1], [0, 0, 1, 1], [], []>} : vector<32x128xbf16>, vector<128x32xbf16>, vector<32x32xf32> -> vector<32x32xf32>
    %85 = arith.truncf %84 : vector<32x32xf32> to vector<32x32xbf16>
    %cst_55 = arith.constant dense<0.000000e+00> : vector<32x64xf32>
    %86 = tpu.matmul %85, %83, %cst_55 {dimension_numbers = #tpu.dot_dimension_numbers<[1], [0], [0], [1], [0, 0, 1, 1], [], []>} : vector<32x32xbf16>, vector<32x64xbf16>, vector<32x64xf32> -> vector<32x64xf32>
    %87 = arith.addf %81, %86 : vector<32x64xf32>
    %c32_56 = arith.constant 32 : index
    %c0_57 = arith.constant 0 : index
    %88 = vector.load %arg6[%c32_56, %c0_57] : memref<288x128xbf16, #tpu.memory_space<vmem>>, vector<32x128xbf16>
    %c32_58 = arith.constant 32 : index
    %c0_59 = arith.constant 0 : index
    %89 = vector.load %arg7[%c32_58, %c0_59] : memref<288x64xbf16, #tpu.memory_space<vmem>>, vector<32x64xbf16>
    %cst_60 = arith.constant dense<0.000000e+00> : vector<32x32xf32>
    %90 = tpu.matmul %88, %80, %cst_60 {dimension_numbers = #tpu.dot_dimension_numbers<[1], [0], [0], [1], [0, 0, 1, 1], [], []>} : vector<32x128xbf16>, vector<128x32xbf16>, vector<32x32xf32> -> vector<32x32xf32>
    %91 = arith.truncf %90 : vector<32x32xf32> to vector<32x32xbf16>
    %cst_61 = arith.constant dense<0.000000e+00> : vector<32x64xf32>
    %92 = tpu.matmul %91, %89, %cst_61 {dimension_numbers = #tpu.dot_dimension_numbers<[1], [0], [0], [1], [0, 0, 1, 1], [], []>} : vector<32x32xbf16>, vector<32x64xbf16>, vector<32x64xf32> -> vector<32x64xf32>
    %93 = arith.addf %87, %92 : vector<32x64xf32>
    %c64_62 = arith.constant 64 : index
    %c0_63 = arith.constant 0 : index
    %94 = vector.load %arg6[%c64_62, %c0_63] : memref<288x128xbf16, #tpu.memory_space<vmem>>, vector<32x128xbf16>
    %c64_64 = arith.constant 64 : index
    %c0_65 = arith.constant 0 : index
    %95 = vector.load %arg7[%c64_64, %c0_65] : memref<288x64xbf16, #tpu.memory_space<vmem>>, vector<32x64xbf16>
    %cst_66 = arith.constant dense<0.000000e+00> : vector<32x32xf32>
    %96 = tpu.matmul %94, %80, %cst_66 {dimension_numbers = #tpu.dot_dimension_numbers<[1], [0], [0], [1], [0, 0, 1, 1], [], []>} : vector<32x128xbf16>, vector<128x32xbf16>, vector<32x32xf32> -> vector<32x32xf32>
    %97 = arith.truncf %96 : vector<32x32xf32> to vector<32x32xbf16>
    %cst_67 = arith.constant dense<0.000000e+00> : vector<32x64xf32>
    %98 = tpu.matmul %97, %95, %cst_67 {dimension_numbers = #tpu.dot_dimension_numbers<[1], [0], [0], [1], [0, 0, 1, 1], [], []>} : vector<32x32xbf16>, vector<32x64xbf16>, vector<32x64xf32> -> vector<32x64xf32>
    %99 = arith.addf %93, %98 : vector<32x64xf32>
    %c96 = arith.constant 96 : index
    %c0_68 = arith.constant 0 : index
    %100 = vector.load %arg6[%c96, %c0_68] : memref<288x128xbf16, #tpu.memory_space<vmem>>, vector<32x128xbf16>
    %c96_69 = arith.constant 96 : index
    %c0_70 = arith.constant 0 : index
    %101 = vector.load %arg7[%c96_69, %c0_70] : memref<288x64xbf16, #tpu.memory_space<vmem>>, vector<32x64xbf16>
    %cst_71 = arith.constant dense<0.000000e+00> : vector<32x32xf32>
    %102 = tpu.matmul %100, %80, %cst_71 {dimension_numbers = #tpu.dot_dimension_numbers<[1], [0], [0], [1], [0, 0, 1, 1], [], []>} : vector<32x128xbf16>, vector<128x32xbf16>, vector<32x32xf32> -> vector<32x32xf32>
    %103 = arith.truncf %102 : vector<32x32xf32> to vector<32x32xbf16>
    %cst_72 = arith.constant dense<0.000000e+00> : vector<32x64xf32>
    %104 = tpu.matmul %103, %101, %cst_72 {dimension_numbers = #tpu.dot_dimension_numbers<[1], [0], [0], [1], [0, 0, 1, 1], [], []>} : vector<32x32xbf16>, vector<32x64xbf16>, vector<32x64xf32> -> vector<32x64xf32>
    %105 = arith.addf %99, %104 : vector<32x64xf32>
    %c128_73 = arith.constant 128 : index
    %c0_74 = arith.constant 0 : index
    %106 = vector.load %arg6[%c128_73, %c0_74] : memref<288x128xbf16, #tpu.memory_space<vmem>>, vector<32x128xbf16>
    %c128_75 = arith.constant 128 : index
    %c0_76 = arith.constant 0 : index
    %107 = vector.load %arg7[%c128_75, %c0_76] : memref<288x64xbf16, #tpu.memory_space<vmem>>, vector<32x64xbf16>
    %cst_77 = arith.constant dense<0.000000e+00> : vector<32x32xf32>
    %108 = tpu.matmul %106, %80, %cst_77 {dimension_numbers = #tpu.dot_dimension_numbers<[1], [0], [0], [1], [0, 0, 1, 1], [], []>} : vector<32x128xbf16>, vector<128x32xbf16>, vector<32x32xf32> -> vector<32x32xf32>
    %109 = arith.truncf %108 : vector<32x32xf32> to vector<32x32xbf16>
    %cst_78 = arith.constant dense<0.000000e+00> : vector<32x64xf32>
    %110 = tpu.matmul %109, %107, %cst_78 {dimension_numbers = #tpu.dot_dimension_numbers<[1], [0], [0], [1], [0, 0, 1, 1], [], []>} : vector<32x32xbf16>, vector<32x64xbf16>, vector<32x64xf32> -> vector<32x64xf32>
    %111 = arith.addf %105, %110 : vector<32x64xf32>
    %c160 = arith.constant 160 : index
    %c0_79 = arith.constant 0 : index
    %112 = vector.load %arg6[%c160, %c0_79] : memref<288x128xbf16, #tpu.memory_space<vmem>>, vector<32x128xbf16>
    %c160_80 = arith.constant 160 : index
    %c0_81 = arith.constant 0 : index
    %113 = vector.load %arg7[%c160_80, %c0_81] : memref<288x64xbf16, #tpu.memory_space<vmem>>, vector<32x64xbf16>
    %cst_82 = arith.constant dense<0.000000e+00> : vector<32x32xf32>
    %114 = tpu.matmul %112, %80, %cst_82 {dimension_numbers = #tpu.dot_dimension_numbers<[1], [0], [0], [1], [0, 0, 1, 1], [], []>} : vector<32x128xbf16>, vector<128x32xbf16>, vector<32x32xf32> -> vector<32x32xf32>
    %115 = arith.truncf %114 : vector<32x32xf32> to vector<32x32xbf16>
    %cst_83 = arith.constant dense<0.000000e+00> : vector<32x64xf32>
    %116 = tpu.matmul %115, %113, %cst_83 {dimension_numbers = #tpu.dot_dimension_numbers<[1], [0], [0], [1], [0, 0, 1, 1], [], []>} : vector<32x32xbf16>, vector<32x64xbf16>, vector<32x64xf32> -> vector<32x64xf32>
    %117 = arith.addf %111, %116 : vector<32x64xf32>
    %c192 = arith.constant 192 : index
    %c0_84 = arith.constant 0 : index
    %118 = vector.load %arg6[%c192, %c0_84] : memref<288x128xbf16, #tpu.memory_space<vmem>>, vector<32x128xbf16>
    %c192_85 = arith.constant 192 : index
    %c0_86 = arith.constant 0 : index
    %119 = vector.load %arg7[%c192_85, %c0_86] : memref<288x64xbf16, #tpu.memory_space<vmem>>, vector<32x64xbf16>
    %cst_87 = arith.constant dense<0.000000e+00> : vector<32x32xf32>
    %120 = tpu.matmul %118, %80, %cst_87 {dimension_numbers = #tpu.dot_dimension_numbers<[1], [0], [0], [1], [0, 0, 1, 1], [], []>} : vector<32x128xbf16>, vector<128x32xbf16>, vector<32x32xf32> -> vector<32x32xf32>
    %121 = arith.truncf %120 : vector<32x32xf32> to vector<32x32xbf16>
    %cst_88 = arith.constant dense<0.000000e+00> : vector<32x64xf32>
    %122 = tpu.matmul %121, %119, %cst_88 {dimension_numbers = #tpu.dot_dimension_numbers<[1], [0], [0], [1], [0, 0, 1, 1], [], []>} : vector<32x32xbf16>, vector<32x64xbf16>, vector<32x64xf32> -> vector<32x64xf32>
    %123 = arith.addf %117, %122 : vector<32x64xf32>
    %c224 = arith.constant 224 : index
    %c0_89 = arith.constant 0 : index
    %124 = vector.load %arg6[%c224, %c0_89] : memref<288x128xbf16, #tpu.memory_space<vmem>>, vector<32x128xbf16>
    %c224_90 = arith.constant 224 : index
    %c0_91 = arith.constant 0 : index
    %125 = vector.load %arg7[%c224_90, %c0_91] : memref<288x64xbf16, #tpu.memory_space<vmem>>, vector<32x64xbf16>
    %cst_92 = arith.constant dense<0.000000e+00> : vector<32x32xf32>
    %126 = tpu.matmul %124, %80, %cst_92 {dimension_numbers = #tpu.dot_dimension_numbers<[1], [0], [0], [1], [0, 0, 1, 1], [], []>} : vector<32x128xbf16>, vector<128x32xbf16>, vector<32x32xf32> -> vector<32x32xf32>
    %127 = arith.truncf %126 : vector<32x32xf32> to vector<32x32xbf16>
    %cst_93 = arith.constant dense<0.000000e+00> : vector<32x64xf32>
    %128 = tpu.matmul %127, %125, %cst_93 {dimension_numbers = #tpu.dot_dimension_numbers<[1], [0], [0], [1], [0, 0, 1, 1], [], []>} : vector<32x32xbf16>, vector<32x64xbf16>, vector<32x64xf32> -> vector<32x64xf32>
    %129 = arith.addf %123, %128 : vector<32x64xf32>
    %c256_94 = arith.constant 256 : index
    %c0_95 = arith.constant 0 : index
    %130 = vector.load %arg6[%c256_94, %c0_95] : memref<288x128xbf16, #tpu.memory_space<vmem>>, vector<32x128xbf16>
    %c256_96 = arith.constant 256 : index
    %c0_97 = arith.constant 0 : index
    %131 = vector.load %arg7[%c256_96, %c0_97] : memref<288x64xbf16, #tpu.memory_space<vmem>>, vector<32x64xbf16>
    %cst_98 = arith.constant dense<0.000000e+00> : vector<32x32xf32>
    %132 = tpu.matmul %130, %80, %cst_98 {dimension_numbers = #tpu.dot_dimension_numbers<[1], [0], [0], [1], [0, 0, 1, 1], [], []>} : vector<32x128xbf16>, vector<128x32xbf16>, vector<32x32xf32> -> vector<32x32xf32>
    %133 = arith.truncf %132 : vector<32x32xf32> to vector<32x32xbf16>
    %cst_99 = arith.constant dense<0.000000e+00> : vector<32x64xf32>
    %134 = tpu.matmul %133, %131, %cst_99 {dimension_numbers = #tpu.dot_dimension_numbers<[1], [0], [0], [1], [0, 0, 1, 1], [], []>} : vector<32x32xbf16>, vector<32x64xbf16>, vector<32x64xf32> -> vector<32x64xf32>
    %135 = arith.addf %129, %134 : vector<32x64xf32>
    %cst_100 = arith.constant dense<0.000000e+00> : vector<64xf32>
    %136 = vector.multi_reduction <add>, %135, %cst_100 [0] : vector<32x64xf32> to vector<64xf32>
    %137 = vector.shape_cast %136 : vector<64xf32> to vector<1x64xf32>
    %cst_101 = arith.constant 3.125000e-02 : f32
    %138 = vector.broadcast %cst_101 : f32 to vector<1x64xf32>
    %139 = arith.mulf %137, %138 : vector<1x64xf32>
    %140 = vector.broadcast %139 : vector<1x64xf32> to vector<32x64xf32>
    %141 = arith.subf %135, %140 : vector<32x64xf32>
    %142 = arith.mulf %141, %141 : vector<32x64xf32>
    %cst_102 = arith.constant dense<0.000000e+00> : vector<64xf32>
    %143 = vector.multi_reduction <add>, %142, %cst_102 [0] : vector<32x64xf32> to vector<64xf32>
    %144 = vector.shape_cast %143 : vector<64xf32> to vector<1x64xf32>
    %cst_103 = arith.constant 3.125000e-02 : f32
    %145 = vector.broadcast %cst_103 : f32 to vector<1x64xf32>
    %146 = arith.mulf %144, %145 : vector<1x64xf32>
    %cst_104 = arith.constant 9.99999974E-6 : f32
    %147 = vector.broadcast %cst_104 : f32 to vector<1x64xf32>
    %148 = arith.addf %146, %147 : vector<1x64xf32>
    %149 = math.rsqrt %148 : vector<1x64xf32>
    %150 = vector.broadcast %149 : vector<1x64xf32> to vector<32x64xf32>
    %151 = arith.mulf %141, %150 : vector<32x64xf32>
    %c0_105 = arith.constant 0 : index
    %c0_106 = arith.constant 0 : index
    %152 = vector.load %arg8[%c0_105, %c0_106] : memref<1x64xf32, #tpu.memory_space<vmem>>, vector<1x64xf32>
    %153 = vector.broadcast %152 : vector<1x64xf32> to vector<32x64xf32>
    %154 = arith.mulf %151, %153 : vector<32x64xf32>
    %c0_107 = arith.constant 0 : index
    %c0_108 = arith.constant 0 : index
    %155 = vector.load %arg9[%c0_107, %c0_108] : memref<1x64xf32, #tpu.memory_space<vmem>>, vector<1x64xf32>
    %156 = vector.broadcast %155 : vector<1x64xf32> to vector<32x64xf32>
    %157 = arith.addf %154, %156 : vector<32x64xf32>
    %cst_109 = arith.constant 0.000000e+00 : f32
    %158 = vector.broadcast %cst_109 : f32 to vector<32x64xf32>
    %159 = arith.maximumf %157, %158 : vector<32x64xf32>
    %160 = arith.truncf %159 : vector<32x64xf32> to vector<32x64xbf16>
    %cst_110 = arith.constant 0.000000e+00 : f32
    %161 = vector.broadcast %cst_110 : f32 to vector<8x128xf32>
    %c0_111 = arith.constant 0 : index
    %c0_112 = arith.constant 0 : index
    %162 = vector.load %arg10[%c0_111, %c0_112] : memref<72x32xbf16, #tpu.memory_space<vmem>>, vector<8x32xbf16>
    %c0_113 = arith.constant 0 : index
    %c0_114 = arith.constant 0 : index
    %163 = vector.load %arg11[%c0_113, %c0_114] : memref<576x128xbf16, #tpu.memory_space<vmem>>, vector<64x128xbf16>
    %cst_115 = arith.constant dense<0.000000e+00> : vector<8x64xf32>
    %164 = tpu.matmul %162, %160, %cst_115 {dimension_numbers = #tpu.dot_dimension_numbers<[1], [0], [0], [1], [0, 0, 1, 1], [], []>} : vector<8x32xbf16>, vector<32x64xbf16>, vector<8x64xf32> -> vector<8x64xf32>
    %165 = arith.truncf %164 : vector<8x64xf32> to vector<8x64xbf16>
    %cst_116 = arith.constant dense<0.000000e+00> : vector<8x128xf32>
    %166 = tpu.matmul %165, %163, %cst_116 {dimension_numbers = #tpu.dot_dimension_numbers<[1], [0], [0], [1], [0, 0, 1, 1], [], []>} : vector<8x64xbf16>, vector<64x128xbf16>, vector<8x128xf32> -> vector<8x128xf32>
    %167 = arith.addf %161, %166 : vector<8x128xf32>
    %c8_117 = arith.constant 8 : index
    %c0_118 = arith.constant 0 : index
    %168 = vector.load %arg10[%c8_117, %c0_118] : memref<72x32xbf16, #tpu.memory_space<vmem>>, vector<8x32xbf16>
    %c64_119 = arith.constant 64 : index
    %c0_120 = arith.constant 0 : index
    %169 = vector.load %arg11[%c64_119, %c0_120] : memref<576x128xbf16, #tpu.memory_space<vmem>>, vector<64x128xbf16>
    %cst_121 = arith.constant dense<0.000000e+00> : vector<8x64xf32>
    %170 = tpu.matmul %168, %160, %cst_121 {dimension_numbers = #tpu.dot_dimension_numbers<[1], [0], [0], [1], [0, 0, 1, 1], [], []>} : vector<8x32xbf16>, vector<32x64xbf16>, vector<8x64xf32> -> vector<8x64xf32>
    %171 = arith.truncf %170 : vector<8x64xf32> to vector<8x64xbf16>
    %cst_122 = arith.constant dense<0.000000e+00> : vector<8x128xf32>
    %172 = tpu.matmul %171, %169, %cst_122 {dimension_numbers = #tpu.dot_dimension_numbers<[1], [0], [0], [1], [0, 0, 1, 1], [], []>} : vector<8x64xbf16>, vector<64x128xbf16>, vector<8x128xf32> -> vector<8x128xf32>
    %173 = arith.addf %167, %172 : vector<8x128xf32>
    %c16_123 = arith.constant 16 : index
    %c0_124 = arith.constant 0 : index
    %174 = vector.load %arg10[%c16_123, %c0_124] : memref<72x32xbf16, #tpu.memory_space<vmem>>, vector<8x32xbf16>
    %c128_125 = arith.constant 128 : index
    %c0_126 = arith.constant 0 : index
    %175 = vector.load %arg11[%c128_125, %c0_126] : memref<576x128xbf16, #tpu.memory_space<vmem>>, vector<64x128xbf16>
    %cst_127 = arith.constant dense<0.000000e+00> : vector<8x64xf32>
    %176 = tpu.matmul %174, %160, %cst_127 {dimension_numbers = #tpu.dot_dimension_numbers<[1], [0], [0], [1], [0, 0, 1, 1], [], []>} : vector<8x32xbf16>, vector<32x64xbf16>, vector<8x64xf32> -> vector<8x64xf32>
    %177 = arith.truncf %176 : vector<8x64xf32> to vector<8x64xbf16>
    %cst_128 = arith.constant dense<0.000000e+00> : vector<8x128xf32>
    %178 = tpu.matmul %177, %175, %cst_128 {dimension_numbers = #tpu.dot_dimension_numbers<[1], [0], [0], [1], [0, 0, 1, 1], [], []>} : vector<8x64xbf16>, vector<64x128xbf16>, vector<8x128xf32> -> vector<8x128xf32>
    %179 = arith.addf %173, %178 : vector<8x128xf32>
    %c24_129 = arith.constant 24 : index
    %c0_130 = arith.constant 0 : index
    %180 = vector.load %arg10[%c24_129, %c0_130] : memref<72x32xbf16, #tpu.memory_space<vmem>>, vector<8x32xbf16>
    %c192_131 = arith.constant 192 : index
    %c0_132 = arith.constant 0 : index
    %181 = vector.load %arg11[%c192_131, %c0_132] : memref<576x128xbf16, #tpu.memory_space<vmem>>, vector<64x128xbf16>
    %cst_133 = arith.constant dense<0.000000e+00> : vector<8x64xf32>
    %182 = tpu.matmul %180, %160, %cst_133 {dimension_numbers = #tpu.dot_dimension_numbers<[1], [0], [0], [1], [0, 0, 1, 1], [], []>} : vector<8x32xbf16>, vector<32x64xbf16>, vector<8x64xf32> -> vector<8x64xf32>
    %183 = arith.truncf %182 : vector<8x64xf32> to vector<8x64xbf16>
    %cst_134 = arith.constant dense<0.000000e+00> : vector<8x128xf32>
    %184 = tpu.matmul %183, %181, %cst_134 {dimension_numbers = #tpu.dot_dimension_numbers<[1], [0], [0], [1], [0, 0, 1, 1], [], []>} : vector<8x64xbf16>, vector<64x128xbf16>, vector<8x128xf32> -> vector<8x128xf32>
    %185 = arith.addf %179, %184 : vector<8x128xf32>
    %c32_135 = arith.constant 32 : index
    %c0_136 = arith.constant 0 : index
    %186 = vector.load %arg10[%c32_135, %c0_136] : memref<72x32xbf16, #tpu.memory_space<vmem>>, vector<8x32xbf16>
    %c256_137 = arith.constant 256 : index
    %c0_138 = arith.constant 0 : index
    %187 = vector.load %arg11[%c256_137, %c0_138] : memref<576x128xbf16, #tpu.memory_space<vmem>>, vector<64x128xbf16>
    %cst_139 = arith.constant dense<0.000000e+00> : vector<8x64xf32>
    %188 = tpu.matmul %186, %160, %cst_139 {dimension_numbers = #tpu.dot_dimension_numbers<[1], [0], [0], [1], [0, 0, 1, 1], [], []>} : vector<8x32xbf16>, vector<32x64xbf16>, vector<8x64xf32> -> vector<8x64xf32>
    %189 = arith.truncf %188 : vector<8x64xf32> to vector<8x64xbf16>
    %cst_140 = arith.constant dense<0.000000e+00> : vector<8x128xf32>
    %190 = tpu.matmul %189, %187, %cst_140 {dimension_numbers = #tpu.dot_dimension_numbers<[1], [0], [0], [1], [0, 0, 1, 1], [], []>} : vector<8x64xbf16>, vector<64x128xbf16>, vector<8x128xf32> -> vector<8x128xf32>
    %191 = arith.addf %185, %190 : vector<8x128xf32>
    %c40_141 = arith.constant 40 : index
    %c0_142 = arith.constant 0 : index
    %192 = vector.load %arg10[%c40_141, %c0_142] : memref<72x32xbf16, #tpu.memory_space<vmem>>, vector<8x32xbf16>
    %c320 = arith.constant 320 : index
    %c0_143 = arith.constant 0 : index
    %193 = vector.load %arg11[%c320, %c0_143] : memref<576x128xbf16, #tpu.memory_space<vmem>>, vector<64x128xbf16>
    %cst_144 = arith.constant dense<0.000000e+00> : vector<8x64xf32>
    %194 = tpu.matmul %192, %160, %cst_144 {dimension_numbers = #tpu.dot_dimension_numbers<[1], [0], [0], [1], [0, 0, 1, 1], [], []>} : vector<8x32xbf16>, vector<32x64xbf16>, vector<8x64xf32> -> vector<8x64xf32>
    %195 = arith.truncf %194 : vector<8x64xf32> to vector<8x64xbf16>
    %cst_145 = arith.constant dense<0.000000e+00> : vector<8x128xf32>
    %196 = tpu.matmul %195, %193, %cst_145 {dimension_numbers = #tpu.dot_dimension_numbers<[1], [0], [0], [1], [0, 0, 1, 1], [], []>} : vector<8x64xbf16>, vector<64x128xbf16>, vector<8x128xf32> -> vector<8x128xf32>
    %197 = arith.addf %191, %196 : vector<8x128xf32>
    %c48_146 = arith.constant 48 : index
    %c0_147 = arith.constant 0 : index
    %198 = vector.load %arg10[%c48_146, %c0_147] : memref<72x32xbf16, #tpu.memory_space<vmem>>, vector<8x32xbf16>
    %c384_148 = arith.constant 384 : index
    %c0_149 = arith.constant 0 : index
    %199 = vector.load %arg11[%c384_148, %c0_149] : memref<576x128xbf16, #tpu.memory_space<vmem>>, vector<64x128xbf16>
    %cst_150 = arith.constant dense<0.000000e+00> : vector<8x64xf32>
    %200 = tpu.matmul %198, %160, %cst_150 {dimension_numbers = #tpu.dot_dimension_numbers<[1], [0], [0], [1], [0, 0, 1, 1], [], []>} : vector<8x32xbf16>, vector<32x64xbf16>, vector<8x64xf32> -> vector<8x64xf32>
    %201 = arith.truncf %200 : vector<8x64xf32> to vector<8x64xbf16>
    %cst_151 = arith.constant dense<0.000000e+00> : vector<8x128xf32>
    %202 = tpu.matmul %201, %199, %cst_151 {dimension_numbers = #tpu.dot_dimension_numbers<[1], [0], [0], [1], [0, 0, 1, 1], [], []>} : vector<8x64xbf16>, vector<64x128xbf16>, vector<8x128xf32> -> vector<8x128xf32>
    %203 = arith.addf %197, %202 : vector<8x128xf32>
    %c56_152 = arith.constant 56 : index
    %c0_153 = arith.constant 0 : index
    %204 = vector.load %arg10[%c56_152, %c0_153] : memref<72x32xbf16, #tpu.memory_space<vmem>>, vector<8x32xbf16>
    %c448 = arith.constant 448 : index
    %c0_154 = arith.constant 0 : index
    %205 = vector.load %arg11[%c448, %c0_154] : memref<576x128xbf16, #tpu.memory_space<vmem>>, vector<64x128xbf16>
    %cst_155 = arith.constant dense<0.000000e+00> : vector<8x64xf32>
    %206 = tpu.matmul %204, %160, %cst_155 {dimension_numbers = #tpu.dot_dimension_numbers<[1], [0], [0], [1], [0, 0, 1, 1], [], []>} : vector<8x32xbf16>, vector<32x64xbf16>, vector<8x64xf32> -> vector<8x64xf32>
    %207 = arith.truncf %206 : vector<8x64xf32> to vector<8x64xbf16>
    %cst_156 = arith.constant dense<0.000000e+00> : vector<8x128xf32>
    %208 = tpu.matmul %207, %205, %cst_156 {dimension_numbers = #tpu.dot_dimension_numbers<[1], [0], [0], [1], [0, 0, 1, 1], [], []>} : vector<8x64xbf16>, vector<64x128xbf16>, vector<8x128xf32> -> vector<8x128xf32>
    %209 = arith.addf %203, %208 : vector<8x128xf32>
    %c64_157 = arith.constant 64 : index
    %c0_158 = arith.constant 0 : index
    %210 = vector.load %arg10[%c64_157, %c0_158] : memref<72x32xbf16, #tpu.memory_space<vmem>>, vector<8x32xbf16>
    %c512_159 = arith.constant 512 : index
    %c0_160 = arith.constant 0 : index
    %211 = vector.load %arg11[%c512_159, %c0_160] : memref<576x128xbf16, #tpu.memory_space<vmem>>, vector<64x128xbf16>
    %cst_161 = arith.constant dense<0.000000e+00> : vector<8x64xf32>
    %212 = tpu.matmul %210, %160, %cst_161 {dimension_numbers = #tpu.dot_dimension_numbers<[1], [0], [0], [1], [0, 0, 1, 1], [], []>} : vector<8x32xbf16>, vector<32x64xbf16>, vector<8x64xf32> -> vector<8x64xf32>
    %213 = arith.truncf %212 : vector<8x64xf32> to vector<8x64xbf16>
    %cst_162 = arith.constant dense<0.000000e+00> : vector<8x128xf32>
    %214 = tpu.matmul %213, %211, %cst_162 {dimension_numbers = #tpu.dot_dimension_numbers<[1], [0], [0], [1], [0, 0, 1, 1], [], []>} : vector<8x64xbf16>, vector<64x128xbf16>, vector<8x128xf32> -> vector<8x128xf32>
    %215 = arith.addf %209, %214 : vector<8x128xf32>
    %cst_163 = arith.constant dense<0.000000e+00> : vector<128xf32>
    %216 = vector.multi_reduction <add>, %215, %cst_163 [0] : vector<8x128xf32> to vector<128xf32>
    %217 = vector.shape_cast %216 : vector<128xf32> to vector<1x128xf32>
    %cst_164 = arith.constant 1.250000e-01 : f32
    %218 = vector.broadcast %cst_164 : f32 to vector<1x128xf32>
    %219 = arith.mulf %217, %218 : vector<1x128xf32>
    %220 = vector.broadcast %219 : vector<1x128xf32> to vector<8x128xf32>
    %221 = arith.subf %215, %220 : vector<8x128xf32>
    %222 = arith.mulf %221, %221 : vector<8x128xf32>
    %cst_165 = arith.constant dense<0.000000e+00> : vector<128xf32>
    %223 = vector.multi_reduction <add>, %222, %cst_165 [0] : vector<8x128xf32> to vector<128xf32>
    %224 = vector.shape_cast %223 : vector<128xf32> to vector<1x128xf32>
    %cst_166 = arith.constant 1.250000e-01 : f32
    %225 = vector.broadcast %cst_166 : f32 to vector<1x128xf32>
    %226 = arith.mulf %224, %225 : vector<1x128xf32>
    %cst_167 = arith.constant 9.99999974E-6 : f32
    %227 = vector.broadcast %cst_167 : f32 to vector<1x128xf32>
    %228 = arith.addf %226, %227 : vector<1x128xf32>
    %229 = math.rsqrt %228 : vector<1x128xf32>
    %230 = vector.broadcast %229 : vector<1x128xf32> to vector<8x128xf32>
    %231 = arith.mulf %221, %230 : vector<8x128xf32>
    %c0_168 = arith.constant 0 : index
    %c0_169 = arith.constant 0 : index
    %232 = vector.load %arg12[%c0_168, %c0_169] : memref<1x128xf32, #tpu.memory_space<vmem>>, vector<1x128xf32>
    %233 = vector.broadcast %232 : vector<1x128xf32> to vector<8x128xf32>
    %234 = arith.mulf %231, %233 : vector<8x128xf32>
    %c0_170 = arith.constant 0 : index
    %c0_171 = arith.constant 0 : index
    %235 = vector.load %arg13[%c0_170, %c0_171] : memref<1x128xf32, #tpu.memory_space<vmem>>, vector<1x128xf32>
    %236 = vector.broadcast %235 : vector<1x128xf32> to vector<8x128xf32>
    %237 = arith.addf %234, %236 : vector<8x128xf32>
    %cst_172 = arith.constant 0.000000e+00 : f32
    %238 = vector.broadcast %cst_172 : f32 to vector<8x128xf32>
    %239 = arith.maximumf %237, %238 : vector<8x128xf32>
    %c0_173 = arith.constant 0 : index
    %c0_174 = arith.constant 0 : index
    %240 = vector.load %arg14[%c0_173, %c0_174] : memref<2x8xbf16, #tpu.memory_space<vmem>>, vector<2x8xbf16>
    %241 = arith.truncf %239 : vector<8x128xf32> to vector<8x128xbf16>
    %cst_175 = arith.constant dense<0.000000e+00> : vector<2x128xf32>
    %242 = tpu.matmul %240, %241, %cst_175 {dimension_numbers = #tpu.dot_dimension_numbers<[1], [0], [0], [1], [0, 0, 1, 1], [], []>} : vector<2x8xbf16>, vector<8x128xbf16>, vector<2x128xf32> -> vector<2x128xf32>
    %cst_176 = arith.constant 2.500000e-01 : f32
    %243 = vector.broadcast %cst_176 : f32 to vector<2x128xf32>
    %244 = arith.mulf %242, %243 : vector<2x128xf32>
    %245 = arith.truncf %244 : vector<2x128xf32> to vector<2x128xbf16>
    %c0_177 = arith.constant 0 : index
    %c0_178 = arith.constant 0 : index
    %246 = vector.load %arg15[%c0_177, %c0_178] : memref<128x128xbf16, #tpu.memory_space<vmem>>, vector<128x128xbf16>
    %cst_179 = arith.constant dense<0.000000e+00> : vector<2x128xf32>
    %247 = tpu.matmul %245, %246, %cst_179 {dimension_numbers = #tpu.dot_dimension_numbers<[1], [0], [0], [1], [0, 0, 1, 1], [], []>} : vector<2x128xbf16>, vector<128x128xbf16>, vector<2x128xf32> -> vector<2x128xf32>
    %c0_180 = arith.constant 0 : index
    %c0_181 = arith.constant 0 : index
    %248 = vector.load %arg16[%c0_180, %c0_181] : memref<1x128xf32, #tpu.memory_space<vmem>>, vector<1x128xf32>
    %249 = vector.broadcast %248 : vector<1x128xf32> to vector<2x128xf32>
    %250 = arith.addf %247, %249 : vector<2x128xf32>
    %cst_182 = arith.constant 0.000000e+00 : f32
    %251 = vector.broadcast %cst_182 : f32 to vector<2x128xf32>
    %252 = arith.maximumf %250, %251 : vector<2x128xf32>
    %253 = arith.truncf %252 : vector<2x128xf32> to vector<2x128xbf16>
    %c0_183 = arith.constant 0 : index
    %c0_184 = arith.constant 0 : index
    %254 = vector.load %arg17[%c0_183, %c0_184] : memref<128x128xbf16, #tpu.memory_space<vmem>>, vector<128x128xbf16>
    %cst_185 = arith.constant dense<0.000000e+00> : vector<2x128xf32>
    %255 = tpu.matmul %253, %254, %cst_185 {dimension_numbers = #tpu.dot_dimension_numbers<[1], [0], [0], [1], [0, 0, 1, 1], [], []>} : vector<2x128xbf16>, vector<128x128xbf16>, vector<2x128xf32> -> vector<2x128xf32>
    %c0_186 = arith.constant 0 : index
    %c0_187 = arith.constant 0 : index
    %256 = vector.load %arg18[%c0_186, %c0_187] : memref<1x128xf32, #tpu.memory_space<vmem>>, vector<1x128xf32>
    %257 = vector.broadcast %256 : vector<1x128xf32> to vector<2x128xf32>
    %258 = arith.addf %255, %257 : vector<2x128xf32>
    %259 = arith.mulf %258, %258 : vector<2x128xf32>
    %cst_188 = arith.constant dense<0.000000e+00> : vector<2xf32>
    %260 = vector.multi_reduction <add>, %259, %cst_188 [1] : vector<2x128xf32> to vector<2xf32>
    %261 = vector.shape_cast %260 : vector<2xf32> to vector<2x1xf32>
    %cst_189 = arith.constant 1.000000e-24 : f32
    %262 = vector.broadcast %cst_189 : f32 to vector<2x1xf32>
    %263 = arith.maximumf %261, %262 : vector<2x1xf32>
    %264 = math.rsqrt %263 : vector<2x1xf32>
    %265 = vector.broadcast %264 : vector<2x1xf32> to vector<2x128xf32>
    %266 = arith.mulf %258, %265 : vector<2x128xf32>
    %c0_190 = arith.constant 0 : index
    %c0_191 = arith.constant 0 : index
    %267 = vector.load %arg19[%c0_190, %c0_191] : memref<2x128xf32, #tpu.memory_space<vmem>>, vector<2x128xf32>
    tpu.vector_store %arg19[%c0_190, %c0_191], %266 {strides = array<i32>} : memref<2x128xf32, #tpu.memory_space<vmem>>, vector<2x128xf32>,
    return
  }
  func.func @transform_0(%arg0: i32) -> (i32, i32) {
    %c0_i32 = arith.constant 0 : i32
    %c0_i32_0 = arith.constant 0 : i32
    %c0_i32_1 = arith.constant 0 : i32
    return %c0_i32, %c0_i32_0 : i32, i32
  }
  func.func @transform_1(%arg0: i32) -> (i32, i32) {
    %c0_i32 = arith.constant 0 : i32
    %c0_i32_0 = arith.constant 0 : i32
    %c0_i32_1 = arith.constant 0 : i32
    return %c0_i32, %c0_i32_0 : i32, i32
  }
  func.func @transform_2(%arg0: i32) -> (i32, i32) {
    %c0_i32 = arith.constant 0 : i32
    %c0_i32_0 = arith.constant 0 : i32
    %c0_i32_1 = arith.constant 0 : i32
    return %c0_i32, %c0_i32_0 : i32, i32
  }
  func.func @transform_3(%arg0: i32) -> (i32, i32) {
    %c0_i32 = arith.constant 0 : i32
    %c0_i32_0 = arith.constant 0 : i32
    %c0_i32_1 = arith.constant 0 : i32
    return %c0_i32, %c0_i32_0 : i32, i32
  }
  func.func @transform_4(%arg0: i32) -> (i32, i32) {
    %c0_i32 = arith.constant 0 : i32
    %c0_i32_0 = arith.constant 0 : i32
    %c0_i32_1 = arith.constant 0 : i32
    return %c0_i32, %c0_i32_0 : i32, i32
  }
  func.func @transform_5(%arg0: i32) -> (i32, i32) {
    %c0_i32 = arith.constant 0 : i32
    %c0_i32_0 = arith.constant 0 : i32
    %c0_i32_1 = arith.constant 0 : i32
    return %c0_i32, %c0_i32_0 : i32, i32
  }
  func.func @transform_6(%arg0: i32) -> (i32, i32) {
    %c0_i32 = arith.constant 0 : i32
    %c0_i32_0 = arith.constant 0 : i32
    %c0_i32_1 = arith.constant 0 : i32
    return %c0_i32, %c0_i32_0 : i32, i32
  }
  func.func @transform_7(%arg0: i32) -> (i32, i32) {
    %c0_i32 = arith.constant 0 : i32
    %c0_i32_0 = arith.constant 0 : i32
    %c0_i32_1 = arith.constant 0 : i32
    return %c0_i32, %c0_i32_0 : i32, i32
  }
  func.func @transform_8(%arg0: i32) -> (i32, i32) {
    %c0_i32 = arith.constant 0 : i32
    %c0_i32_0 = arith.constant 0 : i32
    %c0_i32_1 = arith.constant 0 : i32
    return %c0_i32, %c0_i32_0 : i32, i32
  }
  func.func @transform_9(%arg0: i32) -> (i32, i32) {
    %c0_i32 = arith.constant 0 : i32
    %c0_i32_0 = arith.constant 0 : i32
    %c0_i32_1 = arith.constant 0 : i32
    return %c0_i32, %c0_i32_0 : i32, i32
  }
  func.func @transform_10(%arg0: i32) -> (i32, i32) {
    %c0_i32 = arith.constant 0 : i32
    %c0_i32_0 = arith.constant 0 : i32
    %c0_i32_1 = arith.constant 0 : i32
    return %c0_i32, %c0_i32_0 : i32, i32
  }
  func.func @transform_11(%arg0: i32) -> (i32, i32) {
    %c0_i32 = arith.constant 0 : i32
    %c0_i32_0 = arith.constant 0 : i32
    %c0_i32_1 = arith.constant 0 : i32
    return %c0_i32, %c0_i32_0 : i32, i32
  }
  func.func @transform_12(%arg0: i32) -> (i32, i32) {
    %c0_i32 = arith.constant 0 : i32
    %c0_i32_0 = arith.constant 0 : i32
    %c0_i32_1 = arith.constant 0 : i32
    return %c0_i32, %c0_i32_0 : i32, i32
  }
  func.func @transform_13(%arg0: i32) -> (i32, i32) {
    %c0_i32 = arith.constant 0 : i32
    %c0_i32_0 = arith.constant 0 : i32
    %c0_i32_1 = arith.constant 0 : i32
    return %c0_i32, %c0_i32_0 : i32, i32
  }
  func.func @transform_14(%arg0: i32) -> (i32, i32) {
    %c0_i32 = arith.constant 0 : i32
    %c0_i32_0 = arith.constant 0 : i32
    %c0_i32_1 = arith.constant 0 : i32
    return %c0_i32, %c0_i32_0 : i32, i32
  }
  func.func @transform_15(%arg0: i32) -> (i32, i32) {
    %c0_i32 = arith.constant 0 : i32
    %c0_i32_0 = arith.constant 0 : i32
    %c0_i32_1 = arith.constant 0 : i32
    return %c0_i32, %c0_i32_0 : i32, i32
  }
  func.func @transform_16(%arg0: i32) -> (i32, i32) {
    %c0_i32 = arith.constant 0 : i32
    %c0_i32_0 = arith.constant 0 : i32
    %c0_i32_1 = arith.constant 0 : i32
    return %c0_i32, %c0_i32_0 : i32, i32
  }
  func.func @transform_17(%arg0: i32) -> (i32, i32) {
    %c0_i32 = arith.constant 0 : i32
    %c0_i32_0 = arith.constant 0 : i32
    %c0_i32_1 = arith.constant 0 : i32
    return %c0_i32, %c0_i32_0 : i32, i32
  }
  func.func @transform_18(%arg0: i32) -> (i32, i32) {
    %c0_i32 = arith.constant 0 : i32
    %c0_i32_0 = arith.constant 0 : i32
    %c0_i32_1 = arith.constant 0 : i32
    return %c0_i32, %c0_i32_0 : i32, i32
  }
}

</mosaic_0001>

<llo_original>
// kernel: moco_forward.1
$region0: #{moco_forward.1}
  #allocation0 [shape = 'u32[]', space=smem, size = 0x4, offset = 0x4, fixed_abs, tag = 'smem constant byte address 0x4 - core index']
  #allocation1 [shape = 'u32[144,128]{1,0:T(1,128)}', space=vmem, size = 0x12000, scoped, tag = 'internal scratch']
  %s0 = inlined_call_operand.vmem [shape: bf16[512,8], index: 0, kind: input, shape index: {}]
  %s1 = inlined_call_operand.hbm [shape: bf16[1152,512], index: 1, kind: input, shape index: {}]
  %s2 = inlined_call_operand.vmem [shape: bf16[72,32], index: 2, kind: input, shape index: {}]
  %s3 = inlined_call_operand.hbm [shape: f32[1,32], index: 3, kind: input, shape index: {}]
  %s4 = inlined_call_operand.hbm [shape: f32[1,32], index: 4, kind: input, shape index: {}]
  %s5 = inlined_call_operand.hbm [shape: bf16[288,128], index: 5, kind: input, shape index: {}]
  %s6 = inlined_call_operand.vmem [shape: bf16[288,64], index: 6, kind: input, shape index: {}]
  %s7 = inlined_call_operand.hbm [shape: f32[1,64], index: 7, kind: input, shape index: {}]
  %s8 = inlined_call_operand.hbm [shape: f32[1,64], index: 8, kind: input, shape index: {}]
  %s9 = inlined_call_operand.vmem [shape: bf16[72,32], index: 9, kind: input, shape index: {}]
  %s10 = inlined_call_operand.hbm [shape: bf16[576,128], index: 10, kind: input, shape index: {}]
  %s11 = inlined_call_operand.hbm [shape: f32[1,128], index: 11, kind: input, shape index: {}]
  %s12 = inlined_call_operand.hbm [shape: f32[1,128], index: 12, kind: input, shape index: {}]
  %s13 = inlined_call_operand.hbm [shape: bf16[2,8], index: 13, kind: input, shape index: {}]
  %s14 = inlined_call_operand.hbm [shape: bf16[128,128], index: 14, kind: input, shape index: {}]
  %s15 = inlined_call_operand.hbm [shape: f32[1,128], index: 15, kind: input, shape index: {}]
  %s16 = inlined_call_operand.hbm [shape: bf16[128,128], index: 16, kind: input, shape index: {}]
  %s17 = inlined_call_operand.hbm [shape: f32[1,128], index: 17, kind: input, shape index: {}]
  %s18 = inlined_call_operand.hbm [shape: f32[2,128], index: 18, kind: output, shape index: {}]
  %s19 = sld [smem:[#allocation0]]
  $region138: #{moco_forward.1} parent=0
    _
  %s21 = ssub.s32 1, %s19
  %s22 = scalar_select 0, %s21, %s19
  $region1: #{moco_forward.1} parent=0
    #allocation2 [shape = 'u8[1179648]{0}', space=vmem, size = 0x120000, scoped, tag = 'input window, operand 1, single buffered']
    #allocation3 [shape = 's32[1]{0}', space=sflag, size = 0x4, scoped, tag = 'scoped memory for moco_forward.1']
    #allocation4 [shape = 's32[1]{0}', space=sflag, size = 0x4, scoped, tag = 'scoped memory for moco_forward.1']
    #allocation5 [shape = 'u8[512]{0}', space=vmem, size = 0x400, scoped, tag = 'input window, operand 3, single buffered']
    #allocation6 [shape = 's32[1]{0}', space=sflag, size = 0x4, scoped, tag = 'scoped memory for moco_forward.1']
    #allocation7 [shape = 'u8[512]{0}', space=vmem, size = 0x400, scoped, tag = 'input window, operand 4, single buffered']
    #allocation8 [shape = 'u8[73728]{0}', space=vmem, size = 0x12000, scoped, tag = 'input window, operand 5, single buffered']
    #allocation9 [shape = 's32[1]{0}', space=sflag, size = 0x4, scoped, tag = 'scoped memory for moco_forward.1']
    #allocation10 [shape = 'u8[512]{0}', space=vmem, size = 0x400, scoped, tag = 'input window, operand 7, single buffered']
    #allocation11 [shape = 'u8[512]{0}', space=vmem, size = 0x400, scoped, tag = 'input window, operand 8, single buffered']
    #allocation12 [shape = 's32[1]{0}', space=sflag, size = 0x4, scoped, tag = 'scoped memory for moco_forward.1']
    #allocation13 [shape = 'u8[147456]{0}', space=vmem, size = 0x24000, scoped, tag = 'input window, operand 10, single buffered']
    #allocation14 [shape = 'u8[512]{0}', space=vmem, size = 0x400, scoped, tag = 'input window, operand 11, single buffered']
    #allocation15 [shape = 's32[1]{0}', space=sflag, size = 0x4, scoped, tag = 'scoped memory for moco_forward.1']
    #allocation16 [shape = 'u8[512]{0}', space=vmem, size = 0x400, scoped, tag = 'input window, operand 12, single buffered']
    #allocation17 [shape = 'u8[512]{0}', space=vmem, size = 0x400, scoped, tag = 'input window, operand 13, single buffered']
    #allocation18 [shape = 's32[1]{0}', space=sflag, size = 0x4, scoped, tag = 'scoped memory for moco_forward.1']
    #allocation19 [shape = 'u8[32768]{0}', space=vmem, size = 0x8000, scoped, tag = 'input window, operand 14, single buffered']
    #allocation20 [shape = 'u8[512]{0}', space=vmem, size = 0x400, scoped, tag = 'input window, operand 15, single buffered']
    #allocation21 [shape = 's32[1]{0}', space=sflag, size = 0x4, scoped, tag = 'scoped memory for moco_forward.1']
    #allocation22 [shape = 'u8[32768]{0}', space=vmem, size = 0x8000, scoped, tag = 'input window, operand 16, single buffered']
    #allocation23 [shape = 'u8[512]{0}', space=vmem, size = 0x400, scoped, tag = 'input window, operand 17, single buffered']
    #allocation24 [shape = 's32[1]{0}', space=sflag, size = 0x4, scoped, tag = 'scoped memory for moco_forward.1']
    #allocation25 [shape = 'u8[1024]{0}', space=vmem, size = 0x400, scoped, tag = 'output window, operand 0, single buffered']
    %23 = vsyncpa [#allocation3], 0
    %24 = vsyncpa [#allocation6], 0
    %25 = vsyncpa [#allocation9], 0
    %26 = vsyncpa [#allocation12], 0
    %27 = vsyncpa [#allocation15], 0
    %28 = vsyncpa [#allocation18], 0
    %29 = vsyncpa [#allocation21], 0
    %30 = vsyncpa [#allocation24], 0
    %31 = vsyncpa [#allocation4], 0
    // Predicated region
    $region2: #{moco_forward.1} parent=1 // pred_check
      _
    $region3: #{moco_forward.1} parent=1 // pred_check_branch
      %33 = sbr.rel (0) target = $region5
    $region4: #{moco_forward.1} parent=1 // pred_region
      _
    $region5: #{moco_forward.1} parent=1 // pred_fallthru
      _
    // Predicated region
    $region6: #{moco_forward.1} parent=1 // pred_check
      _
    $region7: #{moco_forward.1} parent=1 // pred_check_branch
      %35 = sbr.rel (0) target = $region9
    $region8: #{moco_forward.1} parent=1 // pred_region
      %s37 = ssub.s32 36864, 36864
      %38 = vsyncadd [#allocation3], %s37
      %s39 = sshll.u32 [#allocation2], 4
      %s40 = int_to_ptr.vmem [resolvable:$true] %s39
      %45 = dma.hbm_to_vmem [thread:$0]  %s1, 36864, %s40, [#allocation3], 256, 256, 16
    $region9: #{moco_forward.1} parent=1 // pred_fallthru
      _
    // Predicated region
    $region10: #{moco_forward.1} parent=1 // pred_check
      _
    $region11: #{moco_forward.1} parent=1 // pred_check_branch
      %47 = sbr.rel (0) target = $region13
    $region12: #{moco_forward.1} parent=1 // pred_region
      _
    $region13: #{moco_forward.1} parent=1 // pred_fallthru
      _
    // Predicated region
    $region14: #{moco_forward.1} parent=1 // pred_check
      _
    $region15: #{moco_forward.1} parent=1 // pred_check_branch
      %49 = sbr.rel (0) target = $region17
    $region16: #{moco_forward.1} parent=1 // pred_region
      %s51 = ssub.s32 16, 16
      %52 = vsyncadd [#allocation6], %s51
      %s54 = sshll.u32 [#allocation5], 4
      %s55 = int_to_ptr.vmem [resolvable:$true] %s54
      %57 = dma.hbm_to_vmem [thread:$0]  %s3, 16, %s55, [#allocation6]
    $region17: #{moco_forward.1} parent=1 // pred_fallthru
      _
    // Predicated region
    $region18: #{moco_forward.1} parent=1 // pred_check
      _
    $region19: #{moco_forward.1} parent=1 // pred_check_branch
      %59 = sbr.rel (0) target = $region21
    $region20: #{moco_forward.1} parent=1 // pred_region
      %s61 = ssub.s32 16, 16
      %62 = vsyncadd [#allocation6], %s61
      %s64 = sshll.u32 [#allocation7], 4
      %s65 = int_to_ptr.vmem [resolvable:$true] %s64
      %67 = dma.hbm_to_vmem [thread:$0]  %s4, 16, %s65, [#allocation6]
    $region21: #{moco_forward.1} parent=1 // pred_fallthru
      _
    // Predicated region
    $region22: #{moco_forward.1} parent=1 // pred_check
      _
    $region23: #{moco_forward.1} parent=1 // pred_check_branch
      %69 = sbr.rel (0) target = $region25
    $region24: #{moco_forward.1} parent=1 // pred_region
      %s71 = ssub.s32 2304, 2304
      %72 = vsyncadd [#allocation9], %s71
      %s73 = sshll.u32 [#allocation8], 4
      %s74 = int_to_ptr.vmem [resolvable:$true] %s73
      %79 = dma.hbm_to_vmem [thread:$0]  %s5, 2304, %s74, [#allocation9], 64, 64, 4
    $region25: #{moco_forward.1} parent=1 // pred_fallthru
      _
    // Predicated region
    $region26: #{moco_forward.1} parent=1 // pred_check
      _
    $region27: #{moco_forward.1} parent=1 // pred_check_branch
      %81 = sbr.rel (0) target = $region29
    $region28: #{moco_forward.1} parent=1 // pred_region
      _
    $region29: #{moco_forward.1} parent=1 // pred_fallthru
      _
    // Predicated region
    $region30: #{moco_forward.1} parent=1 // pred_check
      _
    $region31: #{moco_forward.1} parent=1 // pred_check_branch
      %83 = sbr.rel (0) target = $region33
    $region32: #{moco_forward.1} parent=1 // pred_region
      %s85 = ssub.s32 16, 16
      %86 = vsyncadd [#allocation9], %s85
      %s88 = sshll.u32 [#allocation10], 4
      %s89 = int_to_ptr.vmem [resolvable:$true] %s88
      %91 = dma.hbm_to_vmem [thread:$0]  %s7, 16, %s89, [#allocation9]
    $region33: #{moco_forward.1} parent=1 // pred_fallthru
      _
    // Predicated region
    $region34: #{moco_forward.1} parent=1 // pred_check
      _
    $region35: #{moco_forward.1} parent=1 // pred_check_branch
      %93 = sbr.rel (0) target = $region37
    $region36: #{moco_forward.1} parent=1 // pred_region
      %s95 = ssub.s32 16, 16
      %96 = vsyncadd [#allocation12], %s95
      %s98 = sshll.u32 [#allocation11], 4
      %s99 = int_to_ptr.vmem [resolvable:$true] %s98
      %101 = dma.hbm_to_vmem [thread:$0]  %s8, 16, %s99, [#allocation12]
    $region37: #{moco_forward.1} parent=1 // pred_fallthru
      _
    // Predicated region
    $region38: #{moco_forward.1} parent=1 // pred_check
      _
    $region39: #{moco_forward.1} parent=1 // pred_check_branch
      %103 = sbr.rel (0) target = $region41
    $region40: #{moco_forward.1} parent=1 // pred_region
      _
    $region41: #{moco_forward.1} parent=1 // pred_fallthru
      _
    // Predicated region
    $region42: #{moco_forward.1} parent=1 // pred_check
      _
    $region43: #{moco_forward.1} parent=1 // pred_check_branch
      %105 = sbr.rel (0) target = $region45
    $region44: #{moco_forward.1} parent=1 // pred_region
      %s107 = ssub.s32 4608, 4608
      %108 = vsyncadd [#allocation12], %s107
      %s109 = sshll.u32 [#allocation13], 4
      %s110 = int_to_ptr.vmem [resolvable:$true] %s109
      %115 = dma.hbm_to_vmem [thread:$0]  %s10, 4608, %s110, [#allocation12], 64, 64, 4
    $region45: #{moco_forward.1} parent=1 // pred_fallthru
      _
    // Predicated region
    $region46: #{moco_forward.1} parent=1 // pred_check
      _
    $region47: #{moco_forward.1} parent=1 // pred_check_branch
      %117 = sbr.rel (0) target = $region49
    $region48: #{moco_forward.1} parent=1 // pred_region
      %s119 = ssub.s32 16, 16
      %120 = vsyncadd [#allocation15], %s119
      %s122 = sshll.u32 [#allocation14], 4
      %s123 = int_to_ptr.vmem [resolvable:$true] %s122
      %125 = dma.hbm_to_vmem [thread:$0]  %s11, 16, %s123, [#allocation15]
    $region49: #{moco_forward.1} parent=1 // pred_fallthru
      _
    // Predicated region
    $region50: #{moco_forward.1} parent=1 // pred_check
      _
    $region51: #{moco_forward.1} parent=1 // pred_check_branch
      %127 = sbr.rel (0) target = $region53
    $region52: #{moco_forward.1} parent=1 // pred_region
      %s129 = ssub.s32 16, 16
      %130 = vsyncadd [#allocation15], %s129
      %s132 = sshll.u32 [#allocation16], 4
      %s133 = int_to_ptr.vmem [resolvable:$true] %s132
      %135 = dma.hbm_to_vmem [thread:$0]  %s12, 16, %s133, [#allocation15]
    $region53: #{moco_forward.1} parent=1 // pred_fallthru
      _
    // Predicated region
    $region54: #{moco_forward.1} parent=1 // pred_check
      _
    $region55: #{moco_forward.1} parent=1 // pred_check_branch
      %137 = sbr.rel (0) target = $region57
    $region56: #{moco_forward.1} parent=1 // pred_region
      %s139 = ssub.s32 16, 16
      %140 = vsyncadd [#allocation18], %s139
      %s142 = sshll.u32 [#allocation17], 4
      %s143 = int_to_ptr.vmem [resolvable:$true] %s142
      %145 = dma.hbm_to_vmem [thread:$0]  %s13, 16, %s143, [#allocation18]
    $region57: #{moco_forward.1} parent=1 // pred_fallthru
      _
    // Predicated region
    $region58: #{moco_forward.1} parent=1 // pred_check
      _
    $region59: #{moco_forward.1} parent=1 // pred_check_branch
      %147 = sbr.rel (0) target = $region61
    $region60: #{moco_forward.1} parent=1 // pred_region
      %s149 = ssub.s32 1024, 1024
      %150 = vsyncadd [#allocation18], %s149
      %s151 = sshll.u32 [#allocation19], 4
      %s152 = int_to_ptr.vmem [resolvable:$true] %s151
      %157 = dma.hbm_to_vmem [thread:$0]  %s14, 1024, %s152, [#allocation18], 64, 64, 4
    $region61: #{moco_forward.1} parent=1 // pred_fallthru
      _
    // Predicated region
    $region62: #{moco_forward.1} parent=1 // pred_check
      _
    $region63: #{moco_forward.1} parent=1 // pred_check_branch
      %159 = sbr.rel (0) target = $region65
    $region64: #{moco_forward.1} parent=1 // pred_region
      %s161 = ssub.s32 16, 16
      %162 = vsyncadd [#allocation21], %s161
      %s164 = sshll.u32 [#allocation20], 4
      %s165 = int_to_ptr.vmem [resolvable:$true] %s164
      %167 = dma.hbm_to_vmem [thread:$0]  %s15, 16, %s165, [#allocation21]
    $region65: #{moco_forward.1} parent=1 // pred_fallthru
      _
    // Predicated region
    $region66: #{moco_forward.1} parent=1 // pred_check
      _
    $region67: #{moco_forward.1} parent=1 // pred_check_branch
      %169 = sbr.rel (0) target = $region69
    $region68: #{moco_forward.1} parent=1 // pred_region
      %s171 = ssub.s32 1024, 1024
      %172 = vsyncadd [#allocation21], %s171
      %s173 = sshll.u32 [#allocation22], 4
      %s174 = int_to_ptr.vmem [resolvable:$true] %s173
      %179 = dma.hbm_to_vmem [thread:$0]  %s16, 1024, %s174, [#allocation21], 64, 64, 4
    $region69: #{moco_forward.1} parent=1 // pred_fallthru
      _
    // Predicated region
    $region70: #{moco_forward.1} parent=1 // pred_check
      _
    $region71: #{moco_forward.1} parent=1 // pred_check_branch
      %181 = sbr.rel (0) target = $region73
    $region72: #{moco_forward.1} parent=1 // pred_region
      %s183 = ssub.s32 16, 16
      %184 = vsyncadd [#allocation24], %s183
      %s186 = sshll.u32 [#allocation23], 4
      %s187 = int_to_ptr.vmem [resolvable:$true] %s186
      %189 = dma.hbm_to_vmem [thread:$0]  %s17, 16, %s187, [#allocation24]
    $region73: #{moco_forward.1} parent=1 // pred_fallthru
      _
    // Predicated region
    $region74: #{moco_forward.1} parent=1 // pred_check
      _
    $region75: #{moco_forward.1} parent=1 // pred_check_branch
      %191 = sbr.rel (0) target = $region77
    $region76: #{moco_forward.1} parent=1 // pred_region
      %192 = dma.done [#allocation3], 36864
    $region77: #{moco_forward.1} parent=1 // pred_fallthru
      _
    // Predicated region
    $region78: #{moco_forward.1} parent=1 // pred_check
      _
    $region79: #{moco_forward.1} parent=1 // pred_check_branch
      %194 = sbr.rel (0) target = $region81
    $region80: #{moco_forward.1} parent=1 // pred_region
      %195 = dma.done [#allocation6], 16
    $region81: #{moco_forward.1} parent=1 // pred_fallthru
      _
    // Predicated region
    $region82: #{moco_forward.1} parent=1 // pred_check
      _
    $region83: #{moco_forward.1} parent=1 // pred_check_branch
      %197 = sbr.rel (0) target = $region85
    $region84: #{moco_forward.1} parent=1 // pred_region
      %198 = dma.done [#allocation6], 16
    $region85: #{moco_forward.1} parent=1 // pred_fallthru
      _
    // Predicated region
    $region86: #{moco_forward.1} parent=1 // pred_check
      _
    $region87: #{moco_forward.1} parent=1 // pred_check_branch
      %200 = sbr.rel (0) target = $region89
    $region88: #{moco_forward.1} parent=1 // pred_region
      %201 = dma.done [#allocation9], 2304
    $region89: #{moco_forward.1} parent=1 // pred_fallthru
      _
    // Predicated region
    $region90: #{moco_forward.1} parent=1 // pred_check
      _
    $region91: #{moco_forward.1} parent=1 // pred_check_branch
      %203 = sbr.rel (0) target = $region93
    $region92: #{moco_forward.1} parent=1 // pred_region
      %204 = dma.done [#allocation9], 16
    $region93: #{moco_forward.1} parent=1 // pred_fallthru
      _
    // Predicated region
    $region94: #{moco_forward.1} parent=1 // pred_check
      _
    $region95: #{moco_forward.1} parent=1 // pred_check_branch
      %206 = sbr.rel (0) target = $region97
    $region96: #{moco_forward.1} parent=1 // pred_region
      %207 = dma.done [#allocation12], 16
    $region97: #{moco_forward.1} parent=1 // pred_fallthru
      _
    // Predicated region
    $region98: #{moco_forward.1} parent=1 // pred_check
      _
    $region99: #{moco_forward.1} parent=1 // pred_check_branch
      %209 = sbr.rel (0) target = $region101
    $region100: #{moco_forward.1} parent=1 // pred_region
      %210 = dma.done [#allocation12], 4608
    $region101: #{moco_forward.1} parent=1 // pred_fallthru
      _
    // Predicated region
    $region102: #{moco_forward.1} parent=1 // pred_check
      _
    $region103: #{moco_forward.1} parent=1 // pred_check_branch
      %212 = sbr.rel (0) target = $region105
    $region104: #{moco_forward.1} parent=1 // pred_region
      %213 = dma.done [#allocation15], 16
    $region105: #{moco_forward.1} parent=1 // pred_fallthru
      _
    // Predicated region
    $region106: #{moco_forward.1} parent=1 // pred_check
      _
    $region107: #{moco_forward.1} parent=1 // pred_check_branch
      %215 = sbr.rel (0) target = $region109
    $region108: #{moco_forward.1} parent=1 // pred_region
      %216 = dma.done [#allocation15], 16
    $region109: #{moco_forward.1} parent=1 // pred_fallthru
      _
    // Predicated region
    $region110: #{moco_forward.1} parent=1 // pred_check
      _
    $region111: #{moco_forward.1} parent=1 // pred_check_branch
      %218 = sbr.rel (0) target = $region113
    $region112: #{moco_forward.1} parent=1 // pred_region
      %219 = dma.done [#allocation18], 16
    $region113: #{moco_forward.1} parent=1 // pred_fallthru
      _
    // Predicated region
    $region114: #{moco_forward.1} parent=1 // pred_check
      _
    $region115: #{moco_forward.1} parent=1 // pred_check_branch
      %221 = sbr.rel (0) target = $region117
    $region116: #{moco_forward.1} parent=1 // pred_region
      %222 = dma.done [#allocation18], 1024
    $region117: #{moco_forward.1} parent=1 // pred_fallthru
      _
    // Predicated region
    $region118: #{moco_forward.1} parent=1 // pred_check
      _
    $region119: #{moco_forward.1} parent=1 // pred_check_branch
      %224 = sbr.rel (0) target = $region121
    $region120: #{moco_forward.1} parent=1 // pred_region
      %225 = dma.done [#allocation21], 16
    $region121: #{moco_forward.1} parent=1 // pred_fallthru
      _
    // Predicated region
    $region122: #{moco_forward.1} parent=1 // pred_check
      _
    $region123: #{moco_forward.1} parent=1 // pred_check_branch
      %227 = sbr.rel (0) target = $region125
    $region124: #{moco_forward.1} parent=1 // pred_region
      %228 = dma.done [#allocation21], 1024
    $region125: #{moco_forward.1} parent=1 // pred_fallthru
      _
    // Predicated region
    $region126: #{moco_forward.1} parent=1 // pred_check
      _
    $region127: #{moco_forward.1} parent=1 // pred_check_branch
      %230 = sbr.rel (0) target = $region129
    $region128: #{moco_forward.1} parent=1 // pred_region
      %231 = dma.done [#allocation24], 16
    $region129: #{moco_forward.1} parent=1 // pred_fallthru
      _
    %v233 = vld [vmem:[%s0] sm:$0xf]
    %v234 = vld [vmem:[%s0 + $0x4] sm:$0xf]
    %v235 = vld [vmem:[%s0 + $0x8] sm:$0xf]
    %v236 = vld [vmem:[%s0 + $0xc] sm:$0xf]
    %v237 = vld [vmem:[%s0 + $0x10] sm:$0xf]
    %v238 = vld [vmem:[%s0 + $0x14] sm:$0xf]
    %v239 = vld [vmem:[%s0 + $0x18] sm:$0xf]
    %v240 = vld [vmem:[%s0 + $0x1c] sm:$0xf]
    %v241 = vld [vmem:[%s0 + $0x20] sm:$0xf]
    %v242 = vld [vmem:[%s0 + $0x24] sm:$0xf]
    %v243 = vld [vmem:[%s0 + $0x28] sm:$0xf]
    %v244 = vld [vmem:[%s0 + $0x2c] sm:$0xf]
    %v245 = vld [vmem:[%s0 + $0x30] sm:$0xf]
    %v246 = vld [vmem:[%s0 + $0x34] sm:$0xf]
    %v247 = vld [vmem:[%s0 + $0x38] sm:$0xf]
    %v248 = vld [vmem:[%s0 + $0x3c] sm:$0xf]
    %v249 = vld [vmem:[%s0 + $0x40] sm:$0xf]
    %v250 = vld [vmem:[%s0 + $0x44] sm:$0xf]
    %v251 = vld [vmem:[%s0 + $0x48] sm:$0xf]
    %v252 = vld [vmem:[%s0 + $0x4c] sm:$0xf]
    %v253 = vld [vmem:[%s0 + $0x50] sm:$0xf]
    %v254 = vld [vmem:[%s0 + $0x54] sm:$0xf]
    %v255 = vld [vmem:[%s0 + $0x58] sm:$0xf]
    %v256 = vld [vmem:[%s0 + $0x5c] sm:$0xf]
    %v257 = vld [vmem:[%s0 + $0x60] sm:$0xf]
    %v258 = vld [vmem:[%s0 + $0x64] sm:$0xf]
    %v259 = vld [vmem:[%s0 + $0x68] sm:$0xf]
    %v260 = vld [vmem:[%s0 + $0x6c] sm:$0xf]
    %v261 = vld [vmem:[%s0 + $0x70] sm:$0xf]
    %v262 = vld [vmem:[%s0 + $0x74] sm:$0xf]
    %v263 = vld [vmem:[%s0 + $0x78] sm:$0xf]
    %v264 = vld [vmem:[%s0 + $0x7c] sm:$0xf]
    %v265 = vld [vmem:[%s0 + $0x80] sm:$0xf]
    %v266 = vld [vmem:[%s0 + $0x84] sm:$0xf]
    %v267 = vld [vmem:[%s0 + $0x88] sm:$0xf]
    %v268 = vld [vmem:[%s0 + $0x8c] sm:$0xf]
    %v269 = vld [vmem:[%s0 + $0x90] sm:$0xf]
    %v270 = vld [vmem:[%s0 + $0x94] sm:$0xf]
    %v271 = vld [vmem:[%s0 + $0x98] sm:$0xf]
    %v272 = vld [vmem:[%s0 + $0x9c] sm:$0xf]
    %v273 = vld [vmem:[%s0 + $0xa0] sm:$0xf]
    %v274 = vld [vmem:[%s0 + $0xa4] sm:$0xf]
    %v275 = vld [vmem:[%s0 + $0xa8] sm:$0xf]
    %v276 = vld [vmem:[%s0 + $0xac] sm:$0xf]
    %v277 = vld [vmem:[%s0 + $0xb0] sm:$0xf]
    %v278 = vld [vmem:[%s0 + $0xb4] sm:$0xf]
    %v279 = vld [vmem:[%s0 + $0xb8] sm:$0xf]
    %v280 = vld [vmem:[%s0 + $0xbc] sm:$0xf]
    %v281 = vld [vmem:[%s0 + $0xc0] sm:$0xf]
    %v282 = vld [vmem:[%s0 + $0xc4] sm:$0xf]
    %v283 = vld [vmem:[%s0 + $0xc8] sm:$0xf]
    %v284 = vld [vmem:[%s0 + $0xcc] sm:$0xf]
    %v285 = vld [vmem:[%s0 + $0xd0] sm:$0xf]
    %v286 = vld [vmem:[%s0 + $0xd4] sm:$0xf]
    %v287 = vld [vmem:[%s0 + $0xd8] sm:$0xf]
    %v288 = vld [vmem:[%s0 + $0xdc] sm:$0xf]
    %v289 = vld [vmem:[%s0 + $0xe0] sm:$0xf]
    %v290 = vld [vmem:[%s0 + $0xe4] sm:$0xf]
    %v291 = vld [vmem:[%s0 + $0xe8] sm:$0xf]
    %v292 = vld [vmem:[%s0 + $0xec] sm:$0xf]
    %v293 = vld [vmem:[%s0 + $0xf0] sm:$0xf]
    %v294 = vld [vmem:[%s0 + $0xf4] sm:$0xf]
    %v295 = vld [vmem:[%s0 + $0xf8] sm:$0xf]
    %v296 = vld [vmem:[%s0 + $0xfc] sm:$0xf]
    %v297 = vld [vmem:[#allocation2] sm:$0xff]
    %v298 = vld [vmem:[#allocation2 + $0x8] sm:$0xff]
    %v299 = vld [vmem:[#allocation2 + $0x10] sm:$0xff]
    %v300 = vld [vmem:[#allocation2 + $0x18] sm:$0xff]
    %v301 = vld [vmem:[#allocation2 + $0x20] sm:$0xff]
    %v302 = vld [vmem:[#allocation2 + $0x28] sm:$0xff]
    %v303 = vld [vmem:[#allocation2 + $0x30] sm:$0xff]
    %v304 = vld [vmem:[#allocation2 + $0x38] sm:$0xff]
    %v305 = vld [vmem:[#allocation2 + $0x40] sm:$0xff]
    %v306 = vld [vmem:[#allocation2 + $0x48] sm:$0xff]
    %v307 = vld [vmem:[#allocation2 + $0x50] sm:$0xff]
    %v308 = vld [vmem:[#allocation2 + $0x58] sm:$0xff]
    %v309 = vld [vmem:[#allocation2 + $0x60] sm:$0xff]
    %v310 = vld [vmem:[#allocation2 + $0x68] sm:$0xff]
    %v311 = vld [vmem:[#allocation2 + $0x70] sm:$0xff]
    %v312 = vld [vmem:[#allocation2 + $0x78] sm:$0xff]
    %v313 = vld [vmem:[#allocation2 + $0x80] sm:$0xff]
    %v314 = vld [vmem:[#allocation2 + $0x88] sm:$0xff]
    %v315 = vld [vmem:[#allocation2 + $0x90] sm:$0xff]
    %v316 = vld [vmem:[#allocation2 + $0x98] sm:$0xff]
    %v317 = vld [vmem:[#allocation2 + $0xa0] sm:$0xff]
    %v318 = vld [vmem:[#allocation2 + $0xa8] sm:$0xff]
    %v319 = vld [vmem:[#allocation2 + $0xb0] sm:$0xff]
    %v320 = vld [vmem:[#allocation2 + $0xb8] sm:$0xff]
    %v321 = vld [vmem:[#allocation2 + $0xc0] sm:$0xff]
    %v322 = vld [vmem:[#allocation2 + $0xc8] sm:$0xff]
    %v323 = vld [vmem:[#allocation2 + $0xd0] sm:$0xff]
    %v324 = vld [vmem:[#allocation2 + $0xd8] sm:$0xff]
    %v325 = vld [vmem:[#allocation2 + $0xe0] sm:$0xff]
    %v326 = vld [vmem:[#allocation2 + $0xe8] sm:$0xff]
    %v327 = vld [vmem:[#allocation2 + $0xf0] sm:$0xff]
    %v328 = vld [vmem:[#allocation2 + $0xf8] sm:$0xff]
    %v329 = vld [vmem:[%s2] sm:$0xf]
    %v362 = vunpack.c.l.b16 %v297
    %v363 = vunpack.c.h.b16 %v297
    %v364 = vunpack.c.l.b16 %v298
    %v365 = vunpack.c.h.b16 %v298
    %v366 = vunpack.c.l.b16 %v299
    %v367 = vunpack.c.h.b16 %v299
    %v368 = vunpack.c.l.b16 %v300
    %v369 = vunpack.c.h.b16 %v300
    %v370 = vunpack.c.l.b16 %v301
    %v371 = vunpack.c.h.b16 %v301
    %v372 = vunpack.c.l.b16 %v302
    %v373 = vunpack.c.h.b16 %v302
    %v374 = vunpack.c.l.b16 %v303
    %v375 = vunpack.c.h.b16 %v303
    %v376 = vunpack.c.l.b16 %v304
    %v377 = vunpack.c.h.b16 %v304
    %v378 = vunpack.c.l.b16 %v305
    %v379 = vunpack.c.h.b16 %v305
    %v380 = vunpack.c.l.b16 %v306
    %v381 = vunpack.c.h.b16 %v306
    %v382 = vunpack.c.l.b16 %v307
    %v383 = vunpack.c.h.b16 %v307
    %v384 = vunpack.c.l.b16 %v308
    %v385 = vunpack.c.h.b16 %v308
    %v386 = vunpack.c.l.b16 %v309
    %v387 = vunpack.c.h.b16 %v309
    %v388 = vunpack.c.l.b16 %v310
    %v389 = vunpack.c.h.b16 %v310
    %v390 = vunpack.c.l.b16 %v311
    %v391 = vunpack.c.h.b16 %v311
    %v392 = vunpack.c.l.b16 %v312
    %v393 = vunpack.c.h.b16 %v312
    %v394 = vunpack.c.l.b16 %v313
    %v395 = vunpack.c.h.b16 %v313
    %v396 = vunpack.c.l.b16 %v314
    %v397 = vunpack.c.h.b16 %v314
    %v398 = vunpack.c.l.b16 %v315
    %v399 = vunpack.c.h.b16 %v315
    %v400 = vunpack.c.l.b16 %v316
    %v401 = vunpack.c.h.b16 %v316
    %v402 = vunpack.c.l.b16 %v317
    %v403 = vunpack.c.h.b16 %v317
    %v404 = vunpack.c.l.b16 %v318
    %v405 = vunpack.c.h.b16 %v318
    %v406 = vunpack.c.l.b16 %v319
    %v407 = vunpack.c.h.b16 %v319
    %v408 = vunpack.c.l.b16 %v320
    %v409 = vunpack.c.h.b16 %v320
    %v410 = vunpack.c.l.b16 %v321
    %v411 = vunpack.c.h.b16 %v321
    %v412 = vunpack.c.l.b16 %v322
    %v413 = vunpack.c.h.b16 %v322
    %v414 = vunpack.c.l.b16 %v323
    %v415 = vunpack.c.h.b16 %v323
    %v416 = vunpack.c.l.b16 %v324
    %v417 = vunpack.c.h.b16 %v324
    %v418 = vunpack.c.l.b16 %v325
    %v419 = vunpack.c.h.b16 %v325
    %v420 = vunpack.c.l.b16 %v326
    %v421 = vunpack.c.h.b16 %v326
    %v422 = vunpack.c.l.b16 %v327
    %v423 = vunpack.c.h.b16 %v327
    %v424 = vunpack.c.l.b16 %v328
    %v425 = vunpack.c.h.b16 %v328
    %v426 = vpack.c.b16 %v366, %v362
    %v427 = vpack.c.b16 %v367, %v363
    %v428 = vpack.c.b16 %v368, %v364
    %v429 = vpack.c.b16 %v369, %v365
    %v430 = vpack.c.b16 %v374, %v370
    %v431 = vpack.c.b16 %v375, %v371
    %v432 = vpack.c.b16 %v376, %v372
    %v433 = vpack.c.b16 %v377, %v373
    %v434 = vpack.c.b16 %v382, %v378
    %v435 = vpack.c.b16 %v383, %v379
    %v436 = vpack.c.b16 %v384, %v380
    %v437 = vpack.c.b16 %v385, %v381
    %v438 = vpack.c.b16 %v390, %v386
    %v439 = vpack.c.b16 %v391, %v387
    %v440 = vpack.c.b16 %v392, %v388
    %v441 = vpack.c.b16 %v393, %v389
    %v442 = vpack.c.b16 %v398, %v394
    %v443 = vpack.c.b16 %v399, %v395
    %v444 = vpack.c.b16 %v400, %v396
    %v445 = vpack.c.b16 %v401, %v397
    %v446 = vpack.c.b16 %v406, %v402
    %v447 = vpack.c.b16 %v407, %v403
    %v448 = vpack.c.b16 %v408, %v404
    %v449 = vpack.c.b16 %v409, %v405
    %v450 = vpack.c.b16 %v414, %v410
    %v451 = vpack.c.b16 %v415, %v411
    %v452 = vpack.c.b16 %v416, %v412
    %v453 = vpack.c.b16 %v417, %v413
    %v454 = vpack.c.b16 %v422, %v418
    %v455 = vpack.c.b16 %v423, %v419
    %v456 = vpack.c.b16 %v424, %v420
    %v457 = vpack.c.b16 %v425, %v421
    %v554 = vunpack.c.l.b16 %v233
    %v555 = vunpack.c.l.b16 %v234
    %v556 = vunpack.c.l.b16 %v235
    %v557 = vunpack.c.l.b16 %v236
    %v558 = vunpack.c.l.b16 %v237
    %v559 = vunpack.c.l.b16 %v238
    %v560 = vunpack.c.l.b16 %v239
    %v561 = vunpack.c.l.b16 %v240
    %v562 = vunpack.c.l.b16 %v241
    %v563 = vunpack.c.l.b16 %v242
    %v564 = vunpack.c.l.b16 %v243
    %v565 = vunpack.c.l.b16 %v244
    %v566 = vunpack.c.l.b16 %v245
    %v567 = vunpack.c.l.b16 %v246
    %v568 = vunpack.c.l.b16 %v247
    %v569 = vunpack.c.l.b16 %v248
    %v570 = vunpack.c.l.b16 %v249
    %v571 = vunpack.c.l.b16 %v250
    %v572 = vunpack.c.l.b16 %v251
    %v573 = vunpack.c.l.b16 %v252
    %v574 = vunpack.c.l.b16 %v253
    %v575 = vunpack.c.l.b16 %v254
    %v576 = vunpack.c.l.b16 %v255
    %v577 = vunpack.c.l.b16 %v256
    %v578 = vunpack.c.l.b16 %v257
    %v579 = vunpack.c.l.b16 %v258
    %v580 = vunpack.c.l.b16 %v259
    %v581 = vunpack.c.l.b16 %v260
    %v582 = vunpack.c.l.b16 %v261
    %v583 = vunpack.c.l.b16 %v262
    %v584 = vunpack.c.l.b16 %v263
    %v585 = vunpack.c.l.b16 %v264
    %v586 = vunpack.c.l.b16 %v265
    %v587 = vunpack.c.l.b16 %v266
    %v588 = vunpack.c.l.b16 %v267
    %v589 = vunpack.c.l.b16 %v268
    %v590 = vunpack.c.l.b16 %v269
    %v591 = vunpack.c.l.b16 %v270
    %v592 = vunpack.c.l.b16 %v271
    %v593 = vunpack.c.l.b16 %v272
    %v594 = vunpack.c.l.b16 %v273
    %v595 = vunpack.c.l.b16 %v274
    %v596 = vunpack.c.l.b16 %v275
    %v597 = vunpack.c.l.b16 %v276
    %v598 = vunpack.c.l.b16 %v277
    %v599 = vunpack.c.l.b16 %v278
    %v600 = vunpack.c.l.b16 %v279
    %v601 = vunpack.c.l.b16 %v280
    %v602 = vunpack.c.l.b16 %v281
    %v603 = vunpack.c.l.b16 %v282
    %v604 = vunpack.c.l.b16 %v283
    %v605 = vunpack.c.l.b16 %v284
    %v606 = vunpack.c.l.b16 %v285
    %v607 = vunpack.c.l.b16 %v286
    %v608 = vunpack.c.l.b16 %v287
    %v609 = vunpack.c.l.b16 %v288
    %v610 = vunpack.c.l.b16 %v289
    %v611 = vunpack.c.l.b16 %v290
    %v612 = vunpack.c.l.b16 %v291
    %v613 = vunpack.c.l.b16 %v292
    %v614 = vunpack.c.l.b16 %v293
    %v615 = vunpack.c.l.b16 %v294
    %v616 = vunpack.c.l.b16 %v295
    %v617 = vunpack.c.l.b16 %v296
    %v618 = vpack.c.b16 %v555, %v554
    %v619 = vpack.c.b16 %v557, %v556
    %v620 = vpack.c.b16 %v559, %v558
    %v621 = vpack.c.b16 %v561, %v560
    %v622 = vpack.c.b16 %v563, %v562
    %v623 = vpack.c.b16 %v565, %v564
    %v624 = vpack.c.b16 %v567, %v566
    %v625 = vpack.c.b16 %v569, %v568
    %v626 = vpack.c.b16 %v571, %v570
    %v627 = vpack.c.b16 %v573, %v572
    %v628 = vpack.c.b16 %v575, %v574
    %v629 = vpack.c.b16 %v577, %v576
    %v630 = vpack.c.b16 %v579, %v578
    %v631 = vpack.c.b16 %v581, %v580
    %v632 = vpack.c.b16 %v583, %v582
    %v633 = vpack.c.b16 %v585, %v584
    %v634 = vpack.c.b16 %v587, %v586
    %v635 = vpack.c.b16 %v589, %v588
    %v636 = vpack.c.b16 %v591, %v590
    %v637 = vpack.c.b16 %v593, %v592
    %v638 = vpack.c.b16 %v595, %v594
    %v639 = vpack.c.b16 %v597, %v596
    %v640 = vpack.c.b16 %v599, %v598
    %v641 = vpack.c.b16 %v601, %v600
    %v642 = vpack.c.b16 %v603, %v602
    %v643 = vpack.c.b16 %v605, %v604
    %v644 = vpack.c.b16 %v607, %v606
    %v645 = vpack.c.b16 %v609, %v608
    %v646 = vpack.c.b16 %v611, %v610
    %v647 = vpack.c.b16 %v613, %v612
    %v648 = vpack.c.b16 %v615, %v614
    %v649 = vpack.c.b16 %v617, %v616
    %682 = vmatprep.subr.bf16.mxu0 0
    %683 = vmatpush1.bf16.msra.mxu0 %v618
    %684 = vmatprep.subr.bf16.mxu0 0
    %685 = vmatpush1.bf16.msra.mxu0 %v619
    %686 = vmatprep.subr.bf16.mxu0 0
    %687 = vmatpush1.bf16.msra.mxu0 %v620
    %688 = vmatprep.subr.bf16.mxu0 0
    %689 = vmatpush1.bf16.msra.mxu0 %v621
    %690 = vmatprep.subr.bf16.mxu0 0
    %691 = vmatpush1.bf16.msra.mxu0 %v622
    %692 = vmatprep.subr.bf16.mxu0 0
    %693 = vmatpush1.bf16.msra.mxu0 %v623
    %694 = vmatprep.subr.bf16.mxu0 0
    %695 = vmatpush1.bf16.msra.mxu0 %v624
    %696 = vmatprep.subr.bf16.mxu0 0
    %697 = vmatpush1.bf16.msra.mxu0 %v625
    %698 = vmatprep.subr.bf16.mxu0 0
    %699 = vmatpush1.bf16.msra.mxu0 %v626
    %700 = vmatprep.subr.bf16.mxu0 0
    %701 = vmatpush1.bf16.msra.mxu0 %v627
    %702 = vmatprep.subr.bf16.mxu0 0
    %703 = vmatpush1.bf16.msra.mxu0 %v628
    %704 = vmatprep.subr.bf16.mxu0 0
    %705 = vmatpush1.bf16.msra.mxu0 %v629
    %706 = vmatprep.subr.bf16.mxu0 0
    %707 = vmatpush1.bf16.msra.mxu0 %v630
    %708 = vmatprep.subr.bf16.mxu0 0
    %709 = vmatpush1.bf16.msra.mxu0 %v631
    %710 = vmatprep.subr.bf16.mxu0 0
    %711 = vmatpush1.bf16.msra.mxu0 %v632
    %712 = vmatprep.subr.bf16.mxu0 0
    %713 = vmatpush1.bf16.msra.mxu0 %v633
    %714 = vmatprep.mubr.bf16.mxu0 %v427
    %715 = vmatmul.mubr.bf16.gmra.mrb[0].mxu0 %v426
    %v716 = vpop.f32.mrb[0].mxu0
    %v717 = vadd.f32 0.0, %v716
    %v718 = vpop.f32.mrb[0].mxu0
    %v719 = vpop.f32.mrb[0].mxu0
    %v720 = vadd.f32 0.0, %v719
    %v721 = vpop.f32.mrb[0].mxu0
    %722 = vmatprep.mubr.bf16.mxu0 %v431
    %723 = vmatmul.mubr.bf16.gmra.mrb[0].mxu0 %v430
    %v724 = vpop.f32.mrb[0].mxu0
    %v725 = vadd.f32 0.0, %v724
    %v726 = vpop.f32.mrb[0].mxu0
    %v727 = vpop.f32.mrb[0].mxu0
    %v728 = vadd.f32 0.0, %v727
    %v729 = vpop.f32.mrb[0].mxu0
    %730 = vmatprep.mubr.bf16.mxu0 %v435
    %731 = vmatmul.mubr.bf16.gmra.mrb[0].mxu0 %v434
    %v732 = vpop.f32.mrb[0].mxu0
    %v733 = vadd.f32 0.0, %v732
    %v734 = vpop.f32.mrb[0].mxu0
    %v735 = vpop.f32.mrb[0].mxu0
    %v736 = vadd.f32 0.0, %v735
    %v737 = vpop.f32.mrb[0].mxu0
    %738 = vmatprep.mubr.bf16.mxu0 %v439
    %739 = vmatmul.mubr.bf16.gmra.mrb[0].mxu0 %v438
    %v740 = vpop.f32.mrb[0].mxu0
    %v741 = vadd.f32 0.0, %v740
    %v742 = vpop.f32.mrb[0].mxu0
    %v743 = vpop.f32.mrb[0].mxu0
    %v744 = vadd.f32 0.0, %v743
    %v745 = vpop.f32.mrb[0].mxu0
    %746 = vmatprep.mubr.bf16.mxu0 %v443
    %747 = vmatmul.mubr.bf16.gmra.mrb[0].mxu0 %v442
    %v748 = vpop.f32.mrb[0].mxu0
    %v749 = vadd.f32 0.0, %v748
    %v750 = vpop.f32.mrb[0].mxu0
    %v751 = vpop.f32.mrb[0].mxu0
    %v752 = vadd.f32 0.0, %v751
    %v753 = vpop.f32.mrb[0].mxu0
    %754 = vmatprep.mubr.bf16.mxu0 %v447
    %755 = vmatmul.mubr.bf16.gmra.mrb[0].mxu0 %v446
    %v756 = vpop.f32.mrb[0].mxu0
    %v757 = vadd.f32 0.0, %v756
    %v758 = vpop.f32.mrb[0].mxu0
    %v759 = vpop.f32.mrb[0].mxu0
    %v760 = vadd.f32 0.0, %v759
    %v761 = vpop.f32.mrb[0].mxu0
    %762 = vmatprep.mubr.bf16.mxu0 %v451
    %763 = vmatmul.mubr.bf16.gmra.mrb[0].mxu0 %v450
    %v764 = vpop.f32.mrb[0].mxu0
    %v765 = vadd.f32 0.0, %v764
    %v766 = vpop.f32.mrb[0].mxu0
    %v767 = vpop.f32.mrb[0].mxu0
    %v768 = vadd.f32 0.0, %v767
    %v769 = vpop.f32.mrb[0].mxu0
    %770 = vmatprep.mubr.bf16.mxu0 %v455
    %771 = vmatmul.mubr.bf16.gmra.mrb[0].mxu0 %v454
    %v772 = vpop.f32.mrb[0].mxu0
    %v773 = vadd.f32 0.0, %v772
    %v774 = vpop.f32.mrb[0].mxu0
    %v775 = vpop.f32.mrb[0].mxu0
    %v776 = vadd.f32 0.0, %v775
    %v777 = vpop.f32.mrb[0].mxu0
    %778 = vdwg.mxu0
    %779 = vmatprep.subr.bf16.mxu0 0
    %780 = vmatpush1.bf16.msra.mxu0 %v634
    %781 = vmatprep.subr.bf16.mxu0 0
    %782 = vmatpush1.bf16.msra.mxu0 %v635
    %783 = vmatprep.subr.bf16.mxu0 0
    %784 = vmatpush1.bf16.msra.mxu0 %v636
    %785 = vmatprep.subr.bf16.mxu0 0
    %786 = vmatpush1.bf16.msra.mxu0 %v637
    %787 = vmatprep.subr.bf16.mxu0 0
    %788 = vmatpush1.bf16.msra.mxu0 %v638
    %789 = vmatprep.subr.bf16.mxu0 0
    %790 = vmatpush1.bf16.msra.mxu0 %v639
    %791 = vmatprep.subr.bf16.mxu0 0
    %792 = vmatpush1.bf16.msra.mxu0 %v640
    %793 = vmatprep.subr.bf16.mxu0 0
    %794 = vmatpush1.bf16.msra.mxu0 %v641
    %795 = vmatprep.subr.bf16.mxu0 0
    %796 = vmatpush1.bf16.msra.mxu0 %v642
    %797 = vmatprep.subr.bf16.mxu0 0
    %798 = vmatpush1.bf16.msra.mxu0 %v643
    %799 = vmatprep.subr.bf16.mxu0 0
    %800 = vmatpush1.bf16.msra.mxu0 %v644
    %801 = vmatprep.subr.bf16.mxu0 0
    %802 = vmatpush1.bf16.msra.mxu0 %v645
    %803 = vmatprep.subr.bf16.mxu0 0
    %804 = vmatpush1.bf16.msra.mxu0 %v646
    %805 = vmatprep.subr.bf16.mxu0 0
    %806 = vmatpush1.bf16.msra.mxu0 %v647
    %807 = vmatprep.subr.bf16.mxu0 0
    %808 = vmatpush1.bf16.msra.mxu0 %v648
    %809 = vmatprep.subr.bf16.mxu0 0
    %810 = vmatpush1.bf16.msra.mxu0 %v649
    %811 = vmatprep.mubr.bf16.mxu0 %v429
    %812 = vmatmul.mubr.bf16.gmra.mrb[0].mxu0 %v428
    %v813 = vpop.f32.mrb[0].mxu0
    %v814 = vadd.f32 %v717, %v813
    %v815 = vpop.f32.mrb[0].mxu0
    %v816 = vpop.f32.mrb[0].mxu0
    %v817 = vadd.f32 %v720, %v816
    %v818 = vpop.f32.mrb[0].mxu0
    %819 = vmatprep.mubr.bf16.mxu0 %v433
    %820 = vmatmul.mubr.bf16.gmra.mrb[0].mxu0 %v432
    %v821 = vpop.f32.mrb[0].mxu0
    %v822 = vadd.f32 %v725, %v821
    %v823 = vpop.f32.mrb[0].mxu0
    %v824 = vpop.f32.mrb[0].mxu0
    %v825 = vadd.f32 %v728, %v824
    %v826 = vpop.f32.mrb[0].mxu0
    %827 = vmatprep.mubr.bf16.mxu0 %v437
    %828 = vmatmul.mubr.bf16.gmra.mrb[0].mxu0 %v436
    %v829 = vpop.f32.mrb[0].mxu0
    %v830 = vadd.f32 %v733, %v829
    %v831 = vpop.f32.mrb[0].mxu0
    %v832 = vpop.f32.mrb[0].mxu0
    %v833 = vadd.f32 %v736, %v832
    %v834 = vpop.f32.mrb[0].mxu0
    %835 = vmatprep.mubr.bf16.mxu0 %v441
    %836 = vmatmul.mubr.bf16.gmra.mrb[0].mxu0 %v440
    %v837 = vpop.f32.mrb[0].mxu0
    %v838 = vadd.f32 %v741, %v837
    %v839 = vpop.f32.mrb[0].mxu0
    %v840 = vpop.f32.mrb[0].mxu0
    %v841 = vadd.f32 %v744, %v840
    %v842 = vpop.f32.mrb[0].mxu0
    %843 = vmatprep.mubr.bf16.mxu0 %v445
    %844 = vmatmul.mubr.bf16.gmra.mrb[0].mxu0 %v444
    %v845 = vpop.f32.mrb[0].mxu0
    %v846 = vadd.f32 %v749, %v845
    %v847 = vpop.f32.mrb[0].mxu0
    %v848 = vpop.f32.mrb[0].mxu0
    %v849 = vadd.f32 %v752, %v848
    %v850 = vpop.f32.mrb[0].mxu0
    %851 = vmatprep.mubr.bf16.mxu0 %v449
    %852 = vmatmul.mubr.bf16.gmra.mrb[0].mxu0 %v448
    %v853 = vpop.f32.mrb[0].mxu0
    %v854 = vadd.f32 %v757, %v853
    %v855 = vpop.f32.mrb[0].mxu0
    %v856 = vpop.f32.mrb[0].mxu0
    %v857 = vadd.f32 %v760, %v856
    %v858 = vpop.f32.mrb[0].mxu0
    %859 = vmatprep.mubr.bf16.mxu0 %v453
    %860 = vmatmul.mubr.bf16.gmra.mrb[0].mxu0 %v452
    %v861 = vpop.f32.mrb[0].mxu0
    %v862 = vadd.f32 %v765, %v861
    %v863 = vpop.f32.mrb[0].mxu0
    %v864 = vpop.f32.mrb[0].mxu0
    %v865 = vadd.f32 %v768, %v864
    %v866 = vpop.f32.mrb[0].mxu0
    %867 = vmatprep.mubr.bf16.mxu0 %v457
    %868 = vmatmul.mubr.bf16.gmra.mrb[0].mxu0 %v456
    %v869 = vpop.f32.mrb[0].mxu0
    %v870 = vadd.f32 %v773, %v869
    %v871 = vpop.f32.mrb[0].mxu0
    %v872 = vpop.f32.mrb[0].mxu0
    %v873 = vadd.f32 %v776, %v872
    %v874 = vpop.f32.mrb[0].mxu0
    %875 = vdwg.mxu0
    %v876 = vpack.c.bf16 %v817, %v814
    %v877 = vpack.c.bf16 %v825, %v822
    %v878 = vpack.c.bf16 %v833, %v830
    %v879 = vpack.c.bf16 %v841, %v838
    %v880 = vpack.c.bf16 %v849, %v846
    %v881 = vpack.c.bf16 %v857, %v854
    %v882 = vpack.c.bf16 %v865, %v862
    %v883 = vpack.c.bf16 %v873, %v870
    %v884 = vld [vmem:[#allocation2 + $0x100] sm:$0xff]
    %v885 = vld [vmem:[#allocation2 + $0x108] sm:$0xff]
    %v886 = vld [vmem:[#allocation2 + $0x110] sm:$0xff]
    %v887 = vld [vmem:[#allocation2 + $0x118] sm:$0xff]
    %v888 = vld [vmem:[#allocation2 + $0x120] sm:$0xff]
    %v889 = vld [vmem:[#allocation2 + $0x128] sm:$0xff]
    %v890 = vld [vmem:[#allocation2 + $0x130] sm:$0xff]
    %v891 = vld [vmem:[#allocation2 + $0x138] sm:$0xff]
    %v892 = vld [vmem:[#allocation2 + $0x140] sm:$0xff]
    %v893 = vld [vmem:[#allocation2 + $0x148] sm:$0xff]
    %v894 = vld [vmem:[#allocation2 + $0x150] sm:$0xff]
    %v895 = vld [vmem:[#allocation2 + $0x158] sm:$0xff]
    %v896 = vld [vmem:[#allocation2 + $0x160] sm:$0xff]
    %v897 = vld [vmem:[#allocation2 + $0x168] sm:$0xff]
    %v898 = vld [vmem:[#allocation2 + $0x170] sm:$0xff]
    %v899 = vld [vmem:[#allocation2 + $0x178] sm:$0xff]
    %v900 = vld [vmem:[#allocation2 + $0x180] sm:$0xff]
    %v901 = vld [vmem:[#allocation2 + $0x188] sm:$0xff]
    %v902 = vld [vmem:[#allocation2 + $0x190] sm:$0xff]
    %v903 = vld [vmem:[#allocation2 + $0x198] sm:$0xff]
    %v904 = vld [vmem:[#allocation2 + $0x1a0] sm:$0xff]
    %v905 = vld [vmem:[#allocation2 + $0x1a8] sm:$0xff]
    %v906 = vld [vmem:[#allocation2 + $0x1b0] sm:$0xff]
    %v907 = vld [vmem:[#allocation2 + $0x1b8] sm:$0xff]
    %v908 = vld [vmem:[#allocation2 + $0x1c0] sm:$0xff]
    %v909 = vld [vmem:[#allocation2 + $0x1c8] sm:$0xff]
    %v910 = vld [vmem:[#allocation2 + $0x1d0] sm:$0xff]
    %v911 = vld [vmem:[#allocation2 + $0x1d8] sm:$0xff]
    %v912 = vld [vmem:[#allocation2 + $0x1e0] sm:$0xff]
    %v913 = vld [vmem:[#allocation2 + $0x1e8] sm:$0xff]
    %v914 = vld [vmem:[#allocation2 + $0x1f0] sm:$0xff]
    %v915 = vld [vmem:[#allocation2 + $0x1f8] sm:$0xff]
    %v916 = vld [vmem:[%s2 + $0x4] sm:$0xf]
    %v949 = vunpack.c.l.b16 %v884
    %v950 = vunpack.c.h.b16 %v884
    %v951 = vunpack.c.l.b16 %v885
    %v952 = vunpack.c.h.b16 %v885
    %v953 = vunpack.c.l.b16 %v886
    %v954 = vunpack.c.h.b16 %v886
    %v955 = vunpack.c.l.b16 %v887
    %v956 = vunpack.c.h.b16 %v887
    %v957 = vunpack.c.l.b16 %v888
    %v958 = vunpack.c.h.b16 %v888
    %v959 = vunpack.c.l.b16 %v889
    %v960 = vunpack.c.h.b16 %v889
    %v961 = vunpack.c.l.b16 %v890
    %v962 = vunpack.c.h.b16 %v890
    %v963 = vunpack.c.l.b16 %v891
    %v964 = vunpack.c.h.b16 %v891
    %v965 = vunpack.c.l.b16 %v892
    %v966 = vunpack.c.h.b16 %v892
    %v967 = vunpack.c.l.b16 %v893
    %v968 = vunpack.c.h.b16 %v893
    %v969 = vunpack.c.l.b16 %v894
    %v970 = vunpack.c.h.b16 %v894
    %v971 = vunpack.c.l.b16 %v895
    %v972 = vunpack.c.h.b16 %v895
    %v973 = vunpack.c.l.b16 %v896
    %v974 = vunpack.c.h.b16 %v896
    %v975 = vunpack.c.l.b16 %v897
    %v976 = vunpack.c.h.b16 %v897
    %v977 = vunpack.c.l.b16 %v898
    %v978 = vunpack.c.h.b16 %v898
    %v979 = vunpack.c.l.b16 %v899
    %v980 = vunpack.c.h.b16 %v899
    %v981 = vunpack.c.l.b16 %v900
    %v982 = vunpack.c.h.b16 %v900
    %v983 = vunpack.c.l.b16 %v901
    %v984 = vunpack.c.h.b16 %v901
    %v985 = vunpack.c.l.b16 %v902
    %v986 = vunpack.c.h.b16 %v902
    %v987 = vunpack.c.l.b16 %v903
    %v988 = vunpack.c.h.b16 %v903
    %v989 = vunpack.c.l.b16 %v904
    %v990 = vunpack.c.h.b16 %v904
    %v991 = vunpack.c.l.b16 %v905
    %v992 = vunpack.c.h.b16 %v905
    %v993 = vunpack.c.l.b16 %v906
    %v994 = vunpack.c.h.b16 %v906
    %v995 = vunpack.c.l.b16 %v907
    %v996 = vunpack.c.h.b16 %v907
    %v997 = vunpack.c.l.b16 %v908
    %v998 = vunpack.c.h.b16 %v908
    %v999 = vunpack.c.l.b16 %v909
    %v1000 = vunpack.c.h.b16 %v909
    %v1001 = vunpack.c.l.b16 %v910
    %v1002 = vunpack.c.h.b16 %v910
    %v1003 = vunpack.c.l.b16 %v911
    %v1004 = vunpack.c.h.b16 %v911
    %v1005 = vunpack.c.l.b16 %v912
    %v1006 = vunpack.c.h.b16 %v912
    %v1007 = vunpack.c.l.b16 %v913
    %v1008 = vunpack.c.h.b16 %v913
    %v1009 = vunpack.c.l.b16 %v914
    %v1010 = vunpack.c.h.b16 %v914
    %v1011 = vunpack.c.l.b16 %v915
    %v1012 = vunpack.c.h.b16 %v915
    %v1013 = vpack.c.b16 %v953, %v949
    %v1014 = vpack.c.b16 %v954, %v950
    %v1015 = vpack.c.b16 %v955, %v951
    %v1016 = vpack.c.b16 %v956, %v952
    %v1017 = vpack.c.b16 %v961, %v957
    %v1018 = vpack.c.b16 %v962, %v958
    %v1019 = vpack.c.b16 %v963, %v959
    %v1020 = vpack.c.b16 %v964, %v960
    %v1021 = vpack.c.b16 %v969, %v965
    %v1022 = vpack.c.b16 %v970, %v966
    %v1023 = vpack.c.b16 %v971, %v967
    %v1024 = vpack.c.b16 %v972, %v968
    %v1025 = vpack.c.b16 %v977, %v973
    %v1026 = vpack.c.b16 %v978, %v974
    %v1027 = vpack.c.b16 %v979, %v975
    %v1028 = vpack.c.b16 %v980, %v976
    %v1029 = vpack.c.b16 %v985, %v981
    %v1030 = vpack.c.b16 %v986, %v982
    %v1031 = vpack.c.b16 %v987, %v983
    %v1032 = vpack.c.b16 %v988, %v984
    %v1033 = vpack.c.b16 %v993, %v989
    %v1034 = vpack.c.b16 %v994, %v990
    %v1035 = vpack.c.b16 %v995, %v991
    %v1036 = vpack.c.b16 %v996, %v992
    %v1037 = vpack.c.b16 %v1001, %v997
    %v1038 = vpack.c.b16 %v1002, %v998
    %v1039 = vpack.c.b16 %v1003, %v999
    %v1040 = vpack.c.b16 %v1004, %v1000
    %v1041 = vpack.c.b16 %v1009, %v1005
    %v1042 = vpack.c.b16 %v1010, %v1006
    %v1043 = vpack.c.b16 %v1011, %v1007
    %v1044 = vpack.c.b16 %v1012, %v1008
    %1077 = vmatprep.subr.bf16.mxu0 0
    %1078 = vmatpush1.bf16.msra.mxu0 %v618
    %1079 = vmatprep.subr.bf16.mxu0 0
    %1080 = vmatpush1.bf16.msra.mxu0 %v619
    %1081 = vmatprep.subr.bf16.mxu0 0
    %1082 = vmatpush1.bf16.msra.mxu0 %v620
    %1083 = vmatprep.subr.bf16.mxu0 0
    %1084 = vmatpush1.bf16.msra.mxu0 %v621
    %1085 = vmatprep.subr.bf16.mxu0 0
    %1086 = vmatpush1.bf16.msra.mxu0 %v622
    %1087 = vmatprep.subr.bf16.mxu0 0
    %1088 = vmatpush1.bf16.msra.mxu0 %v623
    %1089 = vmatprep.subr.bf16.mxu0 0
    %1090 = vmatpush1.bf16.msra.mxu0 %v624
    %1091 = vmatprep.subr.bf16.mxu0 0
    %1092 = vmatpush1.bf16.msra.mxu0 %v625
    %1093 = vmatprep.subr.bf16.mxu0 0
    %1094 = vmatpush1.bf16.msra.mxu0 %v626
    %1095 = vmatprep.subr.bf16.mxu0 0
    %1096 = vmatpush1.bf16.msra.mxu0 %v627
    %1097 = vmatprep.subr.bf16.mxu0 0
    %1098 = vmatpush1.bf16.msra.mxu0 %v628
    %1099 = vmatprep.subr.bf16.mxu0 0
    %1100 = vmatpush1.bf16.msra.mxu0 %v629
    %1101 = vmatprep.subr.bf16.mxu0 0
    %1102 = vmatpush1.bf16.msra.mxu0 %v630
    %1103 = vmatprep.subr.bf16.mxu0 0
    %1104 = vmatpush1.bf16.msra.mxu0 %v631
    %1105 = vmatprep.subr.bf16.mxu0 0
    %1106 = vmatpush1.bf16.msra.mxu0 %v632
    %1107 = vmatprep.subr.bf16.mxu0 0
    %1108 = vmatpush1.bf16.msra.mxu0 %v633
    %1109 = vmatprep.mubr.bf16.mxu0 %v1014
    %1110 = vmatmul.mubr.bf16.gmra.mrb[0].mxu0 %v1013
    %v1111 = vpop.f32.mrb[0].mxu0
    %v1112 = vadd.f32 0.0, %v1111
    %v1113 = vpop.f32.mrb[0].mxu0
    %v1114 = vpop.f32.mrb[0].mxu0
    %v1115 = vadd.f32 0.0, %v1114
    %v1116 = vpop.f32.mrb[0].mxu0
    %1117 = vmatprep.mubr.bf16.mxu0 %v1018
    %1118 = vmatmul.mubr.bf16.gmra.mrb[0].mxu0 %v1017
    %v1119 = vpop.f32.mrb[0].mxu0
    %v1120 = vadd.f32 0.0, %v1119
    %v1121 = vpop.f32.mrb[0].mxu0
    %v1122 = vpop.f32.mrb[0].mxu0
    %v1123 = vadd.f32 0.0, %v1122
    %v1124 = vpop.f32.mrb[0].mxu0
    %1125 = vmatprep.mubr.bf16.mxu0 %v1022
    %1126 = vmatmul.mubr.bf16.gmra.mrb[0].mxu0 %v1021
    %v1127 = vpop.f32.mrb[0].mxu0
    %v1128 = vadd.f32 0.0, %v1127
    %v1129 = vpop.f32.mrb[0].mxu0
    %v1130 = vpop.f32.mrb[0].mxu0
    %v1131 = vadd.f32 0.0, %v1130
    %v1132 = vpop.f32.mrb[0].mxu0
    %1133 = vmatprep.mubr.bf16.mxu0 %v1026
    %1134 = vmatmul.mubr.bf16.gmra.mrb[0].mxu0 %v1025
    %v1135 = vpop.f32.mrb[0].mxu0
    %v1136 = vadd.f32 0.0, %v1135
    %v1137 = vpop.f32.mrb[0].mxu0
    %v1138 = vpop.f32.mrb[0].mxu0
    %v1139 = vadd.f32 0.0, %v1138
    %v1140 = vpop.f32.mrb[0].mxu0
    %1141 = vmatprep.mubr.bf16.mxu0 %v1030
    %1142 = vmatmul.mubr.bf16.gmra.mrb[0].mxu0 %v1029
    %v1143 = vpop.f32.mrb[0].mxu0
    %v1144 = vadd.f32 0.0, %v1143
    %v1145 = vpop.f32.mrb[0].mxu0
    %v1146 = vpop.f32.mrb[0].mxu0
    %v1147 = vadd.f32 0.0, %v1146
    %v1148 = vpop.f32.mrb[0].mxu0
    %1149 = vmatprep.mubr.bf16.mxu0 %v1034
    %1150 = vmatmul.mubr.bf16.gmra.mrb[0].mxu0 %v1033
    %v1151 = vpop.f32.mrb[0].mxu0
    %v1152 = vadd.f32 0.0, %v1151
    %v1153 = vpop.f32.mrb[0].mxu0
    %v1154 = vpop.f32.mrb[0].mxu0
    %v1155 = vadd.f32 0.0, %v1154
    %v1156 = vpop.f32.mrb[0].mxu0
    %1157 = vmatprep.mubr.bf16.mxu0 %v1038
    %1158 = vmatmul.mubr.bf16.gmra.mrb[0].mxu0 %v1037
    %v1159 = vpop.f32.mrb[0].mxu0
    %v1160 = vadd.f32 0.0, %v1159
    %v1161 = vpop.f32.mrb[0].mxu0
    %v1162 = vpop.f32.mrb[0].mxu0
    %v1163 = vadd.f32 0.0, %v1162
    %v1164 = vpop.f32.mrb[0].mxu0
    %1165 = vmatprep.mubr.bf16.mxu0 %v1042
    %1166 = vmatmul.mubr.bf16.gmra.mrb[0].mxu0 %v1041
    %v1167 = vpop.f32.mrb[0].mxu0
    %v1168 = vadd.f32 0.0, %v1167
    %v1169 = vpop.f32.mrb[0].mxu0
    %v1170 = vpop.f32.mrb[0].mxu0
    %v1171 = vadd.f32 0.0, %v1170
    %v1172 = vpop.f32.mrb[0].mxu0
    %1173 = vdwg.mxu0
    %1174 = vmatprep.subr.bf16.mxu0 0
    %1175 = vmatpush1.bf16.msra.mxu0 %v634
    %1176 = vmatprep.subr.bf16.mxu0 0
    %1177 = vmatpush1.bf16.msra.mxu0 %v635
    %1178 = vmatprep.subr.bf16.mxu0 0
    %1179 = vmatpush1.bf16.msra.mxu0 %v636
    %1180 = vmatprep.subr.bf16.mxu0 0
    %1181 = vmatpush1.bf16.msra.mxu0 %v637
    %1182 = vmatprep.subr.bf16.mxu0 0
    %1183 = vmatpush1.bf16.msra.mxu0 %v638
    %1184 = vmatprep.subr.bf16.mxu0 0
    %1185 = vmatpush1.bf16.msra.mxu0 %v639
    %1186 = vmatprep.subr.bf16.mxu0 0
    %1187 = vmatpush1.bf16.msra.mxu0 %v640
    %1188 = vmatprep.subr.bf16.mxu0 0
    %1189 = vmatpush1.bf16.msra.mxu0 %v641
    %1190 = vmatprep.subr.bf16.mxu0 0
    %1191 = vmatpush1.bf16.msra.mxu0 %v642
    %1192 = vmatprep.subr.bf16.mxu0 0
    %1193 = vmatpush1.bf16.msra.mxu0 %v643
    %1194 = vmatprep.subr.bf16.mxu0 0
    %1195 = vmatpush1.bf16.msra.mxu0 %v644
    %1196 = vmatprep.subr.bf16.mxu0 0
    %1197 = vmatpush1.bf16.msra.mxu0 %v645
    %1198 = vmatprep.subr.bf16.mxu0 0
    %1199 = vmatpush1.bf16.msra.mxu0 %v646
    %1200 = vmatprep.subr.bf16.mxu0 0
    %1201 = vmatpush1.bf16.msra.mxu0 %v647
    %1202 = vmatprep.subr.bf16.mxu0 0
    %1203 = vmatpush1.bf16.msra.mxu0 %v648
    %1204 = vmatprep.subr.bf16.mxu0 0
    %1205 = vmatpush1.bf16.msra.mxu0 %v649
    %1206 = vmatprep.mubr.bf16.mxu0 %v1016
    %1207 = vmatmul.mubr.bf16.gmra.mrb[0].mxu0 %v1015
    %v1208 = vpop.f32.mrb[0].mxu0
    %v1209 = vadd.f32 %v1112, %v1208
    %v1210 = vpop.f32.mrb[0].mxu0
    %v1211 = vpop.f32.mrb[0].mxu0
    %v1212 = vadd.f32 %v1115, %v1211
    %v1213 = vpop.f32.mrb[0].mxu0
    %1214 = vmatprep.mubr.bf16.mxu0 %v1020
    %1215 = vmatmul.mubr.bf16.gmra.mrb[0].mxu0 %v1019
    %v1216 = vpop.f32.mrb[0].mxu0
    %v1217 = vadd.f32 %v1120, %v1216
    %v1218 = vpop.f32.mrb[0].mxu0
    %v1219 = vpop.f32.mrb[0].mxu0
    %v1220 = vadd.f32 %v1123, %v1219
    %v1221 = vpop.f32.mrb[0].mxu0
    %1222 = vmatprep.mubr.bf16.mxu0 %v1024
    %1223 = vmatmul.mubr.bf16.gmra.mrb[0].mxu0 %v1023
    %v1224 = vpop.f32.mrb[0].mxu0
    %v1225 = vadd.f32 %v1128, %v1224
    %v1226 = vpop.f32.mrb[0].mxu0
    %v1227 = vpop.f32.mrb[0].mxu0
    %v1228 = vadd.f32 %v1131, %v1227
    %v1229 = vpop.f32.mrb[0].mxu0
    %1230 = vmatprep.mubr.bf16.mxu0 %v1028
    %1231 = vmatmul.mubr.bf16.gmra.mrb[0].mxu0 %v1027
    %v1232 = vpop.f32.mrb[0].mxu0
    %v1233 = vadd.f32 %v1136, %v1232
    %v1234 = vpop.f32.mrb[0].mxu0
    %v1235 = vpop.f32.mrb[0].mxu0
    %v1236 = vadd.f32 %v1139, %v1235
    %v1237 = vpop.f32.mrb[0].mxu0
    %1238 = vmatprep.mubr.bf16.mxu0 %v1032
    %1239 = vmatmul.mubr.bf16.gmra.mrb[0].mxu0 %v1031
    %v1240 = vpop.f32.mrb[0].mxu0
    %v1241 = vadd.f32 %v1144, %v1240
    %v1242 = vpop.f32.mrb[0].mxu0
    %v1243 = vpop.f32.mrb[0].mxu0
    %v1244 = vadd.f32 %v1147, %v1243
    %v1245 = vpop.f32.mrb[0].mxu0
    %1246 = vmatprep.mubr.bf16.mxu0 %v1036
    %1247 = vmatmul.mubr.bf16.gmra.mrb[0].mxu0 %v1035
    %v1248 = vpop.f32.mrb[0].mxu0
    %v1249 = vadd.f32 %v1152, %v1248
    %v1250 = vpop.f32.mrb[0].mxu0
    %v1251 = vpop.f32.mrb[0].mxu0
    %v1252 = vadd.f32 %v1155, %v1251
    %v1253 = vpop.f32.mrb[0].mxu0
    %1254 = vmatprep.mubr.bf16.mxu0 %v1040
    %1255 = vmatmul.mubr.bf16.gmra.mrb[0].mxu0 %v1039
    %v1256 = vpop.f32.mrb[0].mxu0
    %v1257 = vadd.f32 %v1160, %v1256
    %v1258 = vpop.f32.mrb[0].mxu0
    %v1259 = vpop.f32.mrb[0].mxu0
    %v1260 = vadd.f32 %v1163, %v1259
    %v1261 = vpop.f32.mrb[0].mxu0
    %1262 = vmatprep.mubr.bf16.mxu0 %v1044
    %1263 = vmatmul.mubr.bf16.gmra.mrb[0].mxu0 %v1043
    %v1264 = vpop.f32.mrb[0].mxu0
    %v1265 = vadd.f32 %v1168, %v1264
    %v1266 = vpop.f32.mrb[0].mxu0
    %v1267 = vpop.f32.mrb[0].mxu0
    %v1268 = vadd.f32 %v1171, %v1267
    %v1269 = vpop.f32.mrb[0].mxu0
    %1270 = vdwg.mxu0
    %v1271 = vpack.c.bf16 %v1212, %v1209
    %v1272 = vpack.c.bf16 %v1220, %v1217
    %v1273 = vpack.c.bf16 %v1228, %v1225
    %v1274 = vpack.c.bf16 %v1236, %v1233
    %v1275 = vpack.c.bf16 %v1244, %v1241
    %v1276 = vpack.c.bf16 %v1252, %v1249
    %v1277 = vpack.c.bf16 %v1260, %v1257
    %v1278 = vpack.c.bf16 %v1268, %v1265
    %vm1279 = vcmask 64512
    %v1281 = vsel %vm1279, %v1271, 0
    %v1284 = vsel %vm1279, %v1272, 0
    %v1287 = vsel %vm1279, %v1273, 0
    %v1290 = vsel %vm1279, %v1274, 0
    %v1293 = vsel %vm1279, %v1275, 0
    %v1296 = vsel %vm1279, %v1276, 0
    %v1299 = vsel %vm1279, %v1277, 0
    %v1302 = vsel %vm1279, %v1278, 0
    %vm1304 = vcmask 1043456
    %v1306 = vsel %vm1304, %v916, 0
    %1308 = vmatprep.subr.bf16.mxu0 0
    %1309 = vmatpush1.bf16.msra.mxu0 %v1306
    %1310 = vmatprep.subr.bf16.mxu0 0
    %1311 = vmatpush1.bf16.msra.mxu0 0
    %1312 = vmatprep.subr.bf16.mxu0 0
    %1313 = vmatpush1.bf16.msra.mxu0 0
    %1314 = vmatprep.subr.bf16.mxu0 0
    %1315 = vmatpush1.bf16.msra.mxu0 0
    %1316 = vmatprep.subr.bf16.mxu0 0
    %1317 = vmatpush1.bf16.msra.mxu0 0
    %1318 = vmatprep.subr.bf16.mxu0 0
    %1319 = vmatpush1.bf16.msra.mxu0 0
    %1320 = vmatprep.subr.bf16.mxu0 0
    %1321 = vmatpush1.bf16.msra.mxu0 0
    %1322 = vmatprep.subr.bf16.mxu0 0
    %1323 = vmatpush1.bf16.msra.mxu0 0
    %1324 = vmatprep.subr.bf16.mxu0 0
    %1325 = vmatpush1.bf16.msra.mxu0 0
    %1326 = vmatprep.subr.bf16.mxu0 0
    %1327 = vmatpush1.bf16.msra.mxu0 0
    %1328 = vmatprep.subr.bf16.mxu0 0
    %1329 = vmatpush1.bf16.msra.mxu0 0
    %1330 = vmatprep.subr.bf16.mxu0 0
    %1331 = vmatpush1.bf16.msra.mxu0 0
    %1332 = vmatprep.subr.bf16.mxu0 0
    %1333 = vmatpush1.bf16.msra.mxu0 0
    %1334 = vmatprep.subr.bf16.mxu0 0
    %1335 = vmatpush1.bf16.msra.mxu0 0
    %1336 = vmatprep.subr.bf16.mxu0 0
    %1337 = vmatpush1.bf16.msra.mxu0 0
    %1338 = vmatprep.subr.bf16.mxu0 0
    %1339 = vmatpush1.bf16.msra.mxu0 0
    %1340 = vmatprep.mubr.bf16.mxu0 0
    %1341 = vmatmul.mubr.bf16.gmra.mrb[0].mxu0 %v1281
    %v1342 = vpop.f32.mrb[0].mxu0
    %v1343 = vadd.f32 0.0, %v1342
    %v1344 = vpop.f32.mrb[0].mxu0
    %v1345 = vpop.f32.mrb[0].mxu0
    %v1346 = vadd.f32 0.0, %v1345
    %v1347 = vpop.f32.mrb[0].mxu0
    %1348 = vmatprep.mubr.bf16.mxu0 0
    %1349 = vmatmul.mubr.bf16.gmra.mrb[0].mxu0 %v1284
    %v1350 = vpop.f32.mrb[0].mxu0
    %v1351 = vadd.f32 0.0, %v1350
    %v1352 = vpop.f32.mrb[0].mxu0
    %v1353 = vpop.f32.mrb[0].mxu0
    %v1354 = vadd.f32 0.0, %v1353
    %v1355 = vpop.f32.mrb[0].mxu0
    %1356 = vmatprep.mubr.bf16.mxu0 0
    %1357 = vmatmul.mubr.bf16.gmra.mrb[0].mxu0 %v1287
    %v1358 = vpop.f32.mrb[0].mxu0
    %v1359 = vadd.f32 0.0, %v1358
    %v1360 = vpop.f32.mrb[0].mxu0
    %v1361 = vpop.f32.mrb[0].mxu0
    %v1362 = vadd.f32 0.0, %v1361
    %v1363 = vpop.f32.mrb[0].mxu0
    %1364 = vmatprep.mubr.bf16.mxu0 0
    %1365 = vmatmul.mubr.bf16.gmra.mrb[0].mxu0 %v1290
    %v1366 = vpop.f32.mrb[0].mxu0
    %v1367 = vadd.f32 0.0, %v1366
    %v1368 = vpop.f32.mrb[0].mxu0
    %v1369 = vpop.f32.mrb[0].mxu0
    %v1370 = vadd.f32 0.0, %v1369
    %v1371 = vpop.f32.mrb[0].mxu0
    %1372 = vmatprep.mubr.bf16.mxu0 0
    %1373 = vmatmul.mubr.bf16.gmra.mrb[0].mxu0 %v1293
    %v1374 = vpop.f32.mrb[0].mxu0
    %v1375 = vadd.f32 0.0, %v1374
    %v1376 = vpop.f32.mrb[0].mxu0
    %v1377 = vpop.f32.mrb[0].mxu0
    %v1378 = vadd.f32 0.0, %v1377
    %v1379 = vpop.f32.mrb[0].mxu0
    %1380 = vmatprep.mubr.bf16.mxu0 0
    %1381 = vmatmul.mubr.bf16.gmra.mrb[0].mxu0 %v1296
    %v1382 = vpop.f32.mrb[0].mxu0
    %v1383 = vadd.f32 0.0, %v1382
    %v1384 = vpop.f32.mrb[0].mxu0
    %v1385 = vpop.f32.mrb[0].mxu0
    %v1386 = vadd.f32 0.0, %v1385
    %v1387 = vpop.f32.mrb[0].mxu0
    %1388 = vmatprep.mubr.bf16.mxu0 0
    %1389 = vmatmul.mubr.bf16.gmra.mrb[0].mxu0 %v1299
    %v1390 = vpop.f32.mrb[0].mxu0
    %v1391 = vadd.f32 0.0, %v1390
    %v1392 = vpop.f32.mrb[0].mxu0
    %v1393 = vpop.f32.mrb[0].mxu0
    %v1394 = vadd.f32 0.0, %v1393
    %v1395 = vpop.f32.mrb[0].mxu0
    %1396 = vmatprep.mubr.bf16.mxu0 0
    %1397 = vmatmul.mubr.bf16.gmra.mrb[0].mxu0 %v1302
    %v1398 = vpop.f32.mrb[0].mxu0
    %v1399 = vadd.f32 0.0, %v1398
    %v1400 = vpop.f32.mrb[0].mxu0
    %v1401 = vpop.f32.mrb[0].mxu0
    %v1402 = vadd.f32 0.0, %v1401
    %v1403 = vpop.f32.mrb[0].mxu0
    %1404 = vdwg.mxu0
    %v1406 = vsel %vm1279, %v876, 0
    %v1409 = vsel %vm1279, %v877, 0
    %v1412 = vsel %vm1279, %v878, 0
    %v1415 = vsel %vm1279, %v879, 0
    %v1418 = vsel %vm1279, %v880, 0
    %v1421 = vsel %vm1279, %v881, 0
    %v1424 = vsel %vm1279, %v882, 0
    %v1427 = vsel %vm1279, %v883, 0
    %v1430 = vsel %vm1304, %v329, 0
    %1432 = vmatprep.subr.bf16.mxu0 0
    %1433 = vmatpush1.bf16.msra.mxu0 %v1430
    %1434 = vmatprep.subr.bf16.mxu0 0
    %1435 = vmatpush1.bf16.msra.mxu0 0
    %1436 = vmatprep.subr.bf16.mxu0 0
    %1437 = vmatpush1.bf16.msra.mxu0 0
    %1438 = vmatprep.subr.bf16.mxu0 0
    %1439 = vmatpush1.bf16.msra.mxu0 0
    %1440 = vmatprep.subr.bf16.mxu0 0
    %1441 = vmatpush1.bf16.msra.mxu0 0
    %1442 = vmatprep.subr.bf16.mxu0 0
    %1443 = vmatpush1.bf16.msra.mxu0 0
    %1444 = vmatprep.subr.bf16.mxu0 0
    %1445 = vmatpush1.bf16.msra.mxu0 0
    %1446 = vmatprep.subr.bf16.mxu0 0
    %1447 = vmatpush1.bf16.msra.mxu0 0
    %1448 = vmatprep.subr.bf16.mxu0 0
    %1449 = vmatpush1.bf16.msra.mxu0 0
    %1450 = vmatprep.subr.bf16.mxu0 0
    %1451 = vmatpush1.bf16.msra.mxu0 0
    %1452 = vmatprep.subr.bf16.mxu0 0
    %1453 = vmatpush1.bf16.msra.mxu0 0
    %1454 = vmatprep.subr.bf16.mxu0 0
    %1455 = vmatpush1.bf16.msra.mxu0 0
    %1456 = vmatprep.subr.bf16.mxu0 0
    %1457 = vmatpush1.bf16.msra.mxu0 0
    %1458 = vmatprep.subr.bf16.mxu0 0
    %1459 = vmatpush1.bf16.msra.mxu0 0
    %1460 = vmatprep.subr.bf16.mxu0 0
    %1461 = vmatpush1.bf16.msra.mxu0 0
    %1462 = vmatprep.subr.bf16.mxu0 0
    %1463 = vmatpush1.bf16.msra.mxu0 0
    %1464 = vmatprep.mubr.bf16.mxu0 0
    %1465 = vmatmul.mubr.bf16.gmra.mrb[0].mxu0 %v1406
    %v1466 = vpop.f32.mrb[0].mxu0
    %v1467 = vadd.f32 %v1343, %v1466
    %v1468 = vpop.f32.mrb[0].mxu0
    %v1469 = vpop.f32.mrb[0].mxu0
    %v1470 = vadd.f32 %v1346, %v1469
    %v1471 = vpop.f32.mrb[0].mxu0
    %1472 = vmatprep.mubr.bf16.mxu0 0
    %1473 = vmatmul.mubr.bf16.gmra.mrb[0].mxu0 %v1409
    %v1474 = vpop.f32.mrb[0].mxu0
    %v1475 = vadd.f32 %v1351, %v1474
    %v1476 = vpop.f32.mrb[0].mxu0
    %v1477 = vpop.f32.mrb[0].mxu0
    %v1478 = vadd.f32 %v1354, %v1477
    %v1479 = vpop.f32.mrb[0].mxu0
    %1480 = vmatprep.mubr.bf16.mxu0 0
    %1481 = vmatmul.mubr.bf16.gmra.mrb[0].mxu0 %v1412
    %v1482 = vpop.f32.mrb[0].mxu0
    %v1483 = vadd.f32 %v1359, %v1482
    %v1484 = vpop.f32.mrb[0].mxu0
    %v1485 = vpop.f32.mrb[0].mxu0
    %v1486 = vadd.f32 %v1362, %v1485
    %v1487 = vpop.f32.mrb[0].mxu0
    %1488 = vmatprep.mubr.bf16.mxu0 0
    %1489 = vmatmul.mubr.bf16.gmra.mrb[0].mxu0 %v1415
    %v1490 = vpop.f32.mrb[0].mxu0
    %v1491 = vadd.f32 %v1367, %v1490
    %v1492 = vpop.f32.mrb[0].mxu0
    %v1493 = vpop.f32.mrb[0].mxu0
    %v1494 = vadd.f32 %v1370, %v1493
    %v1495 = vpop.f32.mrb[0].mxu0
    %1496 = vmatprep.mubr.bf16.mxu0 0
    %1497 = vmatmul.mubr.bf16.gmra.mrb[0].mxu0 %v1418
    %v1498 = vpop.f32.mrb[0].mxu0
    %v1499 = vadd.f32 %v1375, %v1498
    %v1500 = vpop.f32.mrb[0].mxu0
    %v1501 = vpop.f32.mrb[0].mxu0
    %v1502 = vadd.f32 %v1378, %v1501
    %v1503 = vpop.f32.mrb[0].mxu0
    %1504 = vmatprep.mubr.bf16.mxu0 0
    %1505 = vmatmul.mubr.bf16.gmra.mrb[0].mxu0 %v1421
    %v1506 = vpop.f32.mrb[0].mxu0
    %v1507 = vadd.f32 %v1383, %v1506
    %v1508 = vpop.f32.mrb[0].mxu0
    %v1509 = vpop.f32.mrb[0].mxu0
    %v1510 = vadd.f32 %v1386, %v1509
    %v1511 = vpop.f32.mrb[0].mxu0
    %1512 = vmatprep.mubr.bf16.mxu0 0
    %1513 = vmatmul.mubr.bf16.gmra.mrb[0].mxu0 %v1424
    %v1514 = vpop.f32.mrb[0].mxu0
    %v1515 = vadd.f32 %v1391, %v1514
    %v1516 = vpop.f32.mrb[0].mxu0
    %v1517 = vpop.f32.mrb[0].mxu0
    %v1518 = vadd.f32 %v1394, %v1517
    %v1519 = vpop.f32.mrb[0].mxu0
    %1520 = vmatprep.mubr.bf16.mxu0 0
    %1521 = vmatmul.mubr.bf16.gmra.mrb[0].mxu0 %v1427
    %v1522 = vpop.f32.mrb[0].mxu0
    %v1523 = vadd.f32 %v1399, %v1522
    %v1524 = vpop.f32.mrb[0].mxu0
    %v1525 = vpop.f32.mrb[0].mxu0
    %v1526 = vadd.f32 %v1402, %v1525
    %v1527 = vpop.f32.mrb[0].mxu0
    %1528 = vdwg.mxu0
    %v1529 = vld [vmem:[#allocation2 + $0x200] sm:$0xff]
    %v1530 = vld [vmem:[#allocation2 + $0x208] sm:$0xff]
    %v1531 = vld [vmem:[#allocation2 + $0x210] sm:$0xff]
    %v1532 = vld [vmem:[#allocation2 + $0x218] sm:$0xff]
    %v1533 = vld [vmem:[#allocation2 + $0x220] sm:$0xff]
    %v1534 = vld [vmem:[#allocation2 + $0x228] sm:$0xff]
    %v1535 = vld [vmem:[#allocation2 + $0x230] sm:$0xff]
    %v1536 = vld [vmem:[#allocation2 + $0x238] sm:$0xff]
    %v1537 = vld [vmem:[#allocation2 + $0x240] sm:$0xff]
    %v1538 = vld [vmem:[#allocation2 + $0x248] sm:$0xff]
    %v1539 = vld [vmem:[#allocation2 + $0x250] sm:$0xff]
    %v1540 = vld [vmem:[#allocation2 + $0x258] sm:$0xff]
    %v1541 = vld [vmem:[#allocation2 + $0x260] sm:$0xff]
    %v1542 = vld [vmem:[#allocation2 + $0x268] sm:$0xff]
    %v1543 = vld [vmem:[#allocation2 + $0x270] sm:$0xff]
    %v1544 = vld [vmem:[#allocation2 + $0x278] sm:$0xff]
    %v1545 = vld [vmem:[#allocation2 + $0x280] sm:$0xff]
    %v1546 = vld [vmem:[#allocation2 + $0x288] sm:$0xff]
    %v1547 = vld [vmem:[#allocation2 + $0x290] sm:$0xff]
    %v1548 = vld [vmem:[#allocation2 + $0x298] sm:$0xff]
    %v1549 = vld [vmem:[#allocation2 + $0x2a0] sm:$0xff]
    %v1550 = vld [vmem:[#allocation2 + $0x2a8] sm:$0xff]
    %v1551 = vld [vmem:[#allocation2 + $0x2b0] sm:$0xff]
    %v1552 = vld [vmem:[#allocation2 + $0x2b8] sm:$0xff]
    %v1553 = vld [vmem:[#allocation2 + $0x2c0] sm:$0xff]
    %v1554 = vld [vmem:[#allocation2 + $0x2c8] sm:$0xff]
    %v1555 = vld [vmem:[#allocation2 + $0x2d0] sm:$0xff]
    %v1556 = vld [vmem:[#allocation2 + $0x2d8] sm:$0xff]
    %v1557 = vld [vmem:[#allocation2 + $0x2e0] sm:$0xff]
    %v1558 = vld [vmem:[#allocation2 + $0x2e8] sm:$0xff]
    %v1559 = vld [vmem:[#allocation2 + $0x2f0] sm:$0xff]
    %v1560 = vld [vmem:[#allocation2 + $0x2f8] sm:$0xff]
    %v1561 = vld [vmem:[%s2 + $0x8] sm:$0xf]
    %v1594 = vunpack.c.l.b16 %v1529
    %v1595 = vunpack.c.h.b16 %v1529
    %v1596 = vunpack.c.l.b16 %v1530
    %v1597 = vunpack.c.h.b16 %v1530
    %v1598 = vunpack.c.l.b16 %v1531
    %v1599 = vunpack.c.h.b16 %v1531
    %v1600 = vunpack.c.l.b16 %v1532
    %v1601 = vunpack.c.h.b16 %v1532
    %v1602 = vunpack.c.l.b16 %v1533
    %v1603 = vunpack.c.h.b16 %v1533
    %v1604 = vunpack.c.l.b16 %v1534
    %v1605 = vunpack.c.h.b16 %v1534
    %v1606 = vunpack.c.l.b16 %v1535
    %v1607 = vunpack.c.h.b16 %v1535
    %v1608 = vunpack.c.l.b16 %v1536
    %v1609 = vunpack.c.h.b16 %v1536
    %v1610 = vunpack.c.l.b16 %v1537
    %v1611 = vunpack.c.h.b16 %v1537
    %v1612 = vunpack.c.l.b16 %v1538
    %v1613 = vunpack.c.h.b16 %v1538
    %v1614 = vunpack.c.l.b16 %v1539
    %v1615 = vunpack.c.h.b16 %v1539
    %v1616 = vunpack.c.l.b16 %v1540
    %v1617 = vunpack.c.h.b16 %v1540
    %v1618 = vunpack.c.l.b16 %v1541
    %v1619 = vunpack.c.h.b16 %v1541
    %v1620 = vunpack.c.l.b16 %v1542
    %v1621 = vunpack.c.h.b16 %v1542
    %v1622 = vunpack.c.l.b16 %v1543
    %v1623 = vunpack.c.h.b16 %v1543
    %v1624 = vunpack.c.l.b16 %v1544
    %v1625 = vunpack.c.h.b16 %v1544
    %v1626 = vunpack.c.l.b16 %v1545
    %v1627 = vunpack.c.h.b16 %v1545
    %v1628 = vunpack.c.l.b16 %v1546
    %v1629 = vunpack.c.h.b16 %v1546
    %v1630 = vunpack.c.l.b16 %v1547
    %v1631 = vunpack.c.h.b16 %v1547
    %v1632 = vunpack.c.l.b16 %v1548
    %v1633 = vunpack.c.h.b16 %v1548
    %v1634 = vunpack.c.l.b16 %v1549
    %v1635 = vunpack.c.h.b16 %v1549
    %v1636 = vunpack.c.l.b16 %v1550
    %v1637 = vunpack.c.h.b16 %v1550
    %v1638 = vunpack.c.l.b16 %v1551
    %v1639 = vunpack.c.h.b16 %v1551
    %v1640 = vunpack.c.l.b16 %v1552
    %v1641 = vunpack.c.h.b16 %v1552
    %v1642 = vunpack.c.l.b16 %v1553
    %v1643 = vunpack.c.h.b16 %v1553
    %v1644 = vunpack.c.l.b16 %v1554
    %v1645 = vunpack.c.h.b16 %v1554
    %v1646 = vunpack.c.l.b16 %v1555
    %v1647 = vunpack.c.h.b16 %v1555
    %v1648 = vunpack.c.l.b16 %v1556
    %v1649 = vunpack.c.h.b16 %v1556
    %v1650 = vunpack.c.l.b16 %v1557
    %v1651 = vunpack.c.h.b16 %v1557
    %v1652 = vunpack.c.l.b16 %v1558
    %v1653 = vunpack.c.h.b16 %v1558
    %v1654 = vunpack.c.l.b16 %v1559
    %v1655 = vunpack.c.h.b16 %v1559
    %v1656 = vunpack.c.l.b16 %v1560
    %v1657 = vunpack.c.h.b16 %v1560
    %v1658 = vpack.c.b16 %v1598, %v1594
    %v1659 = vpack.c.b16 %v1599, %v1595
    %v1660 = vpack.c.b16 %v1600, %v1596
    %v1661 = vpack.c.b16 %v1601, %v1597
    %v1662 = vpack.c.b16 %v1606, %v1602
    %v1663 = vpack.c.b16 %v1607, %v1603
    %v1664 = vpack.c.b16 %v1608, %v1604
    %v1665 = vpack.c.b16 %v1609, %v1605
    %v1666 = vpack.c.b16 %v1614, %v1610
    %v1667 = vpack.c.b16 %v1615, %v1611
    %v1668 = vpack.c.b16 %v1616, %v1612
    %v1669 = vpack.c.b16 %v1617, %v1613
    %v1670 = vpack.c.b16 %v1622, %v1618
    %v1671 = vpack.c.b16 %v1623, %v1619
    %v1672 = vpack.c.b16 %v1624, %v1620
    %v1673 = vpack.c.b16 %v1625, %v1621
    %v1674 = vpack.c.b16 %v1630, %v1626
    %v1675 = vpack.c.b16 %v1631, %v1627
    %v1676 = vpack.c.b16 %v1632, %v1628
    %v1677 = vpack.c.b16 %v1633, %v1629
    %v1678 = vpack.c.b16 %v1638, %v1634
    %v1679 = vpack.c.b16 %v1639, %v1635
    %v1680 = vpack.c.b16 %v1640, %v1636
    %v1681 = vpack.c.b16 %v1641, %v1637
    %v1682 = vpack.c.b16 %v1646, %v1642
    %v1683 = vpack.c.b16 %v1647, %v1643
    %v1684 = vpack.c.b16 %v1648, %v1644
    %v1685 = vpack.c.b16 %v1649, %v1645
    %v1686 = vpack.c.b16 %v1654, %v1650
    %v1687 = vpack.c.b16 %v1655, %v1651
    %v1688 = vpack.c.b16 %v1656, %v1652
    %v1689 = vpack.c.b16 %v1657, %v1653
    %1722 = vmatprep.subr.bf16.mxu0 0
    %1723 = vmatpush1.bf16.msra.mxu0 %v618
    %1724 = vmatprep.subr.bf16.mxu0 0
    %1725 = vmatpush1.bf16.msra.mxu0 %v619
    %1726 = vmatprep.subr.bf16.mxu0 0
    %1727 = vmatpush1.bf16.msra.mxu0 %v620
    %1728 = vmatprep.subr.bf16.mxu0 0
    %1729 = vmatpush1.bf16.msra.mxu0 %v621
    %1730 = vmatprep.subr.bf16.mxu0 0
    %1731 = vmatpush1.bf16.msra.mxu0 %v622
    %1732 = vmatprep.subr.bf16.mxu0 0
    %1733 = vmatpush1.bf16.msra.mxu0 %v623
    %1734 = vmatprep.subr.bf16.mxu0 0
    %1735 = vmatpush1.bf16.msra.mxu0 %v624
    %1736 = vmatprep.subr.bf16.mxu0 0
    %1737 = vmatpush1.bf16.msra.mxu0 %v625
    %1738 = vmatprep.subr.bf16.mxu0 0
    %1739 = vmatpush1.bf16.msra.mxu0 %v626
    %1740 = vmatprep.subr.bf16.mxu0 0
    %1741 = vmatpush1.bf16.msra.mxu0 %v627
    %1742 = vmatprep.subr.bf16.mxu0 0
    %1743 = vmatpush1.bf16.msra.mxu0 %v628
    %1744 = vmatprep.subr.bf16.mxu0 0
    %1745 = vmatpush1.bf16.msra.mxu0 %v629
    %1746 = vmatprep.subr.bf16.mxu0 0
    %1747 = vmatpush1.bf16.msra.mxu0 %v630
    %1748 = vmatprep.subr.bf16.mxu0 0
    %1749 = vmatpush1.bf16.msra.mxu0 %v631
    %1750 = vmatprep.subr.bf16.mxu0 0
    %1751 = vmatpush1.bf16.msra.mxu0 %v632
    %1752 = vmatprep.subr.bf16.mxu0 0
    %1753 = vmatpush1.bf16.msra.mxu0 %v633
    %1754 = vmatprep.mubr.bf16.mxu0 %v1659
    %1755 = vmatmul.mubr.bf16.gmra.mrb[0].mxu0 %v1658
    %v1756 = vpop.f32.mrb[0].mxu0
    %v1757 = vadd.f32 0.0, %v1756
    %v1758 = vpop.f32.mrb[0].mxu0
    %v1759 = vpop.f32.mrb[0].mxu0
    %v1760 = vadd.f32 0.0, %v1759
    %v1761 = vpop.f32.mrb[0].mxu0
    %1762 = vmatprep.mubr.bf16.mxu0 %v1663
    %1763 = vmatmul.mubr.bf16.gmra.mrb[0].mxu0 %v1662
    %v1764 = vpop.f32.mrb[0].mxu0
    %v1765 = vadd.f32 0.0, %v1764
    %v1766 = vpop.f32.mrb[0].mxu0
    %v1767 = vpop.f32.mrb[0].mxu0
    %v1768 = vadd.f32 0.0, %v1767
    %v1769 = vpop.f32.mrb[0].mxu0
    %1770 = vmatprep.mubr.bf16.mxu0 %v1667
    %1771 = vmatmul.mubr.bf16.gmra.mrb[0].mxu0 %v1666
    %v1772 = vpop.f32.mrb[0].mxu0
    %v1773 = vadd.f32 0.0, %v1772
    %v1774 = vpop.f32.mrb[0].mxu0
    %v1775 = vpop.f32.mrb[0].mxu0
    %v1776 = vadd.f32 0.0, %v1775
    %v1777 = vpop.f32.mrb[0].mxu0
    %1778 = vmatprep.mubr.bf16.mxu0 %v1671
    %1779 = vmatmul.mubr.bf16.gmra.mrb[0].mxu0 %v1670
    %v1780 = vpop.f32.mrb[0].mxu0
    %v1781 = vadd.f32 0.0, %v1780
    %v1782 = vpop.f32.mrb[0].mxu0
    %v1783 = vpop.f32.mrb[0].mxu0
    %v1784 = vadd.f32 0.0, %v1783
    %v1785 = vpop.f32.mrb[0].mxu0
    %1786 = vmatprep.mubr.bf16.mxu0 %v1675
    %1787 = vmatmul.mubr.bf16.gmra.mrb[0].mxu0 %v1674
    %v1788 = vpop.f32.mrb[0].mxu0
    %v1789 = vadd.f32 0.0, %v1788
    %v1790 = vpop.f32.mrb[0].mxu0
    %v1791 = vpop.f32.mrb[0].mxu0
    %v1792 = vadd.f32 0.0, %v1791
    %v1793 = vpop.f32.mrb[0].mxu0
    %1794 = vmatprep.mubr.bf16.mxu0 %v1679
    %1795 = vmatmul.mubr.bf16.gmra.mrb[0].mxu0 %v1678
    %v1796 = vpop.f32.mrb[0].mxu0
    %v1797 = vadd.f32 0.0, %v1796
    %v1798 = vpop.f32.mrb[0].mxu0
    %v1799 = vpop.f32.mrb[0].mxu0
    %v1800 = vadd.f32 0.0, %v1799
    %v1801 = vpop.f32.mrb[0].mxu0
    %1802 = vmatprep.mubr.bf16.mxu0 %v1683
    %1803 = vmatmul.mubr.bf16.gmra.mrb[0].mxu0 %v1682
    %v1804 = vpop.f32.mrb[0].mxu0
    %v1805 = vadd.f32 0.0, %v1804
    %v1806 = vpop.f32.mrb[0].mxu0
    %v1807 = vpop.f32.mrb[0].mxu0
    %v1808 = vadd.f32 0.0, %v1807
    %v1809 = vpop.f32.mrb[0].mxu0
    %1810 = vmatprep.mubr.bf16.mxu0 %v1687
    %1811 = vmatmul.mubr.bf16.gmra.mrb[0].mxu0 %v1686
    %v1812 = vpop.f32.mrb[0].mxu0
    %v1813 = vadd.f32 0.0, %v1812
    %v1814 = vpop.f32.mrb[0].mxu0
    %v1815 = vpop.f32.mrb[0].mxu0
    %v1816 = vadd.f32 0.0, %v1815
    %v1817 = vpop.f32.mrb[0].mxu0
    %1818 = vdwg.mxu0
    %1819 = vmatprep.subr.bf16.mxu0 0
    %1820 = vmatpush1.bf16.msra.mxu0 %v634
    %1821 = vmatprep.subr.bf16.mxu0 0
    %1822 = vmatpush1.bf16.msra.mxu0 %v635
    %1823 = vmatprep.subr.bf16.mxu0 0
    %1824 = vmatpush1.bf16.msra.mxu0 %v636
    %1825 = vmatprep.subr.bf16.mxu0 0
    %1826 = vmatpush1.bf16.msra.mxu0 %v637
    %1827 = vmatprep.subr.bf16.mxu0 0
    %1828 = vmatpush1.bf16.msra.mxu0 %v638
    %1829 = vmatprep.subr.bf16.mxu0 0
    %1830 = vmatpush1.bf16.msra.mxu0 %v639
    %1831 = vmatprep.subr.bf16.mxu0 0
    %1832 = vmatpush1.bf16.msra.mxu0 %v640
    %1833 = vmatprep.subr.bf16.mxu0 0
    %1834 = vmatpush1.bf16.msra.mxu0 %v641
    %1835 = vmatprep.subr.bf16.mxu0 0
    %1836 = vmatpush1.bf16.msra.mxu0 %v642
    %1837 = vmatprep.subr.bf16.mxu0 0
    %1838 = vmatpush1.bf16.msra.mxu0 %v643
    %1839 = vmatprep.subr.bf16.mxu0 0
    %1840 = vmatpush1.bf16.msra.mxu0 %v644
    %1841 = vmatprep.subr.bf16.mxu0 0
    %1842 = vmatpush1.bf16.msra.mxu0 %v645
    %1843 = vmatprep.subr.bf16.mxu0 0
    %1844 = vmatpush1.bf16.msra.mxu0 %v646
    %1845 = vmatprep.subr.bf16.mxu0 0
    %1846 = vmatpush1.bf16.msra.mxu0 %v647
    %1847 = vmatprep.subr.bf16.mxu0 0
    %1848 = vmatpush1.bf16.msra.mxu0 %v648
    %1849 = vmatprep.subr.bf16.mxu0 0
    %1850 = vmatpush1.bf16.msra.mxu0 %v649
    %1851 = vmatprep.mubr.bf16.mxu0 %v1661
    %1852 = vmatmul.mubr.bf16.gmra.mrb[0].mxu0 %v1660
    %v1853 = vpop.f32.mrb[0].mxu0
    %v1854 = vadd.f32 %v1757, %v1853
    %v1855 = vpop.f32.mrb[0].mxu0
    %v1856 = vpop.f32.mrb[0].mxu0
    %v1857 = vadd.f32 %v1760, %v1856
    %v1858 = vpop.f32.mrb[0].mxu0
    %1859 = vmatprep.mubr.bf16.mxu0 %v1665
    %1860 = vmatmul.mubr.bf16.gmra.mrb[0].mxu0 %v1664
    %v1861 = vpop.f32.mrb[0].mxu0
    %v1862 = vadd.f32 %v1765, %v1861
    %v1863 = vpop.f32.mrb[0].mxu0
    %v1864 = vpop.f32.mrb[0].mxu0
    %v1865 = vadd.f32 %v1768, %v1864
    %v1866 = vpop.f32.mrb[0].mxu0
    %1867 = vmatprep.mubr.bf16.mxu0 %v1669
    %1868 = vmatmul.mubr.bf16.gmra.mrb[0].mxu0 %v1668
    %v1869 = vpop.f32.mrb[0].mxu0
    %v1870 = vadd.f32 %v1773, %v1869
    %v1871 = vpop.f32.mrb[0].mxu0
    %v1872 = vpop.f32.mrb[0].mxu0
    %v1873 = vadd.f32 %v1776, %v1872
    %v1874 = vpop.f32.mrb[0].mxu0
    %1875 = vmatprep.mubr.bf16.mxu0 %v1673
    %1876 = vmatmul.mubr.bf16.gmra.mrb[0].mxu0 %v1672
    %v1877 = vpop.f32.mrb[0].mxu0
    %v1878 = vadd.f32 %v1781, %v1877
    %v1879 = vpop.f32.mrb[0].mxu0
    %v1880 = vpop.f32.mrb[0].mxu0
    %v1881 = vadd.f32 %v1784, %v1880
    %v1882 = vpop.f32.mrb[0].mxu0
    %1883 = vmatprep.mubr.bf16.mxu0 %v1677
    %1884 = vmatmul.mubr.bf16.gmra.mrb[0].mxu0 %v1676
    %v1885 = vpop.f32.mrb[0].mxu0
    %v1886 = vadd.f32 %v1789, %v1885
    %v1887 = vpop.f32.mrb[0].mxu0
    %v1888 = vpop.f32.mrb[0].mxu0
    %v1889 = vadd.f32 %v1792, %v1888
    %v1890 = vpop.f32.mrb[0].mxu0
    %1891 = vmatprep.mubr.bf16.mxu0 %v1681
    %1892 = vmatmul.mubr.bf16.gmra.mrb[0].mxu0 %v1680
    %v1893 = vpop.f32.mrb[0].mxu0
    %v1894 = vadd.f32 %v1797, %v1893
    %v1895 = vpop.f32.mrb[0].mxu0
    %v1896 = vpop.f32.mrb[0].mxu0
    %v1897 = vadd.f32 %v1800, %v1896
    %v1898 = vpop.f32.mrb[0].mxu0
    %1899 = vmatprep.mubr.bf16.mxu0 %v1685
    %1900 = vmatmul.mubr.bf16.gmra.mrb[0].mxu0 %v1684
    %v1901 = vpop.f32.mrb[0].mxu0
    %v1902 = vadd.f32 %v1805, %v1901
    %v1903 = vpop.f32.mrb[0].mxu0
    %v1904 = vpop.f32.mrb[0].mxu0
    %v1905 = vadd.f32 %v1808, %v1904
    %v1906 = vpop.f32.mrb[0].mxu0
    %1907 = vmatprep.mubr.bf16.mxu0 %v1689
    %1908 = vmatmul.mubr.bf16.gmra.mrb[0].mxu0 %v1688
    %v1909 = vpop.f32.mrb[0].mxu0
    %v1910 = vadd.f32 %v1813, %v1909
    %v1911 = vpop.f32.mrb[0].mxu0
    %v1912 = vpop.f32.mrb[0].mxu0
    %v1913 = vadd.f32 %v1816, %v1912
    %v1914 = vpop.f32.mrb[0].mxu0
    %1915 = vdwg.mxu0
    %v1916 = vpack.c.bf16 %v1857, %v1854
    %v1917 = vpack.c.bf16 %v1865, %v1862
    %v1918 = vpack.c.bf16 %v1873, %v1870
    %v1919 = vpack.c.bf16 %v1881, %v1878
    %v1920 = vpack.c.bf16 %v1889, %v1886
    %v1921 = vpack.c.bf16 %v1897, %v1894
    %v1922 = vpack.c.bf16 %v1905, %v1902
    %v1923 = vpack.c.bf16 %v1913, %v1910
    %v1925 = vsel %vm1279, %v1916, 0
    %v1928 = vsel %vm1279, %v1917, 0
    %v1931 = vsel %vm1279, %v1918, 0
    %v1934 = vsel %vm1279, %v1919, 0
    %v1937 = vsel %vm1279, %v1920, 0
    %v1940 = vsel %vm1279, %v1921, 0
    %v1943 = vsel %vm1279, %v1922, 0
    %v1946 = vsel %vm1279, %v1923, 0
    %v1949 = vsel %vm1304, %v1561, 0
    %1951 = vmatprep.subr.bf16.mxu0 0
    %1952 = vmatpush1.bf16.msra.mxu0 %v1949
    %1953 = vmatprep.subr.bf16.mxu0 0
    %1954 = vmatpush1.bf16.msra.mxu0 0
    %1955 = vmatprep.subr.bf16.mxu0 0
    %1956 = vmatpush1.bf16.msra.mxu0 0
    %1957 = vmatprep.subr.bf16.mxu0 0
    %1958 = vmatpush1.bf16.msra.mxu0 0
    %1959 = vmatprep.subr.bf16.mxu0 0
    %1960 = vmatpush1.bf16.msra.mxu0 0
    %1961 = vmatprep.subr.bf16.mxu0 0
    %1962 = vmatpush1.bf16.msra.mxu0 0
    %1963 = vmatprep.subr.bf16.mxu0 0
    %1964 = vmatpush1.bf16.msra.mxu0 0
    %1965 = vmatprep.subr.bf16.mxu0 0
    %1966 = vmatpush1.bf16.msra.mxu0 0
    %1967 = vmatprep.subr.bf16.mxu0 0
    %1968 = vmatpush1.bf16.msra.mxu0 0
    %1969 = vmatprep.subr.bf16.mxu0 0
    %1970 = vmatpush1.bf16.msra.mxu0 0
    %1971 = vmatprep.subr.bf16.mxu0 0
    %1972 = vmatpush1.bf16.msra.mxu0 0
    %1973 = vmatprep.subr.bf16.mxu0 0
    %1974 = vmatpush1.bf16.msra.mxu0 0
    %1975 = vmatprep.subr.bf16.mxu0 0
    %1976 = vmatpush1.bf16.msra.mxu0 0
    %1977 = vmatprep.subr.bf16.mxu0 0
    %1978 = vmatpush1.bf16.msra.mxu0 0
    %1979 = vmatprep.subr.bf16.mxu0 0
    %1980 = vmatpush1.bf16.msra.mxu0 0
    %1981 = vmatprep.subr.bf16.mxu0 0
    %1982 = vmatpush1.bf16.msra.mxu0 0
    %1983 = vmatprep.mubr.bf16.mxu0 0
    %1984 = vmatmul.mubr.bf16.gmra.mrb[0].mxu0 %v1925
    %v1985 = vpop.f32.mrb[0].mxu0
    %v1986 = vadd.f32 0.0, %v1985
    %v1987 = vpop.f32.mrb[0].mxu0
    %v1988 = vpop.f32.mrb[0].mxu0
    %v1989 = vadd.f32 0.0, %v1988
    %v1990 = vpop.f32.mrb[0].mxu0
    %1991 = vmatprep.mubr.bf16.mxu0 0
    %1992 = vmatmul.mubr.bf16.gmra.mrb[0].mxu0 %v1928
    %v1993 = vpop.f32.mrb[0].mxu0
    %v1994 = vadd.f32 0.0, %v1993
    %v1995 = vpop.f32.mrb[0].mxu0
    %v1996 = vpop.f32.mrb[0].mxu0
    %v1997 = vadd.f32 0.0, %v1996
    %v1998 = vpop.f32.mrb[0].mxu0
    %1999 = vmatprep.mubr.bf16.mxu0 0
    %2000 = vmatmul.mubr.bf16.gmra.mrb[0].mxu0 %v1931
    %v2001 = vpop.f32.mrb[0].mxu0
    %v2002 = vadd.f32 0.0, %v2001
    %v2003 = vpop.f32.mrb[0].mxu0
    %v2004 = vpop.f32.mrb[0].mxu0
    %v2005 = vadd.f32 0.0, %v2004
    %v2006 = vpop.f32.mrb[0].mxu0
    %2007 = vmatprep.mubr.bf16.mxu0 0
    %2008 = vmatmul.mubr.bf16.gmra.mrb[0].mxu0 %v1934
    %v2009 = vpop.f32.mrb[0].mxu0
    %v2010 = vadd.f32 0.0, %v2009
    %v2011 = vpop.f32.mrb[0].mxu0
    %v2012 = vpop.f32.mrb[0].mxu0
    %v2013 = vadd.f32 0.0, %v2012
    %v2014 = vpop.f32.mrb[0].mxu0
    %2015 = vmatprep.mubr.bf16.mxu0 0
    %2016 = vmatmul.mubr.bf16.gmra.mrb[0].mxu0 %v1937
    %v2017 = vpop.f32.mrb[0].mxu0
    %v2018 = vadd.f32 0.0, %v2017
    %v2019 = vpop.f32.mrb[0].mxu0
    %v2020 = vpop.f32.mrb[0].mxu0
    %v2021 = vadd.f32 0.0, %v2020
    %v2022 = vpop.f32.mrb[0].mxu0
    %2023 = vmatprep.mubr.bf16.mxu0 0
    %2024 = vmatmul.mubr.bf16.gmra.mrb[0].mxu0 %v1940
    %v2025 = vpop.f32.mrb[0].mxu0
    %v2026 = vadd.f32 0.0, %v2025
    %v2027 = vpop.f32.mrb[0].mxu0
    %v2028 = vpop.f32.mrb[0].mxu0
    %v2029 = vadd.f32 0.0, %v2028
    %v2030 = vpop.f32.mrb[0].mxu0
    %2031 = vmatprep.mubr.bf16.mxu0 0
    %2032 = vmatmul.mubr.bf16.gmra.mrb[0].mxu0 %v1943
    %v2033 = vpop.f32.mrb[0].mxu0
    %v2034 = vadd.f32 0.0, %v2033
    %v2035 = vpop.f32.mrb[0].mxu0
    %v2036 = vpop.f32.mrb[0].mxu0
    %v2037 = vadd.f32 0.0, %v2036
    %v2038 = vpop.f32.mrb[0].mxu0
    %2039 = vmatprep.mubr.bf16.mxu0 0
    %2040 = vmatmul.mubr.bf16.gmra.mrb[0].mxu0 %v1946
    %v2041 = vpop.f32.mrb[0].mxu0
    %v2042 = vadd.f32 0.0, %v2041
    %v2043 = vpop.f32.mrb[0].mxu0
    %v2044 = vpop.f32.mrb[0].mxu0
    %v2045 = vadd.f32 0.0, %v2044
    %v2046 = vpop.f32.mrb[0].mxu0
    %2047 = vdwg.mxu0
    %v2048 = vadd.f32 %v1467, %v1986
    %v2049 = vadd.f32 %v1470, %v1989
    %v2050 = vadd.f32 %v1475, %v1994
    %v2051 = vadd.f32 %v1478, %v1997
    %v2052 = vadd.f32 %v1483, %v2002
    %v2053 = vadd.f32 %v1486, %v2005
    %v2054 = vadd.f32 %v1491, %v2010
    %v2055 = vadd.f32 %v1494, %v2013
    %v2056 = vadd.f32 %v1499, %v2018
    %v2057 = vadd.f32 %v1502, %v2021
    %v2058 = vadd.f32 %v1507, %v2026
    %v2059 = vadd.f32 %v1510, %v2029
    %v2060 = vadd.f32 %v1515, %v2034
    %v2061 = vadd.f32 %v1518, %v2037
    %v2062 = vadd.f32 %v1523, %v2042
    %v2063 = vadd.f32 %v1526, %v2045
    %v2064 = vld [vmem:[#allocation2 + $0x300] sm:$0xff]
    %v2065 = vld [vmem:[#allocation2 + $0x308] sm:$0xff]
    %v2066 = vld [vmem:[#allocation2 + $0x310] sm:$0xff]
    %v2067 = vld [vmem:[#allocation2 + $0x318] sm:$0xff]
    %v2068 = vld [vmem:[#allocation2 + $0x320] sm:$0xff]
    %v2069 = vld [vmem:[#allocation2 + $0x328] sm:$0xff]
    %v2070 = vld [vmem:[#allocation2 + $0x330] sm:$0xff]
    %v2071 = vld [vmem:[#allocation2 + $0x338] sm:$0xff]
    %v2072 = vld [vmem:[#allocation2 + $0x340] sm:$0xff]
    %v2073 = vld [vmem:[#allocation2 + $0x348] sm:$0xff]
    %v2074 = vld [vmem:[#allocation2 + $0x350] sm:$0xff]
    %v2075 = vld [vmem:[#allocation2 + $0x358] sm:$0xff]
    %v2076 = vld [vmem:[#allocation2 + $0x360] sm:$0xff]
    %v2077 = vld [vmem:[#allocation2 + $0x368] sm:$0xff]
    %v2078 = vld [vmem:[#allocation2 + $0x370] sm:$0xff]
    %v2079 = vld [vmem:[#allocation2 + $0x378] sm:$0xff]
    %v2080 = vld [vmem:[#allocation2 + $0x380] sm:$0xff]
    %v2081 = vld [vmem:[#allocation2 + $0x388] sm:$0xff]
    %v2082 = vld [vmem:[#allocation2 + $0x390] sm:$0xff]
    %v2083 = vld [vmem:[#allocation2 + $0x398] sm:$0xff]
    %v2084 = vld [vmem:[#allocation2 + $0x3a0] sm:$0xff]
    %v2085 = vld [vmem:[#allocation2 + $0x3a8] sm:$0xff]
    %v2086 = vld [vmem:[#allocation2 + $0x3b0] sm:$0xff]
    %v2087 = vld [vmem:[#allocation2 + $0x3b8] sm:$0xff]
    %v2088 = vld [vmem:[#allocation2 + $0x3c0] sm:$0xff]
    %v2089 = vld [vmem:[#allocation2 + $0x3c8] sm:$0xff]
    %v2090 = vld [vmem:[#allocation2 + $0x3d0] sm:$0xff]
    %v2091 = vld [vmem:[#allocation2 + $0x3d8] sm:$0xff]
    %v2092 = vld [vmem:[#allocation2 + $0x3e0] sm:$0xff]
    %v2093 = vld [vmem:[#allocation2 + $0x3e8] sm:$0xff]
    %v2094 = vld [vmem:[#allocation2 + $0x3f0] sm:$0xff]
    %v2095 = vld [vmem:[#allocation2 + $0x3f8] sm:$0xff]
    %v2096 = vld [vmem:[%s2 + $0xc] sm:$0xf]
    %v2129 = vunpack.c.l.b16 %v2064
    %v2130 = vunpack.c.h.b16 %v2064
    %v2131 = vunpack.c.l.b16 %v2065
    %v2132 = vunpack.c.h.b16 %v2065
    %v2133 = vunpack.c.l.b16 %v2066
    %v2134 = vunpack.c.h.b16 %v2066
    %v2135 = vunpack.c.l.b16 %v2067
    %v2136 = vunpack.c.h.b16 %v2067
    %v2137 = vunpack.c.l.b16 %v2068
    %v2138 = vunpack.c.h.b16 %v2068
    %v2139 = vunpack.c.l.b16 %v2069
    %v2140 = vunpack.c.h.b16 %v2069
    %v2141 = vunpack.c.l.b16 %v2070
    %v2142 = vunpack.c.h.b16 %v2070
    %v2143 = vunpack.c.l.b16 %v2071
    %v2144 = vunpack.c.h.b16 %v2071
    %v2145 = vunpack.c.l.b16 %v2072
    %v2146 = vunpack.c.h.b16 %v2072
    %v2147 = vunpack.c.l.b16 %v2073
    %v2148 = vunpack.c.h.b16 %v2073
    %v2149 = vunpack.c.l.b16 %v2074
    %v2150 = vunpack.c.h.b16 %v2074
    %v2151 = vunpack.c.l.b16 %v2075
    %v2152 = vunpack.c.h.b16 %v2075
    %v2153 = vunpack.c.l.b16 %v2076
    %v2154 = vunpack.c.h.b16 %v2076
    %v2155 = vunpack.c.l.b16 %v2077
    %v2156 = vunpack.c.h.b16 %v2077
    %v2157 = vunpack.c.l.b16 %v2078
    %v2158 = vunpack.c.h.b16 %v2078
    %v2159 = vunpack.c.l.b16 %v2079
    %v2160 = vunpack.c.h.b16 %v2079
    %v2161 = vunpack.c.l.b16 %v2080
    %v2162 = vunpack.c.h.b16 %v2080
    %v2163 = vunpack.c.l.b16 %v2081
    %v2164 = vunpack.c.h.b16 %v2081
    %v2165 = vunpack.c.l.b16 %v2082
    %v2166 = vunpack.c.h.b16 %v2082
    %v2167 = vunpack.c.l.b16 %v2083
    %v2168 = vunpack.c.h.b16 %v2083
    %v2169 = vunpack.c.l.b16 %v2084
    %v2170 = vunpack.c.h.b16 %v2084
    %v2171 = vunpack.c.l.b16 %v2085
    %v2172 = vunpack.c.h.b16 %v2085
    %v2173 = vunpack.c.l.b16 %v2086
    %v2174 = vunpack.c.h.b16 %v2086
    %v2175 = vunpack.c.l.b16 %v2087
    %v2176 = vunpack.c.h.b16 %v2087
    %v2177 = vunpack.c.l.b16 %v2088
    %v2178 = vunpack.c.h.b16 %v2088
    %v2179 = vunpack.c.l.b16 %v2089
    %v2180 = vunpack.c.h.b16 %v2089
    %v2181 = vunpack.c.l.b16 %v2090
    %v2182 = vunpack.c.h.b16 %v2090
    %v2183 = vunpack.c.l.b16 %v2091
    %v2184 = vunpack.c.h.b16 %v2091
    %v2185 = vunpack.c.l.b16 %v2092
    %v2186 = vunpack.c.h.b16 %v2092
    %v2187 = vunpack.c.l.b16 %v2093
    %v2188 = vunpack.c.h.b16 %v2093
    %v2189 = vunpack.c.l.b16 %v2094
    %v2190 = vunpack.c.h.b16 %v2094
    %v2191 = vunpack.c.l.b16 %v2095
    %v2192 = vunpack.c.h.b16 %v2095
    %v2193 = vpack.c.b16 %v2133, %v2129
    %v2194 = vpack.c.b16 %v2134, %v2130
    %v2195 = vpack.c.b16 %v2135, %v2131
    %v2196 = vpack.c.b16 %v2136, %v2132
    %v2197 = vpack.c.b16 %v2141, %v2137
    %v2198 = vpack.c.b16 %v2142, %v2138
    %v2199 = vpack.c.b16 %v2143, %v2139
    %v2200 = vpack.c.b16 %v2144, %v2140
    %v2201 = vpack.c.b16 %v2149, %v2145
    %v2202 = vpack.c.b16 %v2150, %v2146
    %v2203 = vpack.c.b16 %v2151, %v2147
    %v2204 = vpack.c.b16 %v2152, %v2148
    %v2205 = vpack.c.b16 %v2157, %v2153
    %v2206 = vpack.c.b16 %v2158, %v2154
    %v2207 = vpack.c.b16 %v2159, %v2155
    %v2208 = vpack.c.b16 %v2160, %v2156
    %v2209 = vpack.c.b16 %v2165, %v2161
    %v2210 = vpack.c.b16 %v2166, %v2162
    %v2211 = vpack.c.b16 %v2167, %v2163
    %v2212 = vpack.c.b16 %v2168, %v2164
    %v2213 = vpack.c.b16 %v2173, %v2169
    %v2214 = vpack.c.b16 %v2174, %v2170
    %v2215 = vpack.c.b16 %v2175, %v2171
    %v2216 = vpack.c.b16 %v2176, %v2172
    %v2217 = vpack.c.b16 %v2181, %v2177
    %v2218 = vpack.c.b16 %v2182, %v2178
    %v2219 = vpack.c.b16 %v2183, %v2179
    %v2220 = vpack.c.b16 %v2184, %v2180
    %v2221 = vpack.c.b16 %v2189, %v2185
    %v2222 = vpack.c.b16 %v2190, %v2186
    %v2223 = vpack.c.b16 %v2191, %v2187
    %v2224 = vpack.c.b16 %v2192, %v2188
    %2257 = vmatprep.subr.bf16.mxu0 0
    %2258 = vmatpush1.bf16.msra.mxu0 %v618
    %2259 = vmatprep.subr.bf16.mxu0 0
    %2260 = vmatpush1.bf16.msra.mxu0 %v619
    %2261 = vmatprep.subr.bf16.mxu0 0
    %2262 = vmatpush1.bf16.msra.mxu0 %v620
    %2263 = vmatprep.subr.bf16.mxu0 0
    %2264 = vmatpush1.bf16.msra.mxu0 %v621
    %2265 = vmatprep.subr.bf16.mxu0 0
    %2266 = vmatpush1.bf16.msra.mxu0 %v622
    %2267 = vmatprep.subr.bf16.mxu0 0
    %2268 = vmatpush1.bf16.msra.mxu0 %v623
    %2269 = vmatprep.subr.bf16.mxu0 0
    %2270 = vmatpush1.bf16.msra.mxu0 %v624
    %2271 = vmatprep.subr.bf16.mxu0 0
    %2272 = vmatpush1.bf16.msra.mxu0 %v625
    %2273 = vmatprep.subr.bf16.mxu0 0
    %2274 = vmatpush1.bf16.msra.mxu0 %v626
    %2275 = vmatprep.subr.bf16.mxu0 0
    %2276 = vmatpush1.bf16.msra.mxu0 %v627
    %2277 = vmatprep.subr.bf16.mxu0 0
    %2278 = vmatpush1.bf16.msra.mxu0 %v628
    %2279 = vmatprep.subr.bf16.mxu0 0
    %2280 = vmatpush1.bf16.msra.mxu0 %v629
    %2281 = vmatprep.subr.bf16.mxu0 0
    %2282 = vmatpush1.bf16.msra.mxu0 %v630
    %2283 = vmatprep.subr.bf16.mxu0 0
    %2284 = vmatpush1.bf16.msra.mxu0 %v631
    %2285 = vmatprep.subr.bf16.mxu0 0
    %2286 = vmatpush1.bf16.msra.mxu0 %v632
    %2287 = vmatprep.subr.bf16.mxu0 0
    %2288 = vmatpush1.bf16.msra.mxu0 %v633
    %2289 = vmatprep.mubr.bf16.mxu0 %v2194
    %2290 = vmatmul.mubr.bf16.gmra.mrb[0].mxu0 %v2193
    %v2291 = vpop.f32.mrb[0].mxu0
    %v2292 = vadd.f32 0.0, %v2291
    %v2293 = vpop.f32.mrb[0].mxu0
    %v2294 = vpop.f32.mrb[0].mxu0
    %v2295 = vadd.f32 0.0, %v2294
    %v2296 = vpop.f32.mrb[0].mxu0
    %2297 = vmatprep.mubr.bf16.mxu0 %v2198
    %2298 = vmatmul.mubr.bf16.gmra.mrb[0].mxu0 %v2197
    %v2299 = vpop.f32.mrb[0].mxu0
    %v2300 = vadd.f32 0.0, %v2299
    %v2301 = vpop.f32.mrb[0].mxu0
    %v2302 = vpop.f32.mrb[0].mxu0
    %v2303 = vadd.f32 0.0, %v2302
    %v2304 = vpop.f32.mrb[0].mxu0
    %2305 = vmatprep.mubr.bf16.mxu0 %v2202
    %2306 = vmatmul.mubr.bf16.gmra.mrb[0].mxu0 %v2201
    %v2307 = vpop.f32.mrb[0].mxu0
    %v2308 = vadd.f32 0.0, %v2307
    %v2309 = vpop.f32.mrb[0].mxu0
    %v2310 = vpop.f32.mrb[0].mxu0
    %v2311 = vadd.f32 0.0, %v2310
    %v2312 = vpop.f32.mrb[0].mxu0
    %2313 = vmatprep.mubr.bf16.mxu0 %v2206
    %2314 = vmatmul.mubr.bf16.gmra.mrb[0].mxu0 %v2205
    %v2315 = vpop.f32.mrb[0].mxu0
    %v2316 = vadd.f32 0.0, %v2315
    %v2317 = vpop.f32.mrb[0].mxu0
    %v2318 = vpop.f32.mrb[0].mxu0
    %v2319 = vadd.f32 0.0, %v2318
    %v2320 = vpop.f32.mrb[0].mxu0
    %2321 = vmatprep.mubr.bf16.mxu0 %v2210
    %2322 = vmatmul.mubr.bf16.gmra.mrb[0].mxu0 %v2209
    %v2323 = vpop.f32.mrb[0].mxu0
    %v2324 = vadd.f32 0.0, %v2323
    %v2325 = vpop.f32.mrb[0].mxu0
    %v2326 = vpop.f32.mrb[0].mxu0
    %v2327 = vadd.f32 0.0, %v2326
    %v2328 = vpop.f32.mrb[0].mxu0
    %2329 = vmatprep.mubr.bf16.mxu0 %v2214
    %2330 = vmatmul.mubr.bf16.gmra.mrb[0].mxu0 %v2213
    %v2331 = vpop.f32.mrb[0].mxu0
    %v2332 = vadd.f32 0.0, %v2331
    %v2333 = vpop.f32.mrb[0].mxu0
    %v2334 = vpop.f32.mrb[0].mxu0
    %v2335 = vadd.f32 0.0, %v2334
    %v2336 = vpop.f32.mrb[0].mxu0
    %2337 = vmatprep.mubr.bf16.mxu0 %v2218
    %2338 = vmatmul.mubr.bf16.gmra.mrb[0].mxu0 %v2217
    %v2339 = vpop.f32.mrb[0].mxu0
    %v2340 = vadd.f32 0.0, %v2339
    %v2341 = vpop.f32.mrb[0].mxu0
    %v2342 = vpop.f32.mrb[0].mxu0
    %v2343 = vadd.f32 0.0, %v2342
    %v2344 = vpop.f32.mrb[0].mxu0
    %2345 = vmatprep.mubr.bf16.mxu0 %v2222
    %2346 = vmatmul.mubr.bf16.gmra.mrb[0].mxu0 %v2221
    %v2347 = vpop.f32.mrb[0].mxu0
    %v2348 = vadd.f32 0.0, %v2347
    %v2349 = vpop.f32.mrb[0].mxu0
    %v2350 = vpop.f32.mrb[0].mxu0
    %v2351 = vadd.f32 0.0, %v2350
    %v2352 = vpop.f32.mrb[0].mxu0
    %2353 = vdwg.mxu0
    %2354 = vmatprep.subr.bf16.mxu0 0
    %2355 = vmatpush1.bf16.msra.mxu0 %v634
    %2356 = vmatprep.subr.bf16.mxu0 0
    %2357 = vmatpush1.bf16.msra.mxu0 %v635
    %2358 = vmatprep.subr.bf16.mxu0 0
    %2359 = vmatpush1.bf16.msra.mxu0 %v636
    %2360 = vmatprep.subr.bf16.mxu0 0
    %2361 = vmatpush1.bf16.msra.mxu0 %v637
    %2362 = vmatprep.subr.bf16.mxu0 0
    %2363 = vmatpush1.bf16.msra.mxu0 %v638
    %2364 = vmatprep.subr.bf16.mxu0 0
    %2365 = vmatpush1.bf16.msra.mxu0 %v639
    %2366 = vmatprep.subr.bf16.mxu0 0
    %2367 = vmatpush1.bf16.msra.mxu0 %v640
    %2368 = vmatprep.subr.bf16.mxu0 0
    %2369 = vmatpush1.bf16.msra.mxu0 %v641
    %2370 = vmatprep.subr.bf16.mxu0 0
    %2371 = vmatpush1.bf16.msra.mxu0 %v642
    %2372 = vmatprep.subr.bf16.mxu0 0
    %2373 = vmatpush1.bf16.msra.mxu0 %v643
    %2374 = vmatprep.subr.bf16.mxu0 0
    %2375 = vmatpush1.bf16.msra.mxu0 %v644
    %2376 = vmatprep.subr.bf16.mxu0 0
    %2377 = vmatpush1.bf16.msra.mxu0 %v645
    %2378 = vmatprep.subr.bf16.mxu0 0
    %2379 = vmatpush1.bf16.msra.mxu0 %v646
    %2380 = vmatprep.subr.bf16.mxu0 0
    %2381 = vmatpush1.bf16.msra.mxu0 %v647
    %2382 = vmatprep.subr.bf16.mxu0 0
    %2383 = vmatpush1.bf16.msra.mxu0 %v648
    %2384 = vmatprep.subr.bf16.mxu0 0
    %2385 = vmatpush1.bf16.msra.mxu0 %v649
    %2386 = vmatprep.mubr.bf16.mxu0 %v2196
    %2387 = vmatmul.mubr.bf16.gmra.mrb[0].mxu0 %v2195
    %v2388 = vpop.f32.mrb[0].mxu0
    %v2389 = vadd.f32 %v2292, %v2388
    %v2390 = vpop.f32.mrb[0].mxu0
    %v2391 = vpop.f32.mrb[0].mxu0
    %v2392 = vadd.f32 %v2295, %v2391
    %v2393 = vpop.f32.mrb[0].mxu0
    %2394 = vmatprep.mubr.bf16.mxu0 %v2200
    %2395 = vmatmul.mubr.bf16.gmra.mrb[0].mxu0 %v2199
    %v2396 = vpop.f32.mrb[0].mxu0
    %v2397 = vadd.f32 %v2300, %v2396
    %v2398 = vpop.f32.mrb[0].mxu0
    %v2399 = vpop.f32.mrb[0].mxu0
    %v2400 = vadd.f32 %v2303, %v2399
    %v2401 = vpop.f32.mrb[0].mxu0
    %2402 = vmatprep.mubr.bf16.mxu0 %v2204
    %2403 = vmatmul.mubr.bf16.gmra.mrb[0].mxu0 %v2203
    %v2404 = vpop.f32.mrb[0].mxu0
    %v2405 = vadd.f32 %v2308, %v2404
    %v2406 = vpop.f32.mrb[0].mxu0
    %v2407 = vpop.f32.mrb[0].mxu0
    %v2408 = vadd.f32 %v2311, %v2407
    %v2409 = vpop.f32.mrb[0].mxu0
    %2410 = vmatprep.mubr.bf16.mxu0 %v2208
    %2411 = vmatmul.mubr.bf16.gmra.mrb[0].mxu0 %v2207
    %v2412 = vpop.f32.mrb[0].mxu0
    %v2413 = vadd.f32 %v2316, %v2412
    %v2414 = vpop.f32.mrb[0].mxu0
    %v2415 = vpop.f32.mrb[0].mxu0
    %v2416 = vadd.f32 %v2319, %v2415
    %v2417 = vpop.f32.mrb[0].mxu0
    %2418 = vmatprep.mubr.bf16.mxu0 %v2212
    %2419 = vmatmul.mubr.bf16.gmra.mrb[0].mxu0 %v2211
    %v2420 = vpop.f32.mrb[0].mxu0
    %v2421 = vadd.f32 %v2324, %v2420
    %v2422 = vpop.f32.mrb[0].mxu0
    %v2423 = vpop.f32.mrb[0].mxu0
    %v2424 = vadd.f32 %v2327, %v2423
    %v2425 = vpop.f32.mrb[0].mxu0
    %2426 = vmatprep.mubr.bf16.mxu0 %v2216
    %2427 = vmatmul.mubr.bf16.gmra.mrb[0].mxu0 %v2215
    %v2428 = vpop.f32.mrb[0].mxu0
    %v2429 = vadd.f32 %v2332, %v2428
    %v2430 = vpop.f32.mrb[0].mxu0
    %v2431 = vpop.f32.mrb[0].mxu0
    %v2432 = vadd.f32 %v2335, %v2431
    %v2433 = vpop.f32.mrb[0].mxu0
    %2434 = vmatprep.mubr.bf16.mxu0 %v2220
    %2435 = vmatmul.mubr.bf16.gmra.mrb[0].mxu0 %v2219
    %v2436 = vpop.f32.mrb[0].mxu0
    %v2437 = vadd.f32 %v2340, %v2436
    %v2438 = vpop.f32.mrb[0].mxu0
    %v2439 = vpop.f32.mrb[0].mxu0
    %v2440 = vadd.f32 %v2343, %v2439
    %v2441 = vpop.f32.mrb[0].mxu0
    %2442 = vmatprep.mubr.bf16.mxu0 %v2224
    %2443 = vmatmul.mubr.bf16.gmra.mrb[0].mxu0 %v2223
    %v2444 = vpop.f32.mrb[0].mxu0
    %v2445 = vadd.f32 %v2348, %v2444
    %v2446 = vpop.f32.mrb[0].mxu0
    %v2447 = vpop.f32.mrb[0].mxu0
    %v2448 = vadd.f32 %v2351, %v2447
    %v2449 = vpop.f32.mrb[0].mxu0
    %2450 = vdwg.mxu0
    %v2451 = vpack.c.bf16 %v2392, %v2389
    %v2452 = vpack.c.bf16 %v2400, %v2397
    %v2453 = vpack.c.bf16 %v2408, %v2405
    %v2454 = vpack.c.bf16 %v2416, %v2413
    %v2455 = vpack.c.bf16 %v2424, %v2421
    %v2456 = vpack.c.bf16 %v2432, %v2429
    %v2457 = vpack.c.bf16 %v2440, %v2437
    %v2458 = vpack.c.bf16 %v2448, %v2445
    %v2460 = vsel %vm1279, %v2451, 0
    %v2463 = vsel %vm1279, %v2452, 0
    %v2466 = vsel %vm1279, %v2453, 0
    %v2469 = vsel %vm1279, %v2454, 0
    %v2472 = vsel %vm1279, %v2455, 0
    %v2475 = vsel %vm1279, %v2456, 0
    %v2478 = vsel %vm1279, %v2457, 0
    %v2481 = vsel %vm1279, %v2458, 0
    %v2484 = vsel %vm1304, %v2096, 0
    %2486 = vmatprep.subr.bf16.mxu0 0
    %2487 = vmatpush1.bf16.msra.mxu0 %v2484
    %2488 = vmatprep.subr.bf16.mxu0 0
    %2489 = vmatpush1.bf16.msra.mxu0 0
    %2490 = vmatprep.subr.bf16.mxu0 0
    %2491 = vmatpush1.bf16.msra.mxu0 0
    %2492 = vmatprep.subr.bf16.mxu0 0
    %2493 = vmatpush1.bf16.msra.mxu0 0
    %2494 = vmatprep.subr.bf16.mxu0 0
    %2495 = vmatpush1.bf16.msra.mxu0 0
    %2496 = vmatprep.subr.bf16.mxu0 0
    %2497 = vmatpush1.bf16.msra.mxu0 0
    %2498 = vmatprep.subr.bf16.mxu0 0
    %2499 = vmatpush1.bf16.msra.mxu0 0
    %2500 = vmatprep.subr.bf16.mxu0 0
    %2501 = vmatpush1.bf16.msra.mxu0 0
    %2502 = vmatprep.subr.bf16.mxu0 0
    %2503 = vmatpush1.bf16.msra.mxu0 0
    %2504 = vmatprep.subr.bf16.mxu0 0
    %2505 = vmatpush1.bf16.msra.mxu0 0
    %2506 = vmatprep.subr.bf16.mxu0 0
    %2507 = vmatpush1.bf16.msra.mxu0 0
    %2508 = vmatprep.subr.bf16.mxu0 0
    %2509 = vmatpush1.bf16.msra.mxu0 0
    %2510 = vmatprep.subr.bf16.mxu0 0
    %2511 = vmatpush1.bf16.msra.mxu0 0
    %2512 = vmatprep.subr.bf16.mxu0 0
    %2513 = vmatpush1.bf16.msra.mxu0 0
    %2514 = vmatprep.subr.bf16.mxu0 0
    %2515 = vmatpush1.bf16.msra.mxu0 0
    %2516 = vmatprep.subr.bf16.mxu0 0
    %2517 = vmatpush1.bf16.msra.mxu0 0
    %2518 = vmatprep.mubr.bf16.mxu0 0
    %2519 = vmatmul.mubr.bf16.gmra.mrb[0].mxu0 %v2460
    %v2520 = vpop.f32.mrb[0].mxu0
    %v2521 = vadd.f32 0.0, %v2520
    %v2522 = vpop.f32.mrb[0].mxu0
    %v2523 = vpop.f32.mrb[0].mxu0
    %v2524 = vadd.f32 0.0, %v2523
    %v2525 = vpop.f32.mrb[0].mxu0
    %2526 = vmatprep.mubr.bf16.mxu0 0
    %2527 = vmatmul.mubr.bf16.gmra.mrb[0].mxu0 %v2463
    %v2528 = vpop.f32.mrb[0].mxu0
    %v2529 = vadd.f32 0.0, %v2528
    %v2530 = vpop.f32.mrb[0].mxu0
    %v2531 = vpop.f32.mrb[0].mxu0
    %v2532 = vadd.f32 0.0, %v2531
    %v2533 = vpop.f32.mrb[0].mxu0
    %2534 = vmatprep.mubr.bf16.mxu0 0
    %2535 = vmatmul.mubr.bf16.gmra.mrb[0].mxu0 %v2466
    %v2536 = vpop.f32.mrb[0].mxu0
    %v2537 = vadd.f32 0.0, %v2536
    %v2538 = vpop.f32.mrb[0].mxu0
    %v2539 = vpop.f32.mrb[0].mxu0
    %v2540 = vadd.f32 0.0, %v2539
    %v2541 = vpop.f32.mrb[0].mxu0
    %2542 = vmatprep.mubr.bf16.mxu0 0
    %2543 = vmatmul.mubr.bf16.gmra.mrb[0].mxu0 %v2469
    %v2544 = vpop.f32.mrb[0].mxu0
    %v2545 = vadd.f32 0.0, %v2544
    %v2546 = vpop.f32.mrb[0].mxu0
    %v2547 = vpop.f32.mrb[0].mxu0
    %v2548 = vadd.f32 0.0, %v2547
    %v2549 = vpop.f32.mrb[0].mxu0
    %2550 = vmatprep.mubr.bf16.mxu0 0
    %2551 = vmatmul.mubr.bf16.gmra.mrb[0].mxu0 %v2472
    %v2552 = vpop.f32.mrb[0].mxu0
    %v2553 = vadd.f32 0.0, %v2552
    %v2554 = vpop.f32.mrb[0].mxu0
    %v2555 = vpop.f32.mrb[0].mxu0
    %v2556 = vadd.f32 0.0, %v2555
    %v2557 = vpop.f32.mrb[0].mxu0
    %2558 = vmatprep.mubr.bf16.mxu0 0
    %2559 = vmatmul.mubr.bf16.gmra.mrb[0].mxu0 %v2475
    %v2560 = vpop.f32.mrb[0].mxu0
    %v2561 = vadd.f32 0.0, %v2560
    %v2562 = vpop.f32.mrb[0].mxu0
    %v2563 = vpop.f32.mrb[0].mxu0
    %v2564 = vadd.f32 0.0, %v2563
    %v2565 = vpop.f32.mrb[0].mxu0
    %2566 = vmatprep.mubr.bf16.mxu0 0
    %2567 = vmatmul.mubr.bf16.gmra.mrb[0].mxu0 %v2478
    %v2568 = vpop.f32.mrb[0].mxu0
    %v2569 = vadd.f32 0.0, %v2568
    %v2570 = vpop.f32.mrb[0].mxu0
    %v2571 = vpop.f32.mrb[0].mxu0
    %v2572 = vadd.f32 0.0, %v2571
    %v2573 = vpop.f32.mrb[0].mxu0
    %2574 = vmatprep.mubr.bf16.mxu0 0
    %2575 = vmatmul.mubr.bf16.gmra.mrb[0].mxu0 %v2481
    %v2576 = vpop.f32.mrb[0].mxu0
    %v2577 = vadd.f32 0.0, %v2576
    %v2578 = vpop.f32.mrb[0].mxu0
    %v2579 = vpop.f32.mrb[0].mxu0
    %v2580 = vadd.f32 0.0, %v2579
    %v2581 = vpop.f32.mrb[0].mxu0
    %2582 = vdwg.mxu0
    %v2583 = vadd.f32 %v2048, %v2521
    %v2584 = vadd.f32 %v2049, %v2524
    %v2585 = vadd.f32 %v2050, %v2529
    %v2586 = vadd.f32 %v2051, %v2532
    %v2587 = vadd.f32 %v2052, %v2537
    %v2588 = vadd.f32 %v2053, %v2540
    %v2589 = vadd.f32 %v2054, %v2545
    %v2590 = vadd.f32 %v2055, %v2548
    %v2591 = vadd.f32 %v2056, %v2553
    %v2592 = vadd.f32 %v2057, %v2556
    %v2593 = vadd.f32 %v2058, %v2561
    %v2594 = vadd.f32 %v2059, %v2564
    %v2595 = vadd.f32 %v2060, %v2569
    %v2596 = vadd.f32 %v2061, %v2572
    %v2597 = vadd.f32 %v2062, %v2577
    %v2598 = vadd.f32 %v2063, %v2580
    %v2599 = vld [vmem:[#allocation2 + $0x400] sm:$0xff]
    %v2600 = vld [vmem:[#allocation2 + $0x408] sm:$0xff]
    %v2601 = vld [vmem:[#allocation2 + $0x410] sm:$0xff]
    %v2602 = vld [vmem:[#allocation2 + $0x418] sm:$0xff]
    %v2603 = vld [vmem:[#allocation2 + $0x420] sm:$0xff]
    %v2604 = vld [vmem:[#allocation2 + $0x428] sm:$0xff]
    %v2605 = vld [vmem:[#allocation2 + $0x430] sm:$0xff]
    %v2606 = vld [vmem:[#allocation2 + $0x438] sm:$0xff]
    %v2607 = vld [vmem:[#allocation2 + $0x440] sm:$0xff]
    %v2608 = vld [vmem:[#allocation2 + $0x448] sm:$0xff]
    %v2609 = vld [vmem:[#allocation2 + $0x450] sm:$0xff]
    %v2610 = vld [vmem:[#allocation2 + $0x458] sm:$0xff]
    %v2611 = vld [vmem:[#allocation2 + $0x460] sm:$0xff]
    %v2612 = vld [vmem:[#allocation2 + $0x468] sm:$0xff]
    %v2613 = vld [vmem:[#allocation2 + $0x470] sm:$0xff]
    %v2614 = vld [vmem:[#allocation2 + $0x478] sm:$0xff]
    %v2615 = vld [vmem:[#allocation2 + $0x480] sm:$0xff]
    %v2616 = vld [vmem:[#allocation2 + $0x488] sm:$0xff]
    %v2617 = vld [vmem:[#allocation2 + $0x490] sm:$0xff]
    %v2618 = vld [vmem:[#allocation2 + $0x498] sm:$0xff]
    %v2619 = vld [vmem:[#allocation2 + $0x4a0] sm:$0xff]
    %v2620 = vld [vmem:[#allocation2 + $0x4a8] sm:$0xff]
    %v2621 = vld [vmem:[#allocation2 + $0x4b0] sm:$0xff]
    %v2622 = vld [vmem:[#allocation2 + $0x4b8] sm:$0xff]
    %v2623 = vld [vmem:[#allocation2 + $0x4c0] sm:$0xff]
    %v2624 = vld [vmem:[#allocation2 + $0x4c8] sm:$0xff]
    %v2625 = vld [vmem:[#allocation2 + $0x4d0] sm:$0xff]
    %v2626 = vld [vmem:[#allocation2 + $0x4d8] sm:$0xff]
    %v2627 = vld [vmem:[#allocation2 + $0x4e0] sm:$0xff]
    %v2628 = vld [vmem:[#allocation2 + $0x4e8] sm:$0xff]
    %v2629 = vld [vmem:[#allocation2 + $0x4f0] sm:$0xff]
    %v2630 = vld [vmem:[#allocation2 + $0x4f8] sm:$0xff]
    %v2631 = vld [vmem:[%s2 + $0x10] sm:$0xf]
    %v2664 = vunpack.c.l.b16 %v2599
    %v2665 = vunpack.c.h.b16 %v2599
    %v2666 = vunpack.c.l.b16 %v2600
    %v2667 = vunpack.c.h.b16 %v2600
    %v2668 = vunpack.c.l.b16 %v2601
    %v2669 = vunpack.c.h.b16 %v2601
    %v2670 = vunpack.c.l.b16 %v2602
    %v2671 = vunpack.c.h.b16 %v2602
    %v2672 = vunpack.c.l.b16 %v2603
    %v2673 = vunpack.c.h.b16 %v2603
    %v2674 = vunpack.c.l.b16 %v2604
    %v2675 = vunpack.c.h.b16 %v2604
    %v2676 = vunpack.c.l.b16 %v2605
    %v2677 = vunpack.c.h.b16 %v2605
    %v2678 = vunpack.c.l.b16 %v2606
    %v2679 = vunpack.c.h.b16 %v2606
    %v2680 = vunpack.c.l.b16 %v2607
    %v2681 = vunpack.c.h.b16 %v2607
    %v2682 = vunpack.c.l.b16 %v2608
    %v2683 = vunpack.c.h.b16 %v2608
    %v2684 = vunpack.c.l.b16 %v2609
    %v2685 = vunpack.c.h.b16 %v2609
    %v2686 = vunpack.c.l.b16 %v2610
    %v2687 = vunpack.c.h.b16 %v2610
    %v2688 = vunpack.c.l.b16 %v2611
    %v2689 = vunpack.c.h.b16 %v2611
    %v2690 = vunpack.c.l.b16 %v2612
    %v2691 = vunpack.c.h.b16 %v2612
    %v2692 = vunpack.c.l.b16 %v2613
    %v2693 = vunpack.c.h.b16 %v2613
    %v2694 = vunpack.c.l.b16 %v2614
    %v2695 = vunpack.c.h.b16 %v2614
    %v2696 = vunpack.c.l.b16 %v2615
    %v2697 = vunpack.c.h.b16 %v2615
    %v2698 = vunpack.c.l.b16 %v2616
    %v2699 = vunpack.c.h.b16 %v2616
    %v2700 = vunpack.c.l.b16 %v2617
    %v2701 = vunpack.c.h.b16 %v2617
    %v2702 = vunpack.c.l.b16 %v2618
    %v2703 = vunpack.c.h.b16 %v2618
    %v2704 = vunpack.c.l.b16 %v2619
    %v2705 = vunpack.c.h.b16 %v2619
    %v2706 = vunpack.c.l.b16 %v2620
    %v2707 = vunpack.c.h.b16 %v2620
    %v2708 = vunpack.c.l.b16 %v2621
    %v2709 = vunpack.c.h.b16 %v2621
    %v2710 = vunpack.c.l.b16 %v2622
    %v2711 = vunpack.c.h.b16 %v2622
    %v2712 = vunpack.c.l.b16 %v2623
    %v2713 = vunpack.c.h.b16 %v2623
    %v2714 = vunpack.c.l.b16 %v2624
    %v2715 = vunpack.c.h.b16 %v2624
    %v2716 = vunpack.c.l.b16 %v2625
    %v2717 = vunpack.c.h.b16 %v2625
    %v2718 = vunpack.c.l.b16 %v2626
    %v2719 = vunpack.c.h.b16 %v2626
    %v2720 = vunpack.c.l.b16 %v2627
    %v2721 = vunpack.c.h.b16 %v2627
    %v2722 = vunpack.c.l.b16 %v2628
    %v2723 = vunpack.c.h.b16 %v2628
    %v2724 = vunpack.c.l.b16 %v2629
    %v2725 = vunpack.c.h.b16 %v2629
    %v2726 = vunpack.c.l.b16 %v2630
    %v2727 = vunpack.c.h.b16 %v2630
    %v2728 = vpack.c.b16 %v2668, %v2664
    %v2729 = vpack.c.b16 %v2669, %v2665
    %v2730 = vpack.c.b16 %v2670, %v2666
    %v2731 = vpack.c.b16 %v2671, %v2667
    %v2732 = vpack.c.b16 %v2676, %v2672
    %v2733 = vpack.c.b16 %v2677, %v2673
    %v2734 = vpack.c.b16 %v2678, %v2674
    %v2735 = vpack.c.b16 %v2679, %v2675
    %v2736 = vpack.c.b16 %v2684, %v2680
    %v2737 = vpack.c.b16 %v2685, %v2681
    %v2738 = vpack.c.b16 %v2686, %v2682
    %v2739 = vpack.c.b16 %v2687, %v2683
    %v2740 = vpack.c.b16 %v2692, %v2688
    %v2741 = vpack.c.b16 %v2693, %v2689
    %v2742 = vpack.c.b16 %v2694, %v2690
    %v2743 = vpack.c.b16 %v2695, %v2691
    %v2744 = vpack.c.b16 %v2700, %v2696
    %v2745 = vpack.c.b16 %v2701, %v2697
    %v2746 = vpack.c.b16 %v2702, %v2698
    %v2747 = vpack.c.b16 %v2703, %v2699
    %v2748 = vpack.c.b16 %v2708, %v2704
    %v2749 = vpack.c.b16 %v2709, %v2705
    %v2750 = vpack.c.b16 %v2710, %v2706
    %v2751 = vpack.c.b16 %v2711, %v2707
    %v2752 = vpack.c.b16 %v2716, %v2712
    %v2753 = vpack.c.b16 %v2717, %v2713
    %v2754 = vpack.c.b16 %v2718, %v2714
    %v2755 = vpack.c.b16 %v2719, %v2715
    %v2756 = vpack.c.b16 %v2724, %v2720
    %v2757 = vpack.c.b16 %v2725, %v2721
    %v2758 = vpack.c.b16 %v2726, %v2722
    %v2759 = vpack.c.b16 %v2727, %v2723
    %2792 = vmatprep.subr.bf16.mxu0 0
    %2793 = vmatpush1.bf16.msra.mxu0 %v618
    %2794 = vmatprep.subr.bf16.mxu0 0
    %2795 = vmatpush1.bf16.msra.mxu0 %v619
    %2796 = vmatprep.subr.bf16.mxu0 0
    %2797 = vmatpush1.bf16.msra.mxu0 %v620
    %2798 = vmatprep.subr.bf16.mxu0 0
    %2799 = vmatpush1.bf16.msra.mxu0 %v621
    %2800 = vmatprep.subr.bf16.mxu0 0
    %2801 = vmatpush1.bf16.msra.mxu0 %v622
    %2802 = vmatprep.subr.bf16.mxu0 0
    %2803 = vmatpush1.bf16.msra.mxu0 %v623
    %2804 = vmatprep.subr.bf16.mxu0 0
    %2805 = vmatpush1.bf16.msra.mxu0 %v624
    %2806 = vmatprep.subr.bf16.mxu0 0
    %2807 = vmatpush1.bf16.msra.mxu0 %v625
    %2808 = vmatprep.subr.bf16.mxu0 0
    %2809 = vmatpush1.bf16.msra.mxu0 %v626
    %2810 = vmatprep.subr.bf16.mxu0 0
    %2811 = vmatpush1.bf16.msra.mxu0 %v627
    %2812 = vmatprep.subr.bf16.mxu0 0
    %2813 = vmatpush1.bf16.msra.mxu0 %v628
    %2814 = vmatprep.subr.bf16.mxu0 0
    %2815 = vmatpush1.bf16.msra.mxu0 %v629
    %2816 = vmatprep.subr.bf16.mxu0 0
    %2817 = vmatpush1.bf16.msra.mxu0 %v630
    %2818 = vmatprep.subr.bf16.mxu0 0
    %2819 = vmatpush1.bf16.msra.mxu0 %v631
    %2820 = vmatprep.subr.bf16.mxu0 0
    %2821 = vmatpush1.bf16.msra.mxu0 %v632
    %2822 = vmatprep.subr.bf16.mxu0 0
    %2823 = vmatpush1.bf16.msra.mxu0 %v633
    %2824 = vmatprep.mubr.bf16.mxu0 %v2729
    %2825 = vmatmul.mubr.bf16.gmra.mrb[0].mxu0 %v2728
    %v2826 = vpop.f32.mrb[0].mxu0
    %v2827 = vadd.f32 0.0, %v2826
    %v2828 = vpop.f32.mrb[0].mxu0
    %v2829 = vpop.f32.mrb[0].mxu0
    %v2830 = vadd.f32 0.0, %v2829
    %v2831 = vpop.f32.mrb[0].mxu0
    %2832 = vmatprep.mubr.bf16.mxu0 %v2733
    %2833 = vmatmul.mubr.bf16.gmra.mrb[0].mxu0 %v2732
    %v2834 = vpop.f32.mrb[0].mxu0
    %v2835 = vadd.f32 0.0, %v2834
    %v2836 = vpop.f32.mrb[0].mxu0
    %v2837 = vpop.f32.mrb[0].mxu0
    %v2838 = vadd.f32 0.0, %v2837
    %v2839 = vpop.f32.mrb[0].mxu0
    %2840 = vmatprep.mubr.bf16.mxu0 %v2737
    %2841 = vmatmul.mubr.bf16.gmra.mrb[0].mxu0 %v2736
    %v2842 = vpop.f32.mrb[0].mxu0
    %v2843 = vadd.f32 0.0, %v2842
    %v2844 = vpop.f32.mrb[0].mxu0
    %v2845 = vpop.f32.mrb[0].mxu0
    %v2846 = vadd.f32 0.0, %v2845
    %v2847 = vpop.f32.mrb[0].mxu0
    %2848 = vmatprep.mubr.bf16.mxu0 %v2741
    %2849 = vmatmul.mubr.bf16.gmra.mrb[0].mxu0 %v2740
    %v2850 = vpop.f32.mrb[0].mxu0
    %v2851 = vadd.f32 0.0, %v2850
    %v2852 = vpop.f32.mrb[0].mxu0
    %v2853 = vpop.f32.mrb[0].mxu0
    %v2854 = vadd.f32 0.0, %v2853
    %v2855 = vpop.f32.mrb[0].mxu0
    %2856 = vmatprep.mubr.bf16.mxu0 %v2745
    %2857 = vmatmul.mubr.bf16.gmra.mrb[0].mxu0 %v2744
    %v2858 = vpop.f32.mrb[0].mxu0
    %v2859 = vadd.f32 0.0, %v2858
    %v2860 = vpop.f32.mrb[0].mxu0
    %v2861 = vpop.f32.mrb[0].mxu0
    %v2862 = vadd.f32 0.0, %v2861
    %v2863 = vpop.f32.mrb[0].mxu0
    %2864 = vmatprep.mubr.bf16.mxu0 %v2749
    %2865 = vmatmul.mubr.bf16.gmra.mrb[0].mxu0 %v2748
    %v2866 = vpop.f32.mrb[0].mxu0
    %v2867 = vadd.f32 0.0, %v2866
    %v2868 = vpop.f32.mrb[0].mxu0
    %v2869 = vpop.f32.mrb[0].mxu0
    %v2870 = vadd.f32 0.0, %v2869
    %v2871 = vpop.f32.mrb[0].mxu0
    %2872 = vmatprep.mubr.bf16.mxu0 %v2753
    %2873 = vmatmul.mubr.bf16.gmra.mrb[0].mxu0 %v2752
    %v2874 = vpop.f32.mrb[0].mxu0
    %v2875 = vadd.f32 0.0, %v2874
    %v2876 = vpop.f32.mrb[0].mxu0
    %v2877 = vpop.f32.mrb[0].mxu0
    %v2878 = vadd.f32 0.0, %v2877
    %v2879 = vpop.f32.mrb[0].mxu0
    %2880 = vmatprep.mubr.bf16.mxu0 %v2757
    %2881 = vmatmul.mubr.bf16.gmra.mrb[0].mxu0 %v2756
    %v2882 = vpop.f32.mrb[0].mxu0
    %v2883 = vadd.f32 0.0, %v2882
    %v2884 = vpop.f32.mrb[0].mxu0
    %v2885 = vpop.f32.mrb[0].mxu0
    %v2886 = vadd.f32 0.0, %v2885
    %v2887 = vpop.f32.mrb[0].mxu0
    %2888 = vdwg.mxu0
    %2889 = vmatprep.subr.bf16.mxu0 0
    %2890 = vmatpush1.bf16.msra.mxu0 %v634
    %2891 = vmatprep.subr.bf16.mxu0 0
    %2892 = vmatpush1.bf16.msra.mxu0 %v635
    %2893 = vmatprep.subr.bf16.mxu0 0
    %2894 = vmatpush1.bf16.msra.mxu0 %v636
    %2895 = vmatprep.subr.bf16.mxu0 0
    %2896 = vmatpush1.bf16.msra.mxu0 %v637
    %2897 = vmatprep.subr.bf16.mxu0 0
    %2898 = vmatpush1.bf16.msra.mxu0 %v638
    %2899 = vmatprep.subr.bf16.mxu0 0
    %2900 = vmatpush1.bf16.msra.mxu0 %v639
    %2901 = vmatprep.subr.bf16.mxu0 0
    %2902 = vmatpush1.bf16.msra.mxu0 %v640
    %2903 = vmatprep.subr.bf16.mxu0 0
    %2904 = vmatpush1.bf16.msra.mxu0 %v641
    %2905 = vmatprep.subr.bf16.mxu0 0
    %2906 = vmatpush1.bf16.msra.mxu0 %v642
    %2907 = vmatprep.subr.bf16.mxu0 0
    %2908 = vmatpush1.bf16.msra.mxu0 %v643
    %2909 = vmatprep.subr.bf16.mxu0 0
    %2910 = vmatpush1.bf16.msra.mxu0 %v644
    %2911 = vmatprep.subr.bf16.mxu0 0
    %2912 = vmatpush1.bf16.msra.mxu0 %v645
    %2913 = vmatprep.subr.bf16.mxu0 0
    %2914 = vmatpush1.bf16.msra.mxu0 %v646
    %2915 = vmatprep.subr.bf16.mxu0 0
    %2916 = vmatpush1.bf16.msra.mxu0 %v647
    %2917 = vmatprep.subr.bf16.mxu0 0
    %2918 = vmatpush1.bf16.msra.mxu0 %v648
    %2919 = vmatprep.subr.bf16.mxu0 0
    %2920 = vmatpush1.bf16.msra.mxu0 %v649
    %2921 = vmatprep.mubr.bf16.mxu0 %v2731
    %2922 = vmatmul.mubr.bf16.gmra.mrb[0].mxu0 %v2730
    %v2923 = vpop.f32.mrb[0].mxu0
    %v2924 = vadd.f32 %v2827, %v2923
    %v2925 = vpop.f32.mrb[0].mxu0
    %v2926 = vpop.f32.mrb[0].mxu0
    %v2927 = vadd.f32 %v2830, %v2926
    %v2928 = vpop.f32.mrb[0].mxu0
    %2929 = vmatprep.mubr.bf16.mxu0 %v2735
    %2930 = vmatmul.mubr.bf16.gmra.mrb[0].mxu0 %v2734
    %v2931 = vpop.f32.mrb[0].mxu0
    %v2932 = vadd.f32 %v2835, %v2931
    %v2933 = vpop.f32.mrb[0].mxu0
    %v2934 = vpop.f32.mrb[0].mxu0
    %v2935 = vadd.f32 %v2838, %v2934
    %v2936 = vpop.f32.mrb[0].mxu0
    %2937 = vmatprep.mubr.bf16.mxu0 %v2739
    %2938 = vmatmul.mubr.bf16.gmra.mrb[0].mxu0 %v2738
    %v2939 = vpop.f32.mrb[0].mxu0
    %v2940 = vadd.f32 %v2843, %v2939
    %v2941 = vpop.f32.mrb[0].mxu0
    %v2942 = vpop.f32.mrb[0].mxu0
    %v2943 = vadd.f32 %v2846, %v2942
    %v2944 = vpop.f32.mrb[0].mxu0
    %2945 = vmatprep.mubr.bf16.mxu0 %v2743
    %2946 = vmatmul.mubr.bf16.gmra.mrb[0].mxu0 %v2742
    %v2947 = vpop.f32.mrb[0].mxu0
    %v2948 = vadd.f32 %v2851, %v2947
    %v2949 = vpop.f32.mrb[0].mxu0
    %v2950 = vpop.f32.mrb[0].mxu0
    %v2951 = vadd.f32 %v2854, %v2950
    %v2952 = vpop.f32.mrb[0].mxu0
    %2953 = vmatprep.mubr.bf16.mxu0 %v2747
    %2954 = vmatmul.mubr.bf16.gmra.mrb[0].mxu0 %v2746
    %v2955 = vpop.f32.mrb[0].mxu0
    %v2956 = vadd.f32 %v2859, %v2955
    %v2957 = vpop.f32.mrb[0].mxu0
    %v2958 = vpop.f32.mrb[0].mxu0
    %v2959 = vadd.f32 %v2862, %v2958
    %v2960 = vpop.f32.mrb[0].mxu0
    %2961 = vmatprep.mubr.bf16.mxu0 %v2751
    %2962 = vmatmul.mubr.bf16.gmra.mrb[0].mxu0 %v2750
    %v2963 = vpop.f32.mrb[0].mxu0
    %v2964 = vadd.f32 %v2867, %v2963
    %v2965 = vpop.f32.mrb[0].mxu0
    %v2966 = vpop.f32.mrb[0].mxu0
    %v2967 = vadd.f32 %v2870, %v2966
    %v2968 = vpop.f32.mrb[0].mxu0
    %2969 = vmatprep.mubr.bf16.mxu0 %v2755
    %2970 = vmatmul.mubr.bf16.gmra.mrb[0].mxu0 %v2754
    %v2971 = vpop.f32.mrb[0].mxu0
    %v2972 = vadd.f32 %v2875, %v2971
    %v2973 = vpop.f32.mrb[0].mxu0
    %v2974 = vpop.f32.mrb[0].mxu0
    %v2975 = vadd.f32 %v2878, %v2974
    %v2976 = vpop.f32.mrb[0].mxu0
    %2977 = vmatprep.mubr.bf16.mxu0 %v2759
    %2978 = vmatmul.mubr.bf16.gmra.mrb[0].mxu0 %v2758
    %v2979 = vpop.f32.mrb[0].mxu0
    %v2980 = vadd.f32 %v2883, %v2979
    %v2981 = vpop.f32.mrb[0].mxu0
    %v2982 = vpop.f32.mrb[0].mxu0
    %v2983 = vadd.f32 %v2886, %v2982
    %v2984 = vpop.f32.mrb[0].mxu0
    %2985 = vdwg.mxu0
    %v2986 = vpack.c.bf16 %v2927, %v2924
    %v2987 = vpack.c.bf16 %v2935, %v2932
    %v2988 = vpack.c.bf16 %v2943, %v2940
    %v2989 = vpack.c.bf16 %v2951, %v2948
    %v2990 = vpack.c.bf16 %v2959, %v2956
    %v2991 = vpack.c.bf16 %v2967, %v2964
    %v2992 = vpack.c.bf16 %v2975, %v2972
    %v2993 = vpack.c.bf16 %v2983, %v2980
    %v2995 = vsel %vm1279, %v2986, 0
    %v2998 = vsel %vm1279, %v2987, 0
    %v3001 = vsel %vm1279, %v2988, 0
    %v3004 = vsel %vm1279, %v2989, 0
    %v3007 = vsel %vm1279, %v2990, 0
    %v3010 = vsel %vm1279, %v2991, 0
    %v3013 = vsel %vm1279, %v2992, 0
    %v3016 = vsel %vm1279, %v2993, 0
    %v3019 = vsel %vm1304, %v2631, 0
    %3021 = vmatprep.subr.bf16.mxu0 0
    %3022 = vmatpush1.bf16.msra.mxu0 %v3019
    %3023 = vmatprep.subr.bf16.mxu0 0
    %3024 = vmatpush1.bf16.msra.mxu0 0
    %3025 = vmatprep.subr.bf16.mxu0 0
    %3026 = vmatpush1.bf16.msra.mxu0 0
    %3027 = vmatprep.subr.bf16.mxu0 0
    %3028 = vmatpush1.bf16.msra.mxu0 0
    %3029 = vmatprep.subr.bf16.mxu0 0
    %3030 = vmatpush1.bf16.msra.mxu0 0
    %3031 = vmatprep.subr.bf16.mxu0 0
    %3032 = vmatpush1.bf16.msra.mxu0 0
    %3033 = vmatprep.subr.bf16.mxu0 0
    %3034 = vmatpush1.bf16.msra.mxu0 0
    %3035 = vmatprep.subr.bf16.mxu0 0
    %3036 = vmatpush1.bf16.msra.mxu0 0
    %3037 = vmatprep.subr.bf16.mxu0 0
    %3038 = vmatpush1.bf16.msra.mxu0 0
    %3039 = vmatprep.subr.bf16.mxu0 0
    %3040 = vmatpush1.bf16.msra.mxu0 0
    %3041 = vmatprep.subr.bf16.mxu0 0
    %3042 = vmatpush1.bf16.msra.mxu0 0
    %3043 = vmatprep.subr.bf16.mxu0 0
    %3044 = vmatpush1.bf16.msra.mxu0 0
    %3045 = vmatprep.subr.bf16.mxu0 0
    %3046 = vmatpush1.bf16.msra.mxu0 0
    %3047 = vmatprep.subr.bf16.mxu0 0
    %3048 = vmatpush1.bf16.msra.mxu0 0
    %3049 = vmatprep.subr.bf16.mxu0 0
    %3050 = vmatpush1.bf16.msra.mxu0 0
    %3051 = vmatprep.subr.bf16.mxu0 0
    %3052 = vmatpush1.bf16.msra.mxu0 0
    %3053 = vmatprep.mubr.bf16.mxu0 0
    %3054 = vmatmul.mubr.bf16.gmra.mrb[0].mxu0 %v2995
    %v3055 = vpop.f32.mrb[0].mxu0
    %v3056 = vadd.f32 0.0, %v3055
    %v3057 = vpop.f32.mrb[0].mxu0
    %v3058 = vpop.f32.mrb[0].mxu0
    %v3059 = vadd.f32 0.0, %v3058
    %v3060 = vpop.f32.mrb[0].mxu0
    %3061 = vmatprep.mubr.bf16.mxu0 0
    %3062 = vmatmul.mubr.bf16.gmra.mrb[0].mxu0 %v2998
    %v3063 = vpop.f32.mrb[0].mxu0
    %v3064 = vadd.f32 0.0, %v3063
    %v3065 = vpop.f32.mrb[0].mxu0
    %v3066 = vpop.f32.mrb[0].mxu0
    %v3067 = vadd.f32 0.0, %v3066
    %v3068 = vpop.f32.mrb[0].mxu0
    %3069 = vmatprep.mubr.bf16.mxu0 0
    %3070 = vmatmul.mubr.bf16.gmra.mrb[0].mxu0 %v3001
    %v3071 = vpop.f32.mrb[0].mxu0
    %v3072 = vadd.f32 0.0, %v3071
    %v3073 = vpop.f32.mrb[0].mxu0
    %v3074 = vpop.f32.mrb[0].mxu0
    %v3075 = vadd.f32 0.0, %v3074
    %v3076 = vpop.f32.mrb[0].mxu0
    %3077 = vmatprep.mubr.bf16.mxu0 0
    %3078 = vmatmul.mubr.bf16.gmra.mrb[0].mxu0 %v3004
    %v3079 = vpop.f32.mrb[0].mxu0
    %v3080 = vadd.f32 0.0, %v3079
    %v3081 = vpop.f32.mrb[0].mxu0
    %v3082 = vpop.f32.mrb[0].mxu0
    %v3083 = vadd.f32 0.0, %v3082
    %v3084 = vpop.f32.mrb[0].mxu0
    %3085 = vmatprep.mubr.bf16.mxu0 0
    %3086 = vmatmul.mubr.bf16.gmra.mrb[0].mxu0 %v3007
    %v3087 = vpop.f32.mrb[0].mxu0
    %v3088 = vadd.f32 0.0, %v3087
    %v3089 = vpop.f32.mrb[0].mxu0
    %v3090 = vpop.f32.mrb[0].mxu0
    %v3091 = vadd.f32 0.0, %v3090
    %v3092 = vpop.f32.mrb[0].mxu0
    %3093 = vmatprep.mubr.bf16.mxu0 0
    %3094 = vmatmul.mubr.bf16.gmra.mrb[0].mxu0 %v3010
    %v3095 = vpop.f32.mrb[0].mxu0
    %v3096 = vadd.f32 0.0, %v3095
    %v3097 = vpop.f32.mrb[0].mxu0
    %v3098 = vpop.f32.mrb[0].mxu0
    %v3099 = vadd.f32 0.0, %v3098
    %v3100 = vpop.f32.mrb[0].mxu0
    %3101 = vmatprep.mubr.bf16.mxu0 0
    %3102 = vmatmul.mubr.bf16.gmra.mrb[0].mxu0 %v3013
    %v3103 = vpop.f32.mrb[0].mxu0
    %v3104 = vadd.f32 0.0, %v3103
    %v3105 = vpop.f32.mrb[0].mxu0
    %v3106 = vpop.f32.mrb[0].mxu0
    %v3107 = vadd.f32 0.0, %v3106
    %v3108 = vpop.f32.mrb[0].mxu0
    %3109 = vmatprep.mubr.bf16.mxu0 0
    %3110 = vmatmul.mubr.bf16.gmra.mrb[0].mxu0 %v3016
    %v3111 = vpop.f32.mrb[0].mxu0
    %v3112 = vadd.f32 0.0, %v3111
    %v3113 = vpop.f32.mrb[0].mxu0
    %v3114 = vpop.f32.mrb[0].mxu0
    %v3115 = vadd.f32 0.0, %v3114
    %v3116 = vpop.f32.mrb[0].mxu0
    %3117 = vdwg.mxu0
    %v3118 = vadd.f32 %v2583, %v3056
    %v3119 = vadd.f32 %v2584, %v3059
    %v3120 = vadd.f32 %v2585, %v3064
    %v3121 = vadd.f32 %v2586, %v3067
    %v3122 = vadd.f32 %v2587, %v3072
    %v3123 = vadd.f32 %v2588, %v3075
    %v3124 = vadd.f32 %v2589, %v3080
    %v3125 = vadd.f32 %v2590, %v3083
    %v3126 = vadd.f32 %v2591, %v3088
    %v3127 = vadd.f32 %v2592, %v3091
    %v3128 = vadd.f32 %v2593, %v3096
    %v3129 = vadd.f32 %v2594, %v3099
    %v3130 = vadd.f32 %v2595, %v3104
    %v3131 = vadd.f32 %v2596, %v3107
    %v3132 = vadd.f32 %v2597, %v3112
    %v3133 = vadd.f32 %v2598, %v3115
    %v3134 = vld [vmem:[#allocation2 + $0x500] sm:$0xff]
    %v3135 = vld [vmem:[#allocation2 + $0x508] sm:$0xff]
    %v3136 = vld [vmem:[#allocation2 + $0x510] sm:$0xff]
    %v3137 = vld [vmem:[#allocation2 + $0x518] sm:$0xff]
    %v3138 = vld [vmem:[#allocation2 + $0x520] sm:$0xff]
    %v3139 = vld [vmem:[#allocation2 + $0x528] sm:$0xff]
    %v3140 = vld [vmem:[#allocation2 + $0x530] sm:$0xff]
    %v3141 = vld [vmem:[#allocation2 + $0x538] sm:$0xff]
    %v3142 = vld [vmem:[#allocation2 + $0x540] sm:$0xff]
    %v3143 = vld [vmem:[#allocation2 + $0x548] sm:$0xff]
    %v3144 = vld [vmem:[#allocation2 + $0x550] sm:$0xff]
    %v3145 = vld [vmem:[#allocation2 + $0x558] sm:$0xff]
    %v3146 = vld [vmem:[#allocation2 + $0x560] sm:$0xff]
    %v3147 = vld [vmem:[#allocation2 + $0x568] sm:$0xff]
    %v3148 = vld [vmem:[#allocation2 + $0x570] sm:$0xff]
    %v3149 = vld [vmem:[#allocation2 + $0x578] sm:$0xff]
    %v3150 = vld [vmem:[#allocation2 + $0x580] sm:$0xff]
    %v3151 = vld [vmem:[#allocation2 + $0x588] sm:$0xff]
    %v3152 = vld [vmem:[#allocation2 + $0x590] sm:$0xff]
    %v3153 = vld [vmem:[#allocation2 + $0x598] sm:$0xff]
    %v3154 = vld [vmem:[#allocation2 + $0x5a0] sm:$0xff]
    %v3155 = vld [vmem:[#allocation2 + $0x5a8] sm:$0xff]
    %v3156 = vld [vmem:[#allocation2 + $0x5b0] sm:$0xff]
    %v3157 = vld [vmem:[#allocation2 + $0x5b8] sm:$0xff]
    %v3158 = vld [vmem:[#allocation2 + $0x5c0] sm:$0xff]
    %v3159 = vld [vmem:[#allocation2 + $0x5c8] sm:$0xff]
    %v3160 = vld [vmem:[#allocation2 + $0x5d0] sm:$0xff]
    %v3161 = vld [vmem:[#allocation2 + $0x5d8] sm:$0xff]
    %v3162 = vld [vmem:[#allocation2 + $0x5e0] sm:$0xff]
    %v3163 = vld [vmem:[#allocation2 + $0x5e8] sm:$0xff]
    %v3164 = vld [vmem:[#allocation2 + $0x5f0] sm:$0xff]
    %v3165 = vld [vmem:[#allocation2 + $0x5f8] sm:$0xff]
    %v3166 = vld [vmem:[%s2 + $0x14] sm:$0xf]
    %v3199 = vunpack.c.l.b16 %v3134
    %v3200 = vunpack.c.h.b16 %v3134
    %v3201 = vunpack.c.l.b16 %v3135
    %v3202 = vunpack.c.h.b16 %v3135
    %v3203 = vunpack.c.l.b16 %v3136
    %v3204 = vunpack.c.h.b16 %v3136
    %v3205 = vunpack.c.l.b16 %v3137
    %v3206 = vunpack.c.h.b16 %v3137
    %v3207 = vunpack.c.l.b16 %v3138
    %v3208 = vunpack.c.h.b16 %v3138
    %v3209 = vunpack.c.l.b16 %v3139
    %v3210 = vunpack.c.h.b16 %v3139
    %v3211 = vunpack.c.l.b16 %v3140
    %v3212 = vunpack.c.h.b16 %v3140
    %v3213 = vunpack.c.l.b16 %v3141
    %v3214 = vunpack.c.h.b16 %v3141
    %v3215 = vunpack.c.l.b16 %v3142
    %v3216 = vunpack.c.h.b16 %v3142
    %v3217 = vunpack.c.l.b16 %v3143
    %v3218 = vunpack.c.h.b16 %v3143
    %v3219 = vunpack.c.l.b16 %v3144
    %v3220 = vunpack.c.h.b16 %v3144
    %v3221 = vunpack.c.l.b16 %v3145
    %v3222 = vunpack.c.h.b16 %v3145
    %v3223 = vunpack.c.l.b16 %v3146
    %v3224 = vunpack.c.h.b16 %v3146
    %v3225 = vunpack.c.l.b16 %v3147
    %v3226 = vunpack.c.h.b16 %v3147
    %v3227 = vunpack.c.l.b16 %v3148
    %v3228 = vunpack.c.h.b16 %v3148
    %v3229 = vunpack.c.l.b16 %v3149
    %v3230 = vunpack.c.h.b16 %v3149
    %v3231 = vunpack.c.l.b16 %v3150
    %v3232 = vunpack.c.h.b16 %v3150
    %v3233 = vunpack.c.l.b16 %v3151
    %v3234 = vunpack.c.h.b16 %v3151
    %v3235 = vunpack.c.l.b16 %v3152
    %v3236 = vunpack.c.h.b16 %v3152
    %v3237 = vunpack.c.l.b16 %v3153
    %v3238 = vunpack.c.h.b16 %v3153
    %v3239 = vunpack.c.l.b16 %v3154
    %v3240 = vunpack.c.h.b16 %v3154
    %v3241 = vunpack.c.l.b16 %v3155
    %v3242 = vunpack.c.h.b16 %v3155
    %v3243 = vunpack.c.l.b16 %v3156
    %v3244 = vunpack.c.h.b16 %v3156
    %v3245 = vunpack.c.l.b16 %v3157
    %v3246 = vunpack.c.h.b16 %v3157
    %v3247 = vunpack.c.l.b16 %v3158
    %v3248 = vunpack.c.h.b16 %v3158
    %v3249 = vunpack.c.l.b16 %v3159
    %v3250 = vunpack.c.h.b16 %v3159
    %v3251 = vunpack.c.l.b16 %v3160
    %v3252 = vunpack.c.h.b16 %v3160
    %v3253 = vunpack.c.l.b16 %v3161
    %v3254 = vunpack.c.h.b16 %v3161
    %v3255 = vunpack.c.l.b16 %v3162
    %v3256 = vunpack.c.h.b16 %v3162
    %v3257 = vunpack.c.l.b16 %v3163
    %v3258 = vunpack.c.h.b16 %v3163
    %v3259 = vunpack.c.l.b16 %v3164
    %v3260 = vunpack.c.h.b16 %v3164
    %v3261 = vunpack.c.l.b16 %v3165
    %v3262 = vunpack.c.h.b16 %v3165
    %v3263 = vpack.c.b16 %v3203, %v3199
    %v3264 = vpack.c.b16 %v3204, %v3200
    %v3265 = vpack.c.b16 %v3205, %v3201
    %v3266 = vpack.c.b16 %v3206, %v3202
    %v3267 = vpack.c.b16 %v3211, %v3207
    %v3268 = vpack.c.b16 %v3212, %v3208
    %v3269 = vpack.c.b16 %v3213, %v3209
    %v3270 = vpack.c.b16 %v3214, %v3210
    %v3271 = vpack.c.b16 %v3219, %v3215
    %v3272 = vpack.c.b16 %v3220, %v3216
    %v3273 = vpack.c.b16 %v3221, %v3217
    %v3274 = vpack.c.b16 %v3222, %v3218
    %v3275 = vpack.c.b16 %v3227, %v3223
    %v3276 = vpack.c.b16 %v3228, %v3224
    %v3277 = vpack.c.b16 %v3229, %v3225
    %v3278 = vpack.c.b16 %v3230, %v3226
    %v3279 = vpack.c.b16 %v3235, %v3231
    %v3280 = vpack.c.b16 %v3236, %v3232
    %v3281 = vpack.c.b16 %v3237, %v3233
    %v3282 = vpack.c.b16 %v3238, %v3234
    %v3283 = vpack.c.b16 %v3243, %v3239
    %v3284 = vpack.c.b16 %v3244, %v3240
    %v3285 = vpack.c.b16 %v3245, %v3241
    %v3286 = vpack.c.b16 %v3246, %v3242
    %v3287 = vpack.c.b16 %v3251, %v3247
    %v3288 = vpack.c.b16 %v3252, %v3248
    %v3289 = vpack.c.b16 %v3253, %v3249
    %v3290 = vpack.c.b16 %v3254, %v3250
    %v3291 = vpack.c.b16 %v3259, %v3255
    %v3292 = vpack.c.b16 %v3260, %v3256
    %v3293 = vpack.c.b16 %v3261, %v3257
    %v3294 = vpack.c.b16 %v3262, %v3258
    %3327 = vmatprep.subr.bf16.mxu0 0
    %3328 = vmatpush1.bf16.msra.mxu0 %v618
    %3329 = vmatprep.subr.bf16.mxu0 0
    %3330 = vmatpush1.bf16.msra.mxu0 %v619
    %3331 = vmatprep.subr.bf16.mxu0 0
    %3332 = vmatpush1.bf16.msra.mxu0 %v620
    %3333 = vmatprep.subr.bf16.mxu0 0
    %3334 = vmatpush1.bf16.msra.mxu0 %v621
    %3335 = vmatprep.subr.bf16.mxu0 0
    %3336 = vmatpush1.bf16.msra.mxu0 %v622
    %3337 = vmatprep.subr.bf16.mxu0 0
    %3338 = vmatpush1.bf16.msra.mxu0 %v623
    %3339 = vmatprep.subr.bf16.mxu0 0
    %3340 = vmatpush1.bf16.msra.mxu0 %v624
    %3341 = vmatprep.subr.bf16.mxu0 0
    %3342 = vmatpush1.bf16.msra.mxu0 %v625
    %3343 = vmatprep.subr.bf16.mxu0 0
    %3344 = vmatpush1.bf16.msra.mxu0 %v626
    %3345 = vmatprep.subr.bf16.mxu0 0
    %3346 = vmatpush1.bf16.msra.mxu0 %v627
    %3347 = vmatprep.subr.bf16.mxu0 0
    %3348 = vmatpush1.bf16.msra.mxu0 %v628
    %3349 = vmatprep.subr.bf16.mxu0 0
    %3350 = vmatpush1.bf16.msra.mxu0 %v629
    %3351 = vmatprep.subr.bf16.mxu0 0
    %3352 = vmatpush1.bf16.msra.mxu0 %v630
    %3353 = vmatprep.subr.bf16.mxu0 0
    %3354 = vmatpush1.bf16.msra.mxu0 %v631
    %3355 = vmatprep.subr.bf16.mxu0 0
    %3356 = vmatpush1.bf16.msra.mxu0 %v632
    %3357 = vmatprep.subr.bf16.mxu0 0
    %3358 = vmatpush1.bf16.msra.mxu0 %v633
    %3359 = vmatprep.mubr.bf16.mxu0 %v3264
    %3360 = vmatmul.mubr.bf16.gmra.mrb[0].mxu0 %v3263
    %v3361 = vpop.f32.mrb[0].mxu0
    %v3362 = vadd.f32 0.0, %v3361
    %v3363 = vpop.f32.mrb[0].mxu0
    %v3364 = vpop.f32.mrb[0].mxu0
    %v3365 = vadd.f32 0.0, %v3364
    %v3366 = vpop.f32.mrb[0].mxu0
    %3367 = vmatprep.mubr.bf16.mxu0 %v3268
    %3368 = vmatmul.mubr.bf16.gmra.mrb[0].mxu0 %v3267
    %v3369 = vpop.f32.mrb[0].mxu0
    %v3370 = vadd.f32 0.0, %v3369
    %v3371 = vpop.f32.mrb[0].mxu0
    %v3372 = vpop.f32.mrb[0].mxu0
    %v3373 = vadd.f32 0.0, %v3372
    %v3374 = vpop.f32.mrb[0].mxu0
    %3375 = vmatprep.mubr.bf16.mxu0 %v3272
    %3376 = vmatmul.mubr.bf16.gmra.mrb[0].mxu0 %v3271
    %v3377 = vpop.f32.mrb[0].mxu0
    %v3378 = vadd.f32 0.0, %v3377
    %v3379 = vpop.f32.mrb[0].mxu0
    %v3380 = vpop.f32.mrb[0].mxu0
    %v3381 = vadd.f32 0.0, %v3380
    %v3382 = vpop.f32.mrb[0].mxu0
    %3383 = vmatprep.mubr.bf16.mxu0 %v3276
    %3384 = vmatmul.mubr.bf16.gmra.mrb[0].mxu0 %v3275
    %v3385 = vpop.f32.mrb[0].mxu0
    %v3386 = vadd.f32 0.0, %v3385
    %v3387 = vpop.f32.mrb[0].mxu0
    %v3388 = vpop.f32.mrb[0].mxu0
    %v3389 = vadd.f32 0.0, %v3388
    %v3390 = vpop.f32.mrb[0].mxu0
    %3391 = vmatprep.mubr.bf16.mxu0 %v3280
    %3392 = vmatmul.mubr.bf16.gmra.mrb[0].mxu0 %v3279
    %v3393 = vpop.f32.mrb[0].mxu0
    %v3394 = vadd.f32 0.0, %v3393
    %v3395 = vpop.f32.mrb[0].mxu0
    %v3396 = vpop.f32.mrb[0].mxu0
    %v3397 = vadd.f32 0.0, %v3396
    %v3398 = vpop.f32.mrb[0].mxu0
    %3399 = vmatprep.mubr.bf16.mxu0 %v3284
    %3400 = vmatmul.mubr.bf16.gmra.mrb[0].mxu0 %v3283
    %v3401 = vpop.f32.mrb[0].mxu0
    %v3402 = vadd.f32 0.0, %v3401
    %v3403 = vpop.f32.mrb[0].mxu0
    %v3404 = vpop.f32.mrb[0].mxu0
    %v3405 = vadd.f32 0.0, %v3404
    %v3406 = vpop.f32.mrb[0].mxu0
    %3407 = vmatprep.mubr.bf16.mxu0 %v3288
    %3408 = vmatmul.mubr.bf16.gmra.mrb[0].mxu0 %v3287
    %v3409 = vpop.f32.mrb[0].mxu0
    %v3410 = vadd.f32 0.0, %v3409
    %v3411 = vpop.f32.mrb[0].mxu0
    %v3412 = vpop.f32.mrb[0].mxu0
    %v3413 = vadd.f32 0.0, %v3412
    %v3414 = vpop.f32.mrb[0].mxu0
    %3415 = vmatprep.mubr.bf16.mxu0 %v3292
    %3416 = vmatmul.mubr.bf16.gmra.mrb[0].mxu0 %v3291
    %v3417 = vpop.f32.mrb[0].mxu0
    %v3418 = vadd.f32 0.0, %v3417
    %v3419 = vpop.f32.mrb[0].mxu0
    %v3420 = vpop.f32.mrb[0].mxu0
    %v3421 = vadd.f32 0.0, %v3420
    %v3422 = vpop.f32.mrb[0].mxu0
    %3423 = vdwg.mxu0
    %3424 = vmatprep.subr.bf16.mxu0 0
    %3425 = vmatpush1.bf16.msra.mxu0 %v634
    %3426 = vmatprep.subr.bf16.mxu0 0
    %3427 = vmatpush1.bf16.msra.mxu0 %v635
    %3428 = vmatprep.subr.bf16.mxu0 0
    %3429 = vmatpush1.bf16.msra.mxu0 %v636
    %3430 = vmatprep.subr.bf16.mxu0 0
    %3431 = vmatpush1.bf16.msra.mxu0 %v637
    %3432 = vmatprep.subr.bf16.mxu0 0
    %3433 = vmatpush1.bf16.msra.mxu0 %v638
    %3434 = vmatprep.subr.bf16.mxu0 0
    %3435 = vmatpush1.bf16.msra.mxu0 %v639
    %3436 = vmatprep.subr.bf16.mxu0 0
    %3437 = vmatpush1.bf16.msra.mxu0 %v640
    %3438 = vmatprep.subr.bf16.mxu0 0
    %3439 = vmatpush1.bf16.msra.mxu0 %v641
    %3440 = vmatprep.subr.bf16.mxu0 0
    %3441 = vmatpush1.bf16.msra.mxu0 %v642
    %3442 = vmatprep.subr.bf16.mxu0 0
    %3443 = vmatpush1.bf16.msra.mxu0 %v643
    %3444 = vmatprep.subr.bf16.mxu0 0
    %3445 = vmatpush1.bf16.msra.mxu0 %v644
    %3446 = vmatprep.subr.bf16.mxu0 0
    %3447 = vmatpush1.bf16.msra.mxu0 %v645
    %3448 = vmatprep.subr.bf16.mxu0 0
    %3449 = vmatpush1.bf16.msra.mxu0 %v646
    %3450 = vmatprep.subr.bf16.mxu0 0
    %3451 = vmatpush1.bf16.msra.mxu0 %v647
    %3452 = vmatprep.subr.bf16.mxu0 0
    %3453 = vmatpush1.bf16.msra.mxu0 %v648
    %3454 = vmatprep.subr.bf16.mxu0 0
    %3455 = vmatpush1.bf16.msra.mxu0 %v649
    %3456 = vmatprep.mubr.bf16.mxu0 %v3266
    %3457 = vmatmul.mubr.bf16.gmra.mrb[0].mxu0 %v3265
    %v3458 = vpop.f32.mrb[0].mxu0
    %v3459 = vadd.f32 %v3362, %v3458
    %v3460 = vpop.f32.mrb[0].mxu0
    %v3461 = vpop.f32.mrb[0].mxu0
    %v3462 = vadd.f32 %v3365, %v3461
    %v3463 = vpop.f32.mrb[0].mxu0
    %3464 = vmatprep.mubr.bf16.mxu0 %v3270
    %3465 = vmatmul.mubr.bf16.gmra.mrb[0].mxu0 %v3269
    %v3466 = vpop.f32.mrb[0].mxu0
    %v3467 = vadd.f32 %v3370, %v3466
    %v3468 = vpop.f32.mrb[0].mxu0
    %v3469 = vpop.f32.mrb[0].mxu0
    %v3470 = vadd.f32 %v3373, %v3469
    %v3471 = vpop.f32.mrb[0].mxu0
    %3472 = vmatprep.mubr.bf16.mxu0 %v3274
    %3473 = vmatmul.mubr.bf16.gmra.mrb[0].mxu0 %v3273
    %v3474 = vpop.f32.mrb[0].mxu0
    %v3475 = vadd.f32 %v3378, %v3474
    %v3476 = vpop.f32.mrb[0].mxu0
    %v3477 = vpop.f32.mrb[0].mxu0
    %v3478 = vadd.f32 %v3381, %v3477
    %v3479 = vpop.f32.mrb[0].mxu0
    %3480 = vmatprep.mubr.bf16.mxu0 %v3278
    %3481 = vmatmul.mubr.bf16.gmra.mrb[0].mxu0 %v3277
    %v3482 = vpop.f32.mrb[0].mxu0
    %v3483 = vadd.f32 %v3386, %v3482
    %v3484 = vpop.f32.mrb[0].mxu0
    %v3485 = vpop.f32.mrb[0].mxu0
    %v3486 = vadd.f32 %v3389, %v3485
    %v3487 = vpop.f32.mrb[0].mxu0
    %3488 = vmatprep.mubr.bf16.mxu0 %v3282
    %3489 = vmatmul.mubr.bf16.gmra.mrb[0].mxu0 %v3281
    %v3490 = vpop.f32.mrb[0].mxu0
    %v3491 = vadd.f32 %v3394, %v3490
    %v3492 = vpop.f32.mrb[0].mxu0
    %v3493 = vpop.f32.mrb[0].mxu0
    %v3494 = vadd.f32 %v3397, %v3493
    %v3495 = vpop.f32.mrb[0].mxu0
    %3496 = vmatprep.mubr.bf16.mxu0 %v3286
    %3497 = vmatmul.mubr.bf16.gmra.mrb[0].mxu0 %v3285
    %v3498 = vpop.f32.mrb[0].mxu0
    %v3499 = vadd.f32 %v3402, %v3498
    %v3500 = vpop.f32.mrb[0].mxu0
    %v3501 = vpop.f32.mrb[0].mxu0
    %v3502 = vadd.f32 %v3405, %v3501
    %v3503 = vpop.f32.mrb[0].mxu0
    %3504 = vmatprep.mubr.bf16.mxu0 %v3290
    %3505 = vmatmul.mubr.bf16.gmra.mrb[0].mxu0 %v3289
    %v3506 = vpop.f32.mrb[0].mxu0
    %v3507 = vadd.f32 %v3410, %v3506
    %v3508 = vpop.f32.mrb[0].mxu0
    %v3509 = vpop.f32.mrb[0].mxu0
    %v3510 = vadd.f32 %v3413, %v3509
    %v3511 = vpop.f32.mrb[0].mxu0
    %3512 = vmatprep.mubr.bf16.mxu0 %v3294
    %3513 = vmatmul.mubr.bf16.gmra.mrb[0].mxu0 %v3293
    %v3514 = vpop.f32.mrb[0].mxu0
    %v3515 = vadd.f32 %v3418, %v3514
    %v3516 = vpop.f32.mrb[0].mxu0
    %v3517 = vpop.f32.mrb[0].mxu0
    %v3518 = vadd.f32 %v3421, %v3517
    %v3519 = vpop.f32.mrb[0].mxu0
    %3520 = vdwg.mxu0
    %v3521 = vpack.c.bf16 %v3462, %v3459
    %v3522 = vpack.c.bf16 %v3470, %v3467
    %v3523 = vpack.c.bf16 %v3478, %v3475
    %v3524 = vpack.c.bf16 %v3486, %v3483
    %v3525 = vpack.c.bf16 %v3494, %v3491
    %v3526 = vpack.c.bf16 %v3502, %v3499
    %v3527 = vpack.c.bf16 %v3510, %v3507
    %v3528 = vpack.c.bf16 %v3518, %v3515
    %v3530 = vsel %vm1279, %v3521, 0
    %v3533 = vsel %vm1279, %v3522, 0
    %v3536 = vsel %vm1279, %v3523, 0
    %v3539 = vsel %vm1279, %v3524, 0
    %v3542 = vsel %vm1279, %v3525, 0
    %v3545 = vsel %vm1279, %v3526, 0
    %v3548 = vsel %vm1279, %v3527, 0
    %v3551 = vsel %vm1279, %v3528, 0
    %v3554 = vsel %vm1304, %v3166, 0
    %3556 = vmatprep.subr.bf16.mxu0 0
    %3557 = vmatpush1.bf16.msra.mxu0 %v3554
    %3558 = vmatprep.subr.bf16.mxu0 0
    %3559 = vmatpush1.bf16.msra.mxu0 0
    %3560 = vmatprep.subr.bf16.mxu0 0
    %3561 = vmatpush1.bf16.msra.mxu0 0
    %3562 = vmatprep.subr.bf16.mxu0 0
    %3563 = vmatpush1.bf16.msra.mxu0 0
    %3564 = vmatprep.subr.bf16.mxu0 0
    %3565 = vmatpush1.bf16.msra.mxu0 0
    %3566 = vmatprep.subr.bf16.mxu0 0
    %3567 = vmatpush1.bf16.msra.mxu0 0
    %3568 = vmatprep.subr.bf16.mxu0 0
    %3569 = vmatpush1.bf16.msra.mxu0 0
    %3570 = vmatprep.subr.bf16.mxu0 0
    %3571 = vmatpush1.bf16.msra.mxu0 0
    %3572 = vmatprep.subr.bf16.mxu0 0
    %3573 = vmatpush1.bf16.msra.mxu0 0
    %3574 = vmatprep.subr.bf16.mxu0 0
    %3575 = vmatpush1.bf16.msra.mxu0 0
    %3576 = vmatprep.subr.bf16.mxu0 0
    %3577 = vmatpush1.bf16.msra.mxu0 0
    %3578 = vmatprep.subr.bf16.mxu0 0
    %3579 = vmatpush1.bf16.msra.mxu0 0
    %3580 = vmatprep.subr.bf16.mxu0 0
    %3581 = vmatpush1.bf16.msra.mxu0 0
    %3582 = vmatprep.subr.bf16.mxu0 0
    %3583 = vmatpush1.bf16.msra.mxu0 0
    %3584 = vmatprep.subr.bf16.mxu0 0
    %3585 = vmatpush1.bf16.msra.mxu0 0
    %3586 = vmatprep.subr.bf16.mxu0 0
    %3587 = vmatpush1.bf16.msra.mxu0 0
    %3588 = vmatprep.mubr.bf16.mxu0 0
    %3589 = vmatmul.mubr.bf16.gmra.mrb[0].mxu0 %v3530
    %v3590 = vpop.f32.mrb[0].mxu0
    %v3591 = vadd.f32 0.0, %v3590
    %v3592 = vpop.f32.mrb[0].mxu0
    %v3593 = vpop.f32.mrb[0].mxu0
    %v3594 = vadd.f32 0.0, %v3593
    %v3595 = vpop.f32.mrb[0].mxu0
    %3596 = vmatprep.mubr.bf16.mxu0 0
    %3597 = vmatmul.mubr.bf16.gmra.mrb[0].mxu0 %v3533
    %v3598 = vpop.f32.mrb[0].mxu0
    %v3599 = vadd.f32 0.0, %v3598
    %v3600 = vpop.f32.mrb[0].mxu0
    %v3601 = vpop.f32.mrb[0].mxu0
    %v3602 = vadd.f32 0.0, %v3601
    %v3603 = vpop.f32.mrb[0].mxu0
    %3604 = vmatprep.mubr.bf16.mxu0 0
    %3605 = vmatmul.mubr.bf16.gmra.mrb[0].mxu0 %v3536
    %v3606 = vpop.f32.mrb[0].mxu0
    %v3607 = vadd.f32 0.0, %v3606
    %v3608 = vpop.f32.mrb[0].mxu0
    %v3609 = vpop.f32.mrb[0].mxu0
    %v3610 = vadd.f32 0.0, %v3609
    %v3611 = vpop.f32.mrb[0].mxu0
    %3612 = vmatprep.mubr.bf16.mxu0 0
    %3613 = vmatmul.mubr.bf16.gmra.mrb[0].mxu0 %v3539
    %v3614 = vpop.f32.mrb[0].mxu0
    %v3615 = vadd.f32 0.0, %v3614
    %v3616 = vpop.f32.mrb[0].mxu0
    %v3617 = vpop.f32.mrb[0].mxu0
    %v3618 = vadd.f32 0.0, %v3617
    %v3619 = vpop.f32.mrb[0].mxu0
    %3620 = vmatprep.mubr.bf16.mxu0 0
    %3621 = vmatmul.mubr.bf16.gmra.mrb[0].mxu0 %v3542
    %v3622 = vpop.f32.mrb[0].mxu0
    %v3623 = vadd.f32 0.0, %v3622
    %v3624 = vpop.f32.mrb[0].mxu0
    %v3625 = vpop.f32.mrb[0].mxu0
    %v3626 = vadd.f32 0.0, %v3625
    %v3627 = vpop.f32.mrb[0].mxu0
    %3628 = vmatprep.mubr.bf16.mxu0 0
    %3629 = vmatmul.mubr.bf16.gmra.mrb[0].mxu0 %v3545
    %v3630 = vpop.f32.mrb[0].mxu0
    %v3631 = vadd.f32 0.0, %v3630
    %v3632 = vpop.f32.mrb[0].mxu0
    %v3633 = vpop.f32.mrb[0].mxu0
    %v3634 = vadd.f32 0.0, %v3633
    %v3635 = vpop.f32.mrb[0].mxu0
    %3636 = vmatprep.mubr.bf16.mxu0 0
    %3637 = vmatmul.mubr.bf16.gmra.mrb[0].mxu0 %v3548
    %v3638 = vpop.f32.mrb[0].mxu0
    %v3639 = vadd.f32 0.0, %v3638
    %v3640 = vpop.f32.mrb[0].mxu0
    %v3641 = vpop.f32.mrb[0].mxu0
    %v3642 = vadd.f32 0.0, %v3641
    %v3643 = vpop.f32.mrb[0].mxu0
    %3644 = vmatprep.mubr.bf16.mxu0 0
    %3645 = vmatmul.mubr.bf16.gmra.mrb[0].mxu0 %v3551
    %v3646 = vpop.f32.mrb[0].mxu0
    %v3647 = vadd.f32 0.0, %v3646
    %v3648 = vpop.f32.mrb[0].mxu0
    %v3649 = vpop.f32.mrb[0].mxu0
    %v3650 = vadd.f32 0.0, %v3649
    %v3651 = vpop.f32.mrb[0].mxu0
    %3652 = vdwg.mxu0
    %v3653 = vadd.f32 %v3118, %v3591
    %v3654 = vadd.f32 %v3119, %v3594
    %v3655 = vadd.f32 %v3120, %v3599
    %v3656 = vadd.f32 %v3121, %v3602
    %v3657 = vadd.f32 %v3122, %v3607
    %v3658 = vadd.f32 %v3123, %v3610
    %v3659 = vadd.f32 %v3124, %v3615
    %v3660 = vadd.f32 %v3125, %v3618
    %v3661 = vadd.f32 %v3126, %v3623
    %v3662 = vadd.f32 %v3127, %v3626
    %v3663 = vadd.f32 %v3128, %v3631
    %v3664 = vadd.f32 %v3129, %v3634
    %v3665 = vadd.f32 %v3130, %v3639
    %v3666 = vadd.f32 %v3131, %v3642
    %v3667 = vadd.f32 %v3132, %v3647
    %v3668 = vadd.f32 %v3133, %v3650
    %v3669 = vld [vmem:[#allocation2 + $0x600] sm:$0xff]
    %v3670 = vld [vmem:[#allocation2 + $0x608] sm:$0xff]
    %v3671 = vld [vmem:[#allocation2 + $0x610] sm:$0xff]
    %v3672 = vld [vmem:[#allocation2 + $0x618] sm:$0xff]
    %v3673 = vld [vmem:[#allocation2 + $0x620] sm:$0xff]
    %v3674 = vld [vmem:[#allocation2 + $0x628] sm:$0xff]
    %v3675 = vld [vmem:[#allocation2 + $0x630] sm:$0xff]
    %v3676 = vld [vmem:[#allocation2 + $0x638] sm:$0xff]
    %v3677 = vld [vmem:[#allocation2 + $0x640] sm:$0xff]
    %v3678 = vld [vmem:[#allocation2 + $0x648] sm:$0xff]
    %v3679 = vld [vmem:[#allocation2 + $0x650] sm:$0xff]
    %v3680 = vld [vmem:[#allocation2 + $0x658] sm:$0xff]
    %v3681 = vld [vmem:[#allocation2 + $0x660] sm:$0xff]
    %v3682 = vld [vmem:[#allocation2 + $0x668] sm:$0xff]
    %v3683 = vld [vmem:[#allocation2 + $0x670] sm:$0xff]
    %v3684 = vld [vmem:[#allocation2 + $0x678] sm:$0xff]
    %v3685 = vld [vmem:[#allocation2 + $0x680] sm:$0xff]
    %v3686 = vld [vmem:[#allocation2 + $0x688] sm:$0xff]
    %v3687 = vld [vmem:[#allocation2 + $0x690] sm:$0xff]
    %v3688 = vld [vmem:[#allocation2 + $0x698] sm:$0xff]
    %v3689 = vld [vmem:[#allocation2 + $0x6a0] sm:$0xff]
    %v3690 = vld [vmem:[#allocation2 + $0x6a8] sm:$0xff]
    %v3691 = vld [vmem:[#allocation2 + $0x6b0] sm:$0xff]
    %v3692 = vld [vmem:[#allocation2 + $0x6b8] sm:$0xff]
    %v3693 = vld [vmem:[#allocation2 + $0x6c0] sm:$0xff]
    %v3694 = vld [vmem:[#allocation2 + $0x6c8] sm:$0xff]
    %v3695 = vld [vmem:[#allocation2 + $0x6d0] sm:$0xff]
    %v3696 = vld [vmem:[#allocation2 + $0x6d8] sm:$0xff]
    %v3697 = vld [vmem:[#allocation2 + $0x6e0] sm:$0xff]
    %v3698 = vld [vmem:[#allocation2 + $0x6e8] sm:$0xff]
    %v3699 = vld [vmem:[#allocation2 + $0x6f0] sm:$0xff]
    %v3700 = vld [vmem:[#allocation2 + $0x6f8] sm:$0xff]
    %v3701 = vld [vmem:[%s2 + $0x18] sm:$0xf]
    %v3734 = vunpack.c.l.b16 %v3669
    %v3735 = vunpack.c.h.b16 %v3669
    %v3736 = vunpack.c.l.b16 %v3670
    %v3737 = vunpack.c.h.b16 %v3670
    %v3738 = vunpack.c.l.b16 %v3671
    %v3739 = vunpack.c.h.b16 %v3671
    %v3740 = vunpack.c.l.b16 %v3672
    %v3741 = vunpack.c.h.b16 %v3672
    %v3742 = vunpack.c.l.b16 %v3673
    %v3743 = vunpack.c.h.b16 %v3673
    %v3744 = vunpack.c.l.b16 %v3674
    %v3745 = vunpack.c.h.b16 %v3674
    %v3746 = vunpack.c.l.b16 %v3675
    %v3747 = vunpack.c.h.b16 %v3675
    %v3748 = vunpack.c.l.b16 %v3676
    %v3749 = vunpack.c.h.b16 %v3676
    %v3750 = vunpack.c.l.b16 %v3677
    %v3751 = vunpack.c.h.b16 %v3677
    %v3752 = vunpack.c.l.b16 %v3678
    %v3753 = vunpack.c.h.b16 %v3678
    %v3754 = vunpack.c.l.b16 %v3679
    %v3755 = vunpack.c.h.b16 %v3679
    %v3756 = vunpack.c.l.b16 %v3680
    %v3757 = vunpack.c.h.b16 %v3680
    %v3758 = vunpack.c.l.b16 %v3681
    %v3759 = vunpack.c.h.b16 %v3681
    %v3760 = vunpack.c.l.b16 %v3682
    %v3761 = vunpack.c.h.b16 %v3682
    %v3762 = vunpack.c.l.b16 %v3683
    %v3763 = vunpack.c.h.b16 %v3683
    %v3764 = vunpack.c.l.b16 %v3684
    %v3765 = vunpack.c.h.b16 %v3684
    %v3766 = vunpack.c.l.b16 %v3685
    %v3767 = vunpack.c.h.b16 %v3685
    %v3768 = vunpack.c.l.b16 %v3686
    %v3769 = vunpack.c.h.b16 %v3686
    %v3770 = vunpack.c.l.b16 %v3687
    %v3771 = vunpack.c.h.b16 %v3687
    %v3772 = vunpack.c.l.b16 %v3688
    %v3773 = vunpack.c.h.b16 %v3688
    %v3774 = vunpack.c.l.b16 %v3689
    %v3775 = vunpack.c.h.b16 %v3689
    %v3776 = vunpack.c.l.b16 %v3690
    %v3777 = vunpack.c.h.b16 %v3690
    %v3778 = vunpack.c.l.b16 %v3691
    %v3779 = vunpack.c.h.b16 %v3691
    %v3780 = vunpack.c.l.b16 %v3692
    %v3781 = vunpack.c.h.b16 %v3692
    %v3782 = vunpack.c.l.b16 %v3693
    %v3783 = vunpack.c.h.b16 %v3693
    %v3784 = vunpack.c.l.b16 %v3694
    %v3785 = vunpack.c.h.b16 %v3694
    %v3786 = vunpack.c.l.b16 %v3695
    %v3787 = vunpack.c.h.b16 %v3695
    %v3788 = vunpack.c.l.b16 %v3696
    %v3789 = vunpack.c.h.b16 %v3696
    %v3790 = vunpack.c.l.b16 %v3697
    %v3791 = vunpack.c.h.b16 %v3697
    %v3792 = vunpack.c.l.b16 %v3698
    %v3793 = vunpack.c.h.b16 %v3698
    %v3794 = vunpack.c.l.b16 %v3699
    %v3795 = vunpack.c.h.b16 %v3699
    %v3796 = vunpack.c.l.b16 %v3700
    %v3797 = vunpack.c.h.b16 %v3700
    %v3798 = vpack.c.b16 %v3738, %v3734
    %v3799 = vpack.c.b16 %v3739, %v3735
    %v3800 = vpack.c.b16 %v3740, %v3736
    %v3801 = vpack.c.b16 %v3741, %v3737
    %v3802 = vpack.c.b16 %v3746, %v3742
    %v3803 = vpack.c.b16 %v3747, %v3743
    %v3804 = vpack.c.b16 %v3748, %v3744
    %v3805 = vpack.c.b16 %v3749, %v3745
    %v3806 = vpack.c.b16 %v3754, %v3750
    %v3807 = vpack.c.b16 %v3755, %v3751
    %v3808 = vpack.c.b16 %v3756, %v3752
    %v3809 = vpack.c.b16 %v3757, %v3753
    %v3810 = vpack.c.b16 %v3762, %v3758
    %v3811 = vpack.c.b16 %v3763, %v3759
    %v3812 = vpack.c.b16 %v3764, %v3760
    %v3813 = vpack.c.b16 %v3765, %v3761
    %v3814 = vpack.c.b16 %v3770, %v3766
    %v3815 = vpack.c.b16 %v3771, %v3767
    %v3816 = vpack.c.b16 %v3772, %v3768
    %v3817 = vpack.c.b16 %v3773, %v3769
    %v3818 = vpack.c.b16 %v3778, %v3774
    %v3819 = vpack.c.b16 %v3779, %v3775
    %v3820 = vpack.c.b16 %v3780, %v3776
    %v3821 = vpack.c.b16 %v3781, %v3777
    %v3822 = vpack.c.b16 %v3786, %v3782
    %v3823 = vpack.c.b16 %v3787, %v3783
    %v3824 = vpack.c.b16 %v3788, %v3784
    %v3825 = vpack.c.b16 %v3789, %v3785
    %v3826 = vpack.c.b16 %v3794, %v3790
    %v3827 = vpack.c.b16 %v3795, %v3791
    %v3828 = vpack.c.b16 %v3796, %v3792
    %v3829 = vpack.c.b16 %v3797, %v3793
    %3862 = vmatprep.subr.bf16.mxu0 0
    %3863 = vmatpush1.bf16.msra.mxu0 %v618
    %3864 = vmatprep.subr.bf16.mxu0 0
    %3865 = vmatpush1.bf16.msra.mxu0 %v619
    %3866 = vmatprep.subr.bf16.mxu0 0
    %3867 = vmatpush1.bf16.msra.mxu0 %v620
    %3868 = vmatprep.subr.bf16.mxu0 0
    %3869 = vmatpush1.bf16.msra.mxu0 %v621
    %3870 = vmatprep.subr.bf16.mxu0 0
    %3871 = vmatpush1.bf16.msra.mxu0 %v622
    %3872 = vmatprep.subr.bf16.mxu0 0
    %3873 = vmatpush1.bf16.msra.mxu0 %v623
    %3874 = vmatprep.subr.bf16.mxu0 0
    %3875 = vmatpush1.bf16.msra.mxu0 %v624
    %3876 = vmatprep.subr.bf16.mxu0 0
    %3877 = vmatpush1.bf16.msra.mxu0 %v625
    %3878 = vmatprep.subr.bf16.mxu0 0
    %3879 = vmatpush1.bf16.msra.mxu0 %v626
    %3880 = vmatprep.subr.bf16.mxu0 0
    %3881 = vmatpush1.bf16.msra.mxu0 %v627
    %3882 = vmatprep.subr.bf16.mxu0 0
    %3883 = vmatpush1.bf16.msra.mxu0 %v628
    %3884 = vmatprep.subr.bf16.mxu0 0
    %3885 = vmatpush1.bf16.msra.mxu0 %v629
    %3886 = vmatprep.subr.bf16.mxu0 0
    %3887 = vmatpush1.bf16.msra.mxu0 %v630
    %3888 = vmatprep.subr.bf16.mxu0 0
    %3889 = vmatpush1.bf16.msra.mxu0 %v631
    %3890 = vmatprep.subr.bf16.mxu0 0
    %3891 = vmatpush1.bf16.msra.mxu0 %v632
    %3892 = vmatprep.subr.bf16.mxu0 0
    %3893 = vmatpush1.bf16.msra.mxu0 %v633
    %3894 = vmatprep.mubr.bf16.mxu0 %v3799
    %3895 = vmatmul.mubr.bf16.gmra.mrb[0].mxu0 %v3798
    %v3896 = vpop.f32.mrb[0].mxu0
    %v3897 = vadd.f32 0.0, %v3896
    %v3898 = vpop.f32.mrb[0].mxu0
    %v3899 = vpop.f32.mrb[0].mxu0
    %v3900 = vadd.f32 0.0, %v3899
    %v3901 = vpop.f32.mrb[0].mxu0
    %3902 = vmatprep.mubr.bf16.mxu0 %v3803
    %3903 = vmatmul.mubr.bf16.gmra.mrb[0].mxu0 %v3802
    %v3904 = vpop.f32.mrb[0].mxu0
    %v3905 = vadd.f32 0.0, %v3904
    %v3906 = vpop.f32.mrb[0].mxu0
    %v3907 = vpop.f32.mrb[0].mxu0
    %v3908 = vadd.f32 0.0, %v3907
    %v3909 = vpop.f32.mrb[0].mxu0
    %3910 = vmatprep.mubr.bf16.mxu0 %v3807
    %3911 = vmatmul.mubr.bf16.gmra.mrb[0].mxu0 %v3806
    %v3912 = vpop.f32.mrb[0].mxu0
    %v3913 = vadd.f32 0.0, %v3912
    %v3914 = vpop.f32.mrb[0].mxu0
    %v3915 = vpop.f32.mrb[0].mxu0
    %v3916 = vadd.f32 0.0, %v3915
    %v3917 = vpop.f32.mrb[0].mxu0
    %3918 = vmatprep.mubr.bf16.mxu0 %v3811
    %3919 = vmatmul.mubr.bf16.gmra.mrb[0].mxu0 %v3810
    %v3920 = vpop.f32.mrb[0].mxu0
    %v3921 = vadd.f32 0.0, %v3920
    %v3922 = vpop.f32.mrb[0].mxu0
    %v3923 = vpop.f32.mrb[0].mxu0
    %v3924 = vadd.f32 0.0, %v3923
    %v3925 = vpop.f32.mrb[0].mxu0
    %3926 = vmatprep.mubr.bf16.mxu0 %v3815
    %3927 = vmatmul.mubr.bf16.gmra.mrb[0].mxu0 %v3814
    %v3928 = vpop.f32.mrb[0].mxu0
    %v3929 = vadd.f32 0.0, %v3928
    %v3930 = vpop.f32.mrb[0].mxu0
    %v3931 = vpop.f32.mrb[0].mxu0
    %v3932 = vadd.f32 0.0, %v3931
    %v3933 = vpop.f32.mrb[0].mxu0
    %3934 = vmatprep.mubr.bf16.mxu0 %v3819
    %3935 = vmatmul.mubr.bf16.gmra.mrb[0].mxu0 %v3818
    %v3936 = vpop.f32.mrb[0].mxu0
    %v3937 = vadd.f32 0.0, %v3936
    %v3938 = vpop.f32.mrb[0].mxu0
    %v3939 = vpop.f32.mrb[0].mxu0
    %v3940 = vadd.f32 0.0, %v3939
    %v3941 = vpop.f32.mrb[0].mxu0
    %3942 = vmatprep.mubr.bf16.mxu0 %v3823
    %3943 = vmatmul.mubr.bf16.gmra.mrb[0].mxu0 %v3822
    %v3944 = vpop.f32.mrb[0].mxu0
    %v3945 = vadd.f32 0.0, %v3944
    %v3946 = vpop.f32.mrb[0].mxu0
    %v3947 = vpop.f32.mrb[0].mxu0
    %v3948 = vadd.f32 0.0, %v3947
    %v3949 = vpop.f32.mrb[0].mxu0
    %3950 = vmatprep.mubr.bf16.mxu0 %v3827
    %3951 = vmatmul.mubr.bf16.gmra.mrb[0].mxu0 %v3826
    %v3952 = vpop.f32.mrb[0].mxu0
    %v3953 = vadd.f32 0.0, %v3952
    %v3954 = vpop.f32.mrb[0].mxu0
    %v3955 = vpop.f32.mrb[0].mxu0
    %v3956 = vadd.f32 0.0, %v3955
    %v3957 = vpop.f32.mrb[0].mxu0
    %3958 = vdwg.mxu0
    %3959 = vmatprep.subr.bf16.mxu0 0
    %3960 = vmatpush1.bf16.msra.mxu0 %v634
    %3961 = vmatprep.subr.bf16.mxu0 0
    %3962 = vmatpush1.bf16.msra.mxu0 %v635
    %3963 = vmatprep.subr.bf16.mxu0 0
    %3964 = vmatpush1.bf16.msra.mxu0 %v636
    %3965 = vmatprep.subr.bf16.mxu0 0
    %3966 = vmatpush1.bf16.msra.mxu0 %v637
    %3967 = vmatprep.subr.bf16.mxu0 0
    %3968 = vmatpush1.bf16.msra.mxu0 %v638
    %3969 = vmatprep.subr.bf16.mxu0 0
    %3970 = vmatpush1.bf16.msra.mxu0 %v639
    %3971 = vmatprep.subr.bf16.mxu0 0
    %3972 = vmatpush1.bf16.msra.mxu0 %v640
    %3973 = vmatprep.subr.bf16.mxu0 0
    %3974 = vmatpush1.bf16.msra.mxu0 %v641
    %3975 = vmatprep.subr.bf16.mxu0 0
    %3976 = vmatpush1.bf16.msra.mxu0 %v642
    %3977 = vmatprep.subr.bf16.mxu0 0
    %3978 = vmatpush1.bf16.msra.mxu0 %v643
    %3979 = vmatprep.subr.bf16.mxu0 0
    %3980 = vmatpush1.bf16.msra.mxu0 %v644
    %3981 = vmatprep.subr.bf16.mxu0 0
    %3982 = vmatpush1.bf16.msra.mxu0 %v645
    %3983 = vmatprep.subr.bf16.mxu0 0
    %3984 = vmatpush1.bf16.msra.mxu0 %v646
    %3985 = vmatprep.subr.bf16.mxu0 0
    %3986 = vmatpush1.bf16.msra.mxu0 %v647
    %3987 = vmatprep.subr.bf16.mxu0 0
    %3988 = vmatpush1.bf16.msra.mxu0 %v648
    %3989 = vmatprep.subr.bf16.mxu0 0
    %3990 = vmatpush1.bf16.msra.mxu0 %v649
    %3991 = vmatprep.mubr.bf16.mxu0 %v3801
    %3992 = vmatmul.mubr.bf16.gmra.mrb[0].mxu0 %v3800
    %v3993 = vpop.f32.mrb[0].mxu0
    %v3994 = vadd.f32 %v3897, %v3993
    %v3995 = vpop.f32.mrb[0].mxu0
    %v3996 = vpop.f32.mrb[0].mxu0
    %v3997 = vadd.f32 %v3900, %v3996
    %v3998 = vpop.f32.mrb[0].mxu0
    %3999 = vmatprep.mubr.bf16.mxu0 %v3805
    %4000 = vmatmul.mubr.bf16.gmra.mrb[0].mxu0 %v3804
    %v4001 = vpop.f32.mrb[0].mxu0
    %v4002 = vadd.f32 %v3905, %v4001
    %v4003 = vpop.f32.mrb[0].mxu0
    %v4004 = vpop.f32.mrb[0].mxu0
    %v4005 = vadd.f32 %v3908, %v4004
    %v4006 = vpop.f32.mrb[0].mxu0
    %4007 = vmatprep.mubr.bf16.mxu0 %v3809
    %4008 = vmatmul.mubr.bf16.gmra.mrb[0].mxu0 %v3808
    %v4009 = vpop.f32.mrb[0].mxu0
    %v4010 = vadd.f32 %v3913, %v4009
    %v4011 = vpop.f32.mrb[0].mxu0
    %v4012 = vpop.f32.mrb[0].mxu0
    %v4013 = vadd.f32 %v3916, %v4012
    %v4014 = vpop.f32.mrb[0].mxu0
    %4015 = vmatprep.mubr.bf16.mxu0 %v3813
    %4016 = vmatmul.mubr.bf16.gmra.mrb[0].mxu0 %v3812
    %v4017 = vpop.f32.mrb[0].mxu0
    %v4018 = vadd.f32 %v3921, %v4017
    %v4019 = vpop.f32.mrb[0].mxu0
    %v4020 = vpop.f32.mrb[0].mxu0
    %v4021 = vadd.f32 %v3924, %v4020
    %v4022 = vpop.f32.mrb[0].mxu0
    %4023 = vmatprep.mubr.bf16.mxu0 %v3817
    %4024 = vmatmul.mubr.bf16.gmra.mrb[0].mxu0 %v3816
    %v4025 = vpop.f32.mrb[0].mxu0
    %v4026 = vadd.f32 %v3929, %v4025
    %v4027 = vpop.f32.mrb[0].mxu0
    %v4028 = vpop.f32.mrb[0].mxu0
    %v4029 = vadd.f32 %v3932, %v4028
    %v4030 = vpop.f32.mrb[0].mxu0
    %4031 = vmatprep.mubr.bf16.mxu0 %v3821
    %4032 = vmatmul.mubr.bf16.gmra.mrb[0].mxu0 %v3820
    %v4033 = vpop.f32.mrb[0].mxu0
    %v4034 = vadd.f32 %v3937, %v4033
    %v4035 = vpop.f32.mrb[0].mxu0
    %v4036 = vpop.f32.mrb[0].mxu0
    %v4037 = vadd.f32 %v3940, %v4036
    %v4038 = vpop.f32.mrb[0].mxu0
    %4039 = vmatprep.mubr.bf16.mxu0 %v3825
    %4040 = vmatmul.mubr.bf16.gmra.mrb[0].mxu0 %v3824
    %v4041 = vpop.f32.mrb[0].mxu0
    %v4042 = vadd.f32 %v3945, %v4041
    %v4043 = vpop.f32.mrb[0].mxu0
    %v4044 = vpop.f32.mrb[0].mxu0
    %v4045 = vadd.f32 %v3948, %v4044
    %v4046 = vpop.f32.mrb[0].mxu0
    %4047 = vmatprep.mubr.bf16.mxu0 %v3829
    %4048 = vmatmul.mubr.bf16.gmra.mrb[0].mxu0 %v3828
    %v4049 = vpop.f32.mrb[0].mxu0
    %v4050 = vadd.f32 %v3953, %v4049
    %v4051 = vpop.f32.mrb[0].mxu0
    %v4052 = vpop.f32.mrb[0].mxu0
    %v4053 = vadd.f32 %v3956, %v4052
    %v4054 = vpop.f32.mrb[0].mxu0
    %4055 = vdwg.mxu0
    %v4056 = vpack.c.bf16 %v3997, %v3994
    %v4057 = vpack.c.bf16 %v4005, %v4002
    %v4058 = vpack.c.bf16 %v4013, %v4010
    %v4059 = vpack.c.bf16 %v4021, %v4018
    %v4060 = vpack.c.bf16 %v4029, %v4026
    %v4061 = vpack.c.bf16 %v4037, %v4034
    %v4062 = vpack.c.bf16 %v4045, %v4042
    %v4063 = vpack.c.bf16 %v4053, %v4050
    %v4065 = vsel %vm1279, %v4056, 0
    %v4068 = vsel %vm1279, %v4057, 0
    %v4071 = vsel %vm1279, %v4058, 0
    %v4074 = vsel %vm1279, %v4059, 0
    %v4077 = vsel %vm1279, %v4060, 0
    %v4080 = vsel %vm1279, %v4061, 0
    %v4083 = vsel %vm1279, %v4062, 0
    %v4086 = vsel %vm1279, %v4063, 0
    %v4089 = vsel %vm1304, %v3701, 0
    %4091 = vmatprep.subr.bf16.mxu0 0
    %4092 = vmatpush1.bf16.msra.mxu0 %v4089
    %4093 = vmatprep.subr.bf16.mxu0 0
    %4094 = vmatpush1.bf16.msra.mxu0 0
    %4095 = vmatprep.subr.bf16.mxu0 0
    %4096 = vmatpush1.bf16.msra.mxu0 0
    %4097 = vmatprep.subr.bf16.mxu0 0
    %4098 = vmatpush1.bf16.msra.mxu0 0
    %4099 = vmatprep.subr.bf16.mxu0 0
    %4100 = vmatpush1.bf16.msra.mxu0 0
    %4101 = vmatprep.subr.bf16.mxu0 0
    %4102 = vmatpush1.bf16.msra.mxu0 0
    %4103 = vmatprep.subr.bf16.mxu0 0
    %4104 = vmatpush1.bf16.msra.mxu0 0
    %4105 = vmatprep.subr.bf16.mxu0 0
    %4106 = vmatpush1.bf16.msra.mxu0 0
    %4107 = vmatprep.subr.bf16.mxu0 0
    %4108 = vmatpush1.bf16.msra.mxu0 0
    %4109 = vmatprep.subr.bf16.mxu0 0
    %4110 = vmatpush1.bf16.msra.mxu0 0
    %4111 = vmatprep.subr.bf16.mxu0 0
    %4112 = vmatpush1.bf16.msra.mxu0 0
    %4113 = vmatprep.subr.bf16.mxu0 0
    %4114 = vmatpush1.bf16.msra.mxu0 0
    %4115 = vmatprep.subr.bf16.mxu0 0
    %4116 = vmatpush1.bf16.msra.mxu0 0
    %4117 = vmatprep.subr.bf16.mxu0 0
    %4118 = vmatpush1.bf16.msra.mxu0 0
    %4119 = vmatprep.subr.bf16.mxu0 0
    %4120 = vmatpush1.bf16.msra.mxu0 0
    %4121 = vmatprep.subr.bf16.mxu0 0
    %4122 = vmatpush1.bf16.msra.mxu0 0
    %4123 = vmatprep.mubr.bf16.mxu0 0
    %4124 = vmatmul.mubr.bf16.gmra.mrb[0].mxu0 %v4065
    %v4125 = vpop.f32.mrb[0].mxu0
    %v4126 = vadd.f32 0.0, %v4125
    %v4127 = vpop.f32.mrb[0].mxu0
    %v4128 = vpop.f32.mrb[0].mxu0
    %v4129 = vadd.f32 0.0, %v4128
    %v4130 = vpop.f32.mrb[0].mxu0
    %4131 = vmatprep.mubr.bf16.mxu0 0
    %4132 = vmatmul.mubr.bf16.gmra.mrb[0].mxu0 %v4068
    %v4133 = vpop.f32.mrb[0].mxu0
    %v4134 = vadd.f32 0.0, %v4133
    %v4135 = vpop.f32.mrb[0].mxu0
    %v4136 = vpop.f32.mrb[0].mxu0
    %v4137 = vadd.f32 0.0, %v4136
    %v4138 = vpop.f32.mrb[0].mxu0
    %4139 = vmatprep.mubr.bf16.mxu0 0
    %4140 = vmatmul.mubr.bf16.gmra.mrb[0].mxu0 %v4071
    %v4141 = vpop.f32.mrb[0].mxu0
    %v4142 = vadd.f32 0.0, %v4141
    %v4143 = vpop.f32.mrb[0].mxu0
    %v4144 = vpop.f32.mrb[0].mxu0
    %v4145 = vadd.f32 0.0, %v4144
    %v4146 = vpop.f32.mrb[0].mxu0
    %4147 = vmatprep.mubr.bf16.mxu0 0
    %4148 = vmatmul.mubr.bf16.gmra.mrb[0].mxu0 %v4074
    %v4149 = vpop.f32.mrb[0].mxu0
    %v4150 = vadd.f32 0.0, %v4149
    %v4151 = vpop.f32.mrb[0].mxu0
    %v4152 = vpop.f32.mrb[0].mxu0
    %v4153 = vadd.f32 0.0, %v4152
    %v4154 = vpop.f32.mrb[0].mxu0
    %4155 = vmatprep.mubr.bf16.mxu0 0
    %4156 = vmatmul.mubr.bf16.gmra.mrb[0].mxu0 %v4077
    %v4157 = vpop.f32.mrb[0].mxu0
    %v4158 = vadd.f32 0.0, %v4157
    %v4159 = vpop.f32.mrb[0].mxu0
    %v4160 = vpop.f32.mrb[0].mxu0
    %v4161 = vadd.f32 0.0, %v4160
    %v4162 = vpop.f32.mrb[0].mxu0
    %4163 = vmatprep.mubr.bf16.mxu0 0
    %4164 = vmatmul.mubr.bf16.gmra.mrb[0].mxu0 %v4080
    %v4165 = vpop.f32.mrb[0].mxu0
    %v4166 = vadd.f32 0.0, %v4165
    %v4167 = vpop.f32.mrb[0].mxu0
    %v4168 = vpop.f32.mrb[0].mxu0
    %v4169 = vadd.f32 0.0, %v4168
    %v4170 = vpop.f32.mrb[0].mxu0
    %4171 = vmatprep.mubr.bf16.mxu0 0
    %4172 = vmatmul.mubr.bf16.gmra.mrb[0].mxu0 %v4083
    %v4173 = vpop.f32.mrb[0].mxu0
    %v4174 = vadd.f32 0.0, %v4173
    %v4175 = vpop.f32.mrb[0].mxu0
    %v4176 = vpop.f32.mrb[0].mxu0
    %v4177 = vadd.f32 0.0, %v4176
    %v4178 = vpop.f32.mrb[0].mxu0
    %4179 = vmatprep.mubr.bf16.mxu0 0
    %4180 = vmatmul.mubr.bf16.gmra.mrb[0].mxu0 %v4086
    %v4181 = vpop.f32.mrb[0].mxu0
    %v4182 = vadd.f32 0.0, %v4181
    %v4183 = vpop.f32.mrb[0].mxu0
    %v4184 = vpop.f32.mrb[0].mxu0
    %v4185 = vadd.f32 0.0, %v4184
    %v4186 = vpop.f32.mrb[0].mxu0
    %4187 = vdwg.mxu0
    %v4188 = vadd.f32 %v3653, %v4126
    %v4189 = vadd.f32 %v3654, %v4129
    %v4190 = vadd.f32 %v3655, %v4134
    %v4191 = vadd.f32 %v3656, %v4137
    %v4192 = vadd.f32 %v3657, %v4142
    %v4193 = vadd.f32 %v3658, %v4145
    %v4194 = vadd.f32 %v3659, %v4150
    %v4195 = vadd.f32 %v3660, %v4153
    %v4196 = vadd.f32 %v3661, %v4158
    %v4197 = vadd.f32 %v3662, %v4161
    %v4198 = vadd.f32 %v3663, %v4166
    %v4199 = vadd.f32 %v3664, %v4169
    %v4200 = vadd.f32 %v3665, %v4174
    %v4201 = vadd.f32 %v3666, %v4177
    %v4202 = vadd.f32 %v3667, %v4182
    %v4203 = vadd.f32 %v3668, %v4185
    %v4204 = vld [vmem:[#allocation2 + $0x700] sm:$0xff]
    %v4205 = vld [vmem:[#allocation2 + $0x708] sm:$0xff]
    %v4206 = vld [vmem:[#allocation2 + $0x710] sm:$0xff]
    %v4207 = vld [vmem:[#allocation2 + $0x718] sm:$0xff]
    %v4208 = vld [vmem:[#allocation2 + $0x720] sm:$0xff]
    %v4209 = vld [vmem:[#allocation2 + $0x728] sm:$0xff]
    %v4210 = vld [vmem:[#allocation2 + $0x730] sm:$0xff]
    %v4211 = vld [vmem:[#allocation2 + $0x738] sm:$0xff]
    %v4212 = vld [vmem:[#allocation2 + $0x740] sm:$0xff]
    %v4213 = vld [vmem:[#allocation2 + $0x748] sm:$0xff]
    %v4214 = vld [vmem:[#allocation2 + $0x750] sm:$0xff]
    %v4215 = vld [vmem:[#allocation2 + $0x758] sm:$0xff]
    %v4216 = vld [vmem:[#allocation2 + $0x760] sm:$0xff]
    %v4217 = vld [vmem:[#allocation2 + $0x768] sm:$0xff]
    %v4218 = vld [vmem:[#allocation2 + $0x770] sm:$0xff]
    %v4219 = vld [vmem:[#allocation2 + $0x778] sm:$0xff]
    %v4220 = vld [vmem:[#allocation2 + $0x780] sm:$0xff]
    %v4221 = vld [vmem:[#allocation2 + $0x788] sm:$0xff]
    %v4222 = vld [vmem:[#allocation2 + $0x790] sm:$0xff]
    %v4223 = vld [vmem:[#allocation2 + $0x798] sm:$0xff]
    %v4224 = vld [vmem:[#allocation2 + $0x7a0] sm:$0xff]
    %v4225 = vld [vmem:[#allocation2 + $0x7a8] sm:$0xff]
    %v4226 = vld [vmem:[#allocation2 + $0x7b0] sm:$0xff]
    %v4227 = vld [vmem:[#allocation2 + $0x7b8] sm:$0xff]
    %v4228 = vld [vmem:[#allocation2 + $0x7c0] sm:$0xff]
    %v4229 = vld [vmem:[#allocation2 + $0x7c8] sm:$0xff]
    %v4230 = vld [vmem:[#allocation2 + $0x7d0] sm:$0xff]
    %v4231 = vld [vmem:[#allocation2 + $0x7d8] sm:$0xff]
    %v4232 = vld [vmem:[#allocation2 + $0x7e0] sm:$0xff]
    %v4233 = vld [vmem:[#allocation2 + $0x7e8] sm:$0xff]
    %v4234 = vld [vmem:[#allocation2 + $0x7f0] sm:$0xff]
    %v4235 = vld [vmem:[#allocation2 + $0x7f8] sm:$0xff]
    %v4236 = vld [vmem:[%s2 + $0x1c] sm:$0xf]
    %v4269 = vunpack.c.l.b16 %v4204
    %v4270 = vunpack.c.h.b16 %v4204
    %v4271 = vunpack.c.l.b16 %v4205
    %v4272 = vunpack.c.h.b16 %v4205
    %v4273 = vunpack.c.l.b16 %v4206
    %v4274 = vunpack.c.h.b16 %v4206
    %v4275 = vunpack.c.l.b16 %v4207
    %v4276 = vunpack.c.h.b16 %v4207
    %v4277 = vunpack.c.l.b16 %v4208
    %v4278 = vunpack.c.h.b16 %v4208
    %v4279 = vunpack.c.l.b16 %v4209
    %v4280 = vunpack.c.h.b16 %v4209
    %v4281 = vunpack.c.l.b16 %v4210
    %v4282 = vunpack.c.h.b16 %v4210
    %v4283 = vunpack.c.l.b16 %v4211
    %v4284 = vunpack.c.h.b16 %v4211
    %v4285 = vunpack.c.l.b16 %v4212
    %v4286 = vunpack.c.h.b16 %v4212
    %v4287 = vunpack.c.l.b16 %v4213
    %v4288 = vunpack.c.h.b16 %v4213
    %v4289 = vunpack.c.l.b16 %v4214
    %v4290 = vunpack.c.h.b16 %v4214
    %v4291 = vunpack.c.l.b16 %v4215
    %v4292 = vunpack.c.h.b16 %v4215
    %v4293 = vunpack.c.l.b16 %v4216
    %v4294 = vunpack.c.h.b16 %v4216
    %v4295 = vunpack.c.l.b16 %v4217
    %v4296 = vunpack.c.h.b16 %v4217
    %v4297 = vunpack.c.l.b16 %v4218
    %v4298 = vunpack.c.h.b16 %v4218
    %v4299 = vunpack.c.l.b16 %v4219
    %v4300 = vunpack.c.h.b16 %v4219
    %v4301 = vunpack.c.l.b16 %v4220
    %v4302 = vunpack.c.h.b16 %v4220
    %v4303 = vunpack.c.l.b16 %v4221
    %v4304 = vunpack.c.h.b16 %v4221
    %v4305 = vunpack.c.l.b16 %v4222
    %v4306 = vunpack.c.h.b16 %v4222
    %v4307 = vunpack.c.l.b16 %v4223
    %v4308 = vunpack.c.h.b16 %v4223
    %v4309 = vunpack.c.l.b16 %v4224
    %v4310 = vunpack.c.h.b16 %v4224
    %v4311 = vunpack.c.l.b16 %v4225
    %v4312 = vunpack.c.h.b16 %v4225
    %v4313 = vunpack.c.l.b16 %v4226
    %v4314 = vunpack.c.h.b16 %v4226
    %v4315 = vunpack.c.l.b16 %v4227
    %v4316 = vunpack.c.h.b16 %v4227
    %v4317 = vunpack.c.l.b16 %v4228
    %v4318 = vunpack.c.h.b16 %v4228
    %v4319 = vunpack.c.l.b16 %v4229
    %v4320 = vunpack.c.h.b16 %v4229
    %v4321 = vunpack.c.l.b16 %v4230
    %v4322 = vunpack.c.h.b16 %v4230
    %v4323 = vunpack.c.l.b16 %v4231
    %v4324 = vunpack.c.h.b16 %v4231
    %v4325 = vunpack.c.l.b16 %v4232
    %v4326 = vunpack.c.h.b16 %v4232
    %v4327 = vunpack.c.l.b16 %v4233
    %v4328 = vunpack.c.h.b16 %v4233
    %v4329 = vunpack.c.l.b16 %v4234
    %v4330 = vunpack.c.h.b16 %v4234
    %v4331 = vunpack.c.l.b16 %v4235
    %v4332 = vunpack.c.h.b16 %v4235
    %v4333 = vpack.c.b16 %v4273, %v4269
    %v4334 = vpack.c.b16 %v4274, %v4270
    %v4335 = vpack.c.b16 %v4275, %v4271
    %v4336 = vpack.c.b16 %v4276, %v4272
    %v4337 = vpack.c.b16 %v4281, %v4277
    %v4338 = vpack.c.b16 %v4282, %v4278
    %v4339 = vpack.c.b16 %v4283, %v4279
    %v4340 = vpack.c.b16 %v4284, %v4280
    %v4341 = vpack.c.b16 %v4289, %v4285
    %v4342 = vpack.c.b16 %v4290, %v4286
    %v4343 = vpack.c.b16 %v4291, %v4287
    %v4344 = vpack.c.b16 %v4292, %v4288
    %v4345 = vpack.c.b16 %v4297, %v4293
    %v4346 = vpack.c.b16 %v4298, %v4294
    %v4347 = vpack.c.b16 %v4299, %v4295
    %v4348 = vpack.c.b16 %v4300, %v4296
    %v4349 = vpack.c.b16 %v4305, %v4301
    %v4350 = vpack.c.b16 %v4306, %v4302
    %v4351 = vpack.c.b16 %v4307, %v4303
    %v4352 = vpack.c.b16 %v4308, %v4304
    %v4353 = vpack.c.b16 %v4313, %v4309
    %v4354 = vpack.c.b16 %v4314, %v4310
    %v4355 = vpack.c.b16 %v4315, %v4311
    %v4356 = vpack.c.b16 %v4316, %v4312
    %v4357 = vpack.c.b16 %v4321, %v4317
    %v4358 = vpack.c.b16 %v4322, %v4318
    %v4359 = vpack.c.b16 %v4323, %v4319
    %v4360 = vpack.c.b16 %v4324, %v4320
    %v4361 = vpack.c.b16 %v4329, %v4325
    %v4362 = vpack.c.b16 %v4330, %v4326
    %v4363 = vpack.c.b16 %v4331, %v4327
    %v4364 = vpack.c.b16 %v4332, %v4328
    %4397 = vmatprep.subr.bf16.mxu0 0
    %4398 = vmatpush1.bf16.msra.mxu0 %v618
    %4399 = vmatprep.subr.bf16.mxu0 0
    %4400 = vmatpush1.bf16.msra.mxu0 %v619
    %4401 = vmatprep.subr.bf16.mxu0 0
    %4402 = vmatpush1.bf16.msra.mxu0 %v620
    %4403 = vmatprep.subr.bf16.mxu0 0
    %4404 = vmatpush1.bf16.msra.mxu0 %v621
    %4405 = vmatprep.subr.bf16.mxu0 0
    %4406 = vmatpush1.bf16.msra.mxu0 %v622
    %4407 = vmatprep.subr.bf16.mxu0 0
    %4408 = vmatpush1.bf16.msra.mxu0 %v623
    %4409 = vmatprep.subr.bf16.mxu0 0
    %4410 = vmatpush1.bf16.msra.mxu0 %v624
    %4411 = vmatprep.subr.bf16.mxu0 0
    %4412 = vmatpush1.bf16.msra.mxu0 %v625
    %4413 = vmatprep.subr.bf16.mxu0 0
    %4414 = vmatpush1.bf16.msra.mxu0 %v626
    %4415 = vmatprep.subr.bf16.mxu0 0
    %4416 = vmatpush1.bf16.msra.mxu0 %v627
    %4417 = vmatprep.subr.bf16.mxu0 0
    %4418 = vmatpush1.bf16.msra.mxu0 %v628
    %4419 = vmatprep.subr.bf16.mxu0 0
    %4420 = vmatpush1.bf16.msra.mxu0 %v629
    %4421 = vmatprep.subr.bf16.mxu0 0
    %4422 = vmatpush1.bf16.msra.mxu0 %v630
    %4423 = vmatprep.subr.bf16.mxu0 0
    %4424 = vmatpush1.bf16.msra.mxu0 %v631
    %4425 = vmatprep.subr.bf16.mxu0 0
    %4426 = vmatpush1.bf16.msra.mxu0 %v632
    %4427 = vmatprep.subr.bf16.mxu0 0
    %4428 = vmatpush1.bf16.msra.mxu0 %v633
    %4429 = vmatprep.mubr.bf16.mxu0 %v4334
    %4430 = vmatmul.mubr.bf16.gmra.mrb[0].mxu0 %v4333
    %v4431 = vpop.f32.mrb[0].mxu0
    %v4432 = vadd.f32 0.0, %v4431
    %v4433 = vpop.f32.mrb[0].mxu0
    %v4434 = vpop.f32.mrb[0].mxu0
    %v4435 = vadd.f32 0.0, %v4434
    %v4436 = vpop.f32.mrb[0].mxu0
    %4437 = vmatprep.mubr.bf16.mxu0 %v4338
    %4438 = vmatmul.mubr.bf16.gmra.mrb[0].mxu0 %v4337
    %v4439 = vpop.f32.mrb[0].mxu0
    %v4440 = vadd.f32 0.0, %v4439
    %v4441 = vpop.f32.mrb[0].mxu0
    %v4442 = vpop.f32.mrb[0].mxu0
    %v4443 = vadd.f32 0.0, %v4442
    %v4444 = vpop.f32.mrb[0].mxu0
    %4445 = vmatprep.mubr.bf16.mxu0 %v4342
    %4446 = vmatmul.mubr.bf16.gmra.mrb[0].mxu0 %v4341
    %v4447 = vpop.f32.mrb[0].mxu0
    %v4448 = vadd.f32 0.0, %v4447
    %v4449 = vpop.f32.mrb[0].mxu0
    %v4450 = vpop.f32.mrb[0].mxu0
    %v4451 = vadd.f32 0.0, %v4450
    %v4452 = vpop.f32.mrb[0].mxu0
    %4453 = vmatprep.mubr.bf16.mxu0 %v4346
    %4454 = vmatmul.mubr.bf16.gmra.mrb[0].mxu0 %v4345
    %v4455 = vpop.f32.mrb[0].mxu0
    %v4456 = vadd.f32 0.0, %v4455
    %v4457 = vpop.f32.mrb[0].mxu0
    %v4458 = vpop.f32.mrb[0].mxu0
    %v4459 = vadd.f32 0.0, %v4458
    %v4460 = vpop.f32.mrb[0].mxu0
    %4461 = vmatprep.mubr.bf16.mxu0 %v4350
    %4462 = vmatmul.mubr.bf16.gmra.mrb[0].mxu0 %v4349
    %v4463 = vpop.f32.mrb[0].mxu0
    %v4464 = vadd.f32 0.0, %v4463
    %v4465 = vpop.f32.mrb[0].mxu0
    %v4466 = vpop.f32.mrb[0].mxu0
    %v4467 = vadd.f32 0.0, %v4466
    %v4468 = vpop.f32.mrb[0].mxu0
    %4469 = vmatprep.mubr.bf16.mxu0 %v4354
    %4470 = vmatmul.mubr.bf16.gmra.mrb[0].mxu0 %v4353
    %v4471 = vpop.f32.mrb[0].mxu0
    %v4472 = vadd.f32 0.0, %v4471
    %v4473 = vpop.f32.mrb[0].mxu0
    %v4474 = vpop.f32.mrb[0].mxu0
    %v4475 = vadd.f32 0.0, %v4474
    %v4476 = vpop.f32.mrb[0].mxu0
    %4477 = vmatprep.mubr.bf16.mxu0 %v4358
    %4478 = vmatmul.mubr.bf16.gmra.mrb[0].mxu0 %v4357
    %v4479 = vpop.f32.mrb[0].mxu0
    %v4480 = vadd.f32 0.0, %v4479
    %v4481 = vpop.f32.mrb[0].mxu0
    %v4482 = vpop.f32.mrb[0].mxu0
    %v4483 = vadd.f32 0.0, %v4482
    %v4484 = vpop.f32.mrb[0].mxu0
    %4485 = vmatprep.mubr.bf16.mxu0 %v4362
    %4486 = vmatmul.mubr.bf16.gmra.mrb[0].mxu0 %v4361
    %v4487 = vpop.f32.mrb[0].mxu0
    %v4488 = vadd.f32 0.0, %v4487
    %v4489 = vpop.f32.mrb[0].mxu0
    %v4490 = vpop.f32.mrb[0].mxu0
    %v4491 = vadd.f32 0.0, %v4490
    %v4492 = vpop.f32.mrb[0].mxu0
    %4493 = vdwg.mxu0
    %4494 = vmatprep.subr.bf16.mxu0 0
    %4495 = vmatpush1.bf16.msra.mxu0 %v634
    %4496 = vmatprep.subr.bf16.mxu0 0
    %4497 = vmatpush1.bf16.msra.mxu0 %v635
    %4498 = vmatprep.subr.bf16.mxu0 0
    %4499 = vmatpush1.bf16.msra.mxu0 %v636
    %4500 = vmatprep.subr.bf16.mxu0 0
    %4501 = vmatpush1.bf16.msra.mxu0 %v637
    %4502 = vmatprep.subr.bf16.mxu0 0
    %4503 = vmatpush1.bf16.msra.mxu0 %v638
    %4504 = vmatprep.subr.bf16.mxu0 0
    %4505 = vmatpush1.bf16.msra.mxu0 %v639
    %4506 = vmatprep.subr.bf16.mxu0 0
    %4507 = vmatpush1.bf16.msra.mxu0 %v640
    %4508 = vmatprep.subr.bf16.mxu0 0
    %4509 = vmatpush1.bf16.msra.mxu0 %v641
    %4510 = vmatprep.subr.bf16.mxu0 0
    %4511 = vmatpush1.bf16.msra.mxu0 %v642
    %4512 = vmatprep.subr.bf16.mxu0 0
    %4513 = vmatpush1.bf16.msra.mxu0 %v643
    %4514 = vmatprep.subr.bf16.mxu0 0
    %4515 = vmatpush1.bf16.msra.mxu0 %v644
    %4516 = vmatprep.subr.bf16.mxu0 0
    %4517 = vmatpush1.bf16.msra.mxu0 %v645
    %4518 = vmatprep.subr.bf16.mxu0 0
    %4519 = vmatpush1.bf16.msra.mxu0 %v646
    %4520 = vmatprep.subr.bf16.mxu0 0
    %4521 = vmatpush1.bf16.msra.mxu0 %v647
    %4522 = vmatprep.subr.bf16.mxu0 0
    %4523 = vmatpush1.bf16.msra.mxu0 %v648
    %4524 = vmatprep.subr.bf16.mxu0 0
    %4525 = vmatpush1.bf16.msra.mxu0 %v649
    %4526 = vmatprep.mubr.bf16.mxu0 %v4336
    %4527 = vmatmul.mubr.bf16.gmra.mrb[0].mxu0 %v4335
    %v4528 = vpop.f32.mrb[0].mxu0
    %v4529 = vadd.f32 %v4432, %v4528
    %v4530 = vpop.f32.mrb[0].mxu0
    %v4531 = vpop.f32.mrb[0].mxu0
    %v4532 = vadd.f32 %v4435, %v4531
    %v4533 = vpop.f32.mrb[0].mxu0
    %4534 = vmatprep.mubr.bf16.mxu0 %v4340
    %4535 = vmatmul.mubr.bf16.gmra.mrb[0].mxu0 %v4339
    %v4536 = vpop.f32.mrb[0].mxu0
    %v4537 = vadd.f32 %v4440, %v4536
    %v4538 = vpop.f32.mrb[0].mxu0
    %v4539 = vpop.f32.mrb[0].mxu0
    %v4540 = vadd.f32 %v4443, %v4539
    %v4541 = vpop.f32.mrb[0].mxu0
    %4542 = vmatprep.mubr.bf16.mxu0 %v4344
    %4543 = vmatmul.mubr.bf16.gmra.mrb[0].mxu0 %v4343
    %v4544 = vpop.f32.mrb[0].mxu0
    %v4545 = vadd.f32 %v4448, %v4544
    %v4546 = vpop.f32.mrb[0].mxu0
    %v4547 = vpop.f32.mrb[0].mxu0
    %v4548 = vadd.f32 %v4451, %v4547
    %v4549 = vpop.f32.mrb[0].mxu0
    %4550 = vmatprep.mubr.bf16.mxu0 %v4348
    %4551 = vmatmul.mubr.bf16.gmra.mrb[0].mxu0 %v4347
    %v4552 = vpop.f32.mrb[0].mxu0
    %v4553 = vadd.f32 %v4456, %v4552
    %v4554 = vpop.f32.mrb[0].mxu0
    %v4555 = vpop.f32.mrb[0].mxu0
    %v4556 = vadd.f32 %v4459, %v4555
    %v4557 = vpop.f32.mrb[0].mxu0
    %4558 = vmatprep.mubr.bf16.mxu0 %v4352
    %4559 = vmatmul.mubr.bf16.gmra.mrb[0].mxu0 %v4351
    %v4560 = vpop.f32.mrb[0].mxu0
    %v4561 = vadd.f32 %v4464, %v4560
    %v4562 = vpop.f32.mrb[0].mxu0
    %v4563 = vpop.f32.mrb[0].mxu0
    %v4564 = vadd.f32 %v4467, %v4563
    %v4565 = vpop.f32.mrb[0].mxu0
    %4566 = vmatprep.mubr.bf16.mxu0 %v4356
    %4567 = vmatmul.mubr.bf16.gmra.mrb[0].mxu0 %v4355
    %v4568 = vpop.f32.mrb[0].mxu0
    %v4569 = vadd.f32 %v4472, %v4568
    %v4570 = vpop.f32.mrb[0].mxu0
    %v4571 = vpop.f32.mrb[0].mxu0
    %v4572 = vadd.f32 %v4475, %v4571
    %v4573 = vpop.f32.mrb[0].mxu0
    %4574 = vmatprep.mubr.bf16.mxu0 %v4360
    %4575 = vmatmul.mubr.bf16.gmra.mrb[0].mxu0 %v4359
    %v4576 = vpop.f32.mrb[0].mxu0
    %v4577 = vadd.f32 %v4480, %v4576
    %v4578 = vpop.f32.mrb[0].mxu0
    %v4579 = vpop.f32.mrb[0].mxu0
    %v4580 = vadd.f32 %v4483, %v4579
    %v4581 = vpop.f32.mrb[0].mxu0
    %4582 = vmatprep.mubr.bf16.mxu0 %v4364
    %4583 = vmatmul.mubr.bf16.gmra.mrb[0].mxu0 %v4363
    %v4584 = vpop.f32.mrb[0].mxu0
    %v4585 = vadd.f32 %v4488, %v4584
    %v4586 = vpop.f32.mrb[0].mxu0
    %v4587 = vpop.f32.mrb[0].mxu0
    %v4588 = vadd.f32 %v4491, %v4587
    %v4589 = vpop.f32.mrb[0].mxu0
    %4590 = vdwg.mxu0
    %v4591 = vpack.c.bf16 %v4532, %v4529
    %v4592 = vpack.c.bf16 %v4540, %v4537
    %v4593 = vpack.c.bf16 %v4548, %v4545
    %v4594 = vpack.c.bf16 %v4556, %v4553
    %v4595 = vpack.c.bf16 %v4564, %v4561
    %v4596 = vpack.c.bf16 %v4572, %v4569
    %v4597 = vpack.c.bf16 %v4580, %v4577
    %v4598 = vpack.c.bf16 %v4588, %v4585
    %v4600 = vsel %vm1279, %v4591, 0
    %v4603 = vsel %vm1279, %v4592, 0
    %v4606 = vsel %vm1279, %v4593, 0
    %v4609 = vsel %vm1279, %v4594, 0
    %v4612 = vsel %vm1279, %v4595, 0
    %v4615 = vsel %vm1279, %v4596, 0
    %v4618 = vsel %vm1279, %v4597, 0
    %v4621 = vsel %vm1279, %v4598, 0
    %v4624 = vsel %vm1304, %v4236, 0
    %4626 = vmatprep.subr.bf16.mxu0 0
    %4627 = vmatpush1.bf16.msra.mxu0 %v4624
    %4628 = vmatprep.subr.bf16.mxu0 0
    %4629 = vmatpush1.bf16.msra.mxu0 0
    %4630 = vmatprep.subr.bf16.mxu0 0
    %4631 = vmatpush1.bf16.msra.mxu0 0
    %4632 = vmatprep.subr.bf16.mxu0 0
    %4633 = vmatpush1.bf16.msra.mxu0 0
    %4634 = vmatprep.subr.bf16.mxu0 0
    %4635 = vmatpush1.bf16.msra.mxu0 0
    %4636 = vmatprep.subr.bf16.mxu0 0
    %4637 = vmatpush1.bf16.msra.mxu0 0
    %4638 = vmatprep.subr.bf16.mxu0 0
    %4639 = vmatpush1.bf16.msra.mxu0 0
    %4640 = vmatprep.subr.bf16.mxu0 0
    %4641 = vmatpush1.bf16.msra.mxu0 0
    %4642 = vmatprep.subr.bf16.mxu0 0
    %4643 = vmatpush1.bf16.msra.mxu0 0
    %4644 = vmatprep.subr.bf16.mxu0 0
    %4645 = vmatpush1.bf16.msra.mxu0 0
    %4646 = vmatprep.subr.bf16.mxu0 0
    %4647 = vmatpush1.bf16.msra.mxu0 0
    %4648 = vmatprep.subr.bf16.mxu0 0
    %4649 = vmatpush1.bf16.msra.mxu0 0
    %4650 = vmatprep.subr.bf16.mxu0 0
    %4651 = vmatpush1.bf16.msra.mxu0 0
    %4652 = vmatprep.subr.bf16.mxu0 0
    %4653 = vmatpush1.bf16.msra.mxu0 0
    %4654 = vmatprep.subr.bf16.mxu0 0
    %4655 = vmatpush1.bf16.msra.mxu0 0
    %4656 = vmatprep.subr.bf16.mxu0 0
    %4657 = vmatpush1.bf16.msra.mxu0 0
    %4658 = vmatprep.mubr.bf16.mxu0 0
    %4659 = vmatmul.mubr.bf16.gmra.mrb[0].mxu0 %v4600
    %v4660 = vpop.f32.mrb[0].mxu0
    %v4661 = vadd.f32 0.0, %v4660
    %v4662 = vpop.f32.mrb[0].mxu0
    %v4663 = vpop.f32.mrb[0].mxu0
    %v4664 = vadd.f32 0.0, %v4663
    %v4665 = vpop.f32.mrb[0].mxu0
    %4666 = vmatprep.mubr.bf16.mxu0 0
    %4667 = vmatmul.mubr.bf16.gmra.mrb[0].mxu0 %v4603
    %v4668 = vpop.f32.mrb[0].mxu0
    %v4669 = vadd.f32 0.0, %v4668
    %v4670 = vpop.f32.mrb[0].mxu0
    %v4671 = vpop.f32.mrb[0].mxu0
    %v4672 = vadd.f32 0.0, %v4671
    %v4673 = vpop.f32.mrb[0].mxu0
    %4674 = vmatprep.mubr.bf16.mxu0 0
    %4675 = vmatmul.mubr.bf16.gmra.mrb[0].mxu0 %v4606
    %v4676 = vpop.f32.mrb[0].mxu0
    %v4677 = vadd.f32 0.0, %v4676
    %v4678 = vpop.f32.mrb[0].mxu0
    %v4679 = vpop.f32.mrb[0].mxu0
    %v4680 = vadd.f32 0.0, %v4679
    %v4681 = vpop.f32.mrb[0].mxu0
    %4682 = vmatprep.mubr.bf16.mxu0 0
    %4683 = vmatmul.mubr.bf16.gmra.mrb[0].mxu0 %v4609
    %v4684 = vpop.f32.mrb[0].mxu0
    %v4685 = vadd.f32 0.0, %v4684
    %v4686 = vpop.f32.mrb[0].mxu0
    %v4687 = vpop.f32.mrb[0].mxu0
    %v4688 = vadd.f32 0.0, %v4687
    %v4689 = vpop.f32.mrb[0].mxu0
    %4690 = vmatprep.mubr.bf16.mxu0 0
    %4691 = vmatmul.mubr.bf16.gmra.mrb[0].mxu0 %v4612
    %v4692 = vpop.f32.mrb[0].mxu0
    %v4693 = vadd.f32 0.0, %v4692
    %v4694 = vpop.f32.mrb[0].mxu0
    %v4695 = vpop.f32.mrb[0].mxu0
    %v4696 = vadd.f32 0.0, %v4695
    %v4697 = vpop.f32.mrb[0].mxu0
    %4698 = vmatprep.mubr.bf16.mxu0 0
    %4699 = vmatmul.mubr.bf16.gmra.mrb[0].mxu0 %v4615
    %v4700 = vpop.f32.mrb[0].mxu0
    %v4701 = vadd.f32 0.0, %v4700
    %v4702 = vpop.f32.mrb[0].mxu0
    %v4703 = vpop.f32.mrb[0].mxu0
    %v4704 = vadd.f32 0.0, %v4703
    %v4705 = vpop.f32.mrb[0].mxu0
    %4706 = vmatprep.mubr.bf16.mxu0 0
    %4707 = vmatmul.mubr.bf16.gmra.mrb[0].mxu0 %v4618
    %v4708 = vpop.f32.mrb[0].mxu0
    %v4709 = vadd.f32 0.0, %v4708
    %v4710 = vpop.f32.mrb[0].mxu0
    %v4711 = vpop.f32.mrb[0].mxu0
    %v4712 = vadd.f32 0.0, %v4711
    %v4713 = vpop.f32.mrb[0].mxu0
    %4714 = vmatprep.mubr.bf16.mxu0 0
    %4715 = vmatmul.mubr.bf16.gmra.mrb[0].mxu0 %v4621
    %v4716 = vpop.f32.mrb[0].mxu0
    %v4717 = vadd.f32 0.0, %v4716
    %v4718 = vpop.f32.mrb[0].mxu0
    %v4719 = vpop.f32.mrb[0].mxu0
    %v4720 = vadd.f32 0.0, %v4719
    %v4721 = vpop.f32.mrb[0].mxu0
    %4722 = vdwg.mxu0
    %v4723 = vadd.f32 %v4188, %v4661
    %v4724 = vadd.f32 %v4189, %v4664
    %v4725 = vadd.f32 %v4190, %v4669
    %v4726 = vadd.f32 %v4191, %v4672
    %v4727 = vadd.f32 %v4192, %v4677
    %v4728 = vadd.f32 %v4193, %v4680
    %v4729 = vadd.f32 %v4194, %v4685
    %v4730 = vadd.f32 %v4195, %v4688
    %v4731 = vadd.f32 %v4196, %v4693
    %v4732 = vadd.f32 %v4197, %v4696
    %v4733 = vadd.f32 %v4198, %v4701
    %v4734 = vadd.f32 %v4199, %v4704
    %v4735 = vadd.f32 %v4200, %v4709
    %v4736 = vadd.f32 %v4201, %v4712
    %v4737 = vadd.f32 %v4202, %v4717
    %v4738 = vadd.f32 %v4203, %v4720
    %v4739 = vld [vmem:[#allocation2 + $0x800] sm:$0xff]
    %v4740 = vld [vmem:[#allocation2 + $0x808] sm:$0xff]
    %v4741 = vld [vmem:[#allocation2 + $0x810] sm:$0xff]
    %v4742 = vld [vmem:[#allocation2 + $0x818] sm:$0xff]
    %v4743 = vld [vmem:[#allocation2 + $0x820] sm:$0xff]
    %v4744 = vld [vmem:[#allocation2 + $0x828] sm:$0xff]
    %v4745 = vld [vmem:[#allocation2 + $0x830] sm:$0xff]
    %v4746 = vld [vmem:[#allocation2 + $0x838] sm:$0xff]
    %v4747 = vld [vmem:[#allocation2 + $0x840] sm:$0xff]
    %v4748 = vld [vmem:[#allocation2 + $0x848] sm:$0xff]
    %v4749 = vld [vmem:[#allocation2 + $0x850] sm:$0xff]
    %v4750 = vld [vmem:[#allocation2 + $0x858] sm:$0xff]
    %v4751 = vld [vmem:[#allocation2 + $0x860] sm:$0xff]
    %v4752 = vld [vmem:[#allocation2 + $0x868] sm:$0xff]
    %v4753 = vld [vmem:[#allocation2 + $0x870] sm:$0xff]
    %v4754 = vld [vmem:[#allocation2 + $0x878] sm:$0xff]
    %v4755 = vld [vmem:[#allocation2 + $0x880] sm:$0xff]
    %v4756 = vld [vmem:[#allocation2 + $0x888] sm:$0xff]
    %v4757 = vld [vmem:[#allocation2 + $0x890] sm:$0xff]
    %v4758 = vld [vmem:[#allocation2 + $0x898] sm:$0xff]
    %v4759 = vld [vmem:[#allocation2 + $0x8a0] sm:$0xff]
    %v4760 = vld [vmem:[#allocation2 + $0x8a8] sm:$0xff]
    %v4761 = vld [vmem:[#allocation2 + $0x8b0] sm:$0xff]
    %v4762 = vld [vmem:[#allocation2 + $0x8b8] sm:$0xff]
    %v4763 = vld [vmem:[#allocation2 + $0x8c0] sm:$0xff]
    %v4764 = vld [vmem:[#allocation2 + $0x8c8] sm:$0xff]
    %v4765 = vld [vmem:[#allocation2 + $0x8d0] sm:$0xff]
    %v4766 = vld [vmem:[#allocation2 + $0x8d8] sm:$0xff]
    %v4767 = vld [vmem:[#allocation2 + $0x8e0] sm:$0xff]
    %v4768 = vld [vmem:[#allocation2 + $0x8e8] sm:$0xff]
    %v4769 = vld [vmem:[#allocation2 + $0x8f0] sm:$0xff]
    %v4770 = vld [vmem:[#allocation2 + $0x8f8] sm:$0xff]
    %v4771 = vld [vmem:[%s2 + $0x20] sm:$0xf]
    %v4804 = vunpack.c.l.b16 %v4739
    %v4805 = vunpack.c.h.b16 %v4739
    %v4806 = vunpack.c.l.b16 %v4740
    %v4807 = vunpack.c.h.b16 %v4740
    %v4808 = vunpack.c.l.b16 %v4741
    %v4809 = vunpack.c.h.b16 %v4741
    %v4810 = vunpack.c.l.b16 %v4742
    %v4811 = vunpack.c.h.b16 %v4742
    %v4812 = vunpack.c.l.b16 %v4743
    %v4813 = vunpack.c.h.b16 %v4743
    %v4814 = vunpack.c.l.b16 %v4744
    %v4815 = vunpack.c.h.b16 %v4744
    %v4816 = vunpack.c.l.b16 %v4745
    %v4817 = vunpack.c.h.b16 %v4745
    %v4818 = vunpack.c.l.b16 %v4746
    %v4819 = vunpack.c.h.b16 %v4746
    %v4820 = vunpack.c.l.b16 %v4747
    %v4821 = vunpack.c.h.b16 %v4747
    %v4822 = vunpack.c.l.b16 %v4748
    %v4823 = vunpack.c.h.b16 %v4748
    %v4824 = vunpack.c.l.b16 %v4749
    %v4825 = vunpack.c.h.b16 %v4749
    %v4826 = vunpack.c.l.b16 %v4750
    %v4827 = vunpack.c.h.b16 %v4750
    %v4828 = vunpack.c.l.b16 %v4751
    %v4829 = vunpack.c.h.b16 %v4751
    %v4830 = vunpack.c.l.b16 %v4752
    %v4831 = vunpack.c.h.b16 %v4752
    %v4832 = vunpack.c.l.b16 %v4753
    %v4833 = vunpack.c.h.b16 %v4753
    %v4834 = vunpack.c.l.b16 %v4754
    %v4835 = vunpack.c.h.b16 %v4754
    %v4836 = vunpack.c.l.b16 %v4755
    %v4837 = vunpack.c.h.b16 %v4755
    %v4838 = vunpack.c.l.b16 %v4756
    %v4839 = vunpack.c.h.b16 %v4756
    %v4840 = vunpack.c.l.b16 %v4757
    %v4841 = vunpack.c.h.b16 %v4757
    %v4842 = vunpack.c.l.b16 %v4758
    %v4843 = vunpack.c.h.b16 %v4758
    %v4844 = vunpack.c.l.b16 %v4759
    %v4845 = vunpack.c.h.b16 %v4759
    %v4846 = vunpack.c.l.b16 %v4760
    %v4847 = vunpack.c.h.b16 %v4760
    %v4848 = vunpack.c.l.b16 %v4761
    %v4849 = vunpack.c.h.b16 %v4761
    %v4850 = vunpack.c.l.b16 %v4762
    %v4851 = vunpack.c.h.b16 %v4762
    %v4852 = vunpack.c.l.b16 %v4763
    %v4853 = vunpack.c.h.b16 %v4763
    %v4854 = vunpack.c.l.b16 %v4764
    %v4855 = vunpack.c.h.b16 %v4764
    %v4856 = vunpack.c.l.b16 %v4765
    %v4857 = vunpack.c.h.b16 %v4765
    %v4858 = vunpack.c.l.b16 %v4766
    %v4859 = vunpack.c.h.b16 %v4766
    %v4860 = vunpack.c.l.b16 %v4767
    %v4861 = vunpack.c.h.b16 %v4767
    %v4862 = vunpack.c.l.b16 %v4768
    %v4863 = vunpack.c.h.b16 %v4768
    %v4864 = vunpack.c.l.b16 %v4769
    %v4865 = vunpack.c.h.b16 %v4769
    %v4866 = vunpack.c.l.b16 %v4770
    %v4867 = vunpack.c.h.b16 %v4770
    %v4868 = vpack.c.b16 %v4808, %v4804
    %v4869 = vpack.c.b16 %v4809, %v4805
    %v4870 = vpack.c.b16 %v4810, %v4806
    %v4871 = vpack.c.b16 %v4811, %v4807
    %v4872 = vpack.c.b16 %v4816, %v4812
    %v4873 = vpack.c.b16 %v4817, %v4813
    %v4874 = vpack.c.b16 %v4818, %v4814
    %v4875 = vpack.c.b16 %v4819, %v4815
    %v4876 = vpack.c.b16 %v4824, %v4820
    %v4877 = vpack.c.b16 %v4825, %v4821
    %v4878 = vpack.c.b16 %v4826, %v4822
    %v4879 = vpack.c.b16 %v4827, %v4823
    %v4880 = vpack.c.b16 %v4832, %v4828
    %v4881 = vpack.c.b16 %v4833, %v4829
    %v4882 = vpack.c.b16 %v4834, %v4830
    %v4883 = vpack.c.b16 %v4835, %v4831
    %v4884 = vpack.c.b16 %v4840, %v4836
    %v4885 = vpack.c.b16 %v4841, %v4837
    %v4886 = vpack.c.b16 %v4842, %v4838
    %v4887 = vpack.c.b16 %v4843, %v4839
    %v4888 = vpack.c.b16 %v4848, %v4844
    %v4889 = vpack.c.b16 %v4849, %v4845
    %v4890 = vpack.c.b16 %v4850, %v4846
    %v4891 = vpack.c.b16 %v4851, %v4847
    %v4892 = vpack.c.b16 %v4856, %v4852
    %v4893 = vpack.c.b16 %v4857, %v4853
    %v4894 = vpack.c.b16 %v4858, %v4854
    %v4895 = vpack.c.b16 %v4859, %v4855
    %v4896 = vpack.c.b16 %v4864, %v4860
    %v4897 = vpack.c.b16 %v4865, %v4861
    %v4898 = vpack.c.b16 %v4866, %v4862
    %v4899 = vpack.c.b16 %v4867, %v4863
    %4932 = vmatprep.subr.bf16.mxu0 0
    %4933 = vmatpush1.bf16.msra.mxu0 %v618
    %4934 = vmatprep.subr.bf16.mxu0 0
    %4935 = vmatpush1.bf16.msra.mxu0 %v619
    %4936 = vmatprep.subr.bf16.mxu0 0
    %4937 = vmatpush1.bf16.msra.mxu0 %v620
    %4938 = vmatprep.subr.bf16.mxu0 0
    %4939 = vmatpush1.bf16.msra.mxu0 %v621
    %4940 = vmatprep.subr.bf16.mxu0 0
    %4941 = vmatpush1.bf16.msra.mxu0 %v622
    %4942 = vmatprep.subr.bf16.mxu0 0
    %4943 = vmatpush1.bf16.msra.mxu0 %v623
    %4944 = vmatprep.subr.bf16.mxu0 0
    %4945 = vmatpush1.bf16.msra.mxu0 %v624
    %4946 = vmatprep.subr.bf16.mxu0 0
    %4947 = vmatpush1.bf16.msra.mxu0 %v625
    %4948 = vmatprep.subr.bf16.mxu0 0
    %4949 = vmatpush1.bf16.msra.mxu0 %v626
    %4950 = vmatprep.subr.bf16.mxu0 0
    %4951 = vmatpush1.bf16.msra.mxu0 %v627
    %4952 = vmatprep.subr.bf16.mxu0 0
    %4953 = vmatpush1.bf16.msra.mxu0 %v628
    %4954 = vmatprep.subr.bf16.mxu0 0
    %4955 = vmatpush1.bf16.msra.mxu0 %v629
    %4956 = vmatprep.subr.bf16.mxu0 0
    %4957 = vmatpush1.bf16.msra.mxu0 %v630
    %4958 = vmatprep.subr.bf16.mxu0 0
    %4959 = vmatpush1.bf16.msra.mxu0 %v631
    %4960 = vmatprep.subr.bf16.mxu0 0
    %4961 = vmatpush1.bf16.msra.mxu0 %v632
    %4962 = vmatprep.subr.bf16.mxu0 0
    %4963 = vmatpush1.bf16.msra.mxu0 %v633
    %4964 = vmatprep.mubr.bf16.mxu0 %v4869
    %4965 = vmatmul.mubr.bf16.gmra.mrb[0].mxu0 %v4868
    %v4966 = vpop.f32.mrb[0].mxu0
    %v4967 = vadd.f32 0.0, %v4966
    %v4968 = vpop.f32.mrb[0].mxu0
    %v4969 = vpop.f32.mrb[0].mxu0
    %v4970 = vadd.f32 0.0, %v4969
    %v4971 = vpop.f32.mrb[0].mxu0
    %4972 = vmatprep.mubr.bf16.mxu0 %v4873
    %4973 = vmatmul.mubr.bf16.gmra.mrb[0].mxu0 %v4872
    %v4974 = vpop.f32.mrb[0].mxu0
    %v4975 = vadd.f32 0.0, %v4974
    %v4976 = vpop.f32.mrb[0].mxu0
    %v4977 = vpop.f32.mrb[0].mxu0
    %v4978 = vadd.f32 0.0, %v4977
    %v4979 = vpop.f32.mrb[0].mxu0
    %4980 = vmatprep.mubr.bf16.mxu0 %v4877
    %4981 = vmatmul.mubr.bf16.gmra.mrb[0].mxu0 %v4876
    %v4982 = vpop.f32.mrb[0].mxu0
    %v4983 = vadd.f32 0.0, %v4982
    %v4984 = vpop.f32.mrb[0].mxu0
    %v4985 = vpop.f32.mrb[0].mxu0
    %v4986 = vadd.f32 0.0, %v4985
    %v4987 = vpop.f32.mrb[0].mxu0
    %4988 = vmatprep.mubr.bf16.mxu0 %v4881
    %4989 = vmatmul.mubr.bf16.gmra.mrb[0].mxu0 %v4880
    %v4990 = vpop.f32.mrb[0].mxu0
    %v4991 = vadd.f32 0.0, %v4990
    %v4992 = vpop.f32.mrb[0].mxu0
    %v4993 = vpop.f32.mrb[0].mxu0
    %v4994 = vadd.f32 0.0, %v4993
    %v4995 = vpop.f32.mrb[0].mxu0
    %4996 = vmatprep.mubr.bf16.mxu0 %v4885
    %4997 = vmatmul.mubr.bf16.gmra.mrb[0].mxu0 %v4884
    %v4998 = vpop.f32.mrb[0].mxu0
    %v4999 = vadd.f32 0.0, %v4998
    %v5000 = vpop.f32.mrb[0].mxu0
    %v5001 = vpop.f32.mrb[0].mxu0
    %v5002 = vadd.f32 0.0, %v5001
    %v5003 = vpop.f32.mrb[0].mxu0
    %5004 = vmatprep.mubr.bf16.mxu0 %v4889
    %5005 = vmatmul.mubr.bf16.gmra.mrb[0].mxu0 %v4888
    %v5006 = vpop.f32.mrb[0].mxu0
    %v5007 = vadd.f32 0.0, %v5006
    %v5008 = vpop.f32.mrb[0].mxu0
    %v5009 = vpop.f32.mrb[0].mxu0
    %v5010 = vadd.f32 0.0, %v5009
    %v5011 = vpop.f32.mrb[0].mxu0
    %5012 = vmatprep.mubr.bf16.mxu0 %v4893
    %5013 = vmatmul.mubr.bf16.gmra.mrb[0].mxu0 %v4892
    %v5014 = vpop.f32.mrb[0].mxu0
    %v5015 = vadd.f32 0.0, %v5014
    %v5016 = vpop.f32.mrb[0].mxu0
    %v5017 = vpop.f32.mrb[0].mxu0
    %v5018 = vadd.f32 0.0, %v5017
    %v5019 = vpop.f32.mrb[0].mxu0
    %5020 = vmatprep.mubr.bf16.mxu0 %v4897
    %5021 = vmatmul.mubr.bf16.gmra.mrb[0].mxu0 %v4896
    %v5022 = vpop.f32.mrb[0].mxu0
    %v5023 = vadd.f32 0.0, %v5022
    %v5024 = vpop.f32.mrb[0].mxu0
    %v5025 = vpop.f32.mrb[0].mxu0
    %v5026 = vadd.f32 0.0, %v5025
    %v5027 = vpop.f32.mrb[0].mxu0
    %5028 = vdwg.mxu0
    %5029 = vmatprep.subr.bf16.mxu0 0
    %5030 = vmatpush1.bf16.msra.mxu0 %v634
    %5031 = vmatprep.subr.bf16.mxu0 0
    %5032 = vmatpush1.bf16.msra.mxu0 %v635
    %5033 = vmatprep.subr.bf16.mxu0 0
    %5034 = vmatpush1.bf16.msra.mxu0 %v636
    %5035 = vmatprep.subr.bf16.mxu0 0
    %5036 = vmatpush1.bf16.msra.mxu0 %v637
    %5037 = vmatprep.subr.bf16.mxu0 0
    %5038 = vmatpush1.bf16.msra.mxu0 %v638
    %5039 = vmatprep.subr.bf16.mxu0 0
    %5040 = vmatpush1.bf16.msra.mxu0 %v639
    %5041 = vmatprep.subr.bf16.mxu0 0
    %5042 = vmatpush1.bf16.msra.mxu0 %v640
    %5043 = vmatprep.subr.bf16.mxu0 0
    %5044 = vmatpush1.bf16.msra.mxu0 %v641
    %5045 = vmatprep.subr.bf16.mxu0 0
    %5046 = vmatpush1.bf16.msra.mxu0 %v642
    %5047 = vmatprep.subr.bf16.mxu0 0
    %5048 = vmatpush1.bf16.msra.mxu0 %v643
    %5049 = vmatprep.subr.bf16.mxu0 0
    %5050 = vmatpush1.bf16.msra.mxu0 %v644
    %5051 = vmatprep.subr.bf16.mxu0 0
    %5052 = vmatpush1.bf16.msra.mxu0 %v645
    %5053 = vmatprep.subr.bf16.mxu0 0
    %5054 = vmatpush1.bf16.msra.mxu0 %v646
    %5055 = vmatprep.subr.bf16.mxu0 0
    %5056 = vmatpush1.bf16.msra.mxu0 %v647
    %5057 = vmatprep.subr.bf16.mxu0 0
    %5058 = vmatpush1.bf16.msra.mxu0 %v648
    %5059 = vmatprep.subr.bf16.mxu0 0
    %5060 = vmatpush1.bf16.msra.mxu0 %v649
    %5061 = vmatprep.mubr.bf16.mxu0 %v4871
    %5062 = vmatmul.mubr.bf16.gmra.mrb[0].mxu0 %v4870
    %v5063 = vpop.f32.mrb[0].mxu0
    %v5064 = vadd.f32 %v4967, %v5063
    %v5065 = vpop.f32.mrb[0].mxu0
    %v5066 = vpop.f32.mrb[0].mxu0
    %v5067 = vadd.f32 %v4970, %v5066
    %v5068 = vpop.f32.mrb[0].mxu0
    %5069 = vmatprep.mubr.bf16.mxu0 %v4875
    %5070 = vmatmul.mubr.bf16.gmra.mrb[0].mxu0 %v4874
    %v5071 = vpop.f32.mrb[0].mxu0
    %v5072 = vadd.f32 %v4975, %v5071
    %v5073 = vpop.f32.mrb[0].mxu0
    %v5074 = vpop.f32.mrb[0].mxu0
    %v5075 = vadd.f32 %v4978, %v5074
    %v5076 = vpop.f32.mrb[0].mxu0
    %5077 = vmatprep.mubr.bf16.mxu0 %v4879
    %5078 = vmatmul.mubr.bf16.gmra.mrb[0].mxu0 %v4878
    %v5079 = vpop.f32.mrb[0].mxu0
    %v5080 = vadd.f32 %v4983, %v5079
    %v5081 = vpop.f32.mrb[0].mxu0
    %v5082 = vpop.f32.mrb[0].mxu0
    %v5083 = vadd.f32 %v4986, %v5082
    %v5084 = vpop.f32.mrb[0].mxu0
    %5085 = vmatprep.mubr.bf16.mxu0 %v4883
    %5086 = vmatmul.mubr.bf16.gmra.mrb[0].mxu0 %v4882
    %v5087 = vpop.f32.mrb[0].mxu0
    %v5088 = vadd.f32 %v4991, %v5087
    %v5089 = vpop.f32.mrb[0].mxu0
    %v5090 = vpop.f32.mrb[0].mxu0
    %v5091 = vadd.f32 %v4994, %v5090
    %v5092 = vpop.f32.mrb[0].mxu0
    %5093 = vmatprep.mubr.bf16.mxu0 %v4887
    %5094 = vmatmul.mubr.bf16.gmra.mrb[0].mxu0 %v4886
    %v5095 = vpop.f32.mrb[0].mxu0
    %v5096 = vadd.f32 %v4999, %v5095
    %v5097 = vpop.f32.mrb[0].mxu0
    %v5098 = vpop.f32.mrb[0].mxu0
    %v5099 = vadd.f32 %v5002, %v5098
    %v5100 = vpop.f32.mrb[0].mxu0
    %5101 = vmatprep.mubr.bf16.mxu0 %v4891
    %5102 = vmatmul.mubr.bf16.gmra.mrb[0].mxu0 %v4890
    %v5103 = vpop.f32.mrb[0].mxu0
    %v5104 = vadd.f32 %v5007, %v5103
    %v5105 = vpop.f32.mrb[0].mxu0
    %v5106 = vpop.f32.mrb[0].mxu0
    %v5107 = vadd.f32 %v5010, %v5106
    %v5108 = vpop.f32.mrb[0].mxu0
    %5109 = vmatprep.mubr.bf16.mxu0 %v4895
    %5110 = vmatmul.mubr.bf16.gmra.mrb[0].mxu0 %v4894
    %v5111 = vpop.f32.mrb[0].mxu0
    %v5112 = vadd.f32 %v5015, %v5111
    %v5113 = vpop.f32.mrb[0].mxu0
    %v5114 = vpop.f32.mrb[0].mxu0
    %v5115 = vadd.f32 %v5018, %v5114
    %v5116 = vpop.f32.mrb[0].mxu0
    %5117 = vmatprep.mubr.bf16.mxu0 %v4899
    %5118 = vmatmul.mubr.bf16.gmra.mrb[0].mxu0 %v4898
    %v5119 = vpop.f32.mrb[0].mxu0
    %v5120 = vadd.f32 %v5023, %v5119
    %v5121 = vpop.f32.mrb[0].mxu0
    %v5122 = vpop.f32.mrb[0].mxu0
    %v5123 = vadd.f32 %v5026, %v5122
    %v5124 = vpop.f32.mrb[0].mxu0
    %5125 = vdwg.mxu0
    %v5126 = vpack.c.bf16 %v5067, %v5064
    %v5127 = vpack.c.bf16 %v5075, %v5072
    %v5128 = vpack.c.bf16 %v5083, %v5080
    %v5129 = vpack.c.bf16 %v5091, %v5088
    %v5130 = vpack.c.bf16 %v5099, %v5096
    %v5131 = vpack.c.bf16 %v5107, %v5104
    %v5132 = vpack.c.bf16 %v5115, %v5112
    %v5133 = vpack.c.bf16 %v5123, %v5120
    %v5135 = vsel %vm1279, %v5126, 0
    %v5138 = vsel %vm1279, %v5127, 0
    %v5141 = vsel %vm1279, %v5128, 0
    %v5144 = vsel %vm1279, %v5129, 0
    %v5147 = vsel %vm1279, %v5130, 0
    %v5150 = vsel %vm1279, %v5131, 0
    %v5153 = vsel %vm1279, %v5132, 0
    %v5156 = vsel %vm1279, %v5133, 0
    %v5159 = vsel %vm1304, %v4771, 0
    %5161 = vmatprep.subr.bf16.mxu0 0
    %5162 = vmatpush1.bf16.msra.mxu0 %v5159
    %5163 = vmatprep.subr.bf16.mxu0 0
    %5164 = vmatpush1.bf16.msra.mxu0 0
    %5165 = vmatprep.subr.bf16.mxu0 0
    %5166 = vmatpush1.bf16.msra.mxu0 0
    %5167 = vmatprep.subr.bf16.mxu0 0
    %5168 = vmatpush1.bf16.msra.mxu0 0
    %5169 = vmatprep.subr.bf16.mxu0 0
    %5170 = vmatpush1.bf16.msra.mxu0 0
    %5171 = vmatprep.subr.bf16.mxu0 0
    %5172 = vmatpush1.bf16.msra.mxu0 0
    %5173 = vmatprep.subr.bf16.mxu0 0
    %5174 = vmatpush1.bf16.msra.mxu0 0
    %5175 = vmatprep.subr.bf16.mxu0 0
    %5176 = vmatpush1.bf16.msra.mxu0 0
    %5177 = vmatprep.subr.bf16.mxu0 0
    %5178 = vmatpush1.bf16.msra.mxu0 0
    %5179 = vmatprep.subr.bf16.mxu0 0
    %5180 = vmatpush1.bf16.msra.mxu0 0
    %5181 = vmatprep.subr.bf16.mxu0 0
    %5182 = vmatpush1.bf16.msra.mxu0 0
    %5183 = vmatprep.subr.bf16.mxu0 0
    %5184 = vmatpush1.bf16.msra.mxu0 0
    %5185 = vmatprep.subr.bf16.mxu0 0
    %5186 = vmatpush1.bf16.msra.mxu0 0
    %5187 = vmatprep.subr.bf16.mxu0 0
    %5188 = vmatpush1.bf16.msra.mxu0 0
    %5189 = vmatprep.subr.bf16.mxu0 0
    %5190 = vmatpush1.bf16.msra.mxu0 0
    %5191 = vmatprep.subr.bf16.mxu0 0
    %5192 = vmatpush1.bf16.msra.mxu0 0
    %5193 = vmatprep.mubr.bf16.mxu0 0
    %5194 = vmatmul.mubr.bf16.gmra.mrb[0].mxu0 %v5135
    %v5195 = vpop.f32.mrb[0].mxu0
    %v5196 = vadd.f32 0.0, %v5195
    %v5197 = vpop.f32.mrb[0].mxu0
    %v5198 = vpop.f32.mrb[0].mxu0
    %v5199 = vadd.f32 0.0, %v5198
    %v5200 = vpop.f32.mrb[0].mxu0
    %5201 = vmatprep.mubr.bf16.mxu0 0
    %5202 = vmatmul.mubr.bf16.gmra.mrb[0].mxu0 %v5138
    %v5203 = vpop.f32.mrb[0].mxu0
    %v5204 = vadd.f32 0.0, %v5203
    %v5205 = vpop.f32.mrb[0].mxu0
    %v5206 = vpop.f32.mrb[0].mxu0
    %v5207 = vadd.f32 0.0, %v5206
    %v5208 = vpop.f32.mrb[0].mxu0
    %5209 = vmatprep.mubr.bf16.mxu0 0
    %5210 = vmatmul.mubr.bf16.gmra.mrb[0].mxu0 %v5141
    %v5211 = vpop.f32.mrb[0].mxu0
    %v5212 = vadd.f32 0.0, %v5211
    %v5213 = vpop.f32.mrb[0].mxu0
    %v5214 = vpop.f32.mrb[0].mxu0
    %v5215 = vadd.f32 0.0, %v5214
    %v5216 = vpop.f32.mrb[0].mxu0
    %5217 = vmatprep.mubr.bf16.mxu0 0
    %5218 = vmatmul.mubr.bf16.gmra.mrb[0].mxu0 %v5144
    %v5219 = vpop.f32.mrb[0].mxu0
    %v5220 = vadd.f32 0.0, %v5219
    %v5221 = vpop.f32.mrb[0].mxu0
    %v5222 = vpop.f32.mrb[0].mxu0
    %v5223 = vadd.f32 0.0, %v5222
    %v5224 = vpop.f32.mrb[0].mxu0
    %5225 = vmatprep.mubr.bf16.mxu0 0
    %5226 = vmatmul.mubr.bf16.gmra.mrb[0].mxu0 %v5147
    %v5227 = vpop.f32.mrb[0].mxu0
    %v5228 = vadd.f32 0.0, %v5227
    %v5229 = vpop.f32.mrb[0].mxu0
    %v5230 = vpop.f32.mrb[0].mxu0
    %v5231 = vadd.f32 0.0, %v5230
    %v5232 = vpop.f32.mrb[0].mxu0
    %5233 = vmatprep.mubr.bf16.mxu0 0
    %5234 = vmatmul.mubr.bf16.gmra.mrb[0].mxu0 %v5150
    %v5235 = vpop.f32.mrb[0].mxu0
    %v5236 = vadd.f32 0.0, %v5235
    %v5237 = vpop.f32.mrb[0].mxu0
    %v5238 = vpop.f32.mrb[0].mxu0
    %v5239 = vadd.f32 0.0, %v5238
    %v5240 = vpop.f32.mrb[0].mxu0
    %5241 = vmatprep.mubr.bf16.mxu0 0
    %5242 = vmatmul.mubr.bf16.gmra.mrb[0].mxu0 %v5153
    %v5243 = vpop.f32.mrb[0].mxu0
    %v5244 = vadd.f32 0.0, %v5243
    %v5245 = vpop.f32.mrb[0].mxu0
    %v5246 = vpop.f32.mrb[0].mxu0
    %v5247 = vadd.f32 0.0, %v5246
    %v5248 = vpop.f32.mrb[0].mxu0
    %5249 = vmatprep.mubr.bf16.mxu0 0
    %5250 = vmatmul.mubr.bf16.gmra.mrb[0].mxu0 %v5156
    %v5251 = vpop.f32.mrb[0].mxu0
    %v5252 = vadd.f32 0.0, %v5251
    %v5253 = vpop.f32.mrb[0].mxu0
    %v5254 = vpop.f32.mrb[0].mxu0
    %v5255 = vadd.f32 0.0, %v5254
    %v5256 = vpop.f32.mrb[0].mxu0
    %5257 = vdwg.mxu0
    %v5258 = vadd.f32 %v4723, %v5196
    %v5259 = vadd.f32 %v4724, %v5199
    %v5260 = vadd.f32 %v4725, %v5204
    %v5261 = vadd.f32 %v4726, %v5207
    %v5262 = vadd.f32 %v4727, %v5212
    %v5263 = vadd.f32 %v4728, %v5215
    %v5264 = vadd.f32 %v4729, %v5220
    %v5265 = vadd.f32 %v4730, %v5223
    %v5266 = vadd.f32 %v4731, %v5228
    %v5267 = vadd.f32 %v4732, %v5231
    %v5268 = vadd.f32 %v4733, %v5236
    %v5269 = vadd.f32 %v4734, %v5239
    %v5270 = vadd.f32 %v4735, %v5244
    %v5271 = vadd.f32 %v4736, %v5247
    %v5272 = vadd.f32 %v4737, %v5252
    %v5273 = vadd.f32 %v4738, %v5255
    %vm5274 = vcmask 261120
    %v5275 = vsel %vm5274, %v5258, 0.0
    %v5276 = vsel %vm5274, %v5259, 0.0
    %v5277 = vadd.f32 %v5275, %v5276
    %v5278 = vsel %vm5274, %v5260, 0.0
    %v5279 = vadd.f32 %v5277, %v5278
    %v5280 = vsel %vm5274, %v5261, 0.0
    %v5281 = vadd.f32 %v5279, %v5280
    %v5282 = vsel %vm5274, %v5262, 0.0
    %v5283 = vadd.f32 %v5281, %v5282
    %v5284 = vsel %vm5274, %v5263, 0.0
    %v5285 = vadd.f32 %v5283, %v5284
    %v5286 = vsel %vm5274, %v5264, 0.0
    %v5287 = vadd.f32 %v5285, %v5286
    %v5288 = vsel %vm5274, %v5265, 0.0
    %v5289 = vadd.f32 %v5287, %v5288
    %v5290 = vsel %vm5274, %v5266, 0.0
    %v5291 = vadd.f32 %v5289, %v5290
    %v5292 = vsel %vm5274, %v5267, 0.0
    %v5293 = vadd.f32 %v5291, %v5292
    %v5294 = vsel %vm5274, %v5268, 0.0
    %v5295 = vadd.f32 %v5293, %v5294
    %v5296 = vsel %vm5274, %v5269, 0.0
    %v5297 = vadd.f32 %v5295, %v5296
    %v5298 = vsel %vm5274, %v5270, 0.0
    %v5299 = vadd.f32 %v5297, %v5298
    %v5300 = vsel %vm5274, %v5271, 0.0
    %v5301 = vadd.f32 %v5299, %v5300
    %v5302 = vsel %vm5274, %v5272, 0.0
    %v5303 = vadd.f32 %v5301, %v5302
    %v5304 = vsel %vm5274, %v5273, 0.0
    %v5305 = vadd.f32 %v5303, %v5304
    %v5306 = vrot.slane %v5305, 4
    %v5307 = vadd.f32 %v5305, %v5306
    %v5308 = vrot.slane %v5307, 2
    %v5309 = vadd.f32 %v5307, %v5308
    %v5310 = vrot.slane %v5309, 1
    %v5311 = vadd.f32 %v5309, %v5310
    %v5312 = vmul.f32 %v5311, 0.0078125
    %v5313 = vsub.f32 %v5258, %v5312
    %v5314 = vsub.f32 %v5259, %v5312
    %v5315 = vsub.f32 %v5260, %v5312
    %v5316 = vsub.f32 %v5261, %v5312
    %v5317 = vsub.f32 %v5262, %v5312
    %v5318 = vsub.f32 %v5263, %v5312
    %v5319 = vsub.f32 %v5264, %v5312
    %v5320 = vsub.f32 %v5265, %v5312
    %v5321 = vsub.f32 %v5266, %v5312
    %v5322 = vsub.f32 %v5267, %v5312
    %v5323 = vsub.f32 %v5268, %v5312
    %v5324 = vsub.f32 %v5269, %v5312
    %v5325 = vsub.f32 %v5270, %v5312
    %v5326 = vsub.f32 %v5271, %v5312
    %v5327 = vsub.f32 %v5272, %v5312
    %v5328 = vsub.f32 %v5273, %v5312
    %v5329 = vmul.f32 %v5313, %v5313
    %v5330 = vmul.f32 %v5314, %v5314
    %v5331 = vmul.f32 %v5315, %v5315
    %v5332 = vmul.f32 %v5316, %v5316
    %v5333 = vmul.f32 %v5317, %v5317
    %v5334 = vmul.f32 %v5318, %v5318
    %v5335 = vmul.f32 %v5319, %v5319
    %v5336 = vmul.f32 %v5320, %v5320
    %v5337 = vmul.f32 %v5321, %v5321
    %v5338 = vmul.f32 %v5322, %v5322
    %v5339 = vmul.f32 %v5323, %v5323
    %v5340 = vmul.f32 %v5324, %v5324
    %v5341 = vmul.f32 %v5325, %v5325
    %v5342 = vmul.f32 %v5326, %v5326
    %v5343 = vmul.f32 %v5327, %v5327
    %v5344 = vmul.f32 %v5328, %v5328
    %v5345 = vsel %vm5274, %v5329, 0.0
    %v5346 = vsel %vm5274, %v5330, 0.0
    %v5347 = vadd.f32 %v5345, %v5346
    %v5348 = vsel %vm5274, %v5331, 0.0
    %v5349 = vadd.f32 %v5347, %v5348
    %v5350 = vsel %vm5274, %v5332, 0.0
    %v5351 = vadd.f32 %v5349, %v5350
    %v5352 = vsel %vm5274, %v5333, 0.0
    %v5353 = vadd.f32 %v5351, %v5352
    %v5354 = vsel %vm5274, %v5334, 0.0
    %v5355 = vadd.f32 %v5353, %v5354
    %v5356 = vsel %vm5274, %v5335, 0.0
    %v5357 = vadd.f32 %v5355, %v5356
    %v5358 = vsel %vm5274, %v5336, 0.0
    %v5359 = vadd.f32 %v5357, %v5358
    %v5360 = vsel %vm5274, %v5337, 0.0
    %v5361 = vadd.f32 %v5359, %v5360
    %v5362 = vsel %vm5274, %v5338, 0.0
    %v5363 = vadd.f32 %v5361, %v5362
    %v5364 = vsel %vm5274, %v5339, 0.0
    %v5365 = vadd.f32 %v5363, %v5364
    %v5366 = vsel %vm5274, %v5340, 0.0
    %v5367 = vadd.f32 %v5365, %v5366
    %v5368 = vsel %vm5274, %v5341, 0.0
    %v5369 = vadd.f32 %v5367, %v5368
    %v5370 = vsel %vm5274, %v5342, 0.0
    %v5371 = vadd.f32 %v5369, %v5370
    %v5372 = vsel %vm5274, %v5343, 0.0
    %v5373 = vadd.f32 %v5371, %v5372
    %v5374 = vsel %vm5274, %v5344, 0.0
    %v5375 = vadd.f32 %v5373, %v5374
    %v5376 = vrot.slane %v5375, 4
    %v5377 = vadd.f32 %v5375, %v5376
    %v5378 = vrot.slane %v5377, 2
    %v5379 = vadd.f32 %v5377, %v5378
    %v5380 = vrot.slane %v5379, 1
    %v5381 = vadd.f32 %v5379, %v5380
    %v5382 = vmul.f32 %v5381, 0.0078125
    %v5383 = vadd.f32 %v5382, 1e-05
    %v5384 = vrsqrt.pop %v5383
    %v5385 = vmul.f32 %v5313, %v5384
    %v5386 = vmul.f32 %v5314, %v5384
    %v5387 = vmul.f32 %v5315, %v5384
    %v5388 = vmul.f32 %v5316, %v5384
    %v5389 = vmul.f32 %v5317, %v5384
    %v5390 = vmul.f32 %v5318, %v5384
    %v5391 = vmul.f32 %v5319, %v5384
    %v5392 = vmul.f32 %v5320, %v5384
    %v5393 = vmul.f32 %v5321, %v5384
    %v5394 = vmul.f32 %v5322, %v5384
    %v5395 = vmul.f32 %v5323, %v5384
    %v5396 = vmul.f32 %v5324, %v5384
    %v5397 = vmul.f32 %v5325, %v5384
    %v5398 = vmul.f32 %v5326, %v5384
    %v5399 = vmul.f32 %v5327, %v5384
    %v5400 = vmul.f32 %v5328, %v5384
    %v5401 = vld [vmem:[#allocation5] sm:$0x1]
    %v5403 = vlaneseq
    %v5404 = vshrl.u32 %v5403, 7
    %v5405 = vsub.s32 0, %v5404
    %v5406 = vrot.slane %v5401, %v5405
    %v5408 = vmul.f32 %v5385, %v5406
    %v5409 = vmul.f32 %v5386, %v5406
    %v5410 = vmul.f32 %v5387, %v5406
    %v5411 = vmul.f32 %v5388, %v5406
    %v5412 = vmul.f32 %v5389, %v5406
    %v5413 = vmul.f32 %v5390, %v5406
    %v5414 = vmul.f32 %v5391, %v5406
    %v5415 = vmul.f32 %v5392, %v5406
    %v5416 = vmul.f32 %v5393, %v5406
    %v5417 = vmul.f32 %v5394, %v5406
    %v5418 = vmul.f32 %v5395, %v5406
    %v5419 = vmul.f32 %v5396, %v5406
    %v5420 = vmul.f32 %v5397, %v5406
    %v5421 = vmul.f32 %v5398, %v5406
    %v5422 = vmul.f32 %v5399, %v5406
    %v5423 = vmul.f32 %v5400, %v5406
    %v5424 = vld [vmem:[#allocation7] sm:$0x1]
    %v5426 = vlaneseq
    %v5427 = vshrl.u32 %v5426, 7
    %v5428 = vsub.s32 0, %v5427
    %v5429 = vrot.slane %v5424, %v5428
    %v5431 = vadd.f32 %v5408, %v5429
    %v5432 = vadd.f32 %v5409, %v5429
    %v5433 = vadd.f32 %v5410, %v5429
    %v5434 = vadd.f32 %v5411, %v5429
    %v5435 = vadd.f32 %v5412, %v5429
    %v5436 = vadd.f32 %v5413, %v5429
    %v5437 = vadd.f32 %v5414, %v5429
    %v5438 = vadd.f32 %v5415, %v5429
    %v5439 = vadd.f32 %v5416, %v5429
    %v5440 = vadd.f32 %v5417, %v5429
    %v5441 = vadd.f32 %v5418, %v5429
    %v5442 = vadd.f32 %v5419, %v5429
    %v5443 = vadd.f32 %v5420, %v5429
    %v5444 = vadd.f32 %v5421, %v5429
    %v5445 = vadd.f32 %v5422, %v5429
    %v5446 = vadd.f32 %v5423, %v5429
    %v5447 = vmax.f32 %v5431, 0.0
    %v5448 = vmax.f32 %v5432, 0.0
    %v5449 = vmax.f32 %v5433, 0.0
    %v5450 = vmax.f32 %v5434, 0.0
    %v5451 = vmax.f32 %v5435, 0.0
    %v5452 = vmax.f32 %v5436, 0.0
    %v5453 = vmax.f32 %v5437, 0.0
    %v5454 = vmax.f32 %v5438, 0.0
    %v5455 = vmax.f32 %v5439, 0.0
    %v5456 = vmax.f32 %v5440, 0.0
    %v5457 = vmax.f32 %v5441, 0.0
    %v5458 = vmax.f32 %v5442, 0.0
    %v5459 = vmax.f32 %v5443, 0.0
    %v5460 = vmax.f32 %v5444, 0.0
    %v5461 = vmax.f32 %v5445, 0.0
    %v5462 = vmax.f32 %v5446, 0.0
    %v5463 = vpack.c.bf16 %v5448, %v5447
    %v5464 = vpack.c.bf16 %v5450, %v5449
    %v5465 = vpack.c.bf16 %v5452, %v5451
    %v5466 = vpack.c.bf16 %v5454, %v5453
    %v5467 = vpack.c.bf16 %v5456, %v5455
    %v5468 = vpack.c.bf16 %v5458, %v5457
    %v5469 = vpack.c.bf16 %v5460, %v5459
    %v5470 = vpack.c.bf16 %v5462, %v5461
    %v5471 = vld [vmem:[#allocation8] sm:$0xf]
    %v5472 = vld [vmem:[#allocation8 + $0x4] sm:$0xf]
    %v5473 = vld [vmem:[#allocation8 + $0x8] sm:$0xf]
    %v5474 = vld [vmem:[#allocation8 + $0xc] sm:$0xf]
    %v5475 = vld [vmem:[%s6] sm:$0xf]
    %v5476 = vld [vmem:[%s6 + $0x4] sm:$0xf]
    %v5477 = vld [vmem:[%s6 + $0x8] sm:$0xf]
    %v5478 = vld [vmem:[%s6 + $0xc] sm:$0xf]
    %v5483 = vunpack.c.l.b16 %v5471
    %v5484 = vunpack.c.l.b16 %v5472
    %v5485 = vunpack.c.l.b16 %v5473
    %v5486 = vunpack.c.l.b16 %v5474
    %v5487 = vpack.c.b16 %v5484, %v5483
    %v5488 = vpack.c.b16 %v5486, %v5485
    %5491 = vmatprep.subr.bf16.mxu0 0
    %5492 = vmatpush1.bf16.msra.mxu0 %v5463
    %5493 = vmatprep.subr.bf16.mxu0 0
    %5494 = vmatpush1.bf16.msra.mxu0 %v5464
    %5495 = vmatprep.subr.bf16.mxu0 0
    %5496 = vmatpush1.bf16.msra.mxu0 %v5465
    %5497 = vmatprep.subr.bf16.mxu0 0
    %5498 = vmatpush1.bf16.msra.mxu0 %v5466
    %5499 = vmatprep.subr.bf16.mxu0 0
    %5500 = vmatpush1.bf16.msra.mxu0 %v5467
    %5501 = vmatprep.subr.bf16.mxu0 0
    %5502 = vmatpush1.bf16.msra.mxu0 %v5468
    %5503 = vmatprep.subr.bf16.mxu0 0
    %5504 = vmatpush1.bf16.msra.mxu0 %v5469
    %5505 = vmatprep.subr.bf16.mxu0 0
    %5506 = vmatpush1.bf16.msra.mxu0 %v5470
    %5507 = vmatprep.subr.bf16.mxu0 0
    %5508 = vmatpush1.bf16.msra.mxu0 0
    %5509 = vmatprep.subr.bf16.mxu0 0
    %5510 = vmatpush1.bf16.msra.mxu0 0
    %5511 = vmatprep.subr.bf16.mxu0 0
    %5512 = vmatpush1.bf16.msra.mxu0 0
    %5513 = vmatprep.subr.bf16.mxu0 0
    %5514 = vmatpush1.bf16.msra.mxu0 0
    %5515 = vmatprep.subr.bf16.mxu0 0
    %5516 = vmatpush1.bf16.msra.mxu0 0
    %5517 = vmatprep.subr.bf16.mxu0 0
    %5518 = vmatpush1.bf16.msra.mxu0 0
    %5519 = vmatprep.subr.bf16.mxu0 0
    %5520 = vmatpush1.bf16.msra.mxu0 0
    %5521 = vmatprep.subr.bf16.mxu0 0
    %5522 = vmatpush1.bf16.msra.mxu0 0
    %5523 = vmatprep.mubr.bf16.mxu0 0
    %5524 = vmatmul.mubr.bf16.gmra.mrb[0].mxu0 %v5487
    %v5525 = vpop.f32.mrb[0].mxu0
    %v5526 = vadd.f32 0.0, %v5525
    %v5527 = vpop.f32.mrb[0].mxu0
    %v5528 = vpop.f32.mrb[0].mxu0
    %v5529 = vadd.f32 0.0, %v5528
    %v5530 = vpop.f32.mrb[0].mxu0
    %5531 = vmatprep.mubr.bf16.mxu0 0
    %5532 = vmatmul.mubr.bf16.gmra.mrb[0].mxu0 %v5488
    %v5533 = vpop.f32.mrb[0].mxu0
    %v5534 = vadd.f32 0.0, %v5533
    %v5535 = vpop.f32.mrb[0].mxu0
    %v5536 = vpop.f32.mrb[0].mxu0
    %v5537 = vadd.f32 0.0, %v5536
    %v5538 = vpop.f32.mrb[0].mxu0
    %5539 = vdwg.mxu0
    %v5540 = vpack.c.bf16 %v5529, %v5526
    %v5541 = vpack.c.bf16 %v5537, %v5534
    %v5542 = vld [vmem:[#allocation8 + $0x10] sm:$0xf]
    %v5543 = vld [vmem:[#allocation8 + $0x14] sm:$0xf]
    %v5544 = vld [vmem:[#allocation8 + $0x18] sm:$0xf]
    %v5545 = vld [vmem:[#allocation8 + $0x1c] sm:$0xf]
    %v5546 = vld [vmem:[%s6 + $0x10] sm:$0xf]
    %v5547 = vld [vmem:[%s6 + $0x14] sm:$0xf]
    %v5548 = vld [vmem:[%s6 + $0x18] sm:$0xf]
    %v5549 = vld [vmem:[%s6 + $0x1c] sm:$0xf]
    %v5554 = vunpack.c.l.b16 %v5542
    %v5555 = vunpack.c.l.b16 %v5543
    %v5556 = vunpack.c.l.b16 %v5544
    %v5557 = vunpack.c.l.b16 %v5545
    %v5558 = vpack.c.b16 %v5555, %v5554
    %v5559 = vpack.c.b16 %v5557, %v5556
    %5562 = vmatprep.subr.bf16.mxu0 0
    %5563 = vmatpush1.bf16.msra.mxu0 %v5463
    %5564 = vmatprep.subr.bf16.mxu0 0
    %5565 = vmatpush1.bf16.msra.mxu0 %v5464
    %5566 = vmatprep.subr.bf16.mxu0 0
    %5567 = vmatpush1.bf16.msra.mxu0 %v5465
    %5568 = vmatprep.subr.bf16.mxu0 0
    %5569 = vmatpush1.bf16.msra.mxu0 %v5466
    %5570 = vmatprep.subr.bf16.mxu0 0
    %5571 = vmatpush1.bf16.msra.mxu0 %v5467
    %5572 = vmatprep.subr.bf16.mxu0 0
    %5573 = vmatpush1.bf16.msra.mxu0 %v5468
    %5574 = vmatprep.subr.bf16.mxu0 0
    %5575 = vmatpush1.bf16.msra.mxu0 %v5469
    %5576 = vmatprep.subr.bf16.mxu0 0
    %5577 = vmatpush1.bf16.msra.mxu0 %v5470
    %5578 = vmatprep.subr.bf16.mxu0 0
    %5579 = vmatpush1.bf16.msra.mxu0 0
    %5580 = vmatprep.subr.bf16.mxu0 0
    %5581 = vmatpush1.bf16.msra.mxu0 0
    %5582 = vmatprep.subr.bf16.mxu0 0
    %5583 = vmatpush1.bf16.msra.mxu0 0
    %5584 = vmatprep.subr.bf16.mxu0 0
    %5585 = vmatpush1.bf16.msra.mxu0 0
    %5586 = vmatprep.subr.bf16.mxu0 0
    %5587 = vmatpush1.bf16.msra.mxu0 0
    %5588 = vmatprep.subr.bf16.mxu0 0
    %5589 = vmatpush1.bf16.msra.mxu0 0
    %5590 = vmatprep.subr.bf16.mxu0 0
    %5591 = vmatpush1.bf16.msra.mxu0 0
    %5592 = vmatprep.subr.bf16.mxu0 0
    %5593 = vmatpush1.bf16.msra.mxu0 0
    %5594 = vmatprep.mubr.bf16.mxu0 0
    %5595 = vmatmul.mubr.bf16.gmra.mrb[0].mxu0 %v5558
    %v5596 = vpop.f32.mrb[0].mxu0
    %v5597 = vadd.f32 0.0, %v5596
    %v5598 = vpop.f32.mrb[0].mxu0
    %v5599 = vpop.f32.mrb[0].mxu0
    %v5600 = vadd.f32 0.0, %v5599
    %v5601 = vpop.f32.mrb[0].mxu0
    %5602 = vmatprep.mubr.bf16.mxu0 0
    %5603 = vmatmul.mubr.bf16.gmra.mrb[0].mxu0 %v5559
    %v5604 = vpop.f32.mrb[0].mxu0
    %v5605 = vadd.f32 0.0, %v5604
    %v5606 = vpop.f32.mrb[0].mxu0
    %v5607 = vpop.f32.mrb[0].mxu0
    %v5608 = vadd.f32 0.0, %v5607
    %v5609 = vpop.f32.mrb[0].mxu0
    %5610 = vdwg.mxu0
    %v5611 = vpack.c.bf16 %v5600, %v5597
    %v5612 = vpack.c.bf16 %v5608, %v5605
    %v5617 = vunpack.c.l.b16 %v5546
    %v5618 = vunpack.c.l.b16 %v5547
    %v5619 = vunpack.c.l.b16 %v5548
    %v5620 = vunpack.c.l.b16 %v5549
    %v5621 = vpack.c.b16 %v5618, %v5617
    %v5622 = vpack.c.b16 %v5620, %v5619
    %v5626 = vsel %vm5274, %v5611, 0
    %v5629 = vsel %vm5274, %v5612, 0
    %5631 = vmatprep.subr.bf16.mxu0 0
    %5632 = vmatpush1.bf16.msra.mxu0 %v5621
    %5633 = vmatprep.subr.bf16.mxu0 0
    %5634 = vmatpush1.bf16.msra.mxu0 %v5622
    %5635 = vmatprep.subr.bf16.mxu0 0
    %5636 = vmatpush1.bf16.msra.mxu0 0
    %5637 = vmatprep.subr.bf16.mxu0 0
    %5638 = vmatpush1.bf16.msra.mxu0 0
    %5639 = vmatprep.subr.bf16.mxu0 0
    %5640 = vmatpush1.bf16.msra.mxu0 0
    %5641 = vmatprep.subr.bf16.mxu0 0
    %5642 = vmatpush1.bf16.msra.mxu0 0
    %5643 = vmatprep.subr.bf16.mxu0 0
    %5644 = vmatpush1.bf16.msra.mxu0 0
    %5645 = vmatprep.subr.bf16.mxu0 0
    %5646 = vmatpush1.bf16.msra.mxu0 0
    %5647 = vmatprep.subr.bf16.mxu0 0
    %5648 = vmatpush1.bf16.msra.mxu0 0
    %5649 = vmatprep.subr.bf16.mxu0 0
    %5650 = vmatpush1.bf16.msra.mxu0 0
    %5651 = vmatprep.subr.bf16.mxu0 0
    %5652 = vmatpush1.bf16.msra.mxu0 0
    %5653 = vmatprep.subr.bf16.mxu0 0
    %5654 = vmatpush1.bf16.msra.mxu0 0
    %5655 = vmatprep.subr.bf16.mxu0 0
    %5656 = vmatpush1.bf16.msra.mxu0 0
    %5657 = vmatprep.subr.bf16.mxu0 0
    %5658 = vmatpush1.bf16.msra.mxu0 0
    %5659 = vmatprep.subr.bf16.mxu0 0
    %5660 = vmatpush1.bf16.msra.mxu0 0
    %5661 = vmatprep.subr.bf16.mxu0 0
    %5662 = vmatpush1.bf16.msra.mxu0 0
    %5663 = vmatprep.mubr.bf16.mxu0 0
    %5664 = vmatmul.mubr.bf16.gmra.mrb[0].mxu0 %v5626
    %v5665 = vpop.f32.mrb[0].mxu0
    %v5666 = vadd.f32 0.0, %v5665
    %v5667 = vpop.f32.mrb[0].mxu0
    %v5668 = vpop.f32.mrb[0].mxu0
    %v5669 = vadd.f32 0.0, %v5668
    %v5670 = vpop.f32.mrb[0].mxu0
    %5671 = vmatprep.mubr.bf16.mxu0 0
    %5672 = vmatmul.mubr.bf16.gmra.mrb[0].mxu0 %v5629
    %v5673 = vpop.f32.mrb[0].mxu0
    %v5674 = vadd.f32 0.0, %v5673
    %v5675 = vpop.f32.mrb[0].mxu0
    %v5676 = vpop.f32.mrb[0].mxu0
    %v5677 = vadd.f32 0.0, %v5676
    %v5678 = vpop.f32.mrb[0].mxu0
    %5679 = vdwg.mxu0
    %v5684 = vunpack.c.l.b16 %v5475
    %v5685 = vunpack.c.l.b16 %v5476
    %v5686 = vunpack.c.l.b16 %v5477
    %v5687 = vunpack.c.l.b16 %v5478
    %v5688 = vpack.c.b16 %v5685, %v5684
    %v5689 = vpack.c.b16 %v5687, %v5686
    %v5693 = vsel %vm5274, %v5540, 0
    %v5696 = vsel %vm5274, %v5541, 0
    %5698 = vmatprep.subr.bf16.mxu0 0
    %5699 = vmatpush1.bf16.msra.mxu0 %v5688
    %5700 = vmatprep.subr.bf16.mxu0 0
    %5701 = vmatpush1.bf16.msra.mxu0 %v5689
    %5702 = vmatprep.subr.bf16.mxu0 0
    %5703 = vmatpush1.bf16.msra.mxu0 0
    %5704 = vmatprep.subr.bf16.mxu0 0
    %5705 = vmatpush1.bf16.msra.mxu0 0
    %5706 = vmatprep.subr.bf16.mxu0 0
    %5707 = vmatpush1.bf16.msra.mxu0 0
    %5708 = vmatprep.subr.bf16.mxu0 0
    %5709 = vmatpush1.bf16.msra.mxu0 0
    %5710 = vmatprep.subr.bf16.mxu0 0
    %5711 = vmatpush1.bf16.msra.mxu0 0
    %5712 = vmatprep.subr.bf16.mxu0 0
    %5713 = vmatpush1.bf16.msra.mxu0 0
    %5714 = vmatprep.subr.bf16.mxu0 0
    %5715 = vmatpush1.bf16.msra.mxu0 0
    %5716 = vmatprep.subr.bf16.mxu0 0
    %5717 = vmatpush1.bf16.msra.mxu0 0
    %5718 = vmatprep.subr.bf16.mxu0 0
    %5719 = vmatpush1.bf16.msra.mxu0 0
    %5720 = vmatprep.subr.bf16.mxu0 0
    %5721 = vmatpush1.bf16.msra.mxu0 0
    %5722 = vmatprep.subr.bf16.mxu0 0
    %5723 = vmatpush1.bf16.msra.mxu0 0
    %5724 = vmatprep.subr.bf16.mxu0 0
    %5725 = vmatpush1.bf16.msra.mxu0 0
    %5726 = vmatprep.subr.bf16.mxu0 0
    %5727 = vmatpush1.bf16.msra.mxu0 0
    %5728 = vmatprep.subr.bf16.mxu0 0
    %5729 = vmatpush1.bf16.msra.mxu0 0
    %5730 = vmatprep.mubr.bf16.mxu0 0
    %5731 = vmatmul.mubr.bf16.gmra.mrb[0].mxu0 %v5693
    %v5732 = vpop.f32.mrb[0].mxu0
    %v5733 = vadd.f32 %v5666, %v5732
    %v5734 = vpop.f32.mrb[0].mxu0
    %v5735 = vpop.f32.mrb[0].mxu0
    %v5736 = vadd.f32 %v5669, %v5735
    %v5737 = vpop.f32.mrb[0].mxu0
    %5738 = vmatprep.mubr.bf16.mxu0 0
    %5739 = vmatmul.mubr.bf16.gmra.mrb[0].mxu0 %v5696
    %v5740 = vpop.f32.mrb[0].mxu0
    %v5741 = vadd.f32 %v5674, %v5740
    %v5742 = vpop.f32.mrb[0].mxu0
    %v5743 = vpop.f32.mrb[0].mxu0
    %v5744 = vadd.f32 %v5677, %v5743
    %v5745 = vpop.f32.mrb[0].mxu0
    %5746 = vdwg.mxu0
    %v5747 = vld [vmem:[#allocation8 + $0x20] sm:$0xf]
    %v5748 = vld [vmem:[#allocation8 + $0x24] sm:$0xf]
    %v5749 = vld [vmem:[#allocation8 + $0x28] sm:$0xf]
    %v5750 = vld [vmem:[#allocation8 + $0x2c] sm:$0xf]
    %v5751 = vld [vmem:[%s6 + $0x20] sm:$0xf]
    %v5752 = vld [vmem:[%s6 + $0x24] sm:$0xf]
    %v5753 = vld [vmem:[%s6 + $0x28] sm:$0xf]
    %v5754 = vld [vmem:[%s6 + $0x2c] sm:$0xf]
    %v5759 = vunpack.c.l.b16 %v5747
    %v5760 = vunpack.c.l.b16 %v5748
    %v5761 = vunpack.c.l.b16 %v5749
    %v5762 = vunpack.c.l.b16 %v5750
    %v5763 = vpack.c.b16 %v5760, %v5759
    %v5764 = vpack.c.b16 %v5762, %v5761
    %5767 = vmatprep.subr.bf16.mxu0 0
    %5768 = vmatpush1.bf16.msra.mxu0 %v5463
    %5769 = vmatprep.subr.bf16.mxu0 0
    %5770 = vmatpush1.bf16.msra.mxu0 %v5464
    %5771 = vmatprep.subr.bf16.mxu0 0
    %5772 = vmatpush1.bf16.msra.mxu0 %v5465
    %5773 = vmatprep.subr.bf16.mxu0 0
    %5774 = vmatpush1.bf16.msra.mxu0 %v5466
    %5775 = vmatprep.subr.bf16.mxu0 0
    %5776 = vmatpush1.bf16.msra.mxu0 %v5467
    %5777 = vmatprep.subr.bf16.mxu0 0
    %5778 = vmatpush1.bf16.msra.mxu0 %v5468
    %5779 = vmatprep.subr.bf16.mxu0 0
    %5780 = vmatpush1.bf16.msra.mxu0 %v5469
    %5781 = vmatprep.subr.bf16.mxu0 0
    %5782 = vmatpush1.bf16.msra.mxu0 %v5470
    %5783 = vmatprep.subr.bf16.mxu0 0
    %5784 = vmatpush1.bf16.msra.mxu0 0
    %5785 = vmatprep.subr.bf16.mxu0 0
    %5786 = vmatpush1.bf16.msra.mxu0 0
    %5787 = vmatprep.subr.bf16.mxu0 0
    %5788 = vmatpush1.bf16.msra.mxu0 0
    %5789 = vmatprep.subr.bf16.mxu0 0
    %5790 = vmatpush1.bf16.msra.mxu0 0
    %5791 = vmatprep.subr.bf16.mxu0 0
    %5792 = vmatpush1.bf16.msra.mxu0 0
    %5793 = vmatprep.subr.bf16.mxu0 0
    %5794 = vmatpush1.bf16.msra.mxu0 0
    %5795 = vmatprep.subr.bf16.mxu0 0
    %5796 = vmatpush1.bf16.msra.mxu0 0
    %5797 = vmatprep.subr.bf16.mxu0 0
    %5798 = vmatpush1.bf16.msra.mxu0 0
    %5799 = vmatprep.mubr.bf16.mxu0 0
    %5800 = vmatmul.mubr.bf16.gmra.mrb[0].mxu0 %v5763
    %v5801 = vpop.f32.mrb[0].mxu0
    %v5802 = vadd.f32 0.0, %v5801
    %v5803 = vpop.f32.mrb[0].mxu0
    %v5804 = vpop.f32.mrb[0].mxu0
    %v5805 = vadd.f32 0.0, %v5804
    %v5806 = vpop.f32.mrb[0].mxu0
    %5807 = vmatprep.mubr.bf16.mxu0 0
    %5808 = vmatmul.mubr.bf16.gmra.mrb[0].mxu0 %v5764
    %v5809 = vpop.f32.mrb[0].mxu0
    %v5810 = vadd.f32 0.0, %v5809
    %v5811 = vpop.f32.mrb[0].mxu0
    %v5812 = vpop.f32.mrb[0].mxu0
    %v5813 = vadd.f32 0.0, %v5812
    %v5814 = vpop.f32.mrb[0].mxu0
    %5815 = vdwg.mxu0
    %v5816 = vpack.c.bf16 %v5805, %v5802
    %v5817 = vpack.c.bf16 %v5813, %v5810
    %v5822 = vunpack.c.l.b16 %v5751
    %v5823 = vunpack.c.l.b16 %v5752
    %v5824 = vunpack.c.l.b16 %v5753
    %v5825 = vunpack.c.l.b16 %v5754
    %v5826 = vpack.c.b16 %v5823, %v5822
    %v5827 = vpack.c.b16 %v5825, %v5824
    %v5831 = vsel %vm5274, %v5816, 0
    %v5834 = vsel %vm5274, %v5817, 0
    %5836 = vmatprep.subr.bf16.mxu0 0
    %5837 = vmatpush1.bf16.msra.mxu0 %v5826
    %5838 = vmatprep.subr.bf16.mxu0 0
    %5839 = vmatpush1.bf16.msra.mxu0 %v5827
    %5840 = vmatprep.subr.bf16.mxu0 0
    %5841 = vmatpush1.bf16.msra.mxu0 0
    %5842 = vmatprep.subr.bf16.mxu0 0
    %5843 = vmatpush1.bf16.msra.mxu0 0
    %5844 = vmatprep.subr.bf16.mxu0 0
    %5845 = vmatpush1.bf16.msra.mxu0 0
    %5846 = vmatprep.subr.bf16.mxu0 0
    %5847 = vmatpush1.bf16.msra.mxu0 0
    %5848 = vmatprep.subr.bf16.mxu0 0
    %5849 = vmatpush1.bf16.msra.mxu0 0
    %5850 = vmatprep.subr.bf16.mxu0 0
    %5851 = vmatpush1.bf16.msra.mxu0 0
    %5852 = vmatprep.subr.bf16.mxu0 0
    %5853 = vmatpush1.bf16.msra.mxu0 0
    %5854 = vmatprep.subr.bf16.mxu0 0
    %5855 = vmatpush1.bf16.msra.mxu0 0
    %5856 = vmatprep.subr.bf16.mxu0 0
    %5857 = vmatpush1.bf16.msra.mxu0 0
    %5858 = vmatprep.subr.bf16.mxu0 0
    %5859 = vmatpush1.bf16.msra.mxu0 0
    %5860 = vmatprep.subr.bf16.mxu0 0
    %5861 = vmatpush1.bf16.msra.mxu0 0
    %5862 = vmatprep.subr.bf16.mxu0 0
    %5863 = vmatpush1.bf16.msra.mxu0 0
    %5864 = vmatprep.subr.bf16.mxu0 0
    %5865 = vmatpush1.bf16.msra.mxu0 0
    %5866 = vmatprep.subr.bf16.mxu0 0
    %5867 = vmatpush1.bf16.msra.mxu0 0
    %5868 = vmatprep.mubr.bf16.mxu0 0
    %5869 = vmatmul.mubr.bf16.gmra.mrb[0].mxu0 %v5831
    %v5870 = vpop.f32.mrb[0].mxu0
    %v5871 = vadd.f32 0.0, %v5870
    %v5872 = vpop.f32.mrb[0].mxu0
    %v5873 = vpop.f32.mrb[0].mxu0
    %v5874 = vadd.f32 0.0, %v5873
    %v5875 = vpop.f32.mrb[0].mxu0
    %5876 = vmatprep.mubr.bf16.mxu0 0
    %5877 = vmatmul.mubr.bf16.gmra.mrb[0].mxu0 %v5834
    %v5878 = vpop.f32.mrb[0].mxu0
    %v5879 = vadd.f32 0.0, %v5878
    %v5880 = vpop.f32.mrb[0].mxu0
    %v5881 = vpop.f32.mrb[0].mxu0
    %v5882 = vadd.f32 0.0, %v5881
    %v5883 = vpop.f32.mrb[0].mxu0
    %5884 = vdwg.mxu0
    %v5885 = vadd.f32 %v5733, %v5871
    %v5886 = vadd.f32 %v5736, %v5874
    %v5887 = vadd.f32 %v5741, %v5879
    %v5888 = vadd.f32 %v5744, %v5882
    %v5889 = vld [vmem:[#allocation8 + $0x30] sm:$0xf]
    %v5890 = vld [vmem:[#allocation8 + $0x34] sm:$0xf]
    %v5891 = vld [vmem:[#allocation8 + $0x38] sm:$0xf]
    %v5892 = vld [vmem:[#allocation8 + $0x3c] sm:$0xf]
    %v5893 = vld [vmem:[%s6 + $0x30] sm:$0xf]
    %v5894 = vld [vmem:[%s6 + $0x34] sm:$0xf]
    %v5895 = vld [vmem:[%s6 + $0x38] sm:$0xf]
    %v5896 = vld [vmem:[%s6 + $0x3c] sm:$0xf]
    %v5901 = vunpack.c.l.b16 %v5889
    %v5902 = vunpack.c.l.b16 %v5890
    %v5903 = vunpack.c.l.b16 %v5891
    %v5904 = vunpack.c.l.b16 %v5892
    %v5905 = vpack.c.b16 %v5902, %v5901
    %v5906 = vpack.c.b16 %v5904, %v5903
    %5909 = vmatprep.subr.bf16.mxu0 0
    %5910 = vmatpush1.bf16.msra.mxu0 %v5463
    %5911 = vmatprep.subr.bf16.mxu0 0
    %5912 = vmatpush1.bf16.msra.mxu0 %v5464
    %5913 = vmatprep.subr.bf16.mxu0 0
    %5914 = vmatpush1.bf16.msra.mxu0 %v5465
    %5915 = vmatprep.subr.bf16.mxu0 0
    %5916 = vmatpush1.bf16.msra.mxu0 %v5466
    %5917 = vmatprep.subr.bf16.mxu0 0
    %5918 = vmatpush1.bf16.msra.mxu0 %v5467
    %5919 = vmatprep.subr.bf16.mxu0 0
    %5920 = vmatpush1.bf16.msra.mxu0 %v5468
    %5921 = vmatprep.subr.bf16.mxu0 0
    %5922 = vmatpush1.bf16.msra.mxu0 %v5469
    %5923 = vmatprep.subr.bf16.mxu0 0
    %5924 = vmatpush1.bf16.msra.mxu0 %v5470
    %5925 = vmatprep.subr.bf16.mxu0 0
    %5926 = vmatpush1.bf16.msra.mxu0 0
    %5927 = vmatprep.subr.bf16.mxu0 0
    %5928 = vmatpush1.bf16.msra.mxu0 0
    %5929 = vmatprep.subr.bf16.mxu0 0
    %5930 = vmatpush1.bf16.msra.mxu0 0
    %5931 = vmatprep.subr.bf16.mxu0 0
    %5932 = vmatpush1.bf16.msra.mxu0 0
    %5933 = vmatprep.subr.bf16.mxu0 0
    %5934 = vmatpush1.bf16.msra.mxu0 0
    %5935 = vmatprep.subr.bf16.mxu0 0
    %5936 = vmatpush1.bf16.msra.mxu0 0
    %5937 = vmatprep.subr.bf16.mxu0 0
    %5938 = vmatpush1.bf16.msra.mxu0 0
    %5939 = vmatprep.subr.bf16.mxu0 0
    %5940 = vmatpush1.bf16.msra.mxu0 0
    %5941 = vmatprep.mubr.bf16.mxu0 0
    %5942 = vmatmul.mubr.bf16.gmra.mrb[0].mxu0 %v5905
    %v5943 = vpop.f32.mrb[0].mxu0
    %v5944 = vadd.f32 0.0, %v5943
    %v5945 = vpop.f32.mrb[0].mxu0
    %v5946 = vpop.f32.mrb[0].mxu0
    %v5947 = vadd.f32 0.0, %v5946
    %v5948 = vpop.f32.mrb[0].mxu0
    %5949 = vmatprep.mubr.bf16.mxu0 0
    %5950 = vmatmul.mubr.bf16.gmra.mrb[0].mxu0 %v5906
    %v5951 = vpop.f32.mrb[0].mxu0
    %v5952 = vadd.f32 0.0, %v5951
    %v5953 = vpop.f32.mrb[0].mxu0
    %v5954 = vpop.f32.mrb[0].mxu0
    %v5955 = vadd.f32 0.0, %v5954
    %v5956 = vpop.f32.mrb[0].mxu0
    %5957 = vdwg.mxu0
    %v5958 = vpack.c.bf16 %v5947, %v5944
    %v5959 = vpack.c.bf16 %v5955, %v5952
    %v5964 = vunpack.c.l.b16 %v5893
    %v5965 = vunpack.c.l.b16 %v5894
    %v5966 = vunpack.c.l.b16 %v5895
    %v5967 = vunpack.c.l.b16 %v5896
    %v5968 = vpack.c.b16 %v5965, %v5964
    %v5969 = vpack.c.b16 %v5967, %v5966
    %v5973 = vsel %vm5274, %v5958, 0
    %v5976 = vsel %vm5274, %v5959, 0
    %5978 = vmatprep.subr.bf16.mxu0 0
    %5979 = vmatpush1.bf16.msra.mxu0 %v5968
    %5980 = vmatprep.subr.bf16.mxu0 0
    %5981 = vmatpush1.bf16.msra.mxu0 %v5969
    %5982 = vmatprep.subr.bf16.mxu0 0
    %5983 = vmatpush1.bf16.msra.mxu0 0
    %5984 = vmatprep.subr.bf16.mxu0 0
    %5985 = vmatpush1.bf16.msra.mxu0 0
    %5986 = vmatprep.subr.bf16.mxu0 0
    %5987 = vmatpush1.bf16.msra.mxu0 0
    %5988 = vmatprep.subr.bf16.mxu0 0
    %5989 = vmatpush1.bf16.msra.mxu0 0
    %5990 = vmatprep.subr.bf16.mxu0 0
    %5991 = vmatpush1.bf16.msra.mxu0 0
    %5992 = vmatprep.subr.bf16.mxu0 0
    %5993 = vmatpush1.bf16.msra.mxu0 0
    %5994 = vmatprep.subr.bf16.mxu0 0
    %5995 = vmatpush1.bf16.msra.mxu0 0
    %5996 = vmatprep.subr.bf16.mxu0 0
    %5997 = vmatpush1.bf16.msra.mxu0 0
    %5998 = vmatprep.subr.bf16.mxu0 0
    %5999 = vmatpush1.bf16.msra.mxu0 0
    %6000 = vmatprep.subr.bf16.mxu0 0
    %6001 = vmatpush1.bf16.msra.mxu0 0
    %6002 = vmatprep.subr.bf16.mxu0 0
    %6003 = vmatpush1.bf16.msra.mxu0 0
    %6004 = vmatprep.subr.bf16.mxu0 0
    %6005 = vmatpush1.bf16.msra.mxu0 0
    %6006 = vmatprep.subr.bf16.mxu0 0
    %6007 = vmatpush1.bf16.msra.mxu0 0
    %6008 = vmatprep.subr.bf16.mxu0 0
    %6009 = vmatpush1.bf16.msra.mxu0 0
    %6010 = vmatprep.mubr.bf16.mxu0 0
    %6011 = vmatmul.mubr.bf16.gmra.mrb[0].mxu0 %v5973
    %v6012 = vpop.f32.mrb[0].mxu0
    %v6013 = vadd.f32 0.0, %v6012
    %v6014 = vpop.f32.mrb[0].mxu0
    %v6015 = vpop.f32.mrb[0].mxu0
    %v6016 = vadd.f32 0.0, %v6015
    %v6017 = vpop.f32.mrb[0].mxu0
    %6018 = vmatprep.mubr.bf16.mxu0 0
    %6019 = vmatmul.mubr.bf16.gmra.mrb[0].mxu0 %v5976
    %v6020 = vpop.f32.mrb[0].mxu0
    %v6021 = vadd.f32 0.0, %v6020
    %v6022 = vpop.f32.mrb[0].mxu0
    %v6023 = vpop.f32.mrb[0].mxu0
    %v6024 = vadd.f32 0.0, %v6023
    %v6025 = vpop.f32.mrb[0].mxu0
    %6026 = vdwg.mxu0
    %v6027 = vadd.f32 %v5885, %v6013
    %v6028 = vadd.f32 %v5886, %v6016
    %v6029 = vadd.f32 %v5887, %v6021
    %v6030 = vadd.f32 %v5888, %v6024
    %v6031 = vld [vmem:[#allocation8 + $0x40] sm:$0xf]
    %v6032 = vld [vmem:[#allocation8 + $0x44] sm:$0xf]
    %v6033 = vld [vmem:[#allocation8 + $0x48] sm:$0xf]
    %v6034 = vld [vmem:[#allocation8 + $0x4c] sm:$0xf]
    %v6035 = vld [vmem:[%s6 + $0x40] sm:$0xf]
    %v6036 = vld [vmem:[%s6 + $0x44] sm:$0xf]
    %v6037 = vld [vmem:[%s6 + $0x48] sm:$0xf]
    %v6038 = vld [vmem:[%s6 + $0x4c] sm:$0xf]
    %v6043 = vunpack.c.l.b16 %v6031
    %v6044 = vunpack.c.l.b16 %v6032
    %v6045 = vunpack.c.l.b16 %v6033
    %v6046 = vunpack.c.l.b16 %v6034
    %v6047 = vpack.c.b16 %v6044, %v6043
    %v6048 = vpack.c.b16 %v6046, %v6045
    %6051 = vmatprep.subr.bf16.mxu0 0
    %6052 = vmatpush1.bf16.msra.mxu0 %v5463
    %6053 = vmatprep.subr.bf16.mxu0 0
    %6054 = vmatpush1.bf16.msra.mxu0 %v5464
    %6055 = vmatprep.subr.bf16.mxu0 0
    %6056 = vmatpush1.bf16.msra.mxu0 %v5465
    %6057 = vmatprep.subr.bf16.mxu0 0
    %6058 = vmatpush1.bf16.msra.mxu0 %v5466
    %6059 = vmatprep.subr.bf16.mxu0 0
    %6060 = vmatpush1.bf16.msra.mxu0 %v5467
    %6061 = vmatprep.subr.bf16.mxu0 0
    %6062 = vmatpush1.bf16.msra.mxu0 %v5468
    %6063 = vmatprep.subr.bf16.mxu0 0
    %6064 = vmatpush1.bf16.msra.mxu0 %v5469
    %6065 = vmatprep.subr.bf16.mxu0 0
    %6066 = vmatpush1.bf16.msra.mxu0 %v5470
    %6067 = vmatprep.subr.bf16.mxu0 0
    %6068 = vmatpush1.bf16.msra.mxu0 0
    %6069 = vmatprep.subr.bf16.mxu0 0
    %6070 = vmatpush1.bf16.msra.mxu0 0
    %6071 = vmatprep.subr.bf16.mxu0 0
    %6072 = vmatpush1.bf16.msra.mxu0 0
    %6073 = vmatprep.subr.bf16.mxu0 0
    %6074 = vmatpush1.bf16.msra.mxu0 0
    %6075 = vmatprep.subr.bf16.mxu0 0
    %6076 = vmatpush1.bf16.msra.mxu0 0
    %6077 = vmatprep.subr.bf16.mxu0 0
    %6078 = vmatpush1.bf16.msra.mxu0 0
    %6079 = vmatprep.subr.bf16.mxu0 0
    %6080 = vmatpush1.bf16.msra.mxu0 0
    %6081 = vmatprep.subr.bf16.mxu0 0
    %6082 = vmatpush1.bf16.msra.mxu0 0
    %6083 = vmatprep.mubr.bf16.mxu0 0
    %6084 = vmatmul.mubr.bf16.gmra.mrb[0].mxu0 %v6047
    %v6085 = vpop.f32.mrb[0].mxu0
    %v6086 = vadd.f32 0.0, %v6085
    %v6087 = vpop.f32.mrb[0].mxu0
    %v6088 = vpop.f32.mrb[0].mxu0
    %v6089 = vadd.f32 0.0, %v6088
    %v6090 = vpop.f32.mrb[0].mxu0
    %6091 = vmatprep.mubr.bf16.mxu0 0
    %6092 = vmatmul.mubr.bf16.gmra.mrb[0].mxu0 %v6048
    %v6093 = vpop.f32.mrb[0].mxu0
    %v6094 = vadd.f32 0.0, %v6093
    %v6095 = vpop.f32.mrb[0].mxu0
    %v6096 = vpop.f32.mrb[0].mxu0
    %v6097 = vadd.f32 0.0, %v6096
    %v6098 = vpop.f32.mrb[0].mxu0
    %6099 = vdwg.mxu0
    %v6100 = vpack.c.bf16 %v6089, %v6086
    %v6101 = vpack.c.bf16 %v6097, %v6094
    %v6106 = vunpack.c.l.b16 %v6035
    %v6107 = vunpack.c.l.b16 %v6036
    %v6108 = vunpack.c.l.b16 %v6037
    %v6109 = vunpack.c.l.b16 %v6038
    %v6110 = vpack.c.b16 %v6107, %v6106
    %v6111 = vpack.c.b16 %v6109, %v6108
    %v6115 = vsel %vm5274, %v6100, 0
    %v6118 = vsel %vm5274, %v6101, 0
    %6120 = vmatprep.subr.bf16.mxu0 0
    %6121 = vmatpush1.bf16.msra.mxu0 %v6110
    %6122 = vmatprep.subr.bf16.mxu0 0
    %6123 = vmatpush1.bf16.msra.mxu0 %v6111
    %6124 = vmatprep.subr.bf16.mxu0 0
    %6125 = vmatpush1.bf16.msra.mxu0 0
    %6126 = vmatprep.subr.bf16.mxu0 0
    %6127 = vmatpush1.bf16.msra.mxu0 0
    %6128 = vmatprep.subr.bf16.mxu0 0
    %6129 = vmatpush1.bf16.msra.mxu0 0
    %6130 = vmatprep.subr.bf16.mxu0 0
    %6131 = vmatpush1.bf16.msra.mxu0 0
    %6132 = vmatprep.subr.bf16.mxu0 0
    %6133 = vmatpush1.bf16.msra.mxu0 0
    %6134 = vmatprep.subr.bf16.mxu0 0
    %6135 = vmatpush1.bf16.msra.mxu0 0
    %6136 = vmatprep.subr.bf16.mxu0 0
    %6137 = vmatpush1.bf16.msra.mxu0 0
    %6138 = vmatprep.subr.bf16.mxu0 0
    %6139 = vmatpush1.bf16.msra.mxu0 0
    %6140 = vmatprep.subr.bf16.mxu0 0
    %6141 = vmatpush1.bf16.msra.mxu0 0
    %6142 = vmatprep.subr.bf16.mxu0 0
    %6143 = vmatpush1.bf16.msra.mxu0 0
    %6144 = vmatprep.subr.bf16.mxu0 0
    %6145 = vmatpush1.bf16.msra.mxu0 0
    %6146 = vmatprep.subr.bf16.mxu0 0
    %6147 = vmatpush1.bf16.msra.mxu0 0
    %6148 = vmatprep.subr.bf16.mxu0 0
    %6149 = vmatpush1.bf16.msra.mxu0 0
    %6150 = vmatprep.subr.bf16.mxu0 0
    %6151 = vmatpush1.bf16.msra.mxu0 0
    %6152 = vmatprep.mubr.bf16.mxu0 0
    %6153 = vmatmul.mubr.bf16.gmra.mrb[0].mxu0 %v6115
    %v6154 = vpop.f32.mrb[0].mxu0
    %v6155 = vadd.f32 0.0, %v6154
    %v6156 = vpop.f32.mrb[0].mxu0
    %v6157 = vpop.f32.mrb[0].mxu0
    %v6158 = vadd.f32 0.0, %v6157
    %v6159 = vpop.f32.mrb[0].mxu0
    %6160 = vmatprep.mubr.bf16.mxu0 0
    %6161 = vmatmul.mubr.bf16.gmra.mrb[0].mxu0 %v6118
    %v6162 = vpop.f32.mrb[0].mxu0
    %v6163 = vadd.f32 0.0, %v6162
    %v6164 = vpop.f32.mrb[0].mxu0
    %v6165 = vpop.f32.mrb[0].mxu0
    %v6166 = vadd.f32 0.0, %v6165
    %v6167 = vpop.f32.mrb[0].mxu0
    %6168 = vdwg.mxu0
    %v6169 = vadd.f32 %v6027, %v6155
    %v6170 = vadd.f32 %v6028, %v6158
    %v6171 = vadd.f32 %v6029, %v6163
    %v6172 = vadd.f32 %v6030, %v6166
    %v6173 = vld [vmem:[#allocation8 + $0x50] sm:$0xf]
    %v6174 = vld [vmem:[#allocation8 + $0x54] sm:$0xf]
    %v6175 = vld [vmem:[#allocation8 + $0x58] sm:$0xf]
    %v6176 = vld [vmem:[#allocation8 + $0x5c] sm:$0xf]
    %v6177 = vld [vmem:[%s6 + $0x50] sm:$0xf]
    %v6178 = vld [vmem:[%s6 + $0x54] sm:$0xf]
    %v6179 = vld [vmem:[%s6 + $0x58] sm:$0xf]
    %v6180 = vld [vmem:[%s6 + $0x5c] sm:$0xf]
    %v6185 = vunpack.c.l.b16 %v6173
    %v6186 = vunpack.c.l.b16 %v6174
    %v6187 = vunpack.c.l.b16 %v6175
    %v6188 = vunpack.c.l.b16 %v6176
    %v6189 = vpack.c.b16 %v6186, %v6185
    %v6190 = vpack.c.b16 %v6188, %v6187
    %6193 = vmatprep.subr.bf16.mxu0 0
    %6194 = vmatpush1.bf16.msra.mxu0 %v5463
    %6195 = vmatprep.subr.bf16.mxu0 0
    %6196 = vmatpush1.bf16.msra.mxu0 %v5464
    %6197 = vmatprep.subr.bf16.mxu0 0
    %6198 = vmatpush1.bf16.msra.mxu0 %v5465
    %6199 = vmatprep.subr.bf16.mxu0 0
    %6200 = vmatpush1.bf16.msra.mxu0 %v5466
    %6201 = vmatprep.subr.bf16.mxu0 0
    %6202 = vmatpush1.bf16.msra.mxu0 %v5467
    %6203 = vmatprep.subr.bf16.mxu0 0
    %6204 = vmatpush1.bf16.msra.mxu0 %v5468
    %6205 = vmatprep.subr.bf16.mxu0 0
    %6206 = vmatpush1.bf16.msra.mxu0 %v5469
    %6207 = vmatprep.subr.bf16.mxu0 0
    %6208 = vmatpush1.bf16.msra.mxu0 %v5470
    %6209 = vmatprep.subr.bf16.mxu0 0
    %6210 = vmatpush1.bf16.msra.mxu0 0
    %6211 = vmatprep.subr.bf16.mxu0 0
    %6212 = vmatpush1.bf16.msra.mxu0 0
    %6213 = vmatprep.subr.bf16.mxu0 0
    %6214 = vmatpush1.bf16.msra.mxu0 0
    %6215 = vmatprep.subr.bf16.mxu0 0
    %6216 = vmatpush1.bf16.msra.mxu0 0
    %6217 = vmatprep.subr.bf16.mxu0 0
    %6218 = vmatpush1.bf16.msra.mxu0 0
    %6219 = vmatprep.subr.bf16.mxu0 0
    %6220 = vmatpush1.bf16.msra.mxu0 0
    %6221 = vmatprep.subr.bf16.mxu0 0
    %6222 = vmatpush1.bf16.msra.mxu0 0
    %6223 = vmatprep.subr.bf16.mxu0 0
    %6224 = vmatpush1.bf16.msra.mxu0 0
    %6225 = vmatprep.mubr.bf16.mxu0 0
    %6226 = vmatmul.mubr.bf16.gmra.mrb[0].mxu0 %v6189
    %v6227 = vpop.f32.mrb[0].mxu0
    %v6228 = vadd.f32 0.0, %v6227
    %v6229 = vpop.f32.mrb[0].mxu0
    %v6230 = vpop.f32.mrb[0].mxu0
    %v6231 = vadd.f32 0.0, %v6230
    %v6232 = vpop.f32.mrb[0].mxu0
    %6233 = vmatprep.mubr.bf16.mxu0 0
    %6234 = vmatmul.mubr.bf16.gmra.mrb[0].mxu0 %v6190
    %v6235 = vpop.f32.mrb[0].mxu0
    %v6236 = vadd.f32 0.0, %v6235
    %v6237 = vpop.f32.mrb[0].mxu0
    %v6238 = vpop.f32.mrb[0].mxu0
    %v6239 = vadd.f32 0.0, %v6238
    %v6240 = vpop.f32.mrb[0].mxu0
    %6241 = vdwg.mxu0
    %v6242 = vpack.c.bf16 %v6231, %v6228
    %v6243 = vpack.c.bf16 %v6239, %v6236
    %v6248 = vunpack.c.l.b16 %v6177
    %v6249 = vunpack.c.l.b16 %v6178
    %v6250 = vunpack.c.l.b16 %v6179
    %v6251 = vunpack.c.l.b16 %v6180
    %v6252 = vpack.c.b16 %v6249, %v6248
    %v6253 = vpack.c.b16 %v6251, %v6250
    %v6257 = vsel %vm5274, %v6242, 0
    %v6260 = vsel %vm5274, %v6243, 0
    %6262 = vmatprep.subr.bf16.mxu0 0
    %6263 = vmatpush1.bf16.msra.mxu0 %v6252
    %6264 = vmatprep.subr.bf16.mxu0 0
    %6265 = vmatpush1.bf16.msra.mxu0 %v6253
    %6266 = vmatprep.subr.bf16.mxu0 0
    %6267 = vmatpush1.bf16.msra.mxu0 0
    %6268 = vmatprep.subr.bf16.mxu0 0
    %6269 = vmatpush1.bf16.msra.mxu0 0
    %6270 = vmatprep.subr.bf16.mxu0 0
    %6271 = vmatpush1.bf16.msra.mxu0 0
    %6272 = vmatprep.subr.bf16.mxu0 0
    %6273 = vmatpush1.bf16.msra.mxu0 0
    %6274 = vmatprep.subr.bf16.mxu0 0
    %6275 = vmatpush1.bf16.msra.mxu0 0
    %6276 = vmatprep.subr.bf16.mxu0 0
    %6277 = vmatpush1.bf16.msra.mxu0 0
    %6278 = vmatprep.subr.bf16.mxu0 0
    %6279 = vmatpush1.bf16.msra.mxu0 0
    %6280 = vmatprep.subr.bf16.mxu0 0
    %6281 = vmatpush1.bf16.msra.mxu0 0
    %6282 = vmatprep.subr.bf16.mxu0 0
    %6283 = vmatpush1.bf16.msra.mxu0 0
    %6284 = vmatprep.subr.bf16.mxu0 0
    %6285 = vmatpush1.bf16.msra.mxu0 0
    %6286 = vmatprep.subr.bf16.mxu0 0
    %6287 = vmatpush1.bf16.msra.mxu0 0
    %6288 = vmatprep.subr.bf16.mxu0 0
    %6289 = vmatpush1.bf16.msra.mxu0 0
    %6290 = vmatprep.subr.bf16.mxu0 0
    %6291 = vmatpush1.bf16.msra.mxu0 0
    %6292 = vmatprep.subr.bf16.mxu0 0
    %6293 = vmatpush1.bf16.msra.mxu0 0
    %6294 = vmatprep.mubr.bf16.mxu0 0
    %6295 = vmatmul.mubr.bf16.gmra.mrb[0].mxu0 %v6257
    %v6296 = vpop.f32.mrb[0].mxu0
    %v6297 = vadd.f32 0.0, %v6296
    %v6298 = vpop.f32.mrb[0].mxu0
    %v6299 = vpop.f32.mrb[0].mxu0
    %v6300 = vadd.f32 0.0, %v6299
    %v6301 = vpop.f32.mrb[0].mxu0
    %6302 = vmatprep.mubr.bf16.mxu0 0
    %6303 = vmatmul.mubr.bf16.gmra.mrb[0].mxu0 %v6260
    %v6304 = vpop.f32.mrb[0].mxu0
    %v6305 = vadd.f32 0.0, %v6304
    %v6306 = vpop.f32.mrb[0].mxu0
    %v6307 = vpop.f32.mrb[0].mxu0
    %v6308 = vadd.f32 0.0, %v6307
    %v6309 = vpop.f32.mrb[0].mxu0
    %6310 = vdwg.mxu0
    %v6311 = vadd.f32 %v6169, %v6297
    %v6312 = vadd.f32 %v6170, %v6300
    %v6313 = vadd.f32 %v6171, %v6305
    %v6314 = vadd.f32 %v6172, %v6308
    %v6315 = vld [vmem:[#allocation8 + $0x60] sm:$0xf]
    %v6316 = vld [vmem:[#allocation8 + $0x64] sm:$0xf]
    %v6317 = vld [vmem:[#allocation8 + $0x68] sm:$0xf]
    %v6318 = vld [vmem:[#allocation8 + $0x6c] sm:$0xf]
    %v6319 = vld [vmem:[%s6 + $0x60] sm:$0xf]
    %v6320 = vld [vmem:[%s6 + $0x64] sm:$0xf]
    %v6321 = vld [vmem:[%s6 + $0x68] sm:$0xf]
    %v6322 = vld [vmem:[%s6 + $0x6c] sm:$0xf]
    %v6327 = vunpack.c.l.b16 %v6315
    %v6328 = vunpack.c.l.b16 %v6316
    %v6329 = vunpack.c.l.b16 %v6317
    %v6330 = vunpack.c.l.b16 %v6318
    %v6331 = vpack.c.b16 %v6328, %v6327
    %v6332 = vpack.c.b16 %v6330, %v6329
    %6335 = vmatprep.subr.bf16.mxu0 0
    %6336 = vmatpush1.bf16.msra.mxu0 %v5463
    %6337 = vmatprep.subr.bf16.mxu0 0
    %6338 = vmatpush1.bf16.msra.mxu0 %v5464
    %6339 = vmatprep.subr.bf16.mxu0 0
    %6340 = vmatpush1.bf16.msra.mxu0 %v5465
    %6341 = vmatprep.subr.bf16.mxu0 0
    %6342 = vmatpush1.bf16.msra.mxu0 %v5466
    %6343 = vmatprep.subr.bf16.mxu0 0
    %6344 = vmatpush1.bf16.msra.mxu0 %v5467
    %6345 = vmatprep.subr.bf16.mxu0 0
    %6346 = vmatpush1.bf16.msra.mxu0 %v5468
    %6347 = vmatprep.subr.bf16.mxu0 0
    %6348 = vmatpush1.bf16.msra.mxu0 %v5469
    %6349 = vmatprep.subr.bf16.mxu0 0
    %6350 = vmatpush1.bf16.msra.mxu0 %v5470
    %6351 = vmatprep.subr.bf16.mxu0 0
    %6352 = vmatpush1.bf16.msra.mxu0 0
    %6353 = vmatprep.subr.bf16.mxu0 0
    %6354 = vmatpush1.bf16.msra.mxu0 0
    %6355 = vmatprep.subr.bf16.mxu0 0
    %6356 = vmatpush1.bf16.msra.mxu0 0
    %6357 = vmatprep.subr.bf16.mxu0 0
    %6358 = vmatpush1.bf16.msra.mxu0 0
    %6359 = vmatprep.subr.bf16.mxu0 0
    %6360 = vmatpush1.bf16.msra.mxu0 0
    %6361 = vmatprep.subr.bf16.mxu0 0
    %6362 = vmatpush1.bf16.msra.mxu0 0
    %6363 = vmatprep.subr.bf16.mxu0 0
    %6364 = vmatpush1.bf16.msra.mxu0 0
    %6365 = vmatprep.subr.bf16.mxu0 0
    %6366 = vmatpush1.bf16.msra.mxu0 0
    %6367 = vmatprep.mubr.bf16.mxu0 0
    %6368 = vmatmul.mubr.bf16.gmra.mrb[0].mxu0 %v6331
    %v6369 = vpop.f32.mrb[0].mxu0
    %v6370 = vadd.f32 0.0, %v6369
    %v6371 = vpop.f32.mrb[0].mxu0
    %v6372 = vpop.f32.mrb[0].mxu0
    %v6373 = vadd.f32 0.0, %v6372
    %v6374 = vpop.f32.mrb[0].mxu0
    %6375 = vmatprep.mubr.bf16.mxu0 0
    %6376 = vmatmul.mubr.bf16.gmra.mrb[0].mxu0 %v6332
    %v6377 = vpop.f32.mrb[0].mxu0
    %v6378 = vadd.f32 0.0, %v6377
    %v6379 = vpop.f32.mrb[0].mxu0
    %v6380 = vpop.f32.mrb[0].mxu0
    %v6381 = vadd.f32 0.0, %v6380
    %v6382 = vpop.f32.mrb[0].mxu0
    %6383 = vdwg.mxu0
    %v6384 = vpack.c.bf16 %v6373, %v6370
    %v6385 = vpack.c.bf16 %v6381, %v6378
    %v6390 = vunpack.c.l.b16 %v6319
    %v6391 = vunpack.c.l.b16 %v6320
    %v6392 = vunpack.c.l.b16 %v6321
    %v6393 = vunpack.c.l.b16 %v6322
    %v6394 = vpack.c.b16 %v6391, %v6390
    %v6395 = vpack.c.b16 %v6393, %v6392
    %v6399 = vsel %vm5274, %v6384, 0
    %v6402 = vsel %vm5274, %v6385, 0
    %6404 = vmatprep.subr.bf16.mxu0 0
    %6405 = vmatpush1.bf16.msra.mxu0 %v6394
    %6406 = vmatprep.subr.bf16.mxu0 0
    %6407 = vmatpush1.bf16.msra.mxu0 %v6395
    %6408 = vmatprep.subr.bf16.mxu0 0
    %6409 = vmatpush1.bf16.msra.mxu0 0
    %6410 = vmatprep.subr.bf16.mxu0 0
    %6411 = vmatpush1.bf16.msra.mxu0 0
    %6412 = vmatprep.subr.bf16.mxu0 0
    %6413 = vmatpush1.bf16.msra.mxu0 0
    %6414 = vmatprep.subr.bf16.mxu0 0
    %6415 = vmatpush1.bf16.msra.mxu0 0
    %6416 = vmatprep.subr.bf16.mxu0 0
    %6417 = vmatpush1.bf16.msra.mxu0 0
    %6418 = vmatprep.subr.bf16.mxu0 0
    %6419 = vmatpush1.bf16.msra.mxu0 0
    %6420 = vmatprep.subr.bf16.mxu0 0
    %6421 = vmatpush1.bf16.msra.mxu0 0
    %6422 = vmatprep.subr.bf16.mxu0 0
    %6423 = vmatpush1.bf16.msra.mxu0 0
    %6424 = vmatprep.subr.bf16.mxu0 0
    %6425 = vmatpush1.bf16.msra.mxu0 0
    %6426 = vmatprep.subr.bf16.mxu0 0
    %6427 = vmatpush1.bf16.msra.mxu0 0
    %6428 = vmatprep.subr.bf16.mxu0 0
    %6429 = vmatpush1.bf16.msra.mxu0 0
    %6430 = vmatprep.subr.bf16.mxu0 0
    %6431 = vmatpush1.bf16.msra.mxu0 0
    %6432 = vmatprep.subr.bf16.mxu0 0
    %6433 = vmatpush1.bf16.msra.mxu0 0
    %6434 = vmatprep.subr.bf16.mxu0 0
    %6435 = vmatpush1.bf16.msra.mxu0 0
    %6436 = vmatprep.mubr.bf16.mxu0 0
    %6437 = vmatmul.mubr.bf16.gmra.mrb[0].mxu0 %v6399
    %v6438 = vpop.f32.mrb[0].mxu0
    %v6439 = vadd.f32 0.0, %v6438
    %v6440 = vpop.f32.mrb[0].mxu0
    %v6441 = vpop.f32.mrb[0].mxu0
    %v6442 = vadd.f32 0.0, %v6441
    %v6443 = vpop.f32.mrb[0].mxu0
    %6444 = vmatprep.mubr.bf16.mxu0 0
    %6445 = vmatmul.mubr.bf16.gmra.mrb[0].mxu0 %v6402
    %v6446 = vpop.f32.mrb[0].mxu0
    %v6447 = vadd.f32 0.0, %v6446
    %v6448 = vpop.f32.mrb[0].mxu0
    %v6449 = vpop.f32.mrb[0].mxu0
    %v6450 = vadd.f32 0.0, %v6449
    %v6451 = vpop.f32.mrb[0].mxu0
    %6452 = vdwg.mxu0
    %v6453 = vadd.f32 %v6311, %v6439
    %v6454 = vadd.f32 %v6312, %v6442
    %v6455 = vadd.f32 %v6313, %v6447
    %v6456 = vadd.f32 %v6314, %v6450
    %v6457 = vld [vmem:[#allocation8 + $0x70] sm:$0xf]
    %v6458 = vld [vmem:[#allocation8 + $0x74] sm:$0xf]
    %v6459 = vld [vmem:[#allocation8 + $0x78] sm:$0xf]
    %v6460 = vld [vmem:[#allocation8 + $0x7c] sm:$0xf]
    %v6461 = vld [vmem:[%s6 + $0x70] sm:$0xf]
    %v6462 = vld [vmem:[%s6 + $0x74] sm:$0xf]
    %v6463 = vld [vmem:[%s6 + $0x78] sm:$0xf]
    %v6464 = vld [vmem:[%s6 + $0x7c] sm:$0xf]
    %v6469 = vunpack.c.l.b16 %v6457
    %v6470 = vunpack.c.l.b16 %v6458
    %v6471 = vunpack.c.l.b16 %v6459
    %v6472 = vunpack.c.l.b16 %v6460
    %v6473 = vpack.c.b16 %v6470, %v6469
    %v6474 = vpack.c.b16 %v6472, %v6471
    %6477 = vmatprep.subr.bf16.mxu0 0
    %6478 = vmatpush1.bf16.msra.mxu0 %v5463
    %6479 = vmatprep.subr.bf16.mxu0 0
    %6480 = vmatpush1.bf16.msra.mxu0 %v5464
    %6481 = vmatprep.subr.bf16.mxu0 0
    %6482 = vmatpush1.bf16.msra.mxu0 %v5465
    %6483 = vmatprep.subr.bf16.mxu0 0
    %6484 = vmatpush1.bf16.msra.mxu0 %v5466
    %6485 = vmatprep.subr.bf16.mxu0 0
    %6486 = vmatpush1.bf16.msra.mxu0 %v5467
    %6487 = vmatprep.subr.bf16.mxu0 0
    %6488 = vmatpush1.bf16.msra.mxu0 %v5468
    %6489 = vmatprep.subr.bf16.mxu0 0
    %6490 = vmatpush1.bf16.msra.mxu0 %v5469
    %6491 = vmatprep.subr.bf16.mxu0 0
    %6492 = vmatpush1.bf16.msra.mxu0 %v5470
    %6493 = vmatprep.subr.bf16.mxu0 0
    %6494 = vmatpush1.bf16.msra.mxu0 0
    %6495 = vmatprep.subr.bf16.mxu0 0
    %6496 = vmatpush1.bf16.msra.mxu0 0
    %6497 = vmatprep.subr.bf16.mxu0 0
    %6498 = vmatpush1.bf16.msra.mxu0 0
    %6499 = vmatprep.subr.bf16.mxu0 0
    %6500 = vmatpush1.bf16.msra.mxu0 0
    %6501 = vmatprep.subr.bf16.mxu0 0
    %6502 = vmatpush1.bf16.msra.mxu0 0
    %6503 = vmatprep.subr.bf16.mxu0 0
    %6504 = vmatpush1.bf16.msra.mxu0 0
    %6505 = vmatprep.subr.bf16.mxu0 0
    %6506 = vmatpush1.bf16.msra.mxu0 0
    %6507 = vmatprep.subr.bf16.mxu0 0
    %6508 = vmatpush1.bf16.msra.mxu0 0
    %6509 = vmatprep.mubr.bf16.mxu0 0
    %6510 = vmatmul.mubr.bf16.gmra.mrb[0].mxu0 %v6473
    %v6511 = vpop.f32.mrb[0].mxu0
    %v6512 = vadd.f32 0.0, %v6511
    %v6513 = vpop.f32.mrb[0].mxu0
    %v6514 = vpop.f32.mrb[0].mxu0
    %v6515 = vadd.f32 0.0, %v6514
    %v6516 = vpop.f32.mrb[0].mxu0
    %6517 = vmatprep.mubr.bf16.mxu0 0
    %6518 = vmatmul.mubr.bf16.gmra.mrb[0].mxu0 %v6474
    %v6519 = vpop.f32.mrb[0].mxu0
    %v6520 = vadd.f32 0.0, %v6519
    %v6521 = vpop.f32.mrb[0].mxu0
    %v6522 = vpop.f32.mrb[0].mxu0
    %v6523 = vadd.f32 0.0, %v6522
    %v6524 = vpop.f32.mrb[0].mxu0
    %6525 = vdwg.mxu0
    %v6526 = vpack.c.bf16 %v6515, %v6512
    %v6527 = vpack.c.bf16 %v6523, %v6520
    %v6532 = vunpack.c.l.b16 %v6461
    %v6533 = vunpack.c.l.b16 %v6462
    %v6534 = vunpack.c.l.b16 %v6463
    %v6535 = vunpack.c.l.b16 %v6464
    %v6536 = vpack.c.b16 %v6533, %v6532
    %v6537 = vpack.c.b16 %v6535, %v6534
    %v6541 = vsel %vm5274, %v6526, 0
    %v6544 = vsel %vm5274, %v6527, 0
    %6546 = vmatprep.subr.bf16.mxu0 0
    %6547 = vmatpush1.bf16.msra.mxu0 %v6536
    %6548 = vmatprep.subr.bf16.mxu0 0
    %6549 = vmatpush1.bf16.msra.mxu0 %v6537
    %6550 = vmatprep.subr.bf16.mxu0 0
    %6551 = vmatpush1.bf16.msra.mxu0 0
    %6552 = vmatprep.subr.bf16.mxu0 0
    %6553 = vmatpush1.bf16.msra.mxu0 0
    %6554 = vmatprep.subr.bf16.mxu0 0
    %6555 = vmatpush1.bf16.msra.mxu0 0
    %6556 = vmatprep.subr.bf16.mxu0 0
    %6557 = vmatpush1.bf16.msra.mxu0 0
    %6558 = vmatprep.subr.bf16.mxu0 0
    %6559 = vmatpush1.bf16.msra.mxu0 0
    %6560 = vmatprep.subr.bf16.mxu0 0
    %6561 = vmatpush1.bf16.msra.mxu0 0
    %6562 = vmatprep.subr.bf16.mxu0 0
    %6563 = vmatpush1.bf16.msra.mxu0 0
    %6564 = vmatprep.subr.bf16.mxu0 0
    %6565 = vmatpush1.bf16.msra.mxu0 0
    %6566 = vmatprep.subr.bf16.mxu0 0
    %6567 = vmatpush1.bf16.msra.mxu0 0
    %6568 = vmatprep.subr.bf16.mxu0 0
    %6569 = vmatpush1.bf16.msra.mxu0 0
    %6570 = vmatprep.subr.bf16.mxu0 0
    %6571 = vmatpush1.bf16.msra.mxu0 0
    %6572 = vmatprep.subr.bf16.mxu0 0
    %6573 = vmatpush1.bf16.msra.mxu0 0
    %6574 = vmatprep.subr.bf16.mxu0 0
    %6575 = vmatpush1.bf16.msra.mxu0 0
    %6576 = vmatprep.subr.bf16.mxu0 0
    %6577 = vmatpush1.bf16.msra.mxu0 0
    %6578 = vmatprep.mubr.bf16.mxu0 0
    %6579 = vmatmul.mubr.bf16.gmra.mrb[0].mxu0 %v6541
    %v6580 = vpop.f32.mrb[0].mxu0
    %v6581 = vadd.f32 0.0, %v6580
    %v6582 = vpop.f32.mrb[0].mxu0
    %v6583 = vpop.f32.mrb[0].mxu0
    %v6584 = vadd.f32 0.0, %v6583
    %v6585 = vpop.f32.mrb[0].mxu0
    %6586 = vmatprep.mubr.bf16.mxu0 0
    %6587 = vmatmul.mubr.bf16.gmra.mrb[0].mxu0 %v6544
    %v6588 = vpop.f32.mrb[0].mxu0
    %v6589 = vadd.f32 0.0, %v6588
    %v6590 = vpop.f32.mrb[0].mxu0
    %v6591 = vpop.f32.mrb[0].mxu0
    %v6592 = vadd.f32 0.0, %v6591
    %v6593 = vpop.f32.mrb[0].mxu0
    %6594 = vdwg.mxu0
    %v6595 = vadd.f32 %v6453, %v6581
    %v6596 = vadd.f32 %v6454, %v6584
    %v6597 = vadd.f32 %v6455, %v6589
    %v6598 = vadd.f32 %v6456, %v6592
    %v6599 = vld [vmem:[#allocation8 + $0x80] sm:$0xf]
    %v6600 = vld [vmem:[#allocation8 + $0x84] sm:$0xf]
    %v6601 = vld [vmem:[#allocation8 + $0x88] sm:$0xf]
    %v6602 = vld [vmem:[#allocation8 + $0x8c] sm:$0xf]
    %v6603 = vld [vmem:[%s6 + $0x80] sm:$0xf]
    %v6604 = vld [vmem:[%s6 + $0x84] sm:$0xf]
    %v6605 = vld [vmem:[%s6 + $0x88] sm:$0xf]
    %v6606 = vld [vmem:[%s6 + $0x8c] sm:$0xf]
    %v6611 = vunpack.c.l.b16 %v6599
    %v6612 = vunpack.c.l.b16 %v6600
    %v6613 = vunpack.c.l.b16 %v6601
    %v6614 = vunpack.c.l.b16 %v6602
    %v6615 = vpack.c.b16 %v6612, %v6611
    %v6616 = vpack.c.b16 %v6614, %v6613
    %6619 = vmatprep.subr.bf16.mxu0 0
    %6620 = vmatpush1.bf16.msra.mxu0 %v5463
    %6621 = vmatprep.subr.bf16.mxu0 0
    %6622 = vmatpush1.bf16.msra.mxu0 %v5464
    %6623 = vmatprep.subr.bf16.mxu0 0
    %6624 = vmatpush1.bf16.msra.mxu0 %v5465
    %6625 = vmatprep.subr.bf16.mxu0 0
    %6626 = vmatpush1.bf16.msra.mxu0 %v5466
    %6627 = vmatprep.subr.bf16.mxu0 0
    %6628 = vmatpush1.bf16.msra.mxu0 %v5467
    %6629 = vmatprep.subr.bf16.mxu0 0
    %6630 = vmatpush1.bf16.msra.mxu0 %v5468
    %6631 = vmatprep.subr.bf16.mxu0 0
    %6632 = vmatpush1.bf16.msra.mxu0 %v5469
    %6633 = vmatprep.subr.bf16.mxu0 0
    %6634 = vmatpush1.bf16.msra.mxu0 %v5470
    %6635 = vmatprep.subr.bf16.mxu0 0
    %6636 = vmatpush1.bf16.msra.mxu0 0
    %6637 = vmatprep.subr.bf16.mxu0 0
    %6638 = vmatpush1.bf16.msra.mxu0 0
    %6639 = vmatprep.subr.bf16.mxu0 0
    %6640 = vmatpush1.bf16.msra.mxu0 0
    %6641 = vmatprep.subr.bf16.mxu0 0
    %6642 = vmatpush1.bf16.msra.mxu0 0
    %6643 = vmatprep.subr.bf16.mxu0 0
    %6644 = vmatpush1.bf16.msra.mxu0 0
    %6645 = vmatprep.subr.bf16.mxu0 0
    %6646 = vmatpush1.bf16.msra.mxu0 0
    %6647 = vmatprep.subr.bf16.mxu0 0
    %6648 = vmatpush1.bf16.msra.mxu0 0
    %6649 = vmatprep.subr.bf16.mxu0 0
    %6650 = vmatpush1.bf16.msra.mxu0 0
    %6651 = vmatprep.mubr.bf16.mxu0 0
    %6652 = vmatmul.mubr.bf16.gmra.mrb[0].mxu0 %v6615
    %v6653 = vpop.f32.mrb[0].mxu0
    %v6654 = vadd.f32 0.0, %v6653
    %v6655 = vpop.f32.mrb[0].mxu0
    %v6656 = vpop.f32.mrb[0].mxu0
    %v6657 = vadd.f32 0.0, %v6656
    %v6658 = vpop.f32.mrb[0].mxu0
    %6659 = vmatprep.mubr.bf16.mxu0 0
    %6660 = vmatmul.mubr.bf16.gmra.mrb[0].mxu0 %v6616
    %v6661 = vpop.f32.mrb[0].mxu0
    %v6662 = vadd.f32 0.0, %v6661
    %v6663 = vpop.f32.mrb[0].mxu0
    %v6664 = vpop.f32.mrb[0].mxu0
    %v6665 = vadd.f32 0.0, %v6664
    %v6666 = vpop.f32.mrb[0].mxu0
    %6667 = vdwg.mxu0
    %v6668 = vpack.c.bf16 %v6657, %v6654
    %v6669 = vpack.c.bf16 %v6665, %v6662
    %v6674 = vunpack.c.l.b16 %v6603
    %v6675 = vunpack.c.l.b16 %v6604
    %v6676 = vunpack.c.l.b16 %v6605
    %v6677 = vunpack.c.l.b16 %v6606
    %v6678 = vpack.c.b16 %v6675, %v6674
    %v6679 = vpack.c.b16 %v6677, %v6676
    %v6683 = vsel %vm5274, %v6668, 0
    %v6686 = vsel %vm5274, %v6669, 0
    %6688 = vmatprep.subr.bf16.mxu0 0
    %6689 = vmatpush1.bf16.msra.mxu0 %v6678
    %6690 = vmatprep.subr.bf16.mxu0 0
    %6691 = vmatpush1.bf16.msra.mxu0 %v6679
    %6692 = vmatprep.subr.bf16.mxu0 0
    %6693 = vmatpush1.bf16.msra.mxu0 0
    %6694 = vmatprep.subr.bf16.mxu0 0
    %6695 = vmatpush1.bf16.msra.mxu0 0
    %6696 = vmatprep.subr.bf16.mxu0 0
    %6697 = vmatpush1.bf16.msra.mxu0 0
    %6698 = vmatprep.subr.bf16.mxu0 0
    %6699 = vmatpush1.bf16.msra.mxu0 0
    %6700 = vmatprep.subr.bf16.mxu0 0
    %6701 = vmatpush1.bf16.msra.mxu0 0
    %6702 = vmatprep.subr.bf16.mxu0 0
    %6703 = vmatpush1.bf16.msra.mxu0 0
    %6704 = vmatprep.subr.bf16.mxu0 0
    %6705 = vmatpush1.bf16.msra.mxu0 0
    %6706 = vmatprep.subr.bf16.mxu0 0
    %6707 = vmatpush1.bf16.msra.mxu0 0
    %6708 = vmatprep.subr.bf16.mxu0 0
    %6709 = vmatpush1.bf16.msra.mxu0 0
    %6710 = vmatprep.subr.bf16.mxu0 0
    %6711 = vmatpush1.bf16.msra.mxu0 0
    %6712 = vmatprep.subr.bf16.mxu0 0
    %6713 = vmatpush1.bf16.msra.mxu0 0
    %6714 = vmatprep.subr.bf16.mxu0 0
    %6715 = vmatpush1.bf16.msra.mxu0 0
    %6716 = vmatprep.subr.bf16.mxu0 0
    %6717 = vmatpush1.bf16.msra.mxu0 0
    %6718 = vmatprep.subr.bf16.mxu0 0
    %6719 = vmatpush1.bf16.msra.mxu0 0
    %6720 = vmatprep.mubr.bf16.mxu0 0
    %6721 = vmatmul.mubr.bf16.gmra.mrb[0].mxu0 %v6683
    %v6722 = vpop.f32.mrb[0].mxu0
    %v6723 = vadd.f32 0.0, %v6722
    %v6724 = vpop.f32.mrb[0].mxu0
    %v6725 = vpop.f32.mrb[0].mxu0
    %v6726 = vadd.f32 0.0, %v6725
    %v6727 = vpop.f32.mrb[0].mxu0
    %6728 = vmatprep.mubr.bf16.mxu0 0
    %6729 = vmatmul.mubr.bf16.gmra.mrb[0].mxu0 %v6686
    %v6730 = vpop.f32.mrb[0].mxu0
    %v6731 = vadd.f32 0.0, %v6730
    %v6732 = vpop.f32.mrb[0].mxu0
    %v6733 = vpop.f32.mrb[0].mxu0
    %v6734 = vadd.f32 0.0, %v6733
    %v6735 = vpop.f32.mrb[0].mxu0
    %6736 = vdwg.mxu0
    %v6737 = vadd.f32 %v6595, %v6723
    %v6738 = vadd.f32 %v6596, %v6726
    %v6739 = vadd.f32 %v6597, %v6731
    %v6740 = vadd.f32 %v6598, %v6734
    %vm6741 = vcmask 523264
    %v6742 = vsel %vm6741, %v6737, 0.0
    %v6743 = vsel %vm6741, %v6738, 0.0
    %v6744 = vadd.f32 %v6742, %v6743
    %v6745 = vsel %vm6741, %v6739, 0.0
    %v6746 = vadd.f32 %v6744, %v6745
    %v6747 = vsel %vm6741, %v6740, 0.0
    %v6748 = vadd.f32 %v6746, %v6747
    %v6749 = vrot.slane %v6748, 4
    %v6750 = vadd.f32 %v6748, %v6749
    %v6751 = vrot.slane %v6750, 2
    %v6752 = vadd.f32 %v6750, %v6751
    %v6753 = vrot.slane %v6752, 1
    %v6754 = vadd.f32 %v6752, %v6753
    %v6755 = vmul.f32 %v6754, 0.03125
    %v6756 = vsub.f32 %v6737, %v6755
    %v6757 = vsub.f32 %v6738, %v6755
    %v6758 = vsub.f32 %v6739, %v6755
    %v6759 = vsub.f32 %v6740, %v6755
    %v6760 = vmul.f32 %v6756, %v6756
    %v6761 = vmul.f32 %v6757, %v6757
    %v6762 = vmul.f32 %v6758, %v6758
    %v6763 = vmul.f32 %v6759, %v6759
    %v6764 = vsel %vm6741, %v6760, 0.0
    %v6765 = vsel %vm6741, %v6761, 0.0
    %v6766 = vadd.f32 %v6764, %v6765
    %v6767 = vsel %vm6741, %v6762, 0.0
    %v6768 = vadd.f32 %v6766, %v6767
    %v6769 = vsel %vm6741, %v6763, 0.0
    %v6770 = vadd.f32 %v6768, %v6769
    %v6771 = vrot.slane %v6770, 4
    %v6772 = vadd.f32 %v6770, %v6771
    %v6773 = vrot.slane %v6772, 2
    %v6774 = vadd.f32 %v6772, %v6773
    %v6775 = vrot.slane %v6774, 1
    %v6776 = vadd.f32 %v6774, %v6775
    %v6777 = vmul.f32 %v6776, 0.03125
    %v6778 = vadd.f32 %v6777, 1e-05
    %v6779 = vrsqrt.pop %v6778
    %v6780 = vmul.f32 %v6756, %v6779
    %v6781 = vmul.f32 %v6757, %v6779
    %v6782 = vmul.f32 %v6758, %v6779
    %v6783 = vmul.f32 %v6759, %v6779
    %v6784 = vld [vmem:[#allocation10] sm:$0x1]
    %v6786 = vlaneseq
    %v6787 = vshrl.u32 %v6786, 7
    %v6788 = vsub.s32 0, %v6787
    %v6789 = vrot.slane %v6784, %v6788
    %v6791 = vmul.f32 %v6780, %v6789
    %v6792 = vmul.f32 %v6781, %v6789
    %v6793 = vmul.f32 %v6782, %v6789
    %v6794 = vmul.f32 %v6783, %v6789
    %v6795 = vld [vmem:[#allocation11] sm:$0x1]
    %v6797 = vlaneseq
    %v6798 = vshrl.u32 %v6797, 7
    %v6799 = vsub.s32 0, %v6798
    %v6800 = vrot.slane %v6795, %v6799
    %v6802 = vadd.f32 %v6791, %v6800
    %v6803 = vadd.f32 %v6792, %v6800
    %v6804 = vadd.f32 %v6793, %v6800
    %v6805 = vadd.f32 %v6794, %v6800
    %v6806 = vmax.f32 %v6802, 0.0
    %v6807 = vmax.f32 %v6803, 0.0
    %v6808 = vmax.f32 %v6804, 0.0
    %v6809 = vmax.f32 %v6805, 0.0
    %v6810 = vpack.c.bf16 %v6807, %v6806
    %v6811 = vpack.c.bf16 %v6809, %v6808
    %v6812 = vld [vmem:[%s9] sm:$0xf]
    %v6813 = vld [vmem:[#allocation13] sm:$0xf]
    %v6814 = vld [vmem:[#allocation13 + $0x4] sm:$0xf]
    %v6815 = vld [vmem:[#allocation13 + $0x8] sm:$0xf]
    %v6816 = vld [vmem:[#allocation13 + $0xc] sm:$0xf]
    %v6817 = vld [vmem:[#allocation13 + $0x10] sm:$0xf]
    %v6818 = vld [vmem:[#allocation13 + $0x14] sm:$0xf]
    %v6819 = vld [vmem:[#allocation13 + $0x18] sm:$0xf]
    %v6820 = vld [vmem:[#allocation13 + $0x1c] sm:$0xf]
    %v6822 = vsel %vm5274, %v6812, 0
    %6824 = vmatprep.subr.bf16.mxu0 0
    %6825 = vmatpush1.bf16.msra.mxu0 %v6810
    %6826 = vmatprep.subr.bf16.mxu0 0
    %6827 = vmatpush1.bf16.msra.mxu0 %v6811
    %6828 = vmatprep.subr.bf16.mxu0 0
    %6829 = vmatpush1.bf16.msra.mxu0 0
    %6830 = vmatprep.subr.bf16.mxu0 0
    %6831 = vmatpush1.bf16.msra.mxu0 0
    %6832 = vmatprep.subr.bf16.mxu0 0
    %6833 = vmatpush1.bf16.msra.mxu0 0
    %6834 = vmatprep.subr.bf16.mxu0 0
    %6835 = vmatpush1.bf16.msra.mxu0 0
    %6836 = vmatprep.subr.bf16.mxu0 0
    %6837 = vmatpush1.bf16.msra.mxu0 0
    %6838 = vmatprep.subr.bf16.mxu0 0
    %6839 = vmatpush1.bf16.msra.mxu0 0
    %6840 = vmatprep.subr.bf16.mxu0 0
    %6841 = vmatpush1.bf16.msra.mxu0 0
    %6842 = vmatprep.subr.bf16.mxu0 0
    %6843 = vmatpush1.bf16.msra.mxu0 0
    %6844 = vmatprep.subr.bf16.mxu0 0
    %6845 = vmatpush1.bf16.msra.mxu0 0
    %6846 = vmatprep.subr.bf16.mxu0 0
    %6847 = vmatpush1.bf16.msra.mxu0 0
    %6848 = vmatprep.subr.bf16.mxu0 0
    %6849 = vmatpush1.bf16.msra.mxu0 0
    %6850 = vmatprep.subr.bf16.mxu0 0
    %6851 = vmatpush1.bf16.msra.mxu0 0
    %6852 = vmatprep.subr.bf16.mxu0 0
    %6853 = vmatpush1.bf16.msra.mxu0 0
    %6854 = vmatprep.subr.bf16.mxu0 0
    %6855 = vmatpush1.bf16.msra.mxu0 0
    %6856 = vmatprep.mubr.bf16.mxu0 0
    %6857 = vmatmul.mubr.bf16.gmra.mrb[0].mxu0 %v6822
    %v6858 = vpop.f32.mrb[0].mxu0
    %v6859 = vadd.f32 0.0, %v6858
    %v6860 = vpop.f32.mrb[0].mxu0
    %v6861 = vpop.f32.mrb[0].mxu0
    %v6862 = vpop.f32.mrb[0].mxu0
    %6863 = vdwg.mxu0
    %v6864 = vpack.c.bf16 %v6859, %v6859
    %v6865 = vld [vmem:[%s9 + $0x4] sm:$0xf]
    %v6866 = vld [vmem:[#allocation13 + $0x20] sm:$0xf]
    %v6867 = vld [vmem:[#allocation13 + $0x24] sm:$0xf]
    %v6868 = vld [vmem:[#allocation13 + $0x28] sm:$0xf]
    %v6869 = vld [vmem:[#allocation13 + $0x2c] sm:$0xf]
    %v6870 = vld [vmem:[#allocation13 + $0x30] sm:$0xf]
    %v6871 = vld [vmem:[#allocation13 + $0x34] sm:$0xf]
    %v6872 = vld [vmem:[#allocation13 + $0x38] sm:$0xf]
    %v6873 = vld [vmem:[#allocation13 + $0x3c] sm:$0xf]
    %v6875 = vsel %vm5274, %v6865, 0
    %6877 = vmatprep.subr.bf16.mxu0 0
    %6878 = vmatpush1.bf16.msra.mxu0 %v6810
    %6879 = vmatprep.subr.bf16.mxu0 0
    %6880 = vmatpush1.bf16.msra.mxu0 %v6811
    %6881 = vmatprep.subr.bf16.mxu0 0
    %6882 = vmatpush1.bf16.msra.mxu0 0
    %6883 = vmatprep.subr.bf16.mxu0 0
    %6884 = vmatpush1.bf16.msra.mxu0 0
    %6885 = vmatprep.subr.bf16.mxu0 0
    %6886 = vmatpush1.bf16.msra.mxu0 0
    %6887 = vmatprep.subr.bf16.mxu0 0
    %6888 = vmatpush1.bf16.msra.mxu0 0
    %6889 = vmatprep.subr.bf16.mxu0 0
    %6890 = vmatpush1.bf16.msra.mxu0 0
    %6891 = vmatprep.subr.bf16.mxu0 0
    %6892 = vmatpush1.bf16.msra.mxu0 0
    %6893 = vmatprep.subr.bf16.mxu0 0
    %6894 = vmatpush1.bf16.msra.mxu0 0
    %6895 = vmatprep.subr.bf16.mxu0 0
    %6896 = vmatpush1.bf16.msra.mxu0 0
    %6897 = vmatprep.subr.bf16.mxu0 0
    %6898 = vmatpush1.bf16.msra.mxu0 0
    %6899 = vmatprep.subr.bf16.mxu0 0
    %6900 = vmatpush1.bf16.msra.mxu0 0
    %6901 = vmatprep.subr.bf16.mxu0 0
    %6902 = vmatpush1.bf16.msra.mxu0 0
    %6903 = vmatprep.subr.bf16.mxu0 0
    %6904 = vmatpush1.bf16.msra.mxu0 0
    %6905 = vmatprep.subr.bf16.mxu0 0
    %6906 = vmatpush1.bf16.msra.mxu0 0
    %6907 = vmatprep.subr.bf16.mxu0 0
    %6908 = vmatpush1.bf16.msra.mxu0 0
    %6909 = vmatprep.mubr.bf16.mxu0 0
    %6910 = vmatmul.mubr.bf16.gmra.mrb[0].mxu0 %v6875
    %v6911 = vpop.f32.mrb[0].mxu0
    %v6912 = vadd.f32 0.0, %v6911
    %v6913 = vpop.f32.mrb[0].mxu0
    %v6914 = vpop.f32.mrb[0].mxu0
    %v6915 = vpop.f32.mrb[0].mxu0
    %6916 = vdwg.mxu0
    %v6917 = vpack.c.bf16 %v6912, %v6912
    %v6926 = vunpack.c.l.b16 %v6866
    %v6927 = vunpack.c.l.b16 %v6867
    %v6928 = vunpack.c.l.b16 %v6868
    %v6929 = vunpack.c.l.b16 %v6869
    %v6930 = vunpack.c.l.b16 %v6870
    %v6931 = vunpack.c.l.b16 %v6871
    %v6932 = vunpack.c.l.b16 %v6872
    %v6933 = vunpack.c.l.b16 %v6873
    %v6934 = vpack.c.b16 %v6927, %v6926
    %v6935 = vpack.c.b16 %v6929, %v6928
    %v6936 = vpack.c.b16 %v6931, %v6930
    %v6937 = vpack.c.b16 %v6933, %v6932
    %v6943 = vsel %vm6741, %v6917, 0
    %6945 = vmatprep.subr.bf16.mxu0 0
    %6946 = vmatpush1.bf16.msra.mxu0 %v6934
    %6947 = vmatprep.subr.bf16.mxu0 0
    %6948 = vmatpush1.bf16.msra.mxu0 %v6935
    %6949 = vmatprep.subr.bf16.mxu0 0
    %6950 = vmatpush1.bf16.msra.mxu0 %v6936
    %6951 = vmatprep.subr.bf16.mxu0 0
    %6952 = vmatpush1.bf16.msra.mxu0 %v6937
    %6953 = vmatprep.subr.bf16.mxu0 0
    %6954 = vmatpush1.bf16.msra.mxu0 0
    %6955 = vmatprep.subr.bf16.mxu0 0
    %6956 = vmatpush1.bf16.msra.mxu0 0
    %6957 = vmatprep.subr.bf16.mxu0 0
    %6958 = vmatpush1.bf16.msra.mxu0 0
    %6959 = vmatprep.subr.bf16.mxu0 0
    %6960 = vmatpush1.bf16.msra.mxu0 0
    %6961 = vmatprep.subr.bf16.mxu0 0
    %6962 = vmatpush1.bf16.msra.mxu0 0
    %6963 = vmatprep.subr.bf16.mxu0 0
    %6964 = vmatpush1.bf16.msra.mxu0 0
    %6965 = vmatprep.subr.bf16.mxu0 0
    %6966 = vmatpush1.bf16.msra.mxu0 0
    %6967 = vmatprep.subr.bf16.mxu0 0
    %6968 = vmatpush1.bf16.msra.mxu0 0
    %6969 = vmatprep.subr.bf16.mxu0 0
    %6970 = vmatpush1.bf16.msra.mxu0 0
    %6971 = vmatprep.subr.bf16.mxu0 0
    %6972 = vmatpush1.bf16.msra.mxu0 0
    %6973 = vmatprep.subr.bf16.mxu0 0
    %6974 = vmatpush1.bf16.msra.mxu0 0
    %6975 = vmatprep.subr.bf16.mxu0 0
    %6976 = vmatpush1.bf16.msra.mxu0 0
    %6977 = vmatprep.mubr.bf16.mxu0 0
    %6978 = vmatmul.mubr.bf16.gmra.mrb[0].mxu0 %v6943
    %v6979 = vpop.f32.mrb[0].mxu0
    %v6980 = vadd.f32 0.0, %v6979
    %v6981 = vpop.f32.mrb[0].mxu0
    %v6982 = vpop.f32.mrb[0].mxu0
    %v6983 = vpop.f32.mrb[0].mxu0
    %6984 = vdwg.mxu0
    %v6993 = vunpack.c.l.b16 %v6813
    %v6994 = vunpack.c.l.b16 %v6814
    %v6995 = vunpack.c.l.b16 %v6815
    %v6996 = vunpack.c.l.b16 %v6816
    %v6997 = vunpack.c.l.b16 %v6817
    %v6998 = vunpack.c.l.b16 %v6818
    %v6999 = vunpack.c.l.b16 %v6819
    %v7000 = vunpack.c.l.b16 %v6820
    %v7001 = vpack.c.b16 %v6994, %v6993
    %v7002 = vpack.c.b16 %v6996, %v6995
    %v7003 = vpack.c.b16 %v6998, %v6997
    %v7004 = vpack.c.b16 %v7000, %v6999
    %v7010 = vsel %vm6741, %v6864, 0
    %7012 = vmatprep.subr.bf16.mxu0 0
    %7013 = vmatpush1.bf16.msra.mxu0 %v7001
    %7014 = vmatprep.subr.bf16.mxu0 0
    %7015 = vmatpush1.bf16.msra.mxu0 %v7002
    %7016 = vmatprep.subr.bf16.mxu0 0
    %7017 = vmatpush1.bf16.msra.mxu0 %v7003
    %7018 = vmatprep.subr.bf16.mxu0 0
    %7019 = vmatpush1.bf16.msra.mxu0 %v7004
    %7020 = vmatprep.subr.bf16.mxu0 0
    %7021 = vmatpush1.bf16.msra.mxu0 0
    %7022 = vmatprep.subr.bf16.mxu0 0
    %7023 = vmatpush1.bf16.msra.mxu0 0
    %7024 = vmatprep.subr.bf16.mxu0 0
    %7025 = vmatpush1.bf16.msra.mxu0 0
    %7026 = vmatprep.subr.bf16.mxu0 0
    %7027 = vmatpush1.bf16.msra.mxu0 0
    %7028 = vmatprep.subr.bf16.mxu0 0
    %7029 = vmatpush1.bf16.msra.mxu0 0
    %7030 = vmatprep.subr.bf16.mxu0 0
    %7031 = vmatpush1.bf16.msra.mxu0 0
    %7032 = vmatprep.subr.bf16.mxu0 0
    %7033 = vmatpush1.bf16.msra.mxu0 0
    %7034 = vmatprep.subr.bf16.mxu0 0
    %7035 = vmatpush1.bf16.msra.mxu0 0
    %7036 = vmatprep.subr.bf16.mxu0 0
    %7037 = vmatpush1.bf16.msra.mxu0 0
    %7038 = vmatprep.subr.bf16.mxu0 0
    %7039 = vmatpush1.bf16.msra.mxu0 0
    %7040 = vmatprep.subr.bf16.mxu0 0
    %7041 = vmatpush1.bf16.msra.mxu0 0
    %7042 = vmatprep.subr.bf16.mxu0 0
    %7043 = vmatpush1.bf16.msra.mxu0 0
    %7044 = vmatprep.mubr.bf16.mxu0 0
    %7045 = vmatmul.mubr.bf16.gmra.mrb[0].mxu0 %v7010
    %v7046 = vpop.f32.mrb[0].mxu0
    %v7047 = vadd.f32 %v6980, %v7046
    %v7048 = vpop.f32.mrb[0].mxu0
    %v7049 = vpop.f32.mrb[0].mxu0
    %v7050 = vpop.f32.mrb[0].mxu0
    %7051 = vdwg.mxu0
    %v7052 = vld [vmem:[%s9 + $0x8] sm:$0xf]
    %v7053 = vld [vmem:[#allocation13 + $0x40] sm:$0xf]
    %v7054 = vld [vmem:[#allocation13 + $0x44] sm:$0xf]
    %v7055 = vld [vmem:[#allocation13 + $0x48] sm:$0xf]
    %v7056 = vld [vmem:[#allocation13 + $0x4c] sm:$0xf]
    %v7057 = vld [vmem:[#allocation13 + $0x50] sm:$0xf]
    %v7058 = vld [vmem:[#allocation13 + $0x54] sm:$0xf]
    %v7059 = vld [vmem:[#allocation13 + $0x58] sm:$0xf]
    %v7060 = vld [vmem:[#allocation13 + $0x5c] sm:$0xf]
    %v7062 = vsel %vm5274, %v7052, 0
    %7064 = vmatprep.subr.bf16.mxu0 0
    %7065 = vmatpush1.bf16.msra.mxu0 %v6810
    %7066 = vmatprep.subr.bf16.mxu0 0
    %7067 = vmatpush1.bf16.msra.mxu0 %v6811
    %7068 = vmatprep.subr.bf16.mxu0 0
    %7069 = vmatpush1.bf16.msra.mxu0 0
    %7070 = vmatprep.subr.bf16.mxu0 0
    %7071 = vmatpush1.bf16.msra.mxu0 0
    %7072 = vmatprep.subr.bf16.mxu0 0
    %7073 = vmatpush1.bf16.msra.mxu0 0
    %7074 = vmatprep.subr.bf16.mxu0 0
    %7075 = vmatpush1.bf16.msra.mxu0 0
    %7076 = vmatprep.subr.bf16.mxu0 0
    %7077 = vmatpush1.bf16.msra.mxu0 0
    %7078 = vmatprep.subr.bf16.mxu0 0
    %7079 = vmatpush1.bf16.msra.mxu0 0
    %7080 = vmatprep.subr.bf16.mxu0 0
    %7081 = vmatpush1.bf16.msra.mxu0 0
    %7082 = vmatprep.subr.bf16.mxu0 0
    %7083 = vmatpush1.bf16.msra.mxu0 0
    %7084 = vmatprep.subr.bf16.mxu0 0
    %7085 = vmatpush1.bf16.msra.mxu0 0
    %7086 = vmatprep.subr.bf16.mxu0 0
    %7087 = vmatpush1.bf16.msra.mxu0 0
    %7088 = vmatprep.subr.bf16.mxu0 0
    %7089 = vmatpush1.bf16.msra.mxu0 0
    %7090 = vmatprep.subr.bf16.mxu0 0
    %7091 = vmatpush1.bf16.msra.mxu0 0
    %7092 = vmatprep.subr.bf16.mxu0 0
    %7093 = vmatpush1.bf16.msra.mxu0 0
    %7094 = vmatprep.subr.bf16.mxu0 0
    %7095 = vmatpush1.bf16.msra.mxu0 0
    %7096 = vmatprep.mubr.bf16.mxu0 0
    %7097 = vmatmul.mubr.bf16.gmra.mrb[0].mxu0 %v7062
    %v7098 = vpop.f32.mrb[0].mxu0
    %v7099 = vadd.f32 0.0, %v7098
    %v7100 = vpop.f32.mrb[0].mxu0
    %v7101 = vpop.f32.mrb[0].mxu0
    %v7102 = vpop.f32.mrb[0].mxu0
    %7103 = vdwg.mxu0
    %v7104 = vpack.c.bf16 %v7099, %v7099
    %v7113 = vunpack.c.l.b16 %v7053
    %v7114 = vunpack.c.l.b16 %v7054
    %v7115 = vunpack.c.l.b16 %v7055
    %v7116 = vunpack.c.l.b16 %v7056
    %v7117 = vunpack.c.l.b16 %v7057
    %v7118 = vunpack.c.l.b16 %v7058
    %v7119 = vunpack.c.l.b16 %v7059
    %v7120 = vunpack.c.l.b16 %v7060
    %v7121 = vpack.c.b16 %v7114, %v7113
    %v7122 = vpack.c.b16 %v7116, %v7115
    %v7123 = vpack.c.b16 %v7118, %v7117
    %v7124 = vpack.c.b16 %v7120, %v7119
    %v7130 = vsel %vm6741, %v7104, 0
    %7132 = vmatprep.subr.bf16.mxu0 0
    %7133 = vmatpush1.bf16.msra.mxu0 %v7121
    %7134 = vmatprep.subr.bf16.mxu0 0
    %7135 = vmatpush1.bf16.msra.mxu0 %v7122
    %7136 = vmatprep.subr.bf16.mxu0 0
    %7137 = vmatpush1.bf16.msra.mxu0 %v7123
    %7138 = vmatprep.subr.bf16.mxu0 0
    %7139 = vmatpush1.bf16.msra.mxu0 %v7124
    %7140 = vmatprep.subr.bf16.mxu0 0
    %7141 = vmatpush1.bf16.msra.mxu0 0
    %7142 = vmatprep.subr.bf16.mxu0 0
    %7143 = vmatpush1.bf16.msra.mxu0 0
    %7144 = vmatprep.subr.bf16.mxu0 0
    %7145 = vmatpush1.bf16.msra.mxu0 0
    %7146 = vmatprep.subr.bf16.mxu0 0
    %7147 = vmatpush1.bf16.msra.mxu0 0
    %7148 = vmatprep.subr.bf16.mxu0 0
    %7149 = vmatpush1.bf16.msra.mxu0 0
    %7150 = vmatprep.subr.bf16.mxu0 0
    %7151 = vmatpush1.bf16.msra.mxu0 0
    %7152 = vmatprep.subr.bf16.mxu0 0
    %7153 = vmatpush1.bf16.msra.mxu0 0
    %7154 = vmatprep.subr.bf16.mxu0 0
    %7155 = vmatpush1.bf16.msra.mxu0 0
    %7156 = vmatprep.subr.bf16.mxu0 0
    %7157 = vmatpush1.bf16.msra.mxu0 0
    %7158 = vmatprep.subr.bf16.mxu0 0
    %7159 = vmatpush1.bf16.msra.mxu0 0
    %7160 = vmatprep.subr.bf16.mxu0 0
    %7161 = vmatpush1.bf16.msra.mxu0 0
    %7162 = vmatprep.subr.bf16.mxu0 0
    %7163 = vmatpush1.bf16.msra.mxu0 0
    %7164 = vmatprep.mubr.bf16.mxu0 0
    %7165 = vmatmul.mubr.bf16.gmra.mrb[0].mxu0 %v7130
    %v7166 = vpop.f32.mrb[0].mxu0
    %v7167 = vadd.f32 0.0, %v7166
    %v7168 = vpop.f32.mrb[0].mxu0
    %v7169 = vpop.f32.mrb[0].mxu0
    %v7170 = vpop.f32.mrb[0].mxu0
    %7171 = vdwg.mxu0
    %v7172 = vadd.f32 %v7047, %v7167
    %v7173 = vld [vmem:[%s9 + $0xc] sm:$0xf]
    %v7174 = vld [vmem:[#allocation13 + $0x60] sm:$0xf]
    %v7175 = vld [vmem:[#allocation13 + $0x64] sm:$0xf]
    %v7176 = vld [vmem:[#allocation13 + $0x68] sm:$0xf]
    %v7177 = vld [vmem:[#allocation13 + $0x6c] sm:$0xf]
    %v7178 = vld [vmem:[#allocation13 + $0x70] sm:$0xf]
    %v7179 = vld [vmem:[#allocation13 + $0x74] sm:$0xf]
    %v7180 = vld [vmem:[#allocation13 + $0x78] sm:$0xf]
    %v7181 = vld [vmem:[#allocation13 + $0x7c] sm:$0xf]
    %v7183 = vsel %vm5274, %v7173, 0
    %7185 = vmatprep.subr.bf16.mxu0 0
    %7186 = vmatpush1.bf16.msra.mxu0 %v6810
    %7187 = vmatprep.subr.bf16.mxu0 0
    %7188 = vmatpush1.bf16.msra.mxu0 %v6811
    %7189 = vmatprep.subr.bf16.mxu0 0
    %7190 = vmatpush1.bf16.msra.mxu0 0
    %7191 = vmatprep.subr.bf16.mxu0 0
    %7192 = vmatpush1.bf16.msra.mxu0 0
    %7193 = vmatprep.subr.bf16.mxu0 0
    %7194 = vmatpush1.bf16.msra.mxu0 0
    %7195 = vmatprep.subr.bf16.mxu0 0
    %7196 = vmatpush1.bf16.msra.mxu0 0
    %7197 = vmatprep.subr.bf16.mxu0 0
    %7198 = vmatpush1.bf16.msra.mxu0 0
    %7199 = vmatprep.subr.bf16.mxu0 0
    %7200 = vmatpush1.bf16.msra.mxu0 0
    %7201 = vmatprep.subr.bf16.mxu0 0
    %7202 = vmatpush1.bf16.msra.mxu0 0
    %7203 = vmatprep.subr.bf16.mxu0 0
    %7204 = vmatpush1.bf16.msra.mxu0 0
    %7205 = vmatprep.subr.bf16.mxu0 0
    %7206 = vmatpush1.bf16.msra.mxu0 0
    %7207 = vmatprep.subr.bf16.mxu0 0
    %7208 = vmatpush1.bf16.msra.mxu0 0
    %7209 = vmatprep.subr.bf16.mxu0 0
    %7210 = vmatpush1.bf16.msra.mxu0 0
    %7211 = vmatprep.subr.bf16.mxu0 0
    %7212 = vmatpush1.bf16.msra.mxu0 0
    %7213 = vmatprep.subr.bf16.mxu0 0
    %7214 = vmatpush1.bf16.msra.mxu0 0
    %7215 = vmatprep.subr.bf16.mxu0 0
    %7216 = vmatpush1.bf16.msra.mxu0 0
    %7217 = vmatprep.mubr.bf16.mxu0 0
    %7218 = vmatmul.mubr.bf16.gmra.mrb[0].mxu0 %v7183
    %v7219 = vpop.f32.mrb[0].mxu0
    %v7220 = vadd.f32 0.0, %v7219
    %v7221 = vpop.f32.mrb[0].mxu0
    %v7222 = vpop.f32.mrb[0].mxu0
    %v7223 = vpop.f32.mrb[0].mxu0
    %7224 = vdwg.mxu0
    %v7225 = vpack.c.bf16 %v7220, %v7220
    %v7234 = vunpack.c.l.b16 %v7174
    %v7235 = vunpack.c.l.b16 %v7175
    %v7236 = vunpack.c.l.b16 %v7176
    %v7237 = vunpack.c.l.b16 %v7177
    %v7238 = vunpack.c.l.b16 %v7178
    %v7239 = vunpack.c.l.b16 %v7179
    %v7240 = vunpack.c.l.b16 %v7180
    %v7241 = vunpack.c.l.b16 %v7181
    %v7242 = vpack.c.b16 %v7235, %v7234
    %v7243 = vpack.c.b16 %v7237, %v7236
    %v7244 = vpack.c.b16 %v7239, %v7238
    %v7245 = vpack.c.b16 %v7241, %v7240
    %v7251 = vsel %vm6741, %v7225, 0
    %7253 = vmatprep.subr.bf16.mxu0 0
    %7254 = vmatpush1.bf16.msra.mxu0 %v7242
    %7255 = vmatprep.subr.bf16.mxu0 0
    %7256 = vmatpush1.bf16.msra.mxu0 %v7243
    %7257 = vmatprep.subr.bf16.mxu0 0
    %7258 = vmatpush1.bf16.msra.mxu0 %v7244
    %7259 = vmatprep.subr.bf16.mxu0 0
    %7260 = vmatpush1.bf16.msra.mxu0 %v7245
    %7261 = vmatprep.subr.bf16.mxu0 0
    %7262 = vmatpush1.bf16.msra.mxu0 0
    %7263 = vmatprep.subr.bf16.mxu0 0
    %7264 = vmatpush1.bf16.msra.mxu0 0
    %7265 = vmatprep.subr.bf16.mxu0 0
    %7266 = vmatpush1.bf16.msra.mxu0 0
    %7267 = vmatprep.subr.bf16.mxu0 0
    %7268 = vmatpush1.bf16.msra.mxu0 0
    %7269 = vmatprep.subr.bf16.mxu0 0
    %7270 = vmatpush1.bf16.msra.mxu0 0
    %7271 = vmatprep.subr.bf16.mxu0 0
    %7272 = vmatpush1.bf16.msra.mxu0 0
    %7273 = vmatprep.subr.bf16.mxu0 0
    %7274 = vmatpush1.bf16.msra.mxu0 0
    %7275 = vmatprep.subr.bf16.mxu0 0
    %7276 = vmatpush1.bf16.msra.mxu0 0
    %7277 = vmatprep.subr.bf16.mxu0 0
    %7278 = vmatpush1.bf16.msra.mxu0 0
    %7279 = vmatprep.subr.bf16.mxu0 0
    %7280 = vmatpush1.bf16.msra.mxu0 0
    %7281 = vmatprep.subr.bf16.mxu0 0
    %7282 = vmatpush1.bf16.msra.mxu0 0
    %7283 = vmatprep.subr.bf16.mxu0 0
    %7284 = vmatpush1.bf16.msra.mxu0 0
    %7285 = vmatprep.mubr.bf16.mxu0 0
    %7286 = vmatmul.mubr.bf16.gmra.mrb[0].mxu0 %v7251
    %v7287 = vpop.f32.mrb[0].mxu0
    %v7288 = vadd.f32 0.0, %v7287
    %v7289 = vpop.f32.mrb[0].mxu0
    %v7290 = vpop.f32.mrb[0].mxu0
    %v7291 = vpop.f32.mrb[0].mxu0
    %7292 = vdwg.mxu0
    %v7293 = vadd.f32 %v7172, %v7288
    %v7294 = vld [vmem:[%s9 + $0x10] sm:$0xf]
    %v7295 = vld [vmem:[#allocation13 + $0x80] sm:$0xf]
    %v7296 = vld [vmem:[#allocation13 + $0x84] sm:$0xf]
    %v7297 = vld [vmem:[#allocation13 + $0x88] sm:$0xf]
    %v7298 = vld [vmem:[#allocation13 + $0x8c] sm:$0xf]
    %v7299 = vld [vmem:[#allocation13 + $0x90] sm:$0xf]
    %v7300 = vld [vmem:[#allocation13 + $0x94] sm:$0xf]
    %v7301 = vld [vmem:[#allocation13 + $0x98] sm:$0xf]
    %v7302 = vld [vmem:[#allocation13 + $0x9c] sm:$0xf]
    %v7304 = vsel %vm5274, %v7294, 0
    %7306 = vmatprep.subr.bf16.mxu0 0
    %7307 = vmatpush1.bf16.msra.mxu0 %v6810
    %7308 = vmatprep.subr.bf16.mxu0 0
    %7309 = vmatpush1.bf16.msra.mxu0 %v6811
    %7310 = vmatprep.subr.bf16.mxu0 0
    %7311 = vmatpush1.bf16.msra.mxu0 0
    %7312 = vmatprep.subr.bf16.mxu0 0
    %7313 = vmatpush1.bf16.msra.mxu0 0
    %7314 = vmatprep.subr.bf16.mxu0 0
    %7315 = vmatpush1.bf16.msra.mxu0 0
    %7316 = vmatprep.subr.bf16.mxu0 0
    %7317 = vmatpush1.bf16.msra.mxu0 0
    %7318 = vmatprep.subr.bf16.mxu0 0
    %7319 = vmatpush1.bf16.msra.mxu0 0
    %7320 = vmatprep.subr.bf16.mxu0 0
    %7321 = vmatpush1.bf16.msra.mxu0 0
    %7322 = vmatprep.subr.bf16.mxu0 0
    %7323 = vmatpush1.bf16.msra.mxu0 0
    %7324 = vmatprep.subr.bf16.mxu0 0
    %7325 = vmatpush1.bf16.msra.mxu0 0
    %7326 = vmatprep.subr.bf16.mxu0 0
    %7327 = vmatpush1.bf16.msra.mxu0 0
    %7328 = vmatprep.subr.bf16.mxu0 0
    %7329 = vmatpush1.bf16.msra.mxu0 0
    %7330 = vmatprep.subr.bf16.mxu0 0
    %7331 = vmatpush1.bf16.msra.mxu0 0
    %7332 = vmatprep.subr.bf16.mxu0 0
    %7333 = vmatpush1.bf16.msra.mxu0 0
    %7334 = vmatprep.subr.bf16.mxu0 0
    %7335 = vmatpush1.bf16.msra.mxu0 0
    %7336 = vmatprep.subr.bf16.mxu0 0
    %7337 = vmatpush1.bf16.msra.mxu0 0
    %7338 = vmatprep.mubr.bf16.mxu0 0
    %7339 = vmatmul.mubr.bf16.gmra.mrb[0].mxu0 %v7304
    %v7340 = vpop.f32.mrb[0].mxu0
    %v7341 = vadd.f32 0.0, %v7340
    %v7342 = vpop.f32.mrb[0].mxu0
    %v7343 = vpop.f32.mrb[0].mxu0
    %v7344 = vpop.f32.mrb[0].mxu0
    %7345 = vdwg.mxu0
    %v7346 = vpack.c.bf16 %v7341, %v7341
    %v7355 = vunpack.c.l.b16 %v7295
    %v7356 = vunpack.c.l.b16 %v7296
    %v7357 = vunpack.c.l.b16 %v7297
    %v7358 = vunpack.c.l.b16 %v7298
    %v7359 = vunpack.c.l.b16 %v7299
    %v7360 = vunpack.c.l.b16 %v7300
    %v7361 = vunpack.c.l.b16 %v7301
    %v7362 = vunpack.c.l.b16 %v7302
    %v7363 = vpack.c.b16 %v7356, %v7355
    %v7364 = vpack.c.b16 %v7358, %v7357
    %v7365 = vpack.c.b16 %v7360, %v7359
    %v7366 = vpack.c.b16 %v7362, %v7361
    %v7372 = vsel %vm6741, %v7346, 0
    %7374 = vmatprep.subr.bf16.mxu0 0
    %7375 = vmatpush1.bf16.msra.mxu0 %v7363
    %7376 = vmatprep.subr.bf16.mxu0 0
    %7377 = vmatpush1.bf16.msra.mxu0 %v7364
    %7378 = vmatprep.subr.bf16.mxu0 0
    %7379 = vmatpush1.bf16.msra.mxu0 %v7365
    %7380 = vmatprep.subr.bf16.mxu0 0
    %7381 = vmatpush1.bf16.msra.mxu0 %v7366
    %7382 = vmatprep.subr.bf16.mxu0 0
    %7383 = vmatpush1.bf16.msra.mxu0 0
    %7384 = vmatprep.subr.bf16.mxu0 0
    %7385 = vmatpush1.bf16.msra.mxu0 0
    %7386 = vmatprep.subr.bf16.mxu0 0
    %7387 = vmatpush1.bf16.msra.mxu0 0
    %7388 = vmatprep.subr.bf16.mxu0 0
    %7389 = vmatpush1.bf16.msra.mxu0 0
    %7390 = vmatprep.subr.bf16.mxu0 0
    %7391 = vmatpush1.bf16.msra.mxu0 0
    %7392 = vmatprep.subr.bf16.mxu0 0
    %7393 = vmatpush1.bf16.msra.mxu0 0
    %7394 = vmatprep.subr.bf16.mxu0 0
    %7395 = vmatpush1.bf16.msra.mxu0 0
    %7396 = vmatprep.subr.bf16.mxu0 0
    %7397 = vmatpush1.bf16.msra.mxu0 0
    %7398 = vmatprep.subr.bf16.mxu0 0
    %7399 = vmatpush1.bf16.msra.mxu0 0
    %7400 = vmatprep.subr.bf16.mxu0 0
    %7401 = vmatpush1.bf16.msra.mxu0 0
    %7402 = vmatprep.subr.bf16.mxu0 0
    %7403 = vmatpush1.bf16.msra.mxu0 0
    %7404 = vmatprep.subr.bf16.mxu0 0
    %7405 = vmatpush1.bf16.msra.mxu0 0
    %7406 = vmatprep.mubr.bf16.mxu0 0
    %7407 = vmatmul.mubr.bf16.gmra.mrb[0].mxu0 %v7372
    %v7408 = vpop.f32.mrb[0].mxu0
    %v7409 = vadd.f32 0.0, %v7408
    %v7410 = vpop.f32.mrb[0].mxu0
    %v7411 = vpop.f32.mrb[0].mxu0
    %v7412 = vpop.f32.mrb[0].mxu0
    %7413 = vdwg.mxu0
    %v7414 = vadd.f32 %v7293, %v7409
    %v7415 = vld [vmem:[%s9 + $0x14] sm:$0xf]
    %v7416 = vld [vmem:[#allocation13 + $0xa0] sm:$0xf]
    %v7417 = vld [vmem:[#allocation13 + $0xa4] sm:$0xf]
    %v7418 = vld [vmem:[#allocation13 + $0xa8] sm:$0xf]
    %v7419 = vld [vmem:[#allocation13 + $0xac] sm:$0xf]
    %v7420 = vld [vmem:[#allocation13 + $0xb0] sm:$0xf]
    %v7421 = vld [vmem:[#allocation13 + $0xb4] sm:$0xf]
    %v7422 = vld [vmem:[#allocation13 + $0xb8] sm:$0xf]
    %v7423 = vld [vmem:[#allocation13 + $0xbc] sm:$0xf]
    %v7425 = vsel %vm5274, %v7415, 0
    %7427 = vmatprep.subr.bf16.mxu0 0
    %7428 = vmatpush1.bf16.msra.mxu0 %v6810
    %7429 = vmatprep.subr.bf16.mxu0 0
    %7430 = vmatpush1.bf16.msra.mxu0 %v6811
    %7431 = vmatprep.subr.bf16.mxu0 0
    %7432 = vmatpush1.bf16.msra.mxu0 0
    %7433 = vmatprep.subr.bf16.mxu0 0
    %7434 = vmatpush1.bf16.msra.mxu0 0
    %7435 = vmatprep.subr.bf16.mxu0 0
    %7436 = vmatpush1.bf16.msra.mxu0 0
    %7437 = vmatprep.subr.bf16.mxu0 0
    %7438 = vmatpush1.bf16.msra.mxu0 0
    %7439 = vmatprep.subr.bf16.mxu0 0
    %7440 = vmatpush1.bf16.msra.mxu0 0
    %7441 = vmatprep.subr.bf16.mxu0 0
    %7442 = vmatpush1.bf16.msra.mxu0 0
    %7443 = vmatprep.subr.bf16.mxu0 0
    %7444 = vmatpush1.bf16.msra.mxu0 0
    %7445 = vmatprep.subr.bf16.mxu0 0
    %7446 = vmatpush1.bf16.msra.mxu0 0
    %7447 = vmatprep.subr.bf16.mxu0 0
    %7448 = vmatpush1.bf16.msra.mxu0 0
    %7449 = vmatprep.subr.bf16.mxu0 0
    %7450 = vmatpush1.bf16.msra.mxu0 0
    %7451 = vmatprep.subr.bf16.mxu0 0
    %7452 = vmatpush1.bf16.msra.mxu0 0
    %7453 = vmatprep.subr.bf16.mxu0 0
    %7454 = vmatpush1.bf16.msra.mxu0 0
    %7455 = vmatprep.subr.bf16.mxu0 0
    %7456 = vmatpush1.bf16.msra.mxu0 0
    %7457 = vmatprep.subr.bf16.mxu0 0
    %7458 = vmatpush1.bf16.msra.mxu0 0
    %7459 = vmatprep.mubr.bf16.mxu0 0
    %7460 = vmatmul.mubr.bf16.gmra.mrb[0].mxu0 %v7425
    %v7461 = vpop.f32.mrb[0].mxu0
    %v7462 = vadd.f32 0.0, %v7461
    %v7463 = vpop.f32.mrb[0].mxu0
    %v7464 = vpop.f32.mrb[0].mxu0
    %v7465 = vpop.f32.mrb[0].mxu0
    %7466 = vdwg.mxu0
    %v7467 = vpack.c.bf16 %v7462, %v7462
    %v7476 = vunpack.c.l.b16 %v7416
    %v7477 = vunpack.c.l.b16 %v7417
    %v7478 = vunpack.c.l.b16 %v7418
    %v7479 = vunpack.c.l.b16 %v7419
    %v7480 = vunpack.c.l.b16 %v7420
    %v7481 = vunpack.c.l.b16 %v7421
    %v7482 = vunpack.c.l.b16 %v7422
    %v7483 = vunpack.c.l.b16 %v7423
    %v7484 = vpack.c.b16 %v7477, %v7476
    %v7485 = vpack.c.b16 %v7479, %v7478
    %v7486 = vpack.c.b16 %v7481, %v7480
    %v7487 = vpack.c.b16 %v7483, %v7482
    %v7493 = vsel %vm6741, %v7467, 0
    %7495 = vmatprep.subr.bf16.mxu0 0
    %7496 = vmatpush1.bf16.msra.mxu0 %v7484
    %7497 = vmatprep.subr.bf16.mxu0 0
    %7498 = vmatpush1.bf16.msra.mxu0 %v7485
    %7499 = vmatprep.subr.bf16.mxu0 0
    %7500 = vmatpush1.bf16.msra.mxu0 %v7486
    %7501 = vmatprep.subr.bf16.mxu0 0
    %7502 = vmatpush1.bf16.msra.mxu0 %v7487
    %7503 = vmatprep.subr.bf16.mxu0 0
    %7504 = vmatpush1.bf16.msra.mxu0 0
    %7505 = vmatprep.subr.bf16.mxu0 0
    %7506 = vmatpush1.bf16.msra.mxu0 0
    %7507 = vmatprep.subr.bf16.mxu0 0
    %7508 = vmatpush1.bf16.msra.mxu0 0
    %7509 = vmatprep.subr.bf16.mxu0 0
    %7510 = vmatpush1.bf16.msra.mxu0 0
    %7511 = vmatprep.subr.bf16.mxu0 0
    %7512 = vmatpush1.bf16.msra.mxu0 0
    %7513 = vmatprep.subr.bf16.mxu0 0
    %7514 = vmatpush1.bf16.msra.mxu0 0
    %7515 = vmatprep.subr.bf16.mxu0 0
    %7516 = vmatpush1.bf16.msra.mxu0 0
    %7517 = vmatprep.subr.bf16.mxu0 0
    %7518 = vmatpush1.bf16.msra.mxu0 0
    %7519 = vmatprep.subr.bf16.mxu0 0
    %7520 = vmatpush1.bf16.msra.mxu0 0
    %7521 = vmatprep.subr.bf16.mxu0 0
    %7522 = vmatpush1.bf16.msra.mxu0 0
    %7523 = vmatprep.subr.bf16.mxu0 0
    %7524 = vmatpush1.bf16.msra.mxu0 0
    %7525 = vmatprep.subr.bf16.mxu0 0
    %7526 = vmatpush1.bf16.msra.mxu0 0
    %7527 = vmatprep.mubr.bf16.mxu0 0
    %7528 = vmatmul.mubr.bf16.gmra.mrb[0].mxu0 %v7493
    %v7529 = vpop.f32.mrb[0].mxu0
    %v7530 = vadd.f32 0.0, %v7529
    %v7531 = vpop.f32.mrb[0].mxu0
    %v7532 = vpop.f32.mrb[0].mxu0
    %v7533 = vpop.f32.mrb[0].mxu0
    %7534 = vdwg.mxu0
    %v7535 = vadd.f32 %v7414, %v7530
    %v7536 = vld [vmem:[%s9 + $0x18] sm:$0xf]
    %v7537 = vld [vmem:[#allocation13 + $0xc0] sm:$0xf]
    %v7538 = vld [vmem:[#allocation13 + $0xc4] sm:$0xf]
    %v7539 = vld [vmem:[#allocation13 + $0xc8] sm:$0xf]
    %v7540 = vld [vmem:[#allocation13 + $0xcc] sm:$0xf]
    %v7541 = vld [vmem:[#allocation13 + $0xd0] sm:$0xf]
    %v7542 = vld [vmem:[#allocation13 + $0xd4] sm:$0xf]
    %v7543 = vld [vmem:[#allocation13 + $0xd8] sm:$0xf]
    %v7544 = vld [vmem:[#allocation13 + $0xdc] sm:$0xf]
    %v7546 = vsel %vm5274, %v7536, 0
    %7548 = vmatprep.subr.bf16.mxu0 0
    %7549 = vmatpush1.bf16.msra.mxu0 %v6810
    %7550 = vmatprep.subr.bf16.mxu0 0
    %7551 = vmatpush1.bf16.msra.mxu0 %v6811
    %7552 = vmatprep.subr.bf16.mxu0 0
    %7553 = vmatpush1.bf16.msra.mxu0 0
    %7554 = vmatprep.subr.bf16.mxu0 0
    %7555 = vmatpush1.bf16.msra.mxu0 0
    %7556 = vmatprep.subr.bf16.mxu0 0
    %7557 = vmatpush1.bf16.msra.mxu0 0
    %7558 = vmatprep.subr.bf16.mxu0 0
    %7559 = vmatpush1.bf16.msra.mxu0 0
    %7560 = vmatprep.subr.bf16.mxu0 0
    %7561 = vmatpush1.bf16.msra.mxu0 0
    %7562 = vmatprep.subr.bf16.mxu0 0
    %7563 = vmatpush1.bf16.msra.mxu0 0
    %7564 = vmatprep.subr.bf16.mxu0 0
    %7565 = vmatpush1.bf16.msra.mxu0 0
    %7566 = vmatprep.subr.bf16.mxu0 0
    %7567 = vmatpush1.bf16.msra.mxu0 0
    %7568 = vmatprep.subr.bf16.mxu0 0
    %7569 = vmatpush1.bf16.msra.mxu0 0
    %7570 = vmatprep.subr.bf16.mxu0 0
    %7571 = vmatpush1.bf16.msra.mxu0 0
    %7572 = vmatprep.subr.bf16.mxu0 0
    %7573 = vmatpush1.bf16.msra.mxu0 0
    %7574 = vmatprep.subr.bf16.mxu0 0
    %7575 = vmatpush1.bf16.msra.mxu0 0
    %7576 = vmatprep.subr.bf16.mxu0 0
    %7577 = vmatpush1.bf16.msra.mxu0 0
    %7578 = vmatprep.subr.bf16.mxu0 0
    %7579 = vmatpush1.bf16.msra.mxu0 0
    %7580 = vmatprep.mubr.bf16.mxu0 0
    %7581 = vmatmul.mubr.bf16.gmra.mrb[0].mxu0 %v7546
    %v7582 = vpop.f32.mrb[0].mxu0
    %v7583 = vadd.f32 0.0, %v7582
    %v7584 = vpop.f32.mrb[0].mxu0
    %v7585 = vpop.f32.mrb[0].mxu0
    %v7586 = vpop.f32.mrb[0].mxu0
    %7587 = vdwg.mxu0
    %v7588 = vpack.c.bf16 %v7583, %v7583
    %v7597 = vunpack.c.l.b16 %v7537
    %v7598 = vunpack.c.l.b16 %v7538
    %v7599 = vunpack.c.l.b16 %v7539
    %v7600 = vunpack.c.l.b16 %v7540
    %v7601 = vunpack.c.l.b16 %v7541
    %v7602 = vunpack.c.l.b16 %v7542
    %v7603 = vunpack.c.l.b16 %v7543
    %v7604 = vunpack.c.l.b16 %v7544
    %v7605 = vpack.c.b16 %v7598, %v7597
    %v7606 = vpack.c.b16 %v7600, %v7599
    %v7607 = vpack.c.b16 %v7602, %v7601
    %v7608 = vpack.c.b16 %v7604, %v7603
    %v7614 = vsel %vm6741, %v7588, 0
    %7616 = vmatprep.subr.bf16.mxu0 0
    %7617 = vmatpush1.bf16.msra.mxu0 %v7605
    %7618 = vmatprep.subr.bf16.mxu0 0
    %7619 = vmatpush1.bf16.msra.mxu0 %v7606
    %7620 = vmatprep.subr.bf16.mxu0 0
    %7621 = vmatpush1.bf16.msra.mxu0 %v7607
    %7622 = vmatprep.subr.bf16.mxu0 0
    %7623 = vmatpush1.bf16.msra.mxu0 %v7608
    %7624 = vmatprep.subr.bf16.mxu0 0
    %7625 = vmatpush1.bf16.msra.mxu0 0
    %7626 = vmatprep.subr.bf16.mxu0 0
    %7627 = vmatpush1.bf16.msra.mxu0 0
    %7628 = vmatprep.subr.bf16.mxu0 0
    %7629 = vmatpush1.bf16.msra.mxu0 0
    %7630 = vmatprep.subr.bf16.mxu0 0
    %7631 = vmatpush1.bf16.msra.mxu0 0
    %7632 = vmatprep.subr.bf16.mxu0 0
    %7633 = vmatpush1.bf16.msra.mxu0 0
    %7634 = vmatprep.subr.bf16.mxu0 0
    %7635 = vmatpush1.bf16.msra.mxu0 0
    %7636 = vmatprep.subr.bf16.mxu0 0
    %7637 = vmatpush1.bf16.msra.mxu0 0
    %7638 = vmatprep.subr.bf16.mxu0 0
    %7639 = vmatpush1.bf16.msra.mxu0 0
    %7640 = vmatprep.subr.bf16.mxu0 0
    %7641 = vmatpush1.bf16.msra.mxu0 0
    %7642 = vmatprep.subr.bf16.mxu0 0
    %7643 = vmatpush1.bf16.msra.mxu0 0
    %7644 = vmatprep.subr.bf16.mxu0 0
    %7645 = vmatpush1.bf16.msra.mxu0 0
    %7646 = vmatprep.subr.bf16.mxu0 0
    %7647 = vmatpush1.bf16.msra.mxu0 0
    %7648 = vmatprep.mubr.bf16.mxu0 0
    %7649 = vmatmul.mubr.bf16.gmra.mrb[0].mxu0 %v7614
    %v7650 = vpop.f32.mrb[0].mxu0
    %v7651 = vadd.f32 0.0, %v7650
    %v7652 = vpop.f32.mrb[0].mxu0
    %v7653 = vpop.f32.mrb[0].mxu0
    %v7654 = vpop.f32.mrb[0].mxu0
    %7655 = vdwg.mxu0
    %v7656 = vadd.f32 %v7535, %v7651
    %v7657 = vld [vmem:[%s9 + $0x1c] sm:$0xf]
    %v7658 = vld [vmem:[#allocation13 + $0xe0] sm:$0xf]
    %v7659 = vld [vmem:[#allocation13 + $0xe4] sm:$0xf]
    %v7660 = vld [vmem:[#allocation13 + $0xe8] sm:$0xf]
    %v7661 = vld [vmem:[#allocation13 + $0xec] sm:$0xf]
    %v7662 = vld [vmem:[#allocation13 + $0xf0] sm:$0xf]
    %v7663 = vld [vmem:[#allocation13 + $0xf4] sm:$0xf]
    %v7664 = vld [vmem:[#allocation13 + $0xf8] sm:$0xf]
    %v7665 = vld [vmem:[#allocation13 + $0xfc] sm:$0xf]
    %v7667 = vsel %vm5274, %v7657, 0
    %7669 = vmatprep.subr.bf16.mxu0 0
    %7670 = vmatpush1.bf16.msra.mxu0 %v6810
    %7671 = vmatprep.subr.bf16.mxu0 0
    %7672 = vmatpush1.bf16.msra.mxu0 %v6811
    %7673 = vmatprep.subr.bf16.mxu0 0
    %7674 = vmatpush1.bf16.msra.mxu0 0
    %7675 = vmatprep.subr.bf16.mxu0 0
    %7676 = vmatpush1.bf16.msra.mxu0 0
    %7677 = vmatprep.subr.bf16.mxu0 0
    %7678 = vmatpush1.bf16.msra.mxu0 0
    %7679 = vmatprep.subr.bf16.mxu0 0
    %7680 = vmatpush1.bf16.msra.mxu0 0
    %7681 = vmatprep.subr.bf16.mxu0 0
    %7682 = vmatpush1.bf16.msra.mxu0 0
    %7683 = vmatprep.subr.bf16.mxu0 0
    %7684 = vmatpush1.bf16.msra.mxu0 0
    %7685 = vmatprep.subr.bf16.mxu0 0
    %7686 = vmatpush1.bf16.msra.mxu0 0
    %7687 = vmatprep.subr.bf16.mxu0 0
    %7688 = vmatpush1.bf16.msra.mxu0 0
    %7689 = vmatprep.subr.bf16.mxu0 0
    %7690 = vmatpush1.bf16.msra.mxu0 0
    %7691 = vmatprep.subr.bf16.mxu0 0
    %7692 = vmatpush1.bf16.msra.mxu0 0
    %7693 = vmatprep.subr.bf16.mxu0 0
    %7694 = vmatpush1.bf16.msra.mxu0 0
    %7695 = vmatprep.subr.bf16.mxu0 0
    %7696 = vmatpush1.bf16.msra.mxu0 0
    %7697 = vmatprep.subr.bf16.mxu0 0
    %7698 = vmatpush1.bf16.msra.mxu0 0
    %7699 = vmatprep.subr.bf16.mxu0 0
    %7700 = vmatpush1.bf16.msra.mxu0 0
    %7701 = vmatprep.mubr.bf16.mxu0 0
    %7702 = vmatmul.mubr.bf16.gmra.mrb[0].mxu0 %v7667
    %v7703 = vpop.f32.mrb[0].mxu0
    %v7704 = vadd.f32 0.0, %v7703
    %v7705 = vpop.f32.mrb[0].mxu0
    %v7706 = vpop.f32.mrb[0].mxu0
    %v7707 = vpop.f32.mrb[0].mxu0
    %7708 = vdwg.mxu0
    %v7709 = vpack.c.bf16 %v7704, %v7704
    %v7718 = vunpack.c.l.b16 %v7658
    %v7719 = vunpack.c.l.b16 %v7659
    %v7720 = vunpack.c.l.b16 %v7660
    %v7721 = vunpack.c.l.b16 %v7661
    %v7722 = vunpack.c.l.b16 %v7662
    %v7723 = vunpack.c.l.b16 %v7663
    %v7724 = vunpack.c.l.b16 %v7664
    %v7725 = vunpack.c.l.b16 %v7665
    %v7726 = vpack.c.b16 %v7719, %v7718
    %v7727 = vpack.c.b16 %v7721, %v7720
    %v7728 = vpack.c.b16 %v7723, %v7722
    %v7729 = vpack.c.b16 %v7725, %v7724
    %v7735 = vsel %vm6741, %v7709, 0
    %7737 = vmatprep.subr.bf16.mxu0 0
    %7738 = vmatpush1.bf16.msra.mxu0 %v7726
    %7739 = vmatprep.subr.bf16.mxu0 0
    %7740 = vmatpush1.bf16.msra.mxu0 %v7727
    %7741 = vmatprep.subr.bf16.mxu0 0
    %7742 = vmatpush1.bf16.msra.mxu0 %v7728
    %7743 = vmatprep.subr.bf16.mxu0 0
    %7744 = vmatpush1.bf16.msra.mxu0 %v7729
    %7745 = vmatprep.subr.bf16.mxu0 0
    %7746 = vmatpush1.bf16.msra.mxu0 0
    %7747 = vmatprep.subr.bf16.mxu0 0
    %7748 = vmatpush1.bf16.msra.mxu0 0
    %7749 = vmatprep.subr.bf16.mxu0 0
    %7750 = vmatpush1.bf16.msra.mxu0 0
    %7751 = vmatprep.subr.bf16.mxu0 0
    %7752 = vmatpush1.bf16.msra.mxu0 0
    %7753 = vmatprep.subr.bf16.mxu0 0
    %7754 = vmatpush1.bf16.msra.mxu0 0
    %7755 = vmatprep.subr.bf16.mxu0 0
    %7756 = vmatpush1.bf16.msra.mxu0 0
    %7757 = vmatprep.subr.bf16.mxu0 0
    %7758 = vmatpush1.bf16.msra.mxu0 0
    %7759 = vmatprep.subr.bf16.mxu0 0
    %7760 = vmatpush1.bf16.msra.mxu0 0
    %7761 = vmatprep.subr.bf16.mxu0 0
    %7762 = vmatpush1.bf16.msra.mxu0 0
    %7763 = vmatprep.subr.bf16.mxu0 0
    %7764 = vmatpush1.bf16.msra.mxu0 0
    %7765 = vmatprep.subr.bf16.mxu0 0
    %7766 = vmatpush1.bf16.msra.mxu0 0
    %7767 = vmatprep.subr.bf16.mxu0 0
    %7768 = vmatpush1.bf16.msra.mxu0 0
    %7769 = vmatprep.mubr.bf16.mxu0 0
    %7770 = vmatmul.mubr.bf16.gmra.mrb[0].mxu0 %v7735
    %v7771 = vpop.f32.mrb[0].mxu0
    %v7772 = vadd.f32 0.0, %v7771
    %v7773 = vpop.f32.mrb[0].mxu0
    %v7774 = vpop.f32.mrb[0].mxu0
    %v7775 = vpop.f32.mrb[0].mxu0
    %7776 = vdwg.mxu0
    %v7777 = vadd.f32 %v7656, %v7772
    %v7778 = vld [vmem:[%s9 + $0x20] sm:$0xf]
    %v7779 = vld [vmem:[#allocation13 + $0x100] sm:$0xf]
    %v7780 = vld [vmem:[#allocation13 + $0x104] sm:$0xf]
    %v7781 = vld [vmem:[#allocation13 + $0x108] sm:$0xf]
    %v7782 = vld [vmem:[#allocation13 + $0x10c] sm:$0xf]
    %v7783 = vld [vmem:[#allocation13 + $0x110] sm:$0xf]
    %v7784 = vld [vmem:[#allocation13 + $0x114] sm:$0xf]
    %v7785 = vld [vmem:[#allocation13 + $0x118] sm:$0xf]
    %v7786 = vld [vmem:[#allocation13 + $0x11c] sm:$0xf]
    %v7788 = vsel %vm5274, %v7778, 0
    %7790 = vmatprep.subr.bf16.mxu0 0
    %7791 = vmatpush1.bf16.msra.mxu0 %v6810
    %7792 = vmatprep.subr.bf16.mxu0 0
    %7793 = vmatpush1.bf16.msra.mxu0 %v6811
    %7794 = vmatprep.subr.bf16.mxu0 0
    %7795 = vmatpush1.bf16.msra.mxu0 0
    %7796 = vmatprep.subr.bf16.mxu0 0
    %7797 = vmatpush1.bf16.msra.mxu0 0
    %7798 = vmatprep.subr.bf16.mxu0 0
    %7799 = vmatpush1.bf16.msra.mxu0 0
    %7800 = vmatprep.subr.bf16.mxu0 0
    %7801 = vmatpush1.bf16.msra.mxu0 0
    %7802 = vmatprep.subr.bf16.mxu0 0
    %7803 = vmatpush1.bf16.msra.mxu0 0
    %7804 = vmatprep.subr.bf16.mxu0 0
    %7805 = vmatpush1.bf16.msra.mxu0 0
    %7806 = vmatprep.subr.bf16.mxu0 0
    %7807 = vmatpush1.bf16.msra.mxu0 0
    %7808 = vmatprep.subr.bf16.mxu0 0
    %7809 = vmatpush1.bf16.msra.mxu0 0
    %7810 = vmatprep.subr.bf16.mxu0 0
    %7811 = vmatpush1.bf16.msra.mxu0 0
    %7812 = vmatprep.subr.bf16.mxu0 0
    %7813 = vmatpush1.bf16.msra.mxu0 0
    %7814 = vmatprep.subr.bf16.mxu0 0
    %7815 = vmatpush1.bf16.msra.mxu0 0
    %7816 = vmatprep.subr.bf16.mxu0 0
    %7817 = vmatpush1.bf16.msra.mxu0 0
    %7818 = vmatprep.subr.bf16.mxu0 0
    %7819 = vmatpush1.bf16.msra.mxu0 0
    %7820 = vmatprep.subr.bf16.mxu0 0
    %7821 = vmatpush1.bf16.msra.mxu0 0
    %7822 = vmatprep.mubr.bf16.mxu0 0
    %7823 = vmatmul.mubr.bf16.gmra.mrb[0].mxu0 %v7788
    %v7824 = vpop.f32.mrb[0].mxu0
    %v7825 = vadd.f32 0.0, %v7824
    %v7826 = vpop.f32.mrb[0].mxu0
    %v7827 = vpop.f32.mrb[0].mxu0
    %v7828 = vpop.f32.mrb[0].mxu0
    %7829 = vdwg.mxu0
    %v7830 = vpack.c.bf16 %v7825, %v7825
    %v7839 = vunpack.c.l.b16 %v7779
    %v7840 = vunpack.c.l.b16 %v7780
    %v7841 = vunpack.c.l.b16 %v7781
    %v7842 = vunpack.c.l.b16 %v7782
    %v7843 = vunpack.c.l.b16 %v7783
    %v7844 = vunpack.c.l.b16 %v7784
    %v7845 = vunpack.c.l.b16 %v7785
    %v7846 = vunpack.c.l.b16 %v7786
    %v7847 = vpack.c.b16 %v7840, %v7839
    %v7848 = vpack.c.b16 %v7842, %v7841
    %v7849 = vpack.c.b16 %v7844, %v7843
    %v7850 = vpack.c.b16 %v7846, %v7845
    %v7856 = vsel %vm6741, %v7830, 0
    %7858 = vmatprep.subr.bf16.mxu0 0
    %7859 = vmatpush1.bf16.msra.mxu0 %v7847
    %7860 = vmatprep.subr.bf16.mxu0 0
    %7861 = vmatpush1.bf16.msra.mxu0 %v7848
    %7862 = vmatprep.subr.bf16.mxu0 0
    %7863 = vmatpush1.bf16.msra.mxu0 %v7849
    %7864 = vmatprep.subr.bf16.mxu0 0
    %7865 = vmatpush1.bf16.msra.mxu0 %v7850
    %7866 = vmatprep.subr.bf16.mxu0 0
    %7867 = vmatpush1.bf16.msra.mxu0 0
    %7868 = vmatprep.subr.bf16.mxu0 0
    %7869 = vmatpush1.bf16.msra.mxu0 0
    %7870 = vmatprep.subr.bf16.mxu0 0
    %7871 = vmatpush1.bf16.msra.mxu0 0
    %7872 = vmatprep.subr.bf16.mxu0 0
    %7873 = vmatpush1.bf16.msra.mxu0 0
    %7874 = vmatprep.subr.bf16.mxu0 0
    %7875 = vmatpush1.bf16.msra.mxu0 0
    %7876 = vmatprep.subr.bf16.mxu0 0
    %7877 = vmatpush1.bf16.msra.mxu0 0
    %7878 = vmatprep.subr.bf16.mxu0 0
    %7879 = vmatpush1.bf16.msra.mxu0 0
    %7880 = vmatprep.subr.bf16.mxu0 0
    %7881 = vmatpush1.bf16.msra.mxu0 0
    %7882 = vmatprep.subr.bf16.mxu0 0
    %7883 = vmatpush1.bf16.msra.mxu0 0
    %7884 = vmatprep.subr.bf16.mxu0 0
    %7885 = vmatpush1.bf16.msra.mxu0 0
    %7886 = vmatprep.subr.bf16.mxu0 0
    %7887 = vmatpush1.bf16.msra.mxu0 0
    %7888 = vmatprep.subr.bf16.mxu0 0
    %7889 = vmatpush1.bf16.msra.mxu0 0
    %7890 = vmatprep.mubr.bf16.mxu0 0
    %7891 = vmatmul.mubr.bf16.gmra.mrb[0].mxu0 %v7856
    %v7892 = vpop.f32.mrb[0].mxu0
    %v7893 = vadd.f32 0.0, %v7892
    %v7894 = vpop.f32.mrb[0].mxu0
    %v7895 = vpop.f32.mrb[0].mxu0
    %v7896 = vpop.f32.mrb[0].mxu0
    %7897 = vdwg.mxu0
    %v7898 = vadd.f32 %v7777, %v7893
    %v7899 = vrot.slane %v7898, 4
    %v7900 = vadd.f32 %v7898, %v7899
    %v7901 = vrot.slane %v7900, 2
    %v7902 = vadd.f32 %v7900, %v7901
    %v7903 = vrot.slane %v7902, 1
    %v7904 = vadd.f32 %v7902, %v7903
    %v7905 = vmul.f32 %v7904, 0.125
    %v7906 = vsub.f32 %v7898, %v7905
    %v7907 = vmul.f32 %v7906, %v7906
    %v7908 = vrot.slane %v7907, 4
    %v7909 = vadd.f32 %v7907, %v7908
    %v7910 = vrot.slane %v7909, 2
    %v7911 = vadd.f32 %v7909, %v7910
    %v7912 = vrot.slane %v7911, 1
    %v7913 = vadd.f32 %v7911, %v7912
    %v7914 = vmul.f32 %v7913, 0.125
    %v7915 = vadd.f32 %v7914, 1e-05
    %v7916 = vrsqrt.pop %v7915
    %v7917 = vmul.f32 %v7906, %v7916
    %v7918 = vld [vmem:[#allocation14] sm:$0x1]
    %v7920 = vlaneseq
    %v7921 = vshrl.u32 %v7920, 7
    %v7922 = vsub.s32 0, %v7921
    %v7923 = vrot.slane %v7918, %v7922
    %v7925 = vmul.f32 %v7917, %v7923
    %v7926 = vld [vmem:[#allocation16] sm:$0x1]
    %v7928 = vlaneseq
    %v7929 = vshrl.u32 %v7928, 7
    %v7930 = vsub.s32 0, %v7929
    %v7931 = vrot.slane %v7926, %v7930
    %v7933 = vadd.f32 %v7925, %v7931
    %v7934 = vmax.f32 %v7933, 0.0
    %v7935 = vld [vmem:[#allocation17] sm:$0x1]
    %v7936 = vpack.c.bf16 %v7934, %v7934
    %v7938 = vsel %vm1279, %v7935, 0
    %v7941 = vsel %vm1304, %v7936, 0
    %7943 = vmatprep.subr.bf16.mxu0 0
    %7944 = vmatpush1.bf16.msra.mxu0 %v7941
    %7945 = vmatprep.subr.bf16.mxu0 0
    %7946 = vmatpush1.bf16.msra.mxu0 0
    %7947 = vmatprep.subr.bf16.mxu0 0
    %7948 = vmatpush1.bf16.msra.mxu0 0
    %7949 = vmatprep.subr.bf16.mxu0 0
    %7950 = vmatpush1.bf16.msra.mxu0 0
    %7951 = vmatprep.subr.bf16.mxu0 0
    %7952 = vmatpush1.bf16.msra.mxu0 0
    %7953 = vmatprep.subr.bf16.mxu0 0
    %7954 = vmatpush1.bf16.msra.mxu0 0
    %7955 = vmatprep.subr.bf16.mxu0 0
    %7956 = vmatpush1.bf16.msra.mxu0 0
    %7957 = vmatprep.subr.bf16.mxu0 0
    %7958 = vmatpush1.bf16.msra.mxu0 0
    %7959 = vmatprep.subr.bf16.mxu0 0
    %7960 = vmatpush1.bf16.msra.mxu0 0
    %7961 = vmatprep.subr.bf16.mxu0 0
    %7962 = vmatpush1.bf16.msra.mxu0 0
    %7963 = vmatprep.subr.bf16.mxu0 0
    %7964 = vmatpush1.bf16.msra.mxu0 0
    %7965 = vmatprep.subr.bf16.mxu0 0
    %7966 = vmatpush1.bf16.msra.mxu0 0
    %7967 = vmatprep.subr.bf16.mxu0 0
    %7968 = vmatpush1.bf16.msra.mxu0 0
    %7969 = vmatprep.subr.bf16.mxu0 0
    %7970 = vmatpush1.bf16.msra.mxu0 0
    %7971 = vmatprep.subr.bf16.mxu0 0
    %7972 = vmatpush1.bf16.msra.mxu0 0
    %7973 = vmatprep.subr.bf16.mxu0 0
    %7974 = vmatpush1.bf16.msra.mxu0 0
    %7975 = vmatprep.mubr.bf16.mxu0 0
    %7976 = vmatmul.mubr.bf16.gmra.mrb[0].mxu0 %v7938
    %v7977 = vpop.f32.mrb[0].mxu0
    %v7978 = vadd.f32 0.0, %v7977
    %v7979 = vpop.f32.mrb[0].mxu0
    %v7980 = vpop.f32.mrb[0].mxu0
    %v7981 = vpop.f32.mrb[0].mxu0
    %7982 = vdwg.mxu0
    %v7983 = vmul.f32 %v7978, 0.25
    %v7984 = vpack.c.bf16 %v7983, %v7983
    %v7985 = vld [vmem:[#allocation19] sm:$0xf]
    %v7986 = vld [vmem:[#allocation19 + $0x4] sm:$0xf]
    %v7987 = vld [vmem:[#allocation19 + $0x8] sm:$0xf]
    %v7988 = vld [vmem:[#allocation19 + $0xc] sm:$0xf]
    %v7989 = vld [vmem:[#allocation19 + $0x10] sm:$0xf]
    %v7990 = vld [vmem:[#allocation19 + $0x14] sm:$0xf]
    %v7991 = vld [vmem:[#allocation19 + $0x18] sm:$0xf]
    %v7992 = vld [vmem:[#allocation19 + $0x1c] sm:$0xf]
    %v7993 = vld [vmem:[#allocation19 + $0x20] sm:$0xf]
    %v7994 = vld [vmem:[#allocation19 + $0x24] sm:$0xf]
    %v7995 = vld [vmem:[#allocation19 + $0x28] sm:$0xf]
    %v7996 = vld [vmem:[#allocation19 + $0x2c] sm:$0xf]
    %v7997 = vld [vmem:[#allocation19 + $0x30] sm:$0xf]
    %v7998 = vld [vmem:[#allocation19 + $0x34] sm:$0xf]
    %v7999 = vld [vmem:[#allocation19 + $0x38] sm:$0xf]
    %v8000 = vld [vmem:[#allocation19 + $0x3c] sm:$0xf]
    %v8001 = vld [vmem:[#allocation20] sm:$0x1]
    %v8003 = vlaneseq
    %v8004 = vshrl.u32 %v8003, 7
    %v8005 = vsub.s32 0, %v8004
    %v8006 = vrot.slane %v8001, %v8005
    %v8024 = vunpack.c.l.b16 %v7985
    %v8025 = vunpack.c.l.b16 %v7986
    %v8026 = vunpack.c.l.b16 %v7987
    %v8027 = vunpack.c.l.b16 %v7988
    %v8028 = vunpack.c.l.b16 %v7989
    %v8029 = vunpack.c.l.b16 %v7990
    %v8030 = vunpack.c.l.b16 %v7991
    %v8031 = vunpack.c.l.b16 %v7992
    %v8032 = vunpack.c.l.b16 %v7993
    %v8033 = vunpack.c.l.b16 %v7994
    %v8034 = vunpack.c.l.b16 %v7995
    %v8035 = vunpack.c.l.b16 %v7996
    %v8036 = vunpack.c.l.b16 %v7997
    %v8037 = vunpack.c.l.b16 %v7998
    %v8038 = vunpack.c.l.b16 %v7999
    %v8039 = vunpack.c.l.b16 %v8000
    %v8040 = vpack.c.b16 %v8025, %v8024
    %v8041 = vpack.c.b16 %v8027, %v8026
    %v8042 = vpack.c.b16 %v8029, %v8028
    %v8043 = vpack.c.b16 %v8031, %v8030
    %v8044 = vpack.c.b16 %v8033, %v8032
    %v8045 = vpack.c.b16 %v8035, %v8034
    %v8046 = vpack.c.b16 %v8037, %v8036
    %v8047 = vpack.c.b16 %v8039, %v8038
    %8056 = vmatprep.subr.bf16.mxu0 0
    %8057 = vmatpush1.bf16.msra.mxu0 %v8040
    %8058 = vmatprep.subr.bf16.mxu0 0
    %8059 = vmatpush1.bf16.msra.mxu0 %v8041
    %8060 = vmatprep.subr.bf16.mxu0 0
    %8061 = vmatpush1.bf16.msra.mxu0 %v8042
    %8062 = vmatprep.subr.bf16.mxu0 0
    %8063 = vmatpush1.bf16.msra.mxu0 %v8043
    %8064 = vmatprep.subr.bf16.mxu0 0
    %8065 = vmatpush1.bf16.msra.mxu0 %v8044
    %8066 = vmatprep.subr.bf16.mxu0 0
    %8067 = vmatpush1.bf16.msra.mxu0 %v8045
    %8068 = vmatprep.subr.bf16.mxu0 0
    %8069 = vmatpush1.bf16.msra.mxu0 %v8046
    %8070 = vmatprep.subr.bf16.mxu0 0
    %8071 = vmatpush1.bf16.msra.mxu0 %v8047
    %8072 = vmatprep.subr.bf16.mxu0 0
    %8073 = vmatpush1.bf16.msra.mxu0 0
    %8074 = vmatprep.subr.bf16.mxu0 0
    %8075 = vmatpush1.bf16.msra.mxu0 0
    %8076 = vmatprep.subr.bf16.mxu0 0
    %8077 = vmatpush1.bf16.msra.mxu0 0
    %8078 = vmatprep.subr.bf16.mxu0 0
    %8079 = vmatpush1.bf16.msra.mxu0 0
    %8080 = vmatprep.subr.bf16.mxu0 0
    %8081 = vmatpush1.bf16.msra.mxu0 0
    %8082 = vmatprep.subr.bf16.mxu0 0
    %8083 = vmatpush1.bf16.msra.mxu0 0
    %8084 = vmatprep.subr.bf16.mxu0 0
    %8085 = vmatpush1.bf16.msra.mxu0 0
    %8086 = vmatprep.subr.bf16.mxu0 0
    %8087 = vmatpush1.bf16.msra.mxu0 0
    %8088 = vmatprep.mubr.bf16.mxu0 0
    %8089 = vmatmul.mubr.bf16.gmra.mrb[0].mxu0 %v7984
    %v8090 = vpop.f32.mrb[0].mxu0
    %v8091 = vadd.f32 %v8006, %v8090
    %v8092 = vpop.f32.mrb[0].mxu0
    %v8093 = vpop.f32.mrb[0].mxu0
    %v8094 = vpop.f32.mrb[0].mxu0
    %8095 = vdwg.mxu0
    %v8096 = vmax.f32 %v8091, 0.0
    %v8097 = vpack.c.bf16 %v8096, %v8096
    %v8098 = vld [vmem:[#allocation22] sm:$0xf]
    %v8099 = vld [vmem:[#allocation22 + $0x4] sm:$0xf]
    %v8100 = vld [vmem:[#allocation22 + $0x8] sm:$0xf]
    %v8101 = vld [vmem:[#allocation22 + $0xc] sm:$0xf]
    %v8102 = vld [vmem:[#allocation22 + $0x10] sm:$0xf]
    %v8103 = vld [vmem:[#allocation22 + $0x14] sm:$0xf]
    %v8104 = vld [vmem:[#allocation22 + $0x18] sm:$0xf]
    %v8105 = vld [vmem:[#allocation22 + $0x1c] sm:$0xf]
    %v8106 = vld [vmem:[#allocation22 + $0x20] sm:$0xf]
    %v8107 = vld [vmem:[#allocation22 + $0x24] sm:$0xf]
    %v8108 = vld [vmem:[#allocation22 + $0x28] sm:$0xf]
    %v8109 = vld [vmem:[#allocation22 + $0x2c] sm:$0xf]
    %v8110 = vld [vmem:[#allocation22 + $0x30] sm:$0xf]
    %v8111 = vld [vmem:[#allocation22 + $0x34] sm:$0xf]
    %v8112 = vld [vmem:[#allocation22 + $0x38] sm:$0xf]
    %v8113 = vld [vmem:[#allocation22 + $0x3c] sm:$0xf]
    %v8114 = vld [vmem:[#allocation23] sm:$0x1]
    %v8116 = vlaneseq
    %v8117 = vshrl.u32 %v8116, 7
    %v8118 = vsub.s32 0, %v8117
    %v8119 = vrot.slane %v8114, %v8118
    %v8137 = vunpack.c.l.b16 %v8098
    %v8138 = vunpack.c.l.b16 %v8099
    %v8139 = vunpack.c.l.b16 %v8100
    %v8140 = vunpack.c.l.b16 %v8101
    %v8141 = vunpack.c.l.b16 %v8102
    %v8142 = vunpack.c.l.b16 %v8103
    %v8143 = vunpack.c.l.b16 %v8104
    %v8144 = vunpack.c.l.b16 %v8105
    %v8145 = vunpack.c.l.b16 %v8106
    %v8146 = vunpack.c.l.b16 %v8107
    %v8147 = vunpack.c.l.b16 %v8108
    %v8148 = vunpack.c.l.b16 %v8109
    %v8149 = vunpack.c.l.b16 %v8110
    %v8150 = vunpack.c.l.b16 %v8111
    %v8151 = vunpack.c.l.b16 %v8112
    %v8152 = vunpack.c.l.b16 %v8113
    %v8153 = vpack.c.b16 %v8138, %v8137
    %v8154 = vpack.c.b16 %v8140, %v8139
    %v8155 = vpack.c.b16 %v8142, %v8141
    %v8156 = vpack.c.b16 %v8144, %v8143
    %v8157 = vpack.c.b16 %v8146, %v8145
    %v8158 = vpack.c.b16 %v8148, %v8147
    %v8159 = vpack.c.b16 %v8150, %v8149
    %v8160 = vpack.c.b16 %v8152, %v8151
    %8169 = vmatprep.subr.bf16.mxu0 0
    %8170 = vmatpush1.bf16.msra.mxu0 %v8153
    %8171 = vmatprep.subr.bf16.mxu0 0
    %8172 = vmatpush1.bf16.msra.mxu0 %v8154
    %8173 = vmatprep.subr.bf16.mxu0 0
    %8174 = vmatpush1.bf16.msra.mxu0 %v8155
    %8175 = vmatprep.subr.bf16.mxu0 0
    %8176 = vmatpush1.bf16.msra.mxu0 %v8156
    %8177 = vmatprep.subr.bf16.mxu0 0
    %8178 = vmatpush1.bf16.msra.mxu0 %v8157
    %8179 = vmatprep.subr.bf16.mxu0 0
    %8180 = vmatpush1.bf16.msra.mxu0 %v8158
    %8181 = vmatprep.subr.bf16.mxu0 0
    %8182 = vmatpush1.bf16.msra.mxu0 %v8159
    %8183 = vmatprep.subr.bf16.mxu0 0
    %8184 = vmatpush1.bf16.msra.mxu0 %v8160
    %8185 = vmatprep.subr.bf16.mxu0 0
    %8186 = vmatpush1.bf16.msra.mxu0 0
    %8187 = vmatprep.subr.bf16.mxu0 0
    %8188 = vmatpush1.bf16.msra.mxu0 0
    %8189 = vmatprep.subr.bf16.mxu0 0
    %8190 = vmatpush1.bf16.msra.mxu0 0
    %8191 = vmatprep.subr.bf16.mxu0 0
    %8192 = vmatpush1.bf16.msra.mxu0 0
    %8193 = vmatprep.subr.bf16.mxu0 0
    %8194 = vmatpush1.bf16.msra.mxu0 0
    %8195 = vmatprep.subr.bf16.mxu0 0
    %8196 = vmatpush1.bf16.msra.mxu0 0
    %8197 = vmatprep.subr.bf16.mxu0 0
    %8198 = vmatpush1.bf16.msra.mxu0 0
    %8199 = vmatprep.subr.bf16.mxu0 0
    %8200 = vmatpush1.bf16.msra.mxu0 0
    %8201 = vmatprep.mubr.bf16.mxu0 0
    %8202 = vmatmul.mubr.bf16.gmra.mrb[0].mxu0 %v8097
    %v8203 = vpop.f32.mrb[0].mxu0
    %v8204 = vadd.f32 %v8119, %v8203
    %v8205 = vpop.f32.mrb[0].mxu0
    %v8206 = vpop.f32.mrb[0].mxu0
    %v8207 = vpop.f32.mrb[0].mxu0
    %8208 = vdwg.mxu0
    %v8209 = vmul.f32 %v8204, %v8204
    %vm8210 = vcmask 1041408
    %v8211 = vsel %vm8210, %v8209, 0.0
    %8212 = vadd.xlane.f32.xlu0 %v8211
    %v8213 = vpop.xlane.xlu0 %8212
    %v8214 = vmax.f32 %v8213, 1e-24
    %v8215 = vrsqrt.pop %v8214
    %v8216 = vmul.f32 %v8204, %v8215
    %8217 = vst [vmem:[#allocation25] sm:$0x3] %v8216
    // Predicated region
    $region130: #{moco_forward.1} parent=1 // pred_check
      _
    $region131: #{moco_forward.1} parent=1 // pred_check_branch
      %8219 = sbr.rel (0) target = $region133
    $region132: #{moco_forward.1} parent=1 // pred_region
      %s8221 = ssub.s32 32, 32
      %8222 = vsyncadd [#allocation4], %s8221
      %s8224 = sshll.u32 [#allocation25], 4
      %s8225 = int_to_ptr.vmem [resolvable:$true] %s8224
      %8227 = dma.vmem_to_hbm [thread:$0]  %s8225, 32, %s18, [#allocation4]
    $region133: #{moco_forward.1} parent=1 // pred_fallthru
      _
    // Predicated region
    $region134: #{moco_forward.1} parent=1 // pred_check
      _
    $region135: #{moco_forward.1} parent=1 // pred_check_branch
      %8229 = sbr.rel (0) target = $region137
    $region136: #{moco_forward.1} parent=1 // pred_region
      %8230 = dma.done [#allocation4], 32
    $region137: #{moco_forward.1} parent=1 // pred_fallthru
      _
    %8231 = vsyncpa [#allocation3], 1
    %8232 = vsyncpa [#allocation6], 1
    %8233 = vsyncpa [#allocation9], 1
    %8234 = vsyncpa [#allocation12], 1
    %8235 = vsyncpa [#allocation15], 1
    %8236 = vsyncpa [#allocation18], 1
    %8237 = vsyncpa [#allocation21], 1
    %8238 = vsyncpa [#allocation24], 1
    %8239 = vsyncpa [#allocation4], 1

</llo_original>
